<compile_context>
chip_gen: v7x
topology: tpu7x:2x2x1
jax: 0.10.0
libtpu: 0.0.40
codegen_flags: <defaults>
</compile_context>

<pallas_src>
import functools

import jax
import jax.numpy as jnp
from jax.experimental import pallas as pl
from jax.experimental.pallas import tpu as pltpu

EPS = 1e-3            # matches nn.BatchNorm2d(eps=0.001)
LANE = 128            # TPU lane width: channel dims padded to this


def _round_up(x, m):
    return (x + m - 1) // m * m


@functools.lru_cache(maxsize=None)
def _vmem_limit_bytes():
    # Generation-aware VMEM limit: ~48 MiB on 128-MiB parts (v5e/v6e),
    # ~35 MiB on 64-MiB parts (v7x).
    cap = 128 * 1024 * 1024
    try:
        cap = int(pltpu.get_tpu_info().vmem_capacity_bytes)
    except Exception:
        pass
    return int(min(48 * 1024 * 1024, cap * 0.55))


def _compiler_params(semantics):
    return pltpu.CompilerParams(dimension_semantics=semantics,
                                vmem_limit_bytes=_vmem_limit_bytes())


def _silu(y):
    return y * jax.nn.sigmoid(y)


# ---------------- Pallas kernels (hot path) ----------------

def _pw_kernel(x_ref, w_ref, scale_ref, bias_ref, o_ref):
    # 1x1 conv + folded-BN + SiLU on a row tile: (rows, K) @ (K, N)
    y = jnp.dot(x_ref[...], w_ref[...], preferred_element_type=jnp.float32)
    y = y * scale_ref[...] + bias_ref[...]
    o_ref[...] = _silu(y).astype(o_ref.dtype)


def _pw2_kernel(xa_ref, xb_ref, wa_ref, wb_ref, scale_ref, bias_ref, o_ref):
    # 1x1 conv over channel-concat([xa, xb]) written as two dots accumulated in
    # f32 (copy-free; no in-kernel concatenate).
    y = jnp.dot(xa_ref[...], wa_ref[...], preferred_element_type=jnp.float32)
    y = y + jnp.dot(xb_ref[...], wb_ref[...], preferred_element_type=jnp.float32)
    y = y * scale_ref[...] + bias_ref[...]
    o_ref[...] = _silu(y).astype(o_ref.dtype)


def _conv3_kernel(x_ref, w_ref, scale_ref, bias_ref, *rest, tH, W, Wp, cout_p, add):
    # 3x3 conv (stride 1, pad 1, groups=1) + BN + SiLU (+ residual add) on one
    # H-strip of one batch element.
    #   x_ref : (1, (tH+2)*Wp, Cin_p)  flat, W zero-padded to Wp (multiple of 8),
    #           with one zero/halo row above and below the strip.
    #   w_ref : (3, Cin_p, 3*Cout_p)   per-ky weights with the 3 kx taps N-stacked.
    # For each ky: one matmul of the contiguous dy-strip (no strided input copies,
    # no reshape — the strip slice is sublane-tile aligned because Wp % 8 == 0).
    # The kx shifts are ±1-row rolls of the flat result (XLU); the zero pad
    # columns make edge masks unnecessary.  Single strided copy in the epilogue
    # compacts Wp -> W.
    if add:
        res_ref, o_ref = rest
    else:
        (o_ref,) = rest
    nrows = tH * Wp
    accw = None
    for dy in range(3):
        strip = x_ref[0, pl.ds(dy * Wp, nrows), :]          # tile-aligned, no copy
        y = jnp.dot(strip, w_ref[dy], preferred_element_type=jnp.float32)
        accw = y if accw is None else accw + y              # (nrows, 3*Cout_p) f32
    left = accw[:, :cout_p]              # kx = 0 tap, needs value from row r-1
    center = accw[:, cout_p:2 * cout_p]  # kx = 1 tap
    right = accw[:, 2 * cout_p:]         # kx = 2 tap, needs value from row r+1
    acc = (center
           + pltpu.roll(left, shift=1, axis=0)
           + pltpu.roll(right, shift=nrows - 1, axis=0))
    y = acc * scale_ref[...] + bias_ref[...]
    y = _silu(y)
    y = y.reshape(tH, Wp, cout_p)[:, 1:W + 1, :]            # single W-compaction copy
    if add:
        y = y + res_ref[0].astype(jnp.float32)
    o_ref[0] = y.astype(o_ref.dtype)


# ---------------- pallas_call wrappers ----------------

def pointwise_conv_bn_silu(x, w, scale, bias, *, row_tile, col_block=0,
                           out_dtype=None):
    # x: (R, C_any) with the wanted K-wide lane block selected via `col_block`
    # (lets us read x1 straight out of the fused cv1/cv2 buffer without an
    # XLA slice).  w: (K, N) compute dtype, scale/bias: (1, N) f32.
    R = x.shape[0]
    Cin_p, Cout_p = w.shape
    out_dtype = out_dtype if out_dtype is not None else x.dtype
    cost = pl.CostEstimate(
        flops=int(2 * R * Cin_p * Cout_p),
        transcendentals=int(R * Cout_p),
        bytes_accessed=int(R * Cin_p * x.dtype.itemsize + w.size * w.dtype.itemsize
                           + R * Cout_p * jnp.dtype(out_dtype).itemsize))
    return pl.pallas_call(
        _pw_kernel,
        out_shape=jax.ShapeDtypeStruct((R, Cout_p), out_dtype),
        grid=(R // row_tile,),
        in_specs=[
            pl.BlockSpec((row_tile, Cin_p), lambda i, cb=col_block: (i, cb)),
            pl.BlockSpec((Cin_p, Cout_p), lambda i: (0, 0)),    # weights resident
            pl.BlockSpec((1, Cout_p), lambda i: (0, 0)),
            pl.BlockSpec((1, Cout_p), lambda i: (0, 0)),
        ],
        out_specs=pl.BlockSpec((row_tile, Cout_p), lambda i: (i, 0)),
        compiler_params=_compiler_params(("parallel",)),
        cost_estimate=cost,
    )(x, w, scale, bias)


def pointwise2_conv_bn_silu(xa, xb, wa, wb, scale, bias, *, row_tile,
                            col_block_a=0, col_block_b=0, out_dtype=None):
    # cv3: 1x1 conv over concat([xa, xb]) as two dots; xb's lane block is taken
    # directly from the fused cv1/cv2 buffer (no concat, no extra copy).
    R = xa.shape[0]
    Ka, Cout_p = wa.shape
    Kb = wb.shape[0]
    out_dtype = out_dtype if out_dtype is not None else xa.dtype
    cost = pl.CostEstimate(
        flops=int(2 * R * (Ka + Kb) * Cout_p),
        transcendentals=int(R * Cout_p),
        bytes_accessed=int(R * (Ka + Kb) * xa.dtype.itemsize
                           + (wa.size + wb.size) * wa.dtype.itemsize
                           + R * Cout_p * jnp.dtype(out_dtype).itemsize))
    return pl.pallas_call(
        _pw2_kernel,
        out_shape=jax.ShapeDtypeStruct((R, Cout_p), out_dtype),
        grid=(R // row_tile,),
        in_specs=[
            pl.BlockSpec((row_tile, Ka), lambda i, cb=col_block_a: (i, cb)),
            pl.BlockSpec((row_tile, Kb), lambda i, cb=col_block_b: (i, cb)),
            pl.BlockSpec((Ka, Cout_p), lambda i: (0, 0)),
            pl.BlockSpec((Kb, Cout_p), lambda i: (0, 0)),
            pl.BlockSpec((1, Cout_p), lambda i: (0, 0)),
            pl.BlockSpec((1, Cout_p), lambda i: (0, 0)),
        ],
        out_specs=pl.BlockSpec((row_tile, Cout_p), lambda i: (i, 0)),
        compiler_params=_compiler_params(("parallel",)),
        cost_estimate=cost,
    )(xa, xb, wa, wb, scale, bias)


def conv3x3_bn_silu(strips, w_taps, scale, bias, residual=None, *,
                    tH, W, Wp, out_dtype):
    # strips: (steps, (tH+2)*Wp, Cin_p) — steps = B * nStrips, grid over steps
    # ("parallel" so v7x megacore splits the work even for small batch).
    steps, rows_in, Cin_p = strips.shape
    Cout_p = w_taps.shape[-1] // 3
    add = residual is not None
    kern = functools.partial(_conv3_kernel, tH=tH, W=W, Wp=Wp, cout_p=Cout_p,
                             add=add)
    in_specs = [
        pl.BlockSpec((1, rows_in, Cin_p), lambda i: (i, 0, 0)),
        pl.BlockSpec((3, Cin_p, 3 * Cout_p), lambda i: (0, 0, 0)),   # resident
        pl.BlockSpec((1, Cout_p), lambda i: (0, 0)),
        pl.BlockSpec((1, Cout_p), lambda i: (0, 0)),
    ]
    args = [strips, w_taps, scale, bias]
    if add:
        # residual may be the wider fused cv1/cv2 buffer: lane block 0 is x1.
        in_specs.append(pl.BlockSpec((1, tH, W, Cout_p), lambda i: (i, 0, 0, 0)))
        args.append(residual)
    nrows = tH * Wp
    cost = pl.CostEstimate(
        flops=int(2 * steps * 3 * nrows * Cin_p * 3 * Cout_p),
        transcendentals=int(steps * nrows * Cout_p),
        bytes_accessed=int(strips.size * strips.dtype.itemsize
                           + w_taps.size * w_taps.dtype.itemsize
                           + (2 if add else 1) * steps * tH * W * Cout_p
                           * jnp.dtype(out_dtype).itemsize))
    return pl.pallas_call(
        kern,
        out_shape=jax.ShapeDtypeStruct((steps, tH, W, Cout_p), out_dtype),
        grid=(steps,),
        in_specs=in_specs,
        out_specs=pl.BlockSpec((1, tH, W, Cout_p), lambda i: (i, 0, 0, 0)),
        compiler_params=_compiler_params(("parallel",)),
        cost_estimate=cost,
    )(*args)


# ---------------- one-time parameter folding / padding (hoisted) ----------------

def fold_bn(gamma, beta, mean, var, eps=EPS):
    scale = gamma / jnp.sqrt(var + eps)
    bias = beta - mean * scale
    return scale, bias


def _fold_pad(p, cout_p):
    s, b = fold_bn(p["gamma"], p["beta"], p["mean"], p["var"])
    pad = cout_p - s.shape[0]
    s = jnp.pad(s, (0, pad)).reshape(1, cout_p).astype(jnp.float32)
    b = jnp.pad(b, (0, pad)).reshape(1, cout_p).astype(jnp.float32)
    return s, b


def _prep_pw_weight(w_oihw, cin_p, cout_p, cdt):
    w = jnp.transpose(w_oihw[:, :, 0, 0])                      # (Cin, Cout)
    w = jnp.pad(w, ((0, cin_p - w.shape[0]), (0, cout_p - w.shape[1])))
    return w.astype(cdt)


def prepare_csp_params(params, compute_dtype=jnp.bfloat16):
    """One-time fold/transpose/pad/cast of all CSPLayer weights."""
    cdt = jnp.dtype(compute_dtype)
    cin = params["cv1"]["w"].shape[1]
    nh = params["cv1"]["w"].shape[0]
    cout = params["cv3"]["w"].shape[0]
    cin_p = _round_up(cin, LANE)
    nh_p = _round_up(nh, LANE)
    cout_p = _round_up(cout, LANE)

    # cv1 + cv2 fused along N: one (Cin_p, 2*nh_p) matmul; lanes [0,nh_p)=x1 branch,
    # lanes [nh_p, 2*nh_p)=x2 branch.
    w1 = _prep_pw_weight(params["cv1"]["w"], cin_p, nh_p, cdt)
    w2 = _prep_pw_weight(params["cv2"]["w"], cin_p, nh_p, cdt)
    s1, b1 = _fold_pad(params["cv1"], nh_p)
    s2, b2 = _fold_pad(params["cv2"], nh_p)
    prep = {
        "w12": jnp.concatenate([w1, w2], axis=1),
        "s12": jnp.concatenate([s1, s2], axis=1),
        "b12": jnp.concatenate([b1, b2], axis=1),
    }

    # cv3 split per concat half (copy-free two-dot form).
    w3 = jnp.transpose(params["cv3"]["w"][:, :, 0, 0])          # (2*nh, cout)
    w3a = jnp.pad(w3[:nh], ((0, nh_p - nh), (0, cout_p - cout))).astype(cdt)
    w3b = jnp.pad(w3[nh:], ((0, nh_p - (w3.shape[0] - nh)),
                            (0, cout_p - cout))).astype(cdt)
    s3, b3 = _fold_pad(params["cv3"], cout_p)
    prep.update(w3a=w3a, w3b=w3b, s3=s3, b3=b3)

    blocks = []
    for bp in params["m"]:
        wm1 = _prep_pw_weight(bp["cv1"]["w"], nh_p, nh_p, cdt)
        sm1, bm1 = _fold_pad(bp["cv1"], nh_p)
        # 3x3 weights -> (ky, Cin_p, 3*Cout_p): per-ky N-stack of the three kx taps.
        wt = jnp.transpose(bp["cv2"]["w"], (2, 3, 1, 0))        # (3, 3, Cin, Cout)
        wt = jnp.pad(wt, ((0, 0), (0, 0), (0, nh_p - nh), (0, nh_p - nh)))
        w_taps = jnp.transpose(wt, (0, 2, 1, 3)).reshape(3, nh_p, 3 * nh_p).astype(cdt)
        sm2, bm2 = _fold_pad(bp["cv2"], nh_p)
        blocks.append(dict(w1=wm1, s1=sm1, b1=bm1, w_taps=w_taps, s2=sm2, b2=bm2))
    prep["m"] = blocks
    return prep


# ---------------- forward ----------------

def _pick_row_tile(R, target=2048):
    # Prefer a divisor of R that is a multiple of 16 sublanes (no pad/slice HBM
    # passes between kernels); fall back to padding only if R has no such divisor.
    cap = min(target, R)
    t0 = (cap // 16) * 16
    for t in range(t0, 0, -16):
        if R % t == 0:
            return t, R
    t = max(16, min(target, _round_up(R, 16)))
    return t, _round_up(R, t)


def _pick_h_tile(H, W, Wp, cin_p, cout_p, itemsize, budget):
    # Largest divisor of H whose per-step working set (double-buffered blocks +
    # f32 intermediates + resident weights) fits the VMEM budget.
    def working_set(tH):
        in_blk = 2 * (tH + 2) * Wp * cin_p * itemsize
        out_blk = 2 * tH * W * cout_p * itemsize
        res_blk = out_blk
        accw = tH * Wp * 3 * cout_p * 4
        tmp = 3 * tH * Wp * cout_p * 4
        wts = 2 * 3 * cin_p * 3 * cout_p * itemsize
        return in_blk + out_blk + res_blk + accw + tmp + wts
    for tH in range(H, 0, -1):
        if H % tH == 0 and working_set(tH) <= budget:
            return tH
    return 1


def _build_strips(x_nhwc, tH, Wp):
    # (B,H,W,C) -> (B*nS, (tH+2)*Wp, C): zero-pad H by 1, W to Wp (multiple of 8,
    # >= W+2), split into H-strips with a 1-row halo, flatten spatial.
    B, H, W, C = x_nhwc.shape
    nS = H // tH
    xp = jnp.pad(x_nhwc, ((0, 0), (1, 1), (1, Wp - W - 1), (0, 0)))
    if nS == 1:
        s = xp[:, None]
    else:
        # TODO(synk): halo rows are duplicated in HBM here; a manual halo DMA
        # (memory_space=pl.ANY) would avoid the ~(tH+2)/tH duplication.
        s = jnp.stack([xp[:, i * tH:i * tH + tH + 2] for i in range(nS)], axis=1)
    return s.reshape(B * nS, (tH + 2) * Wp, C)


def csp_layer_forward(x_nchw, prep, *, n=1, shortcut=True, cout=None):
    # NOTE: NCHW<->NHWC transposes only at the module boundary (PyTorch interface);
    # everything in between stays channels-last / flat.
    orig_dtype = x_nchw.dtype
    B, Cin, H, W = x_nchw.shape
    cdt = prep["w12"].dtype
    cin_p = prep["w12"].shape[0]
    nh_p = prep["w12"].shape[1] // 2
    cout_p = prep["w3a"].shape[1]
    if cout is None:
        cout = cout_p

    Wp = _round_up(W + 2, 8)
    tH = _pick_h_tile(H, W, Wp, nh_p, nh_p, jnp.dtype(cdt).itemsize,
                      budget=int(_vmem_limit_bytes() * 0.6))
    nS = H // tH

    R = B * H * W
    row_tile, R_p = _pick_row_tile(R)

    # NCHW -> flat channels-last rows, channels zero-padded to a lane multiple.
    x = jnp.transpose(x_nchw, (0, 2, 3, 1)).reshape(R, Cin)
    x = jnp.pad(x, ((0, R_p - R), (0, cin_p - Cin))).astype(cdt)

    # fused cv1 + cv2: single matmul with N = 2*nh_p (one HBM read of x).
    fused = pointwise_conv_bn_silu(x, prep["w12"], prep["s12"], prep["b12"],
                                   row_tile=row_tile)

    src = fused     # x1 lives in lane block 0 of `fused` for the first bottleneck
    for i in range(n):
        bp = prep["m"][i]
        h = pointwise_conv_bn_silu(src, bp["w1"], bp["s1"], bp["b1"],
                                   row_tile=row_tile)           # (R_p, nh_p)
        h_c = h if R_p == R else h[:R]
        strips = _build_strips(h_c.reshape(B, H, W, nh_p), tH, Wp)
        res = None
        if shortcut:
            src_c = src if R_p == R else src[:R]
            res = src_c.reshape(B * nS, tH, W, src_c.shape[-1])
        y4 = conv3x3_bn_silu(strips, bp["w_taps"], bp["s2"], bp["b2"],
                             residual=res, tH=tH, W=W, Wp=Wp, out_dtype=cdt)
        x1 = y4.reshape(R, nh_p)
        if R_p != R:
            x1 = jnp.pad(x1, ((0, R_p - R), (0, 0)))
        src = x1

    # cv3 over concat([x1, x2]) as two dots; x2 = lane block 1 of `fused`.
    yf = pointwise2_conv_bn_silu(src, fused, prep["w3a"], prep["w3b"],
                                 prep["s3"], prep["b3"], row_tile=row_tile,
                                 col_block_a=0, col_block_b=1,
                                 out_dtype=orig_dtype)
    y = yf[:R, :cout].reshape(B, H, W, cout)
    return jnp.transpose(y, (0, 3, 1, 2)).astype(orig_dtype)   # back to NCHW


# ---------------- deterministic parameter init ----------------

def make_conv_block_params(key, cin, cout, k):
    kw, kg, kb, km, kv = jax.random.split(key, 5)
    return {
        "w": jax.random.normal(kw, (cout, cin, k, k), jnp.float32) * 0.1,
        "gamma": 1.0 + 0.1 * jax.random.normal(kg, (cout,), jnp.float32),
        "beta": 0.1 * jax.random.normal(kb, (cout,), jnp.float32),
        "mean": 0.1 * jax.random.normal(km, (cout,), jnp.float32),
        "var": jax.random.uniform(kv, (cout,), jnp.float32, minval=0.5, maxval=1.5),
    }


# ---------------- pure-JAX reference (correctness check) ----------------

def _ref_conv_block(x_nchw, p, k):
    pad = k // 2
    y = jax.lax.conv_general_dilated(
        x_nchw, p["w"], window_strides=(1, 1),
        padding=[(pad, pad), (pad, pad)],
        dimension_numbers=("NCHW", "OIHW", "NCHW"))
    s, b = fold_bn(p["gamma"], p["beta"], p["mean"], p["var"])
    y = y * s[None, :, None, None] + b[None, :, None, None]
    return y * jax.nn.sigmoid(y)


def _ref_csp(x, params, n=1, shortcut=True):
    x1 = _ref_conv_block(x, params["cv1"], 1)
    for i in range(n):
        bp = params["m"][i]
        h = _ref_conv_block(x1, bp["cv1"], 1)
        y = _ref_conv_block(h, bp["cv2"], 3)
        x1 = y + x1 if shortcut else y
    x2 = _ref_conv_block(x, params["cv2"], 1)
    y = jnp.concatenate([x1, x2], axis=1)
    return _ref_conv_block(y, params["cv3"], 1)


if __name__ == "__main__":
    key = jax.random.PRNGKey(0)
    B, Cin, H, W = 2, 4, 16, 16
    Cout, n = 4, 1
    nh = int(Cout * 0.5)   # num_hiddens

    kx, kp = jax.random.split(key)
    x = jax.random.normal(kx, (B, Cin, H, W), jnp.float32)

    ks = jax.random.split(kp, 5)
    params = {
        "cv1": make_conv_block_params(ks[0], Cin, nh, 1),
        "cv2": make_conv_block_params(ks[1], Cin, nh, 1),
        "cv3": make_conv_block_params(ks[2], 2 * nh, Cout, 1),
        "m": [{
            "cv1": make_conv_block_params(ks[3], nh, nh, 1),
            "cv2": make_conv_block_params(ks[4], nh, nh, 3),
        }],
    }

    ref = _ref_csp(x, params, n=n, shortcut=True)

    # f32 compute path: exact-math check against the pure-JAX reference.
    prep_f32 = prepare_csp_params(params, compute_dtype=jnp.float32)
    fwd = jax.jit(functools.partial(csp_layer_forward, n=n, shortcut=True, cout=Cout))
    out_f32 = jax.block_until_ready(fwd(x, prep_f32))
    assert out_f32.shape == (B, Cout, H, W), out_f32.shape
    if not jnp.allclose(out_f32, ref, atol=1e-4, rtol=1e-4):
        raise AssertionError("Pallas CSPLayer (f32 compute) mismatch vs reference")

    # bf16 MXU path (production setting): relaxed tolerance vs f32 reference.
    prep_bf16 = prepare_csp_params(params, compute_dtype=jnp.bfloat16)
    out_bf16 = jax.block_until_ready(fwd(x, prep_bf16))
    assert out_bf16.shape == (B, Cout, H, W), out_bf16.shape
    if not jnp.allclose(out_bf16, ref, atol=5e-2, rtol=5e-2):
        raise AssertionError("Pallas CSPLayer (bf16 compute) mismatch vs reference")

    print("KERNEL_OK")
</pallas_src>

<mosaic_0001>
module attributes {stable_mosaic.version = 11 : i64} {
  func.func @_pw_kernel(%arg0: i32, %arg1: memref<512x128xf32, #tpu.memory_space<vmem>>, %arg2: memref<128x128xf32, #tpu.memory_space<vmem>>, %arg3: memref<1x128xf32, #tpu.memory_space<vmem>>, %arg4: memref<1x128xf32, #tpu.memory_space<vmem>>, %arg5: memref<512x128xf32, #tpu.memory_space<vmem>>) attributes {dimension_semantics = [#tpu.dimension_semantics<parallel>], iteration_bounds = array<i64: 1>, scalar_prefetch = 0 : i64, scratch_operands = 0 : i64, tpu.core_type = #tpu.core_type<tc>, window_params = [{transform_indices = @transform_0, window_bounds = array<i64: 512, 128>}, {pipeline_mode = #tpu.pipeline_mode<synchronous>, transform_indices = @transform_1, window_bounds = array<i64: 128, 128>}, {pipeline_mode = #tpu.pipeline_mode<synchronous>, transform_indices = @transform_2, window_bounds = array<i64: 1, 128>}, {pipeline_mode = #tpu.pipeline_mode<synchronous>, transform_indices = @transform_3, window_bounds = array<i64: 1, 128>}, {transform_indices = @transform_4, window_bounds = array<i64: 512, 128>}]} {
    %c0 = arith.constant 0 : index
    %c0_0 = arith.constant 0 : index
    %0 = vector.load %arg1[%c0, %c0_0] : memref<512x128xf32, #tpu.memory_space<vmem>>, vector<512x128xf32>
    %c0_1 = arith.constant 0 : index
    %c0_2 = arith.constant 0 : index
    %1 = vector.load %arg2[%c0_1, %c0_2] : memref<128x128xf32, #tpu.memory_space<vmem>>, vector<128x128xf32>
    %cst = arith.constant dense<0.000000e+00> : vector<512x128xf32>
    %2 = tpu.matmul %0, %1, %cst {dimension_numbers = #tpu.dot_dimension_numbers<[1], [0], [0], [1], [0, 0, 1, 1], [], []>} : vector<512x128xf32>, vector<128x128xf32>, vector<512x128xf32> -> vector<512x128xf32>
    %c0_3 = arith.constant 0 : index
    %c0_4 = arith.constant 0 : index
    %3 = vector.load %arg3[%c0_3, %c0_4] : memref<1x128xf32, #tpu.memory_space<vmem>>, vector<1x128xf32>
    %4 = vector.broadcast %3 : vector<1x128xf32> to vector<512x128xf32>
    %5 = arith.mulf %2, %4 : vector<512x128xf32>
    %c0_5 = arith.constant 0 : index
    %c0_6 = arith.constant 0 : index
    %6 = vector.load %arg4[%c0_5, %c0_6] : memref<1x128xf32, #tpu.memory_space<vmem>>, vector<1x128xf32>
    %7 = vector.broadcast %6 : vector<1x128xf32> to vector<512x128xf32>
    %8 = arith.addf %5, %7 : vector<512x128xf32>
    %9 = arith.negf %8 : vector<512x128xf32>
    %10 = math.exp %9 : vector<512x128xf32>
    %cst_7 = arith.constant 1.000000e+00 : f32
    %11 = vector.broadcast %cst_7 : f32 to vector<512x128xf32>
    %12 = arith.addf %11, %10 : vector<512x128xf32>
    %13 = arith.divf %11, %12 : vector<512x128xf32>
    %14 = arith.mulf %8, %13 : vector<512x128xf32>
    %c0_8 = arith.constant 0 : index
    %c0_9 = arith.constant 0 : index
    %15 = vector.load %arg5[%c0_8, %c0_9] : memref<512x128xf32, #tpu.memory_space<vmem>>, vector<512x128xf32>
    tpu.vector_store %arg5[%c0_8, %c0_9], %14 {strides = array<i32>} : memref<512x128xf32, #tpu.memory_space<vmem>>, vector<512x128xf32>,
    return
  }
  func.func @transform_0(%arg0: i32) -> (i32, i32) {
    %c0_i32 = arith.constant 0 : i32
    %c0_i32_0 = arith.constant 0 : i32
    return %arg0, %c0_i32 : i32, i32
  }
  func.func @transform_1(%arg0: i32) -> (i32, i32) {
    %c0_i32 = arith.constant 0 : i32
    %c0_i32_0 = arith.constant 0 : i32
    %c0_i32_1 = arith.constant 0 : i32
    return %c0_i32, %c0_i32_0 : i32, i32
  }
  func.func @transform_2(%arg0: i32) -> (i32, i32) {
    %c0_i32 = arith.constant 0 : i32
    %c0_i32_0 = arith.constant 0 : i32
    %c0_i32_1 = arith.constant 0 : i32
    return %c0_i32, %c0_i32_0 : i32, i32
  }
  func.func @transform_3(%arg0: i32) -> (i32, i32) {
    %c0_i32 = arith.constant 0 : i32
    %c0_i32_0 = arith.constant 0 : i32
    %c0_i32_1 = arith.constant 0 : i32
    return %c0_i32, %c0_i32_0 : i32, i32
  }
  func.func @transform_4(%arg0: i32) -> (i32, i32) {
    %c0_i32 = arith.constant 0 : i32
    %c0_i32_0 = arith.constant 0 : i32
    return %arg0, %c0_i32 : i32, i32
  }
}

module attributes {stable_mosaic.version = 11 : i64} {
  func.func @_pw_kernel(%arg0: i32, %arg1: memref<512x128xf32, #tpu.memory_space<vmem>>, %arg2: memref<128x256xf32, #tpu.memory_space<vmem>>, %arg3: memref<1x256xf32, #tpu.memory_space<vmem>>, %arg4: memref<1x256xf32, #tpu.memory_space<vmem>>, %arg5: memref<512x256xf32, #tpu.memory_space<vmem>>) attributes {dimension_semantics = [#tpu.dimension_semantics<parallel>], iteration_bounds = array<i64: 1>, scalar_prefetch = 0 : i64, scratch_operands = 0 : i64, tpu.core_type = #tpu.core_type<tc>, window_params = [{transform_indices = @transform_0, window_bounds = array<i64: 512, 128>}, {pipeline_mode = #tpu.pipeline_mode<synchronous>, transform_indices = @transform_1, window_bounds = array<i64: 128, 256>}, {pipeline_mode = #tpu.pipeline_mode<synchronous>, transform_indices = @transform_2, window_bounds = array<i64: 1, 256>}, {pipeline_mode = #tpu.pipeline_mode<synchronous>, transform_indices = @transform_3, window_bounds = array<i64: 1, 256>}, {transform_indices = @transform_4, window_bounds = array<i64: 512, 256>}]} {
    %c0 = arith.constant 0 : index
    %c0_0 = arith.constant 0 : index
    %0 = vector.load %arg1[%c0, %c0_0] : memref<512x128xf32, #tpu.memory_space<vmem>>, vector<512x128xf32>
    %c0_1 = arith.constant 0 : index
    %c0_2 = arith.constant 0 : index
    %1 = vector.load %arg2[%c0_1, %c0_2] : memref<128x256xf32, #tpu.memory_space<vmem>>, vector<128x256xf32>
    %cst = arith.constant dense<0.000000e+00> : vector<512x256xf32>
    %2 = tpu.matmul %0, %1, %cst {dimension_numbers = #tpu.dot_dimension_numbers<[1], [0], [0], [1], [0, 0, 1, 1], [], []>} : vector<512x128xf32>, vector<128x256xf32>, vector<512x256xf32> -> vector<512x256xf32>
    %c0_3 = arith.constant 0 : index
    %c0_4 = arith.constant 0 : index
    %3 = vector.load %arg3[%c0_3, %c0_4] : memref<1x256xf32, #tpu.memory_space<vmem>>, vector<1x256xf32>
    %4 = vector.broadcast %3 : vector<1x256xf32> to vector<512x256xf32>
    %5 = arith.mulf %2, %4 : vector<512x256xf32>
    %c0_5 = arith.constant 0 : index
    %c0_6 = arith.constant 0 : index
    %6 = vector.load %arg4[%c0_5, %c0_6] : memref<1x256xf32, #tpu.memory_space<vmem>>, vector<1x256xf32>
    %7 = vector.broadcast %6 : vector<1x256xf32> to vector<512x256xf32>
    %8 = arith.addf %5, %7 : vector<512x256xf32>
    %9 = arith.negf %8 : vector<512x256xf32>
    %10 = math.exp %9 : vector<512x256xf32>
    %cst_7 = arith.constant 1.000000e+00 : f32
    %11 = vector.broadcast %cst_7 : f32 to vector<512x256xf32>
    %12 = arith.addf %11, %10 : vector<512x256xf32>
    %13 = arith.divf %11, %12 : vector<512x256xf32>
    %14 = arith.mulf %8, %13 : vector<512x256xf32>
    %c0_8 = arith.constant 0 : index
    %c0_9 = arith.constant 0 : index
    %15 = vector.load %arg5[%c0_8, %c0_9] : memref<512x256xf32, #tpu.memory_space<vmem>>, vector<512x256xf32>
    tpu.vector_store %arg5[%c0_8, %c0_9], %14 {strides = array<i32>} : memref<512x256xf32, #tpu.memory_space<vmem>>, vector<512x256xf32>,
    return
  }
  func.func @transform_0(%arg0: i32) -> (i32, i32) {
    %c0_i32 = arith.constant 0 : i32
    %c0_i32_0 = arith.constant 0 : i32
    return %arg0, %c0_i32 : i32, i32
  }
  func.func @transform_1(%arg0: i32) -> (i32, i32) {
    %c0_i32 = arith.constant 0 : i32
    %c0_i32_0 = arith.constant 0 : i32
    %c0_i32_1 = arith.constant 0 : i32
    return %c0_i32, %c0_i32_0 : i32, i32
  }
  func.func @transform_2(%arg0: i32) -> (i32, i32) {
    %c0_i32 = arith.constant 0 : i32
    %c0_i32_0 = arith.constant 0 : i32
    %c0_i32_1 = arith.constant 0 : i32
    return %c0_i32, %c0_i32_0 : i32, i32
  }
  func.func @transform_3(%arg0: i32) -> (i32, i32) {
    %c0_i32 = arith.constant 0 : i32
    %c0_i32_0 = arith.constant 0 : i32
    %c0_i32_1 = arith.constant 0 : i32
    return %c0_i32, %c0_i32_0 : i32, i32
  }
  func.func @transform_4(%arg0: i32) -> (i32, i32) {
    %c0_i32 = arith.constant 0 : i32
    %c0_i32_0 = arith.constant 0 : i32
    return %arg0, %c0_i32 : i32, i32
  }
}

module attributes {stable_mosaic.version = 11 : i64} {
  func.func @_conv3_kernel(%arg0: i32, %arg1: memref<1x432x128xf32, #tpu.memory_space<vmem>>, %arg2: memref<3x128x384xf32, #tpu.memory_space<vmem>>, %arg3: memref<1x128xf32, #tpu.memory_space<vmem>>, %arg4: memref<1x128xf32, #tpu.memory_space<vmem>>, %arg5: memref<1x16x16x128xf32, #tpu.memory_space<vmem>>, %arg6: memref<1x16x16x128xf32, #tpu.memory_space<vmem>>) attributes {dimension_semantics = [#tpu.dimension_semantics<parallel>], iteration_bounds = array<i64: 2>, scalar_prefetch = 0 : i64, scratch_operands = 0 : i64, tpu.core_type = #tpu.core_type<tc>, window_params = [{transform_indices = @transform_0, window_bounds = array<i64: 1, 432, 128>}, {pipeline_mode = #tpu.pipeline_mode<synchronous>, transform_indices = @transform_1, window_bounds = array<i64: 3, 128, 384>}, {pipeline_mode = #tpu.pipeline_mode<synchronous>, transform_indices = @transform_2, window_bounds = array<i64: 1, 128>}, {pipeline_mode = #tpu.pipeline_mode<synchronous>, transform_indices = @transform_3, window_bounds = array<i64: 1, 128>}, {transform_indices = @transform_4, window_bounds = array<i64: 1, 16, 16, 128>}, {transform_indices = @transform_5, window_bounds = array<i64: 1, 16, 16, 128>}]} {
    %c0 = arith.constant 0 : index
    %c0_0 = arith.constant 0 : index
    %c0_1 = arith.constant 0 : index
    %0 = vector.load %arg1[%c0, %c0_0, %c0_1] : memref<1x432x128xf32, #tpu.memory_space<vmem>>, vector<1x384x128xf32>
    %1 = vector.shape_cast %0 : vector<1x384x128xf32> to vector<384x128xf32>
    %c0_2 = arith.constant 0 : index
    %c0_3 = arith.constant 0 : index
    %c0_4 = arith.constant 0 : index
    %2 = vector.load %arg2[%c0_2, %c0_3, %c0_4] : memref<3x128x384xf32, #tpu.memory_space<vmem>>, vector<1x128x384xf32>
    %3 = vector.shape_cast %2 : vector<1x128x384xf32> to vector<128x384xf32>
    %cst = arith.constant dense<0.000000e+00> : vector<384x384xf32>
    %4 = tpu.matmul %1, %3, %cst {dimension_numbers = #tpu.dot_dimension_numbers<[1], [0], [0], [1], [0, 0, 1, 1], [], []>} : vector<384x128xf32>, vector<128x384xf32>, vector<384x384xf32> -> vector<384x384xf32>
    %c0_5 = arith.constant 0 : index
    %c24 = arith.constant 24 : index
    %c0_6 = arith.constant 0 : index
    %5 = vector.load %arg1[%c0_5, %c24, %c0_6] : memref<1x432x128xf32, #tpu.memory_space<vmem>>, vector<1x384x128xf32>
    %6 = vector.shape_cast %5 : vector<1x384x128xf32> to vector<384x128xf32>
    %c1 = arith.constant 1 : index
    %c0_7 = arith.constant 0 : index
    %c0_8 = arith.constant 0 : index
    %7 = vector.load %arg2[%c1, %c0_7, %c0_8] : memref<3x128x384xf32, #tpu.memory_space<vmem>>, vector<1x128x384xf32>
    %8 = vector.shape_cast %7 : vector<1x128x384xf32> to vector<128x384xf32>
    %cst_9 = arith.constant dense<0.000000e+00> : vector<384x384xf32>
    %9 = tpu.matmul %6, %8, %cst_9 {dimension_numbers = #tpu.dot_dimension_numbers<[1], [0], [0], [1], [0, 0, 1, 1], [], []>} : vector<384x128xf32>, vector<128x384xf32>, vector<384x384xf32> -> vector<384x384xf32>
    %10 = arith.addf %4, %9 : vector<384x384xf32>
    %c0_10 = arith.constant 0 : index
    %c48 = arith.constant 48 : index
    %c0_11 = arith.constant 0 : index
    %11 = vector.load %arg1[%c0_10, %c48, %c0_11] : memref<1x432x128xf32, #tpu.memory_space<vmem>>, vector<1x384x128xf32>
    %12 = vector.shape_cast %11 : vector<1x384x128xf32> to vector<384x128xf32>
    %c2 = arith.constant 2 : index
    %c0_12 = arith.constant 0 : index
    %c0_13 = arith.constant 0 : index
    %13 = vector.load %arg2[%c2, %c0_12, %c0_13] : memref<3x128x384xf32, #tpu.memory_space<vmem>>, vector<1x128x384xf32>
    %14 = vector.shape_cast %13 : vector<1x128x384xf32> to vector<128x384xf32>
    %cst_14 = arith.constant dense<0.000000e+00> : vector<384x384xf32>
    %15 = tpu.matmul %12, %14, %cst_14 {dimension_numbers = #tpu.dot_dimension_numbers<[1], [0], [0], [1], [0, 0, 1, 1], [], []>} : vector<384x128xf32>, vector<128x384xf32>, vector<384x384xf32> -> vector<384x384xf32>
    %16 = arith.addf %10, %15 : vector<384x384xf32>
    %17 = vector.extract_strided_slice %16 {offsets = [0, 0], sizes = [384, 128], strides = [1, 1]} : vector<384x384xf32> to vector<384x128xf32>
    %18 = vector.extract_strided_slice %16 {offsets = [0, 128], sizes = [384, 128], strides = [1, 1]} : vector<384x384xf32> to vector<384x128xf32>
    %19 = vector.extract_strided_slice %16 {offsets = [0, 256], sizes = [384, 128], strides = [1, 1]} : vector<384x384xf32> to vector<384x128xf32>
    %c1_i32 = arith.constant 1 : i32
    %20 = tpu.dynamic_rotate %17 by %c1_i32 dim 0 : vector<384x128xf32>, i32 -> vector<384x128xf32>
    %21 = arith.addf %18, %20 : vector<384x128xf32>
    %c383_i32 = arith.constant 383 : i32
    %22 = tpu.dynamic_rotate %19 by %c383_i32 dim 0 : vector<384x128xf32>, i32 -> vector<384x128xf32>
    %23 = arith.addf %21, %22 : vector<384x128xf32>
    %c0_15 = arith.constant 0 : index
    %c0_16 = arith.constant 0 : index
    %24 = vector.load %arg3[%c0_15, %c0_16] : memref<1x128xf32, #tpu.memory_space<vmem>>, vector<1x128xf32>
    %25 = vector.broadcast %24 : vector<1x128xf32> to vector<384x128xf32>
    %26 = arith.mulf %23, %25 : vector<384x128xf32>
    %c0_17 = arith.constant 0 : index
    %c0_18 = arith.constant 0 : index
    %27 = vector.load %arg4[%c0_17, %c0_18] : memref<1x128xf32, #tpu.memory_space<vmem>>, vector<1x128xf32>
    %28 = vector.broadcast %27 : vector<1x128xf32> to vector<384x128xf32>
    %29 = arith.addf %26, %28 : vector<384x128xf32>
    %30 = arith.negf %29 : vector<384x128xf32>
    %31 = math.exp %30 : vector<384x128xf32>
    %cst_19 = arith.constant 1.000000e+00 : f32
    %32 = vector.broadcast %cst_19 : f32 to vector<384x128xf32>
    %33 = arith.addf %32, %31 : vector<384x128xf32>
    %34 = arith.divf %32, %33 : vector<384x128xf32>
    %35 = arith.mulf %29, %34 : vector<384x128xf32>
    %36 = vector.shape_cast %35 : vector<384x128xf32> to vector<16x24x128xf32>
    %37 = vector.extract_strided_slice %36 {offsets = [0, 1, 0], sizes = [16, 16, 128], strides = [1, 1, 1]} : vector<16x24x128xf32> to vector<16x16x128xf32>
    %c0_20 = arith.constant 0 : index
    %c0_21 = arith.constant 0 : index
    %c0_22 = arith.constant 0 : index
    %c0_23 = arith.constant 0 : index
    %38 = vector.load %arg5[%c0_20, %c0_21, %c0_22, %c0_23] : memref<1x16x16x128xf32, #tpu.memory_space<vmem>>, vector<1x16x16x128xf32>
    %39 = vector.shape_cast %38 : vector<1x16x16x128xf32> to vector<16x16x128xf32>
    %40 = arith.addf %37, %39 : vector<16x16x128xf32>
    %c0_24 = arith.constant 0 : index
    %c0_25 = arith.constant 0 : index
    %c0_26 = arith.constant 0 : index
    %c0_27 = arith.constant 0 : index
    %41 = vector.load %arg6[%c0_24, %c0_25, %c0_26, %c0_27] : memref<1x16x16x128xf32, #tpu.memory_space<vmem>>, vector<1x16x16x128xf32>
    %42 = vector.shape_cast %41 : vector<1x16x16x128xf32> to vector<16x16x128xf32>
    %43 = vector.shape_cast %40 : vector<16x16x128xf32> to vector<1x16x16x128xf32>
    tpu.vector_store %arg6[%c0_24, %c0_25, %c0_26, %c0_27], %43 {strides = array<i32>} : memref<1x16x16x128xf32, #tpu.memory_space<vmem>>, vector<1x16x16x128xf32>,
    return
  }
  func.func @transform_0(%arg0: i32) -> (i32, i32, i32) {
    %c0_i32 = arith.constant 0 : i32
    %c0_i32_0 = arith.constant 0 : i32
    %c0_i32_1 = arith.constant 0 : i32
    return %arg0, %c0_i32, %c0_i32_0 : i32, i32, i32
  }
  func.func @transform_1(%arg0: i32) -> (i32, i32, i32) {
    %c0_i32 = arith.constant 0 : i32
    %c0_i32_0 = arith.constant 0 : i32
    %c0_i32_1 = arith.constant 0 : i32
    %c0_i32_2 = arith.constant 0 : i32
    return %c0_i32, %c0_i32_0, %c0_i32_1 : i32, i32, i32
  }
  func.func @transform_2(%arg0: i32) -> (i32, i32) {
    %c0_i32 = arith.constant 0 : i32
    %c0_i32_0 = arith.constant 0 : i32
    %c0_i32_1 = arith.constant 0 : i32
    return %c0_i32, %c0_i32_0 : i32, i32
  }
  func.func @transform_3(%arg0: i32) -> (i32, i32) {
    %c0_i32 = arith.constant 0 : i32
    %c0_i32_0 = arith.constant 0 : i32
    %c0_i32_1 = arith.constant 0 : i32
    return %c0_i32, %c0_i32_0 : i32, i32
  }
  func.func @transform_4(%arg0: i32) -> (i32, i32, i32, i32) {
    %c0_i32 = arith.constant 0 : i32
    %c0_i32_0 = arith.constant 0 : i32
    %c0_i32_1 = arith.constant 0 : i32
    %c0_i32_2 = arith.constant 0 : i32
    return %arg0, %c0_i32, %c0_i32_0, %c0_i32_1 : i32, i32, i32, i32
  }
  func.func @transform_5(%arg0: i32) -> (i32, i32, i32, i32) {
    %c0_i32 = arith.constant 0 : i32
    %c0_i32_0 = arith.constant 0 : i32
    %c0_i32_1 = arith.constant 0 : i32
    %c0_i32_2 = arith.constant 0 : i32
    return %arg0, %c0_i32, %c0_i32_0, %c0_i32_1 : i32, i32, i32, i32
  }
}

module attributes {stable_mosaic.version = 11 : i64} {
  func.func @_pw2_kernel(%arg0: i32, %arg1: memref<512x128xf32, #tpu.memory_space<vmem>>, %arg2: memref<512x128xf32, #tpu.memory_space<vmem>>, %arg3: memref<128x128xf32, #tpu.memory_space<vmem>>, %arg4: memref<128x128xf32, #tpu.memory_space<vmem>>, %arg5: memref<1x128xf32, #tpu.memory_space<vmem>>, %arg6: memref<1x128xf32, #tpu.memory_space<vmem>>, %arg7: memref<512x128xf32, #tpu.memory_space<vmem>>) attributes {dimension_semantics = [#tpu.dimension_semantics<parallel>], iteration_bounds = array<i64: 1>, scalar_prefetch = 0 : i64, scratch_operands = 0 : i64, tpu.core_type = #tpu.core_type<tc>, window_params = [{transform_indices = @transform_0, window_bounds = array<i64: 512, 128>}, {transform_indices = @transform_1, window_bounds = array<i64: 512, 128>}, {pipeline_mode = #tpu.pipeline_mode<synchronous>, transform_indices = @transform_2, window_bounds = array<i64: 128, 128>}, {pipeline_mode = #tpu.pipeline_mode<synchronous>, transform_indices = @transform_3, window_bounds = array<i64: 128, 128>}, {pipeline_mode = #tpu.pipeline_mode<synchronous>, transform_indices = @transform_4, window_bounds = array<i64: 1, 128>}, {pipeline_mode = #tpu.pipeline_mode<synchronous>, transform_indices = @transform_5, window_bounds = array<i64: 1, 128>}, {transform_indices = @transform_6, window_bounds = array<i64: 512, 128>}]} {
    %c0 = arith.constant 0 : index
    %c0_0 = arith.constant 0 : index
    %0 = vector.load %arg1[%c0, %c0_0] : memref<512x128xf32, #tpu.memory_space<vmem>>, vector<512x128xf32>
    %c0_1 = arith.constant 0 : index
    %c0_2 = arith.constant 0 : index
    %1 = vector.load %arg3[%c0_1, %c0_2] : memref<128x128xf32, #tpu.memory_space<vmem>>, vector<128x128xf32>
    %cst = arith.constant dense<0.000000e+00> : vector<512x128xf32>
    %2 = tpu.matmul %0, %1, %cst {dimension_numbers = #tpu.dot_dimension_numbers<[1], [0], [0], [1], [0, 0, 1, 1], [], []>} : vector<512x128xf32>, vector<128x128xf32>, vector<512x128xf32> -> vector<512x128xf32>
    %c0_3 = arith.constant 0 : index
    %c0_4 = arith.constant 0 : index
    %3 = vector.load %arg2[%c0_3, %c0_4] : memref<512x128xf32, #tpu.memory_space<vmem>>, vector<512x128xf32>
    %c0_5 = arith.constant 0 : index
    %c0_6 = arith.constant 0 : index
    %4 = vector.load %arg4[%c0_5, %c0_6] : memref<128x128xf32, #tpu.memory_space<vmem>>, vector<128x128xf32>
    %cst_7 = arith.constant dense<0.000000e+00> : vector<512x128xf32>
    %5 = tpu.matmul %3, %4, %cst_7 {dimension_numbers = #tpu.dot_dimension_numbers<[1], [0], [0], [1], [0, 0, 1, 1], [], []>} : vector<512x128xf32>, vector<128x128xf32>, vector<512x128xf32> -> vector<512x128xf32>
    %6 = arith.addf %2, %5 : vector<512x128xf32>
    %c0_8 = arith.constant 0 : index
    %c0_9 = arith.constant 0 : index
    %7 = vector.load %arg5[%c0_8, %c0_9] : memref<1x128xf32, #tpu.memory_space<vmem>>, vector<1x128xf32>
    %8 = vector.broadcast %7 : vector<1x128xf32> to vector<512x128xf32>
    %9 = arith.mulf %6, %8 : vector<512x128xf32>
    %c0_10 = arith.constant 0 : index
    %c0_11 = arith.constant 0 : index
    %10 = vector.load %arg6[%c0_10, %c0_11] : memref<1x128xf32, #tpu.memory_space<vmem>>, vector<1x128xf32>
    %11 = vector.broadcast %10 : vector<1x128xf32> to vector<512x128xf32>
    %12 = arith.addf %9, %11 : vector<512x128xf32>
    %13 = arith.negf %12 : vector<512x128xf32>
    %14 = math.exp %13 : vector<512x128xf32>
    %cst_12 = arith.constant 1.000000e+00 : f32
    %15 = vector.broadcast %cst_12 : f32 to vector<512x128xf32>
    %16 = arith.addf %15, %14 : vector<512x128xf32>
    %17 = arith.divf %15, %16 : vector<512x128xf32>
    %18 = arith.mulf %12, %17 : vector<512x128xf32>
    %c0_13 = arith.constant 0 : index
    %c0_14 = arith.constant 0 : index
    %19 = vector.load %arg7[%c0_13, %c0_14] : memref<512x128xf32, #tpu.memory_space<vmem>>, vector<512x128xf32>
    tpu.vector_store %arg7[%c0_13, %c0_14], %18 {strides = array<i32>} : memref<512x128xf32, #tpu.memory_space<vmem>>, vector<512x128xf32>,
    return
  }
  func.func @transform_0(%arg0: i32) -> (i32, i32) {
    %c0_i32 = arith.constant 0 : i32
    %c0_i32_0 = arith.constant 0 : i32
    return %arg0, %c0_i32 : i32, i32
  }
  func.func @transform_1(%arg0: i32) -> (i32, i32) {
    %c1_i32 = arith.constant 1 : i32
    %c0_i32 = arith.constant 0 : i32
    return %arg0, %c1_i32 : i32, i32
  }
  func.func @transform_2(%arg0: i32) -> (i32, i32) {
    %c0_i32 = arith.constant 0 : i32
    %c0_i32_0 = arith.constant 0 : i32
    %c0_i32_1 = arith.constant 0 : i32
    return %c0_i32, %c0_i32_0 : i32, i32
  }
  func.func @transform_3(%arg0: i32) -> (i32, i32) {
    %c0_i32 = arith.constant 0 : i32
    %c0_i32_0 = arith.constant 0 : i32
    %c0_i32_1 = arith.constant 0 : i32
    return %c0_i32, %c0_i32_0 : i32, i32
  }
  func.func @transform_4(%arg0: i32) -> (i32, i32) {
    %c0_i32 = arith.constant 0 : i32
    %c0_i32_0 = arith.constant 0 : i32
    %c0_i32_1 = arith.constant 0 : i32
    return %c0_i32, %c0_i32_0 : i32, i32
  }
  func.func @transform_5(%arg0: i32) -> (i32, i32) {
    %c0_i32 = arith.constant 0 : i32
    %c0_i32_0 = arith.constant 0 : i32
    %c0_i32_1 = arith.constant 0 : i32
    return %c0_i32, %c0_i32_0 : i32, i32
  }
  func.func @transform_6(%arg0: i32) -> (i32, i32) {
    %c0_i32 = arith.constant 0 : i32
    %c0_i32_0 = arith.constant 0 : i32
    return %arg0, %c0_i32 : i32, i32
  }
}

</mosaic_0001>

<llo_original>
// kernel: csp_layer_forward.5
$region0: #{csp_layer_forward.5}
  #allocation0 [shape = 'u32[]', space=smem, size = 0x4, offset = 0x4, fixed_abs, tag = 'smem constant byte address 0x4 - core index']
  #allocation1 [shape = 'u32[144,128]{1,0:T(1,128)}', space=vmem, size = 0x12000, scoped, tag = 'internal scratch']
  %s0 = inlined_call_operand.vmem [shape: f32[512,256], index: 0, kind: input, shape index: {}]
  %s1 = inlined_call_operand.vmem [shape: f32[128,128], index: 1, kind: input, shape index: {}]
  %s2 = inlined_call_operand.vmem [shape: f32[1,128], index: 2, kind: input, shape index: {}]
  %s3 = inlined_call_operand.vmem [shape: f32[1,128], index: 3, kind: input, shape index: {}]
  %s4 = inlined_call_operand.vmem [shape: f32[512,128], index: 4, kind: output, shape index: {}]
  %s5 = sld [smem:[#allocation0]]
  $region64: #{csp_layer_forward.5} parent=0
    _
  %s7 = ssub.s32 1, %s5
  %s8 = scalar_select 0, %s7, %s5
  $region1: #{csp_layer_forward.5} parent=0
    #allocation2 [shape = 'u8[262144]{0}', space=vmem, size = 0x40000, scoped, tag = 'input window, operand 0, single buffered']
    // Predicated region
    $region2: #{csp_layer_forward.5} parent=1 // pred_check
      _
    $region3: #{csp_layer_forward.5} parent=1 // pred_check_branch
      %10 = sbr.rel (0) target = $region5
    $region4: #{csp_layer_forward.5} parent=1 // pred_region
      // Predicated region
      $region6: #{csp_layer_forward.5} parent=4 // pred_check
        _
      $region7: #{csp_layer_forward.5} parent=4 // pred_check_branch
        %12 = sbr.rel (0) target = $region9
      $region8: #{csp_layer_forward.5} parent=4 // pred_region
        // Predicated region
        $region10: #{csp_layer_forward.5} parent=8 // pred_check
          _
        $region11: #{csp_layer_forward.5} parent=8 // pred_check_branch
          %14 = sbr.rel (0) target = $region13
        $region12: #{csp_layer_forward.5} parent=8 // pred_region
          // Predicated region
          $region25: #{csp_layer_forward.5} parent=12 // pred_check
            _
          $region26: #{csp_layer_forward.5} parent=12 // pred_check_branch
            %155 = sbr.rel (0) target = $region28
          $region27: #{csp_layer_forward.5} parent=12 // pred_region
            loop: start=0, step=1, limit=1
            $region29: #{csp_layer_forward.5} parent=27 // loop_pre_header
              _
            $region30: #{csp_layer_forward.5} parent=27 // loop_header
              %s157 = sphi 0, %s161
              %p158 = scmp.ge.s32.totalorder %s157, 1
              %s162 = sphi %s0, %s0
              %s163 = sphi [#allocation2], [#allocation2]
            $region31: #{csp_layer_forward.5} parent=27 // loop_header_branch
              %160 = sbr.rel (%p158) target = $region35
            $region32: #{csp_layer_forward.5} parent=27 // loop_body
              %v164 = vld [vmem:[%s162] sm:$0xff]
              %165 = vst [vmem:[%s163] sm:$0xff] %v164
              %v166 = vld [vmem:[%s162 + $0x10] sm:$0xff]
              %167 = vst [vmem:[%s163 + $0x8] sm:$0xff] %v166
              %v168 = vld [vmem:[%s162 + $0x20] sm:$0xff]
              %169 = vst [vmem:[%s163 + $0x10] sm:$0xff] %v168
              %v170 = vld [vmem:[%s162 + $0x30] sm:$0xff]
              %171 = vst [vmem:[%s163 + $0x18] sm:$0xff] %v170
              %v172 = vld [vmem:[%s162 + $0x40] sm:$0xff]
              %173 = vst [vmem:[%s163 + $0x20] sm:$0xff] %v172
              %v174 = vld [vmem:[%s162 + $0x50] sm:$0xff]
              %175 = vst [vmem:[%s163 + $0x28] sm:$0xff] %v174
              %v176 = vld [vmem:[%s162 + $0x60] sm:$0xff]
              %177 = vst [vmem:[%s163 + $0x30] sm:$0xff] %v176
              %v178 = vld [vmem:[%s162 + $0x70] sm:$0xff]
              %179 = vst [vmem:[%s163 + $0x38] sm:$0xff] %v178
              %v180 = vld [vmem:[%s162 + $0x80] sm:$0xff]
              %181 = vst [vmem:[%s163 + $0x40] sm:$0xff] %v180
              %v182 = vld [vmem:[%s162 + $0x90] sm:$0xff]
              %183 = vst [vmem:[%s163 + $0x48] sm:$0xff] %v182
              %v184 = vld [vmem:[%s162 + $0xa0] sm:$0xff]
              %185 = vst [vmem:[%s163 + $0x50] sm:$0xff] %v184
              %v186 = vld [vmem:[%s162 + $0xb0] sm:$0xff]
              %187 = vst [vmem:[%s163 + $0x58] sm:$0xff] %v186
              %v188 = vld [vmem:[%s162 + $0xc0] sm:$0xff]
              %189 = vst [vmem:[%s163 + $0x60] sm:$0xff] %v188
              %v190 = vld [vmem:[%s162 + $0xd0] sm:$0xff]
              %191 = vst [vmem:[%s163 + $0x68] sm:$0xff] %v190
              %v192 = vld [vmem:[%s162 + $0xe0] sm:$0xff]
              %193 = vst [vmem:[%s163 + $0x70] sm:$0xff] %v192
              %v194 = vld [vmem:[%s162 + $0xf0] sm:$0xff]
              %195 = vst [vmem:[%s163 + $0x78] sm:$0xff] %v194
              %v196 = vld [vmem:[%s162 + $0x100] sm:$0xff]
              %197 = vst [vmem:[%s163 + $0x80] sm:$0xff] %v196
              %v198 = vld [vmem:[%s162 + $0x110] sm:$0xff]
              %199 = vst [vmem:[%s163 + $0x88] sm:$0xff] %v198
              %v200 = vld [vmem:[%s162 + $0x120] sm:$0xff]
              %201 = vst [vmem:[%s163 + $0x90] sm:$0xff] %v200
              %v202 = vld [vmem:[%s162 + $0x130] sm:$0xff]
              %203 = vst [vmem:[%s163 + $0x98] sm:$0xff] %v202
              %v204 = vld [vmem:[%s162 + $0x140] sm:$0xff]
              %205 = vst [vmem:[%s163 + $0xa0] sm:$0xff] %v204
              %v206 = vld [vmem:[%s162 + $0x150] sm:$0xff]
              %207 = vst [vmem:[%s163 + $0xa8] sm:$0xff] %v206
              %v208 = vld [vmem:[%s162 + $0x160] sm:$0xff]
              %209 = vst [vmem:[%s163 + $0xb0] sm:$0xff] %v208
              %v210 = vld [vmem:[%s162 + $0x170] sm:$0xff]
              %211 = vst [vmem:[%s163 + $0xb8] sm:$0xff] %v210
              %v212 = vld [vmem:[%s162 + $0x180] sm:$0xff]
              %213 = vst [vmem:[%s163 + $0xc0] sm:$0xff] %v212
              %v214 = vld [vmem:[%s162 + $0x190] sm:$0xff]
              %215 = vst [vmem:[%s163 + $0xc8] sm:$0xff] %v214
              %v216 = vld [vmem:[%s162 + $0x1a0] sm:$0xff]
              %217 = vst [vmem:[%s163 + $0xd0] sm:$0xff] %v216
              %v218 = vld [vmem:[%s162 + $0x1b0] sm:$0xff]
              %219 = vst [vmem:[%s163 + $0xd8] sm:$0xff] %v218
              %v220 = vld [vmem:[%s162 + $0x1c0] sm:$0xff]
              %221 = vst [vmem:[%s163 + $0xe0] sm:$0xff] %v220
              %v222 = vld [vmem:[%s162 + $0x1d0] sm:$0xff]
              %223 = vst [vmem:[%s163 + $0xe8] sm:$0xff] %v222
              %v224 = vld [vmem:[%s162 + $0x1e0] sm:$0xff]
              %225 = vst [vmem:[%s163 + $0xf0] sm:$0xff] %v224
              %v226 = vld [vmem:[%s162 + $0x1f0] sm:$0xff]
              %227 = vst [vmem:[%s163 + $0xf8] sm:$0xff] %v226
              %v228 = vld [vmem:[%s162 + $0x200] sm:$0xff]
              %229 = vst [vmem:[%s163 + $0x100] sm:$0xff] %v228
              %v230 = vld [vmem:[%s162 + $0x210] sm:$0xff]
              %231 = vst [vmem:[%s163 + $0x108] sm:$0xff] %v230
              %v232 = vld [vmem:[%s162 + $0x220] sm:$0xff]
              %233 = vst [vmem:[%s163 + $0x110] sm:$0xff] %v232
              %v234 = vld [vmem:[%s162 + $0x230] sm:$0xff]
              %235 = vst [vmem:[%s163 + $0x118] sm:$0xff] %v234
              %v236 = vld [vmem:[%s162 + $0x240] sm:$0xff]
              %237 = vst [vmem:[%s163 + $0x120] sm:$0xff] %v236
              %v238 = vld [vmem:[%s162 + $0x250] sm:$0xff]
              %239 = vst [vmem:[%s163 + $0x128] sm:$0xff] %v238
              %v240 = vld [vmem:[%s162 + $0x260] sm:$0xff]
              %241 = vst [vmem:[%s163 + $0x130] sm:$0xff] %v240
              %v242 = vld [vmem:[%s162 + $0x270] sm:$0xff]
              %243 = vst [vmem:[%s163 + $0x138] sm:$0xff] %v242
              %v244 = vld [vmem:[%s162 + $0x280] sm:$0xff]
              %245 = vst [vmem:[%s163 + $0x140] sm:$0xff] %v244
              %v246 = vld [vmem:[%s162 + $0x290] sm:$0xff]
              %247 = vst [vmem:[%s163 + $0x148] sm:$0xff] %v246
              %v248 = vld [vmem:[%s162 + $0x2a0] sm:$0xff]
              %249 = vst [vmem:[%s163 + $0x150] sm:$0xff] %v248
              %v250 = vld [vmem:[%s162 + $0x2b0] sm:$0xff]
              %251 = vst [vmem:[%s163 + $0x158] sm:$0xff] %v250
              %v252 = vld [vmem:[%s162 + $0x2c0] sm:$0xff]
              %253 = vst [vmem:[%s163 + $0x160] sm:$0xff] %v252
              %v254 = vld [vmem:[%s162 + $0x2d0] sm:$0xff]
              %255 = vst [vmem:[%s163 + $0x168] sm:$0xff] %v254
              %v256 = vld [vmem:[%s162 + $0x2e0] sm:$0xff]
              %257 = vst [vmem:[%s163 + $0x170] sm:$0xff] %v256
              %v258 = vld [vmem:[%s162 + $0x2f0] sm:$0xff]
              %259 = vst [vmem:[%s163 + $0x178] sm:$0xff] %v258
              %v260 = vld [vmem:[%s162 + $0x300] sm:$0xff]
              %261 = vst [vmem:[%s163 + $0x180] sm:$0xff] %v260
              %v262 = vld [vmem:[%s162 + $0x310] sm:$0xff]
              %263 = vst [vmem:[%s163 + $0x188] sm:$0xff] %v262
              %v264 = vld [vmem:[%s162 + $0x320] sm:$0xff]
              %265 = vst [vmem:[%s163 + $0x190] sm:$0xff] %v264
              %v266 = vld [vmem:[%s162 + $0x330] sm:$0xff]
              %267 = vst [vmem:[%s163 + $0x198] sm:$0xff] %v266
              %v268 = vld [vmem:[%s162 + $0x340] sm:$0xff]
              %269 = vst [vmem:[%s163 + $0x1a0] sm:$0xff] %v268
              %v270 = vld [vmem:[%s162 + $0x350] sm:$0xff]
              %271 = vst [vmem:[%s163 + $0x1a8] sm:$0xff] %v270
              %v272 = vld [vmem:[%s162 + $0x360] sm:$0xff]
              %273 = vst [vmem:[%s163 + $0x1b0] sm:$0xff] %v272
              %v274 = vld [vmem:[%s162 + $0x370] sm:$0xff]
              %275 = vst [vmem:[%s163 + $0x1b8] sm:$0xff] %v274
              %v276 = vld [vmem:[%s162 + $0x380] sm:$0xff]
              %277 = vst [vmem:[%s163 + $0x1c0] sm:$0xff] %v276
              %v278 = vld [vmem:[%s162 + $0x390] sm:$0xff]
              %279 = vst [vmem:[%s163 + $0x1c8] sm:$0xff] %v278
              %v280 = vld [vmem:[%s162 + $0x3a0] sm:$0xff]
              %281 = vst [vmem:[%s163 + $0x1d0] sm:$0xff] %v280
              %v282 = vld [vmem:[%s162 + $0x3b0] sm:$0xff]
              %283 = vst [vmem:[%s163 + $0x1d8] sm:$0xff] %v282
              %v284 = vld [vmem:[%s162 + $0x3c0] sm:$0xff]
              %285 = vst [vmem:[%s163 + $0x1e0] sm:$0xff] %v284
              %v286 = vld [vmem:[%s162 + $0x3d0] sm:$0xff]
              %287 = vst [vmem:[%s163 + $0x1e8] sm:$0xff] %v286
              %v288 = vld [vmem:[%s162 + $0x3e0] sm:$0xff]
              %289 = vst [vmem:[%s163 + $0x1f0] sm:$0xff] %v288
              %v290 = vld [vmem:[%s162 + $0x3f0] sm:$0xff]
              %291 = vst [vmem:[%s163 + $0x1f8] sm:$0xff] %v290
            $region33: #{csp_layer_forward.5} parent=27 // loop_footer
              %s161 = sadd.s32 1, %s157
            $region34: #{csp_layer_forward.5} parent=27 // loop_footer_branch
              %156 = sbr.rel target = $region30
            $region35: #{csp_layer_forward.5} parent=27 // loop_exit
              _
          $region28: #{csp_layer_forward.5} parent=12 // pred_fallthru
            _
          // Predicated region
          $region36: #{csp_layer_forward.5} parent=12 // pred_check
            _
          $region37: #{csp_layer_forward.5} parent=12 // pred_check_branch
            %293 = sbr.rel target = $region39
          $region38: #{csp_layer_forward.5} parent=12 // pred_region
            _
          $region39: #{csp_layer_forward.5} parent=12 // pred_fallthru
            _
        $region13: #{csp_layer_forward.5} parent=8 // pred_fallthru
          _
        // Predicated region
        $region14: #{csp_layer_forward.5} parent=8 // pred_check
          _
        $region15: #{csp_layer_forward.5} parent=8 // pred_check_branch
          %16 = sbr.rel target = $region17
        $region16: #{csp_layer_forward.5} parent=8 // pred_region
          loop: start=0, step=1, limit=1
          $region18: #{csp_layer_forward.5} parent=16 // loop_pre_header
            _
          $region19: #{csp_layer_forward.5} parent=16 // loop_header
            %s19 = sphi 0, %s23
            %p20 = scmp.ge.s32.totalorder %s19, 1
            %s24 = sphi %s0, %s0
            %s25 = sphi [#allocation2], [#allocation2]
          $region20: #{csp_layer_forward.5} parent=16 // loop_header_branch
            %22 = sbr.rel (%p20) target = $region24
          $region21: #{csp_layer_forward.5} parent=16 // loop_body
            %v26 = vld [vmem:[%s24] sm:$0xff]
            %27 = vst [vmem:[%s25] sm:$0xff] %v26
            %v28 = vld [vmem:[%s24 + $0x10] sm:$0xff]
            %29 = vst [vmem:[%s25 + $0x8] sm:$0xff] %v28
            %v30 = vld [vmem:[%s24 + $0x20] sm:$0xff]
            %31 = vst [vmem:[%s25 + $0x10] sm:$0xff] %v30
            %v32 = vld [vmem:[%s24 + $0x30] sm:$0xff]
            %33 = vst [vmem:[%s25 + $0x18] sm:$0xff] %v32
            %v34 = vld [vmem:[%s24 + $0x40] sm:$0xff]
            %35 = vst [vmem:[%s25 + $0x20] sm:$0xff] %v34
            %v36 = vld [vmem:[%s24 + $0x50] sm:$0xff]
            %37 = vst [vmem:[%s25 + $0x28] sm:$0xff] %v36
            %v38 = vld [vmem:[%s24 + $0x60] sm:$0xff]
            %39 = vst [vmem:[%s25 + $0x30] sm:$0xff] %v38
            %v40 = vld [vmem:[%s24 + $0x70] sm:$0xff]
            %41 = vst [vmem:[%s25 + $0x38] sm:$0xff] %v40
            %v42 = vld [vmem:[%s24 + $0x80] sm:$0xff]
            %43 = vst [vmem:[%s25 + $0x40] sm:$0xff] %v42
            %v44 = vld [vmem:[%s24 + $0x90] sm:$0xff]
            %45 = vst [vmem:[%s25 + $0x48] sm:$0xff] %v44
            %v46 = vld [vmem:[%s24 + $0xa0] sm:$0xff]
            %47 = vst [vmem:[%s25 + $0x50] sm:$0xff] %v46
            %v48 = vld [vmem:[%s24 + $0xb0] sm:$0xff]
            %49 = vst [vmem:[%s25 + $0x58] sm:$0xff] %v48
            %v50 = vld [vmem:[%s24 + $0xc0] sm:$0xff]
            %51 = vst [vmem:[%s25 + $0x60] sm:$0xff] %v50
            %v52 = vld [vmem:[%s24 + $0xd0] sm:$0xff]
            %53 = vst [vmem:[%s25 + $0x68] sm:$0xff] %v52
            %v54 = vld [vmem:[%s24 + $0xe0] sm:$0xff]
            %55 = vst [vmem:[%s25 + $0x70] sm:$0xff] %v54
            %v56 = vld [vmem:[%s24 + $0xf0] sm:$0xff]
            %57 = vst [vmem:[%s25 + $0x78] sm:$0xff] %v56
            %v58 = vld [vmem:[%s24 + $0x100] sm:$0xff]
            %59 = vst [vmem:[%s25 + $0x80] sm:$0xff] %v58
            %v60 = vld [vmem:[%s24 + $0x110] sm:$0xff]
            %61 = vst [vmem:[%s25 + $0x88] sm:$0xff] %v60
            %v62 = vld [vmem:[%s24 + $0x120] sm:$0xff]
            %63 = vst [vmem:[%s25 + $0x90] sm:$0xff] %v62
            %v64 = vld [vmem:[%s24 + $0x130] sm:$0xff]
            %65 = vst [vmem:[%s25 + $0x98] sm:$0xff] %v64
            %v66 = vld [vmem:[%s24 + $0x140] sm:$0xff]
            %67 = vst [vmem:[%s25 + $0xa0] sm:$0xff] %v66
            %v68 = vld [vmem:[%s24 + $0x150] sm:$0xff]
            %69 = vst [vmem:[%s25 + $0xa8] sm:$0xff] %v68
            %v70 = vld [vmem:[%s24 + $0x160] sm:$0xff]
            %71 = vst [vmem:[%s25 + $0xb0] sm:$0xff] %v70
            %v72 = vld [vmem:[%s24 + $0x170] sm:$0xff]
            %73 = vst [vmem:[%s25 + $0xb8] sm:$0xff] %v72
            %v74 = vld [vmem:[%s24 + $0x180] sm:$0xff]
            %75 = vst [vmem:[%s25 + $0xc0] sm:$0xff] %v74
            %v76 = vld [vmem:[%s24 + $0x190] sm:$0xff]
            %77 = vst [vmem:[%s25 + $0xc8] sm:$0xff] %v76
            %v78 = vld [vmem:[%s24 + $0x1a0] sm:$0xff]
            %79 = vst [vmem:[%s25 + $0xd0] sm:$0xff] %v78
            %v80 = vld [vmem:[%s24 + $0x1b0] sm:$0xff]
            %81 = vst [vmem:[%s25 + $0xd8] sm:$0xff] %v80
            %v82 = vld [vmem:[%s24 + $0x1c0] sm:$0xff]
            %83 = vst [vmem:[%s25 + $0xe0] sm:$0xff] %v82
            %v84 = vld [vmem:[%s24 + $0x1d0] sm:$0xff]
            %85 = vst [vmem:[%s25 + $0xe8] sm:$0xff] %v84
            %v86 = vld [vmem:[%s24 + $0x1e0] sm:$0xff]
            %87 = vst [vmem:[%s25 + $0xf0] sm:$0xff] %v86
            %v88 = vld [vmem:[%s24 + $0x1f0] sm:$0xff]
            %89 = vst [vmem:[%s25 + $0xf8] sm:$0xff] %v88
            %v90 = vld [vmem:[%s24 + $0x200] sm:$0xff]
            %91 = vst [vmem:[%s25 + $0x100] sm:$0xff] %v90
            %v92 = vld [vmem:[%s24 + $0x210] sm:$0xff]
            %93 = vst [vmem:[%s25 + $0x108] sm:$0xff] %v92
            %v94 = vld [vmem:[%s24 + $0x220] sm:$0xff]
            %95 = vst [vmem:[%s25 + $0x110] sm:$0xff] %v94
            %v96 = vld [vmem:[%s24 + $0x230] sm:$0xff]
            %97 = vst [vmem:[%s25 + $0x118] sm:$0xff] %v96
            %v98 = vld [vmem:[%s24 + $0x240] sm:$0xff]
            %99 = vst [vmem:[%s25 + $0x120] sm:$0xff] %v98
            %v100 = vld [vmem:[%s24 + $0x250] sm:$0xff]
            %101 = vst [vmem:[%s25 + $0x128] sm:$0xff] %v100
            %v102 = vld [vmem:[%s24 + $0x260] sm:$0xff]
            %103 = vst [vmem:[%s25 + $0x130] sm:$0xff] %v102
            %v104 = vld [vmem:[%s24 + $0x270] sm:$0xff]
            %105 = vst [vmem:[%s25 + $0x138] sm:$0xff] %v104
            %v106 = vld [vmem:[%s24 + $0x280] sm:$0xff]
            %107 = vst [vmem:[%s25 + $0x140] sm:$0xff] %v106
            %v108 = vld [vmem:[%s24 + $0x290] sm:$0xff]
            %109 = vst [vmem:[%s25 + $0x148] sm:$0xff] %v108
            %v110 = vld [vmem:[%s24 + $0x2a0] sm:$0xff]
            %111 = vst [vmem:[%s25 + $0x150] sm:$0xff] %v110
            %v112 = vld [vmem:[%s24 + $0x2b0] sm:$0xff]
            %113 = vst [vmem:[%s25 + $0x158] sm:$0xff] %v112
            %v114 = vld [vmem:[%s24 + $0x2c0] sm:$0xff]
            %115 = vst [vmem:[%s25 + $0x160] sm:$0xff] %v114
            %v116 = vld [vmem:[%s24 + $0x2d0] sm:$0xff]
            %117 = vst [vmem:[%s25 + $0x168] sm:$0xff] %v116
            %v118 = vld [vmem:[%s24 + $0x2e0] sm:$0xff]
            %119 = vst [vmem:[%s25 + $0x170] sm:$0xff] %v118
            %v120 = vld [vmem:[%s24 + $0x2f0] sm:$0xff]
            %121 = vst [vmem:[%s25 + $0x178] sm:$0xff] %v120
            %v122 = vld [vmem:[%s24 + $0x300] sm:$0xff]
            %123 = vst [vmem:[%s25 + $0x180] sm:$0xff] %v122
            %v124 = vld [vmem:[%s24 + $0x310] sm:$0xff]
            %125 = vst [vmem:[%s25 + $0x188] sm:$0xff] %v124
            %v126 = vld [vmem:[%s24 + $0x320] sm:$0xff]
            %127 = vst [vmem:[%s25 + $0x190] sm:$0xff] %v126
            %v128 = vld [vmem:[%s24 + $0x330] sm:$0xff]
            %129 = vst [vmem:[%s25 + $0x198] sm:$0xff] %v128
            %v130 = vld [vmem:[%s24 + $0x340] sm:$0xff]
            %131 = vst [vmem:[%s25 + $0x1a0] sm:$0xff] %v130
            %v132 = vld [vmem:[%s24 + $0x350] sm:$0xff]
            %133 = vst [vmem:[%s25 + $0x1a8] sm:$0xff] %v132
            %v134 = vld [vmem:[%s24 + $0x360] sm:$0xff]
            %135 = vst [vmem:[%s25 + $0x1b0] sm:$0xff] %v134
            %v136 = vld [vmem:[%s24 + $0x370] sm:$0xff]
            %137 = vst [vmem:[%s25 + $0x1b8] sm:$0xff] %v136
            %v138 = vld [vmem:[%s24 + $0x380] sm:$0xff]
            %139 = vst [vmem:[%s25 + $0x1c0] sm:$0xff] %v138
            %v140 = vld [vmem:[%s24 + $0x390] sm:$0xff]
            %141 = vst [vmem:[%s25 + $0x1c8] sm:$0xff] %v140
            %v142 = vld [vmem:[%s24 + $0x3a0] sm:$0xff]
            %143 = vst [vmem:[%s25 + $0x1d0] sm:$0xff] %v142
            %v144 = vld [vmem:[%s24 + $0x3b0] sm:$0xff]
            %145 = vst [vmem:[%s25 + $0x1d8] sm:$0xff] %v144
            %v146 = vld [vmem:[%s24 + $0x3c0] sm:$0xff]
            %147 = vst [vmem:[%s25 + $0x1e0] sm:$0xff] %v146
            %v148 = vld [vmem:[%s24 + $0x3d0] sm:$0xff]
            %149 = vst [vmem:[%s25 + $0x1e8] sm:$0xff] %v148
            %v150 = vld [vmem:[%s24 + $0x3e0] sm:$0xff]
            %151 = vst [vmem:[%s25 + $0x1f0] sm:$0xff] %v150
            %v152 = vld [vmem:[%s24 + $0x3f0] sm:$0xff]
            %153 = vst [vmem:[%s25 + $0x1f8] sm:$0xff] %v152
          $region22: #{csp_layer_forward.5} parent=16 // loop_footer
            %s23 = sadd.s32 1, %s19
          $region23: #{csp_layer_forward.5} parent=16 // loop_footer_branch
            %18 = sbr.rel target = $region19
          $region24: #{csp_layer_forward.5} parent=16 // loop_exit
            _
        $region17: #{csp_layer_forward.5} parent=8 // pred_fallthru
          _
      $region9: #{csp_layer_forward.5} parent=4 // pred_fallthru
        _
      %294 = vnop
    $region5: #{csp_layer_forward.5} parent=1 // pred_fallthru
      _
    // Predicated region
    $region40: #{csp_layer_forward.5} parent=1 // pred_check
      _
    $region41: #{csp_layer_forward.5} parent=1 // pred_check_branch
      %296 = sbr.rel (0) target = $region43
    $region42: #{csp_layer_forward.5} parent=1 // pred_region
      _
    $region43: #{csp_layer_forward.5} parent=1 // pred_fallthru
      _
    // Predicated region
    $region44: #{csp_layer_forward.5} parent=1 // pred_check
      _
    $region45: #{csp_layer_forward.5} parent=1 // pred_check_branch
      %298 = sbr.rel (0) target = $region47
    $region46: #{csp_layer_forward.5} parent=1 // pred_region
      _
    $region47: #{csp_layer_forward.5} parent=1 // pred_fallthru
      _
    // Predicated region
    $region48: #{csp_layer_forward.5} parent=1 // pred_check
      _
    $region49: #{csp_layer_forward.5} parent=1 // pred_check_branch
      %300 = sbr.rel (0) target = $region51
    $region50: #{csp_layer_forward.5} parent=1 // pred_region
      _
    $region51: #{csp_layer_forward.5} parent=1 // pred_fallthru
      _
    // Predicated region
    $region52: #{csp_layer_forward.5} parent=1 // pred_check
      _
    $region53: #{csp_layer_forward.5} parent=1 // pred_check_branch
      %302 = sbr.rel (0) target = $region55
    $region54: #{csp_layer_forward.5} parent=1 // pred_region
      _
    $region55: #{csp_layer_forward.5} parent=1 // pred_fallthru
      _
    %v303 = vld [vmem:[#allocation2] sm:$0xff]
    %v304 = vld [vmem:[#allocation2 + $0x8] sm:$0xff]
    %v305 = vld [vmem:[#allocation2 + $0x10] sm:$0xff]
    %v306 = vld [vmem:[#allocation2 + $0x18] sm:$0xff]
    %v307 = vld [vmem:[#allocation2 + $0x20] sm:$0xff]
    %v308 = vld [vmem:[#allocation2 + $0x28] sm:$0xff]
    %v309 = vld [vmem:[#allocation2 + $0x30] sm:$0xff]
    %v310 = vld [vmem:[#allocation2 + $0x38] sm:$0xff]
    %v311 = vld [vmem:[#allocation2 + $0x40] sm:$0xff]
    %v312 = vld [vmem:[#allocation2 + $0x48] sm:$0xff]
    %v313 = vld [vmem:[#allocation2 + $0x50] sm:$0xff]
    %v314 = vld [vmem:[#allocation2 + $0x58] sm:$0xff]
    %v315 = vld [vmem:[#allocation2 + $0x60] sm:$0xff]
    %v316 = vld [vmem:[#allocation2 + $0x68] sm:$0xff]
    %v317 = vld [vmem:[#allocation2 + $0x70] sm:$0xff]
    %v318 = vld [vmem:[#allocation2 + $0x78] sm:$0xff]
    %v319 = vld [vmem:[#allocation2 + $0x80] sm:$0xff]
    %v320 = vld [vmem:[#allocation2 + $0x88] sm:$0xff]
    %v321 = vld [vmem:[#allocation2 + $0x90] sm:$0xff]
    %v322 = vld [vmem:[#allocation2 + $0x98] sm:$0xff]
    %v323 = vld [vmem:[#allocation2 + $0xa0] sm:$0xff]
    %v324 = vld [vmem:[#allocation2 + $0xa8] sm:$0xff]
    %v325 = vld [vmem:[#allocation2 + $0xb0] sm:$0xff]
    %v326 = vld [vmem:[#allocation2 + $0xb8] sm:$0xff]
    %v327 = vld [vmem:[#allocation2 + $0xc0] sm:$0xff]
    %v328 = vld [vmem:[#allocation2 + $0xc8] sm:$0xff]
    %v329 = vld [vmem:[#allocation2 + $0xd0] sm:$0xff]
    %v330 = vld [vmem:[#allocation2 + $0xd8] sm:$0xff]
    %v331 = vld [vmem:[#allocation2 + $0xe0] sm:$0xff]
    %v332 = vld [vmem:[#allocation2 + $0xe8] sm:$0xff]
    %v333 = vld [vmem:[#allocation2 + $0xf0] sm:$0xff]
    %v334 = vld [vmem:[#allocation2 + $0xf8] sm:$0xff]
    %v335 = vld [vmem:[#allocation2 + $0x100] sm:$0xff]
    %v336 = vld [vmem:[#allocation2 + $0x108] sm:$0xff]
    %v337 = vld [vmem:[#allocation2 + $0x110] sm:$0xff]
    %v338 = vld [vmem:[#allocation2 + $0x118] sm:$0xff]
    %v339 = vld [vmem:[#allocation2 + $0x120] sm:$0xff]
    %v340 = vld [vmem:[#allocation2 + $0x128] sm:$0xff]
    %v341 = vld [vmem:[#allocation2 + $0x130] sm:$0xff]
    %v342 = vld [vmem:[#allocation2 + $0x138] sm:$0xff]
    %v343 = vld [vmem:[#allocation2 + $0x140] sm:$0xff]
    %v344 = vld [vmem:[#allocation2 + $0x148] sm:$0xff]
    %v345 = vld [vmem:[#allocation2 + $0x150] sm:$0xff]
    %v346 = vld [vmem:[#allocation2 + $0x158] sm:$0xff]
    %v347 = vld [vmem:[#allocation2 + $0x160] sm:$0xff]
    %v348 = vld [vmem:[#allocation2 + $0x168] sm:$0xff]
    %v349 = vld [vmem:[#allocation2 + $0x170] sm:$0xff]
    %v350 = vld [vmem:[#allocation2 + $0x178] sm:$0xff]
    %v351 = vld [vmem:[#allocation2 + $0x180] sm:$0xff]
    %v352 = vld [vmem:[#allocation2 + $0x188] sm:$0xff]
    %v353 = vld [vmem:[#allocation2 + $0x190] sm:$0xff]
    %v354 = vld [vmem:[#allocation2 + $0x198] sm:$0xff]
    %v355 = vld [vmem:[#allocation2 + $0x1a0] sm:$0xff]
    %v356 = vld [vmem:[#allocation2 + $0x1a8] sm:$0xff]
    %v357 = vld [vmem:[#allocation2 + $0x1b0] sm:$0xff]
    %v358 = vld [vmem:[#allocation2 + $0x1b8] sm:$0xff]
    %v359 = vld [vmem:[#allocation2 + $0x1c0] sm:$0xff]
    %v360 = vld [vmem:[#allocation2 + $0x1c8] sm:$0xff]
    %v361 = vld [vmem:[#allocation2 + $0x1d0] sm:$0xff]
    %v362 = vld [vmem:[#allocation2 + $0x1d8] sm:$0xff]
    %v363 = vld [vmem:[#allocation2 + $0x1e0] sm:$0xff]
    %v364 = vld [vmem:[#allocation2 + $0x1e8] sm:$0xff]
    %v365 = vld [vmem:[#allocation2 + $0x1f0] sm:$0xff]
    %v366 = vld [vmem:[#allocation2 + $0x1f8] sm:$0xff]
    %v367 = vld [vmem:[%s1] sm:$0xff]
    %v368 = vld [vmem:[%s1 + $0x8] sm:$0xff]
    %v369 = vld [vmem:[%s1 + $0x10] sm:$0xff]
    %v370 = vld [vmem:[%s1 + $0x18] sm:$0xff]
    %v371 = vld [vmem:[%s1 + $0x20] sm:$0xff]
    %v372 = vld [vmem:[%s1 + $0x28] sm:$0xff]
    %v373 = vld [vmem:[%s1 + $0x30] sm:$0xff]
    %v374 = vld [vmem:[%s1 + $0x38] sm:$0xff]
    %v375 = vld [vmem:[%s1 + $0x40] sm:$0xff]
    %v376 = vld [vmem:[%s1 + $0x48] sm:$0xff]
    %v377 = vld [vmem:[%s1 + $0x50] sm:$0xff]
    %v378 = vld [vmem:[%s1 + $0x58] sm:$0xff]
    %v379 = vld [vmem:[%s1 + $0x60] sm:$0xff]
    %v380 = vld [vmem:[%s1 + $0x68] sm:$0xff]
    %v381 = vld [vmem:[%s1 + $0x70] sm:$0xff]
    %v382 = vld [vmem:[%s1 + $0x78] sm:$0xff]
    %383 = vmatprep.subr.mxu0 0.0
    %384 = vmatpush1.msra.mxu0 %v367
    %385 = vmatprep.subr.mxu0 0.0
    %386 = vmatpush1.msra.mxu0 %v368
    %387 = vmatprep.subr.mxu0 0.0
    %388 = vmatpush1.msra.mxu0 %v369
    %389 = vmatprep.subr.mxu0 0.0
    %390 = vmatpush1.msra.mxu0 %v370
    %391 = vmatprep.subr.mxu0 0.0
    %392 = vmatpush1.msra.mxu0 %v371
    %393 = vmatprep.subr.mxu0 0.0
    %394 = vmatpush1.msra.mxu0 %v372
    %395 = vmatprep.subr.mxu0 0.0
    %396 = vmatpush1.msra.mxu0 %v373
    %397 = vmatprep.subr.mxu0 0.0
    %398 = vmatpush1.msra.mxu0 %v374
    %399 = vmatprep.subr.mxu0 0.0
    %400 = vmatpush1.msra.mxu0 %v375
    %401 = vmatprep.subr.mxu0 0.0
    %402 = vmatpush1.msra.mxu0 %v376
    %403 = vmatprep.subr.mxu0 0.0
    %404 = vmatpush1.msra.mxu0 %v377
    %405 = vmatprep.subr.mxu0 0.0
    %406 = vmatpush1.msra.mxu0 %v378
    %407 = vmatprep.subr.mxu0 0.0
    %408 = vmatpush1.msra.mxu0 %v379
    %409 = vmatprep.subr.mxu0 0.0
    %410 = vmatpush1.msra.mxu0 %v380
    %411 = vmatprep.subr.mxu0 0.0
    %412 = vmatpush1.msra.mxu0 %v381
    %413 = vmatprep.subr.mxu0 0.0
    %414 = vmatpush1.msra.mxu0 %v382
    %415 = vmatprep.subr.mxu0 0.0
    %416 = vmatpush1.msra.mxu0 0.0
    %417 = vmatprep.subr.mxu0 0.0
    %418 = vmatpush1.msra.mxu0 0.0
    %419 = vmatprep.subr.mxu0 0.0
    %420 = vmatpush1.msra.mxu0 0.0
    %421 = vmatprep.subr.mxu0 0.0
    %422 = vmatpush1.msra.mxu0 0.0
    %423 = vmatprep.subr.mxu0 0.0
    %424 = vmatpush1.msra.mxu0 0.0
    %425 = vmatprep.subr.mxu0 0.0
    %426 = vmatpush1.msra.mxu0 0.0
    %427 = vmatprep.subr.mxu0 0.0
    %428 = vmatpush1.msra.mxu0 0.0
    %429 = vmatprep.subr.mxu0 0.0
    %430 = vmatpush1.msra.mxu0 0.0
    %431 = vmatprep.subr.mxu0 0.0
    %432 = vmatpush1.msra.mxu0 0.0
    %433 = vmatprep.subr.mxu0 0.0
    %434 = vmatpush1.msra.mxu0 0.0
    %435 = vmatprep.subr.mxu0 0.0
    %436 = vmatpush1.msra.mxu0 0.0
    %437 = vmatprep.subr.mxu0 0.0
    %438 = vmatpush1.msra.mxu0 0.0
    %439 = vmatprep.subr.mxu0 0.0
    %440 = vmatpush1.msra.mxu0 0.0
    %441 = vmatprep.subr.mxu0 0.0
    %442 = vmatpush1.msra.mxu0 0.0
    %443 = vmatprep.subr.mxu0 0.0
    %444 = vmatpush1.msra.mxu0 0.0
    %445 = vmatprep.subr.mxu0 0.0
    %446 = vmatpush1.msra.mxu0 0.0
    %447 = vmatprep.mubr.f32.mxu0 0.0
    %448 = vmatmul.mubr.f32.gmra.mrb[0].mxu0 %v303
    %v449 = vpop.f32.mrb[0].mxu0
    %v450 = vadd.f32 0.0, %v449
    %v451 = vpop.f32.mrb[0].mxu0
    %452 = vmatprep.mubr.f32.mxu0 0.0
    %453 = vmatmul.mubr.f32.gmra.mrb[0].mxu0 %v304
    %v454 = vpop.f32.mrb[0].mxu0
    %v455 = vadd.f32 0.0, %v454
    %v456 = vpop.f32.mrb[0].mxu0
    %457 = vmatprep.mubr.f32.mxu0 0.0
    %458 = vmatmul.mubr.f32.gmra.mrb[0].mxu0 %v305
    %v459 = vpop.f32.mrb[0].mxu0
    %v460 = vadd.f32 0.0, %v459
    %v461 = vpop.f32.mrb[0].mxu0
    %462 = vmatprep.mubr.f32.mxu0 0.0
    %463 = vmatmul.mubr.f32.gmra.mrb[0].mxu0 %v306
    %v464 = vpop.f32.mrb[0].mxu0
    %v465 = vadd.f32 0.0, %v464
    %v466 = vpop.f32.mrb[0].mxu0
    %467 = vmatprep.mubr.f32.mxu0 0.0
    %468 = vmatmul.mubr.f32.gmra.mrb[0].mxu0 %v307
    %v469 = vpop.f32.mrb[0].mxu0
    %v470 = vadd.f32 0.0, %v469
    %v471 = vpop.f32.mrb[0].mxu0
    %472 = vmatprep.mubr.f32.mxu0 0.0
    %473 = vmatmul.mubr.f32.gmra.mrb[0].mxu0 %v308
    %v474 = vpop.f32.mrb[0].mxu0
    %v475 = vadd.f32 0.0, %v474
    %v476 = vpop.f32.mrb[0].mxu0
    %477 = vmatprep.mubr.f32.mxu0 0.0
    %478 = vmatmul.mubr.f32.gmra.mrb[0].mxu0 %v309
    %v479 = vpop.f32.mrb[0].mxu0
    %v480 = vadd.f32 0.0, %v479
    %v481 = vpop.f32.mrb[0].mxu0
    %482 = vmatprep.mubr.f32.mxu0 0.0
    %483 = vmatmul.mubr.f32.gmra.mrb[0].mxu0 %v310
    %v484 = vpop.f32.mrb[0].mxu0
    %v485 = vadd.f32 0.0, %v484
    %v486 = vpop.f32.mrb[0].mxu0
    %487 = vmatprep.mubr.f32.mxu0 0.0
    %488 = vmatmul.mubr.f32.gmra.mrb[0].mxu0 %v311
    %v489 = vpop.f32.mrb[0].mxu0
    %v490 = vadd.f32 0.0, %v489
    %v491 = vpop.f32.mrb[0].mxu0
    %492 = vmatprep.mubr.f32.mxu0 0.0
    %493 = vmatmul.mubr.f32.gmra.mrb[0].mxu0 %v312
    %v494 = vpop.f32.mrb[0].mxu0
    %v495 = vadd.f32 0.0, %v494
    %v496 = vpop.f32.mrb[0].mxu0
    %497 = vmatprep.mubr.f32.mxu0 0.0
    %498 = vmatmul.mubr.f32.gmra.mrb[0].mxu0 %v313
    %v499 = vpop.f32.mrb[0].mxu0
    %v500 = vadd.f32 0.0, %v499
    %v501 = vpop.f32.mrb[0].mxu0
    %502 = vmatprep.mubr.f32.mxu0 0.0
    %503 = vmatmul.mubr.f32.gmra.mrb[0].mxu0 %v314
    %v504 = vpop.f32.mrb[0].mxu0
    %v505 = vadd.f32 0.0, %v504
    %v506 = vpop.f32.mrb[0].mxu0
    %507 = vmatprep.mubr.f32.mxu0 0.0
    %508 = vmatmul.mubr.f32.gmra.mrb[0].mxu0 %v315
    %v509 = vpop.f32.mrb[0].mxu0
    %v510 = vadd.f32 0.0, %v509
    %v511 = vpop.f32.mrb[0].mxu0
    %512 = vmatprep.mubr.f32.mxu0 0.0
    %513 = vmatmul.mubr.f32.gmra.mrb[0].mxu0 %v316
    %v514 = vpop.f32.mrb[0].mxu0
    %v515 = vadd.f32 0.0, %v514
    %v516 = vpop.f32.mrb[0].mxu0
    %517 = vmatprep.mubr.f32.mxu0 0.0
    %518 = vmatmul.mubr.f32.gmra.mrb[0].mxu0 %v317
    %v519 = vpop.f32.mrb[0].mxu0
    %v520 = vadd.f32 0.0, %v519
    %v521 = vpop.f32.mrb[0].mxu0
    %522 = vmatprep.mubr.f32.mxu0 0.0
    %523 = vmatmul.mubr.f32.gmra.mrb[0].mxu0 %v318
    %v524 = vpop.f32.mrb[0].mxu0
    %v525 = vadd.f32 0.0, %v524
    %v526 = vpop.f32.mrb[0].mxu0
    %527 = vmatprep.mubr.f32.mxu0 0.0
    %528 = vmatmul.mubr.f32.gmra.mrb[0].mxu0 %v319
    %v529 = vpop.f32.mrb[0].mxu0
    %v530 = vadd.f32 0.0, %v529
    %v531 = vpop.f32.mrb[0].mxu0
    %532 = vmatprep.mubr.f32.mxu0 0.0
    %533 = vmatmul.mubr.f32.gmra.mrb[0].mxu0 %v320
    %v534 = vpop.f32.mrb[0].mxu0
    %v535 = vadd.f32 0.0, %v534
    %v536 = vpop.f32.mrb[0].mxu0
    %537 = vmatprep.mubr.f32.mxu0 0.0
    %538 = vmatmul.mubr.f32.gmra.mrb[0].mxu0 %v321
    %v539 = vpop.f32.mrb[0].mxu0
    %v540 = vadd.f32 0.0, %v539
    %v541 = vpop.f32.mrb[0].mxu0
    %542 = vmatprep.mubr.f32.mxu0 0.0
    %543 = vmatmul.mubr.f32.gmra.mrb[0].mxu0 %v322
    %v544 = vpop.f32.mrb[0].mxu0
    %v545 = vadd.f32 0.0, %v544
    %v546 = vpop.f32.mrb[0].mxu0
    %547 = vmatprep.mubr.f32.mxu0 0.0
    %548 = vmatmul.mubr.f32.gmra.mrb[0].mxu0 %v323
    %v549 = vpop.f32.mrb[0].mxu0
    %v550 = vadd.f32 0.0, %v549
    %v551 = vpop.f32.mrb[0].mxu0
    %552 = vmatprep.mubr.f32.mxu0 0.0
    %553 = vmatmul.mubr.f32.gmra.mrb[0].mxu0 %v324
    %v554 = vpop.f32.mrb[0].mxu0
    %v555 = vadd.f32 0.0, %v554
    %v556 = vpop.f32.mrb[0].mxu0
    %557 = vmatprep.mubr.f32.mxu0 0.0
    %558 = vmatmul.mubr.f32.gmra.mrb[0].mxu0 %v325
    %v559 = vpop.f32.mrb[0].mxu0
    %v560 = vadd.f32 0.0, %v559
    %v561 = vpop.f32.mrb[0].mxu0
    %562 = vmatprep.mubr.f32.mxu0 0.0
    %563 = vmatmul.mubr.f32.gmra.mrb[0].mxu0 %v326
    %v564 = vpop.f32.mrb[0].mxu0
    %v565 = vadd.f32 0.0, %v564
    %v566 = vpop.f32.mrb[0].mxu0
    %567 = vmatprep.mubr.f32.mxu0 0.0
    %568 = vmatmul.mubr.f32.gmra.mrb[0].mxu0 %v327
    %v569 = vpop.f32.mrb[0].mxu0
    %v570 = vadd.f32 0.0, %v569
    %v571 = vpop.f32.mrb[0].mxu0
    %572 = vmatprep.mubr.f32.mxu0 0.0
    %573 = vmatmul.mubr.f32.gmra.mrb[0].mxu0 %v328
    %v574 = vpop.f32.mrb[0].mxu0
    %v575 = vadd.f32 0.0, %v574
    %v576 = vpop.f32.mrb[0].mxu0
    %577 = vmatprep.mubr.f32.mxu0 0.0
    %578 = vmatmul.mubr.f32.gmra.mrb[0].mxu0 %v329
    %v579 = vpop.f32.mrb[0].mxu0
    %v580 = vadd.f32 0.0, %v579
    %v581 = vpop.f32.mrb[0].mxu0
    %582 = vmatprep.mubr.f32.mxu0 0.0
    %583 = vmatmul.mubr.f32.gmra.mrb[0].mxu0 %v330
    %v584 = vpop.f32.mrb[0].mxu0
    %v585 = vadd.f32 0.0, %v584
    %v586 = vpop.f32.mrb[0].mxu0
    %587 = vmatprep.mubr.f32.mxu0 0.0
    %588 = vmatmul.mubr.f32.gmra.mrb[0].mxu0 %v331
    %v589 = vpop.f32.mrb[0].mxu0
    %v590 = vadd.f32 0.0, %v589
    %v591 = vpop.f32.mrb[0].mxu0
    %592 = vmatprep.mubr.f32.mxu0 0.0
    %593 = vmatmul.mubr.f32.gmra.mrb[0].mxu0 %v332
    %v594 = vpop.f32.mrb[0].mxu0
    %v595 = vadd.f32 0.0, %v594
    %v596 = vpop.f32.mrb[0].mxu0
    %597 = vmatprep.mubr.f32.mxu0 0.0
    %598 = vmatmul.mubr.f32.gmra.mrb[0].mxu0 %v333
    %v599 = vpop.f32.mrb[0].mxu0
    %v600 = vadd.f32 0.0, %v599
    %v601 = vpop.f32.mrb[0].mxu0
    %602 = vmatprep.mubr.f32.mxu0 0.0
    %603 = vmatmul.mubr.f32.gmra.mrb[0].mxu0 %v334
    %v604 = vpop.f32.mrb[0].mxu0
    %v605 = vadd.f32 0.0, %v604
    %v606 = vpop.f32.mrb[0].mxu0
    %607 = vmatprep.mubr.f32.mxu0 0.0
    %608 = vmatmul.mubr.f32.gmra.mrb[0].mxu0 %v335
    %v609 = vpop.f32.mrb[0].mxu0
    %v610 = vadd.f32 0.0, %v609
    %v611 = vpop.f32.mrb[0].mxu0
    %612 = vmatprep.mubr.f32.mxu0 0.0
    %613 = vmatmul.mubr.f32.gmra.mrb[0].mxu0 %v336
    %v614 = vpop.f32.mrb[0].mxu0
    %v615 = vadd.f32 0.0, %v614
    %v616 = vpop.f32.mrb[0].mxu0
    %617 = vmatprep.mubr.f32.mxu0 0.0
    %618 = vmatmul.mubr.f32.gmra.mrb[0].mxu0 %v337
    %v619 = vpop.f32.mrb[0].mxu0
    %v620 = vadd.f32 0.0, %v619
    %v621 = vpop.f32.mrb[0].mxu0
    %622 = vmatprep.mubr.f32.mxu0 0.0
    %623 = vmatmul.mubr.f32.gmra.mrb[0].mxu0 %v338
    %v624 = vpop.f32.mrb[0].mxu0
    %v625 = vadd.f32 0.0, %v624
    %v626 = vpop.f32.mrb[0].mxu0
    %627 = vmatprep.mubr.f32.mxu0 0.0
    %628 = vmatmul.mubr.f32.gmra.mrb[0].mxu0 %v339
    %v629 = vpop.f32.mrb[0].mxu0
    %v630 = vadd.f32 0.0, %v629
    %v631 = vpop.f32.mrb[0].mxu0
    %632 = vmatprep.mubr.f32.mxu0 0.0
    %633 = vmatmul.mubr.f32.gmra.mrb[0].mxu0 %v340
    %v634 = vpop.f32.mrb[0].mxu0
    %v635 = vadd.f32 0.0, %v634
    %v636 = vpop.f32.mrb[0].mxu0
    %637 = vmatprep.mubr.f32.mxu0 0.0
    %638 = vmatmul.mubr.f32.gmra.mrb[0].mxu0 %v341
    %v639 = vpop.f32.mrb[0].mxu0
    %v640 = vadd.f32 0.0, %v639
    %v641 = vpop.f32.mrb[0].mxu0
    %642 = vmatprep.mubr.f32.mxu0 0.0
    %643 = vmatmul.mubr.f32.gmra.mrb[0].mxu0 %v342
    %v644 = vpop.f32.mrb[0].mxu0
    %v645 = vadd.f32 0.0, %v644
    %v646 = vpop.f32.mrb[0].mxu0
    %647 = vmatprep.mubr.f32.mxu0 0.0
    %648 = vmatmul.mubr.f32.gmra.mrb[0].mxu0 %v343
    %v649 = vpop.f32.mrb[0].mxu0
    %v650 = vadd.f32 0.0, %v649
    %v651 = vpop.f32.mrb[0].mxu0
    %652 = vmatprep.mubr.f32.mxu0 0.0
    %653 = vmatmul.mubr.f32.gmra.mrb[0].mxu0 %v344
    %v654 = vpop.f32.mrb[0].mxu0
    %v655 = vadd.f32 0.0, %v654
    %v656 = vpop.f32.mrb[0].mxu0
    %657 = vmatprep.mubr.f32.mxu0 0.0
    %658 = vmatmul.mubr.f32.gmra.mrb[0].mxu0 %v345
    %v659 = vpop.f32.mrb[0].mxu0
    %v660 = vadd.f32 0.0, %v659
    %v661 = vpop.f32.mrb[0].mxu0
    %662 = vmatprep.mubr.f32.mxu0 0.0
    %663 = vmatmul.mubr.f32.gmra.mrb[0].mxu0 %v346
    %v664 = vpop.f32.mrb[0].mxu0
    %v665 = vadd.f32 0.0, %v664
    %v666 = vpop.f32.mrb[0].mxu0
    %667 = vmatprep.mubr.f32.mxu0 0.0
    %668 = vmatmul.mubr.f32.gmra.mrb[0].mxu0 %v347
    %v669 = vpop.f32.mrb[0].mxu0
    %v670 = vadd.f32 0.0, %v669
    %v671 = vpop.f32.mrb[0].mxu0
    %672 = vmatprep.mubr.f32.mxu0 0.0
    %673 = vmatmul.mubr.f32.gmra.mrb[0].mxu0 %v348
    %v674 = vpop.f32.mrb[0].mxu0
    %v675 = vadd.f32 0.0, %v674
    %v676 = vpop.f32.mrb[0].mxu0
    %677 = vmatprep.mubr.f32.mxu0 0.0
    %678 = vmatmul.mubr.f32.gmra.mrb[0].mxu0 %v349
    %v679 = vpop.f32.mrb[0].mxu0
    %v680 = vadd.f32 0.0, %v679
    %v681 = vpop.f32.mrb[0].mxu0
    %682 = vmatprep.mubr.f32.mxu0 0.0
    %683 = vmatmul.mubr.f32.gmra.mrb[0].mxu0 %v350
    %v684 = vpop.f32.mrb[0].mxu0
    %v685 = vadd.f32 0.0, %v684
    %v686 = vpop.f32.mrb[0].mxu0
    %687 = vmatprep.mubr.f32.mxu0 0.0
    %688 = vmatmul.mubr.f32.gmra.mrb[0].mxu0 %v351
    %v689 = vpop.f32.mrb[0].mxu0
    %v690 = vadd.f32 0.0, %v689
    %v691 = vpop.f32.mrb[0].mxu0
    %692 = vmatprep.mubr.f32.mxu0 0.0
    %693 = vmatmul.mubr.f32.gmra.mrb[0].mxu0 %v352
    %v694 = vpop.f32.mrb[0].mxu0
    %v695 = vadd.f32 0.0, %v694
    %v696 = vpop.f32.mrb[0].mxu0
    %697 = vmatprep.mubr.f32.mxu0 0.0
    %698 = vmatmul.mubr.f32.gmra.mrb[0].mxu0 %v353
    %v699 = vpop.f32.mrb[0].mxu0
    %v700 = vadd.f32 0.0, %v699
    %v701 = vpop.f32.mrb[0].mxu0
    %702 = vmatprep.mubr.f32.mxu0 0.0
    %703 = vmatmul.mubr.f32.gmra.mrb[0].mxu0 %v354
    %v704 = vpop.f32.mrb[0].mxu0
    %v705 = vadd.f32 0.0, %v704
    %v706 = vpop.f32.mrb[0].mxu0
    %707 = vmatprep.mubr.f32.mxu0 0.0
    %708 = vmatmul.mubr.f32.gmra.mrb[0].mxu0 %v355
    %v709 = vpop.f32.mrb[0].mxu0
    %v710 = vadd.f32 0.0, %v709
    %v711 = vpop.f32.mrb[0].mxu0
    %712 = vmatprep.mubr.f32.mxu0 0.0
    %713 = vmatmul.mubr.f32.gmra.mrb[0].mxu0 %v356
    %v714 = vpop.f32.mrb[0].mxu0
    %v715 = vadd.f32 0.0, %v714
    %v716 = vpop.f32.mrb[0].mxu0
    %717 = vmatprep.mubr.f32.mxu0 0.0
    %718 = vmatmul.mubr.f32.gmra.mrb[0].mxu0 %v357
    %v719 = vpop.f32.mrb[0].mxu0
    %v720 = vadd.f32 0.0, %v719
    %v721 = vpop.f32.mrb[0].mxu0
    %722 = vmatprep.mubr.f32.mxu0 0.0
    %723 = vmatmul.mubr.f32.gmra.mrb[0].mxu0 %v358
    %v724 = vpop.f32.mrb[0].mxu0
    %v725 = vadd.f32 0.0, %v724
    %v726 = vpop.f32.mrb[0].mxu0
    %727 = vmatprep.mubr.f32.mxu0 0.0
    %728 = vmatmul.mubr.f32.gmra.mrb[0].mxu0 %v359
    %v729 = vpop.f32.mrb[0].mxu0
    %v730 = vadd.f32 0.0, %v729
    %v731 = vpop.f32.mrb[0].mxu0
    %732 = vmatprep.mubr.f32.mxu0 0.0
    %733 = vmatmul.mubr.f32.gmra.mrb[0].mxu0 %v360
    %v734 = vpop.f32.mrb[0].mxu0
    %v735 = vadd.f32 0.0, %v734
    %v736 = vpop.f32.mrb[0].mxu0
    %737 = vmatprep.mubr.f32.mxu0 0.0
    %738 = vmatmul.mubr.f32.gmra.mrb[0].mxu0 %v361
    %v739 = vpop.f32.mrb[0].mxu0
    %v740 = vadd.f32 0.0, %v739
    %v741 = vpop.f32.mrb[0].mxu0
    %742 = vmatprep.mubr.f32.mxu0 0.0
    %743 = vmatmul.mubr.f32.gmra.mrb[0].mxu0 %v362
    %v744 = vpop.f32.mrb[0].mxu0
    %v745 = vadd.f32 0.0, %v744
    %v746 = vpop.f32.mrb[0].mxu0
    %747 = vmatprep.mubr.f32.mxu0 0.0
    %748 = vmatmul.mubr.f32.gmra.mrb[0].mxu0 %v363
    %v749 = vpop.f32.mrb[0].mxu0
    %v750 = vadd.f32 0.0, %v749
    %v751 = vpop.f32.mrb[0].mxu0
    %752 = vmatprep.mubr.f32.mxu0 0.0
    %753 = vmatmul.mubr.f32.gmra.mrb[0].mxu0 %v364
    %v754 = vpop.f32.mrb[0].mxu0
    %v755 = vadd.f32 0.0, %v754
    %v756 = vpop.f32.mrb[0].mxu0
    %757 = vmatprep.mubr.f32.mxu0 0.0
    %758 = vmatmul.mubr.f32.gmra.mrb[0].mxu0 %v365
    %v759 = vpop.f32.mrb[0].mxu0
    %v760 = vadd.f32 0.0, %v759
    %v761 = vpop.f32.mrb[0].mxu0
    %762 = vmatprep.mubr.f32.mxu0 0.0
    %763 = vmatmul.mubr.f32.gmra.mrb[0].mxu0 %v366
    %v764 = vpop.f32.mrb[0].mxu0
    %v765 = vadd.f32 0.0, %v764
    %v766 = vpop.f32.mrb[0].mxu0
    %767 = vdwg.mxu0
    %v768 = vld [vmem:[%s2] sm:$0x1]
    %v770 = vlaneseq
    %v771 = vshrl.u32 %v770, 7
    %v772 = vsub.s32 0, %v771
    %v773 = vrot.slane %v768, %v772
    %v775 = vmul.f32 %v450, %v773
    %v776 = vmul.f32 %v455, %v773
    %v777 = vmul.f32 %v460, %v773
    %v778 = vmul.f32 %v465, %v773
    %v779 = vmul.f32 %v470, %v773
    %v780 = vmul.f32 %v475, %v773
    %v781 = vmul.f32 %v480, %v773
    %v782 = vmul.f32 %v485, %v773
    %v783 = vmul.f32 %v490, %v773
    %v784 = vmul.f32 %v495, %v773
    %v785 = vmul.f32 %v500, %v773
    %v786 = vmul.f32 %v505, %v773
    %v787 = vmul.f32 %v510, %v773
    %v788 = vmul.f32 %v515, %v773
    %v789 = vmul.f32 %v520, %v773
    %v790 = vmul.f32 %v525, %v773
    %v791 = vmul.f32 %v530, %v773
    %v792 = vmul.f32 %v535, %v773
    %v793 = vmul.f32 %v540, %v773
    %v794 = vmul.f32 %v545, %v773
    %v795 = vmul.f32 %v550, %v773
    %v796 = vmul.f32 %v555, %v773
    %v797 = vmul.f32 %v560, %v773
    %v798 = vmul.f32 %v565, %v773
    %v799 = vmul.f32 %v570, %v773
    %v800 = vmul.f32 %v575, %v773
    %v801 = vmul.f32 %v580, %v773
    %v802 = vmul.f32 %v585, %v773
    %v803 = vmul.f32 %v590, %v773
    %v804 = vmul.f32 %v595, %v773
    %v805 = vmul.f32 %v600, %v773
    %v806 = vmul.f32 %v605, %v773
    %v807 = vmul.f32 %v610, %v773
    %v808 = vmul.f32 %v615, %v773
    %v809 = vmul.f32 %v620, %v773
    %v810 = vmul.f32 %v625, %v773
    %v811 = vmul.f32 %v630, %v773
    %v812 = vmul.f32 %v635, %v773
    %v813 = vmul.f32 %v640, %v773
    %v814 = vmul.f32 %v645, %v773
    %v815 = vmul.f32 %v650, %v773
    %v816 = vmul.f32 %v655, %v773
    %v817 = vmul.f32 %v660, %v773
    %v818 = vmul.f32 %v665, %v773
    %v819 = vmul.f32 %v670, %v773
    %v820 = vmul.f32 %v675, %v773
    %v821 = vmul.f32 %v680, %v773
    %v822 = vmul.f32 %v685, %v773
    %v823 = vmul.f32 %v690, %v773
    %v824 = vmul.f32 %v695, %v773
    %v825 = vmul.f32 %v700, %v773
    %v826 = vmul.f32 %v705, %v773
    %v827 = vmul.f32 %v710, %v773
    %v828 = vmul.f32 %v715, %v773
    %v829 = vmul.f32 %v720, %v773
    %v830 = vmul.f32 %v725, %v773
    %v831 = vmul.f32 %v730, %v773
    %v832 = vmul.f32 %v735, %v773
    %v833 = vmul.f32 %v740, %v773
    %v834 = vmul.f32 %v745, %v773
    %v835 = vmul.f32 %v750, %v773
    %v836 = vmul.f32 %v755, %v773
    %v837 = vmul.f32 %v760, %v773
    %v838 = vmul.f32 %v765, %v773
    %v839 = vld [vmem:[%s3] sm:$0x1]
    %v841 = vlaneseq
    %v842 = vshrl.u32 %v841, 7
    %v843 = vsub.s32 0, %v842
    %v844 = vrot.slane %v839, %v843
    %v846 = vadd.f32 %v775, %v844
    %v847 = vadd.f32 %v776, %v844
    %v848 = vadd.f32 %v777, %v844
    %v849 = vadd.f32 %v778, %v844
    %v850 = vadd.f32 %v779, %v844
    %v851 = vadd.f32 %v780, %v844
    %v852 = vadd.f32 %v781, %v844
    %v853 = vadd.f32 %v782, %v844
    %v854 = vadd.f32 %v783, %v844
    %v855 = vadd.f32 %v784, %v844
    %v856 = vadd.f32 %v785, %v844
    %v857 = vadd.f32 %v786, %v844
    %v858 = vadd.f32 %v787, %v844
    %v859 = vadd.f32 %v788, %v844
    %v860 = vadd.f32 %v789, %v844
    %v861 = vadd.f32 %v790, %v844
    %v862 = vadd.f32 %v791, %v844
    %v863 = vadd.f32 %v792, %v844
    %v864 = vadd.f32 %v793, %v844
    %v865 = vadd.f32 %v794, %v844
    %v866 = vadd.f32 %v795, %v844
    %v867 = vadd.f32 %v796, %v844
    %v868 = vadd.f32 %v797, %v844
    %v869 = vadd.f32 %v798, %v844
    %v870 = vadd.f32 %v799, %v844
    %v871 = vadd.f32 %v800, %v844
    %v872 = vadd.f32 %v801, %v844
    %v873 = vadd.f32 %v802, %v844
    %v874 = vadd.f32 %v803, %v844
    %v875 = vadd.f32 %v804, %v844
    %v876 = vadd.f32 %v805, %v844
    %v877 = vadd.f32 %v806, %v844
    %v878 = vadd.f32 %v807, %v844
    %v879 = vadd.f32 %v808, %v844
    %v880 = vadd.f32 %v809, %v844
    %v881 = vadd.f32 %v810, %v844
    %v882 = vadd.f32 %v811, %v844
    %v883 = vadd.f32 %v812, %v844
    %v884 = vadd.f32 %v813, %v844
    %v885 = vadd.f32 %v814, %v844
    %v886 = vadd.f32 %v815, %v844
    %v887 = vadd.f32 %v816, %v844
    %v888 = vadd.f32 %v817, %v844
    %v889 = vadd.f32 %v818, %v844
    %v890 = vadd.f32 %v819, %v844
    %v891 = vadd.f32 %v820, %v844
    %v892 = vadd.f32 %v821, %v844
    %v893 = vadd.f32 %v822, %v844
    %v894 = vadd.f32 %v823, %v844
    %v895 = vadd.f32 %v824, %v844
    %v896 = vadd.f32 %v825, %v844
    %v897 = vadd.f32 %v826, %v844
    %v898 = vadd.f32 %v827, %v844
    %v899 = vadd.f32 %v828, %v844
    %v900 = vadd.f32 %v829, %v844
    %v901 = vadd.f32 %v830, %v844
    %v902 = vadd.f32 %v831, %v844
    %v903 = vadd.f32 %v832, %v844
    %v904 = vadd.f32 %v833, %v844
    %v905 = vadd.f32 %v834, %v844
    %v906 = vadd.f32 %v835, %v844
    %v907 = vadd.f32 %v836, %v844
    %v908 = vadd.f32 %v837, %v844
    %v909 = vadd.f32 %v838, %v844
    %v910 = vxor.u32 %v846, 2147483648
    %v911 = vxor.u32 %v847, 2147483648
    %v912 = vxor.u32 %v848, 2147483648
    %v913 = vxor.u32 %v849, 2147483648
    %v914 = vxor.u32 %v850, 2147483648
    %v915 = vxor.u32 %v851, 2147483648
    %v916 = vxor.u32 %v852, 2147483648
    %v917 = vxor.u32 %v853, 2147483648
    %v918 = vxor.u32 %v854, 2147483648
    %v919 = vxor.u32 %v855, 2147483648
    %v920 = vxor.u32 %v856, 2147483648
    %v921 = vxor.u32 %v857, 2147483648
    %v922 = vxor.u32 %v858, 2147483648
    %v923 = vxor.u32 %v859, 2147483648
    %v924 = vxor.u32 %v860, 2147483648
    %v925 = vxor.u32 %v861, 2147483648
    %v926 = vxor.u32 %v862, 2147483648
    %v927 = vxor.u32 %v863, 2147483648
    %v928 = vxor.u32 %v864, 2147483648
    %v929 = vxor.u32 %v865, 2147483648
    %v930 = vxor.u32 %v866, 2147483648
    %v931 = vxor.u32 %v867, 2147483648
    %v932 = vxor.u32 %v868, 2147483648
    %v933 = vxor.u32 %v869, 2147483648
    %v934 = vxor.u32 %v870, 2147483648
    %v935 = vxor.u32 %v871, 2147483648
    %v936 = vxor.u32 %v872, 2147483648
    %v937 = vxor.u32 %v873, 2147483648
    %v938 = vxor.u32 %v874, 2147483648
    %v939 = vxor.u32 %v875, 2147483648
    %v940 = vxor.u32 %v876, 2147483648
    %v941 = vxor.u32 %v877, 2147483648
    %v942 = vxor.u32 %v878, 2147483648
    %v943 = vxor.u32 %v879, 2147483648
    %v944 = vxor.u32 %v880, 2147483648
    %v945 = vxor.u32 %v881, 2147483648
    %v946 = vxor.u32 %v882, 2147483648
    %v947 = vxor.u32 %v883, 2147483648
    %v948 = vxor.u32 %v884, 2147483648
    %v949 = vxor.u32 %v885, 2147483648
    %v950 = vxor.u32 %v886, 2147483648
    %v951 = vxor.u32 %v887, 2147483648
    %v952 = vxor.u32 %v888, 2147483648
    %v953 = vxor.u32 %v889, 2147483648
    %v954 = vxor.u32 %v890, 2147483648
    %v955 = vxor.u32 %v891, 2147483648
    %v956 = vxor.u32 %v892, 2147483648
    %v957 = vxor.u32 %v893, 2147483648
    %v958 = vxor.u32 %v894, 2147483648
    %v959 = vxor.u32 %v895, 2147483648
    %v960 = vxor.u32 %v896, 2147483648
    %v961 = vxor.u32 %v897, 2147483648
    %v962 = vxor.u32 %v898, 2147483648
    %v963 = vxor.u32 %v899, 2147483648
    %v964 = vxor.u32 %v900, 2147483648
    %v965 = vxor.u32 %v901, 2147483648
    %v966 = vxor.u32 %v902, 2147483648
    %v967 = vxor.u32 %v903, 2147483648
    %v968 = vxor.u32 %v904, 2147483648
    %v969 = vxor.u32 %v905, 2147483648
    %v970 = vxor.u32 %v906, 2147483648
    %v971 = vxor.u32 %v907, 2147483648
    %v972 = vxor.u32 %v908, 2147483648
    %v973 = vxor.u32 %v909, 2147483648
    %v974 = vmul.f32 %v910, 1.442695
    %v975 = vpow.pop %v974
    %v976 = vmul.f32 %v911, 1.442695
    %v977 = vpow.pop %v976
    %v978 = vmul.f32 %v912, 1.442695
    %v979 = vpow.pop %v978
    %v980 = vmul.f32 %v913, 1.442695
    %v981 = vpow.pop %v980
    %v982 = vmul.f32 %v914, 1.442695
    %v983 = vpow.pop %v982
    %v984 = vmul.f32 %v915, 1.442695
    %v985 = vpow.pop %v984
    %v986 = vmul.f32 %v916, 1.442695
    %v987 = vpow.pop %v986
    %v988 = vmul.f32 %v917, 1.442695
    %v989 = vpow.pop %v988
    %v990 = vmul.f32 %v918, 1.442695
    %v991 = vpow.pop %v990
    %v992 = vmul.f32 %v919, 1.442695
    %v993 = vpow.pop %v992
    %v994 = vmul.f32 %v920, 1.442695
    %v995 = vpow.pop %v994
    %v996 = vmul.f32 %v921, 1.442695
    %v997 = vpow.pop %v996
    %v998 = vmul.f32 %v922, 1.442695
    %v999 = vpow.pop %v998
    %v1000 = vmul.f32 %v923, 1.442695
    %v1001 = vpow.pop %v1000
    %v1002 = vmul.f32 %v924, 1.442695
    %v1003 = vpow.pop %v1002
    %v1004 = vmul.f32 %v925, 1.442695
    %v1005 = vpow.pop %v1004
    %v1006 = vmul.f32 %v926, 1.442695
    %v1007 = vpow.pop %v1006
    %v1008 = vmul.f32 %v927, 1.442695
    %v1009 = vpow.pop %v1008
    %v1010 = vmul.f32 %v928, 1.442695
    %v1011 = vpow.pop %v1010
    %v1012 = vmul.f32 %v929, 1.442695
    %v1013 = vpow.pop %v1012
    %v1014 = vmul.f32 %v930, 1.442695
    %v1015 = vpow.pop %v1014
    %v1016 = vmul.f32 %v931, 1.442695
    %v1017 = vpow.pop %v1016
    %v1018 = vmul.f32 %v932, 1.442695
    %v1019 = vpow.pop %v1018
    %v1020 = vmul.f32 %v933, 1.442695
    %v1021 = vpow.pop %v1020
    %v1022 = vmul.f32 %v934, 1.442695
    %v1023 = vpow.pop %v1022
    %v1024 = vmul.f32 %v935, 1.442695
    %v1025 = vpow.pop %v1024
    %v1026 = vmul.f32 %v936, 1.442695
    %v1027 = vpow.pop %v1026
    %v1028 = vmul.f32 %v937, 1.442695
    %v1029 = vpow.pop %v1028
    %v1030 = vmul.f32 %v938, 1.442695
    %v1031 = vpow.pop %v1030
    %v1032 = vmul.f32 %v939, 1.442695
    %v1033 = vpow.pop %v1032
    %v1034 = vmul.f32 %v940, 1.442695
    %v1035 = vpow.pop %v1034
    %v1036 = vmul.f32 %v941, 1.442695
    %v1037 = vpow.pop %v1036
    %v1038 = vmul.f32 %v942, 1.442695
    %v1039 = vpow.pop %v1038
    %v1040 = vmul.f32 %v943, 1.442695
    %v1041 = vpow.pop %v1040
    %v1042 = vmul.f32 %v944, 1.442695
    %v1043 = vpow.pop %v1042
    %v1044 = vmul.f32 %v945, 1.442695
    %v1045 = vpow.pop %v1044
    %v1046 = vmul.f32 %v946, 1.442695
    %v1047 = vpow.pop %v1046
    %v1048 = vmul.f32 %v947, 1.442695
    %v1049 = vpow.pop %v1048
    %v1050 = vmul.f32 %v948, 1.442695
    %v1051 = vpow.pop %v1050
    %v1052 = vmul.f32 %v949, 1.442695
    %v1053 = vpow.pop %v1052
    %v1054 = vmul.f32 %v950, 1.442695
    %v1055 = vpow.pop %v1054
    %v1056 = vmul.f32 %v951, 1.442695
    %v1057 = vpow.pop %v1056
    %v1058 = vmul.f32 %v952, 1.442695
    %v1059 = vpow.pop %v1058
    %v1060 = vmul.f32 %v953, 1.442695
    %v1061 = vpow.pop %v1060
    %v1062 = vmul.f32 %v954, 1.442695
    %v1063 = vpow.pop %v1062
    %v1064 = vmul.f32 %v955, 1.442695
    %v1065 = vpow.pop %v1064
    %v1066 = vmul.f32 %v956, 1.442695
    %v1067 = vpow.pop %v1066
    %v1068 = vmul.f32 %v957, 1.442695
    %v1069 = vpow.pop %v1068
    %v1070 = vmul.f32 %v958, 1.442695
    %v1071 = vpow.pop %v1070
    %v1072 = vmul.f32 %v959, 1.442695
    %v1073 = vpow.pop %v1072
    %v1074 = vmul.f32 %v960, 1.442695
    %v1075 = vpow.pop %v1074
    %v1076 = vmul.f32 %v961, 1.442695
    %v1077 = vpow.pop %v1076
    %v1078 = vmul.f32 %v962, 1.442695
    %v1079 = vpow.pop %v1078
    %v1080 = vmul.f32 %v963, 1.442695
    %v1081 = vpow.pop %v1080
    %v1082 = vmul.f32 %v964, 1.442695
    %v1083 = vpow.pop %v1082
    %v1084 = vmul.f32 %v965, 1.442695
    %v1085 = vpow.pop %v1084
    %v1086 = vmul.f32 %v966, 1.442695
    %v1087 = vpow.pop %v1086
    %v1088 = vmul.f32 %v967, 1.442695
    %v1089 = vpow.pop %v1088
    %v1090 = vmul.f32 %v968, 1.442695
    %v1091 = vpow.pop %v1090
    %v1092 = vmul.f32 %v969, 1.442695
    %v1093 = vpow.pop %v1092
    %v1094 = vmul.f32 %v970, 1.442695
    %v1095 = vpow.pop %v1094
    %v1096 = vmul.f32 %v971, 1.442695
    %v1097 = vpow.pop %v1096
    %v1098 = vmul.f32 %v972, 1.442695
    %v1099 = vpow.pop %v1098
    %v1100 = vmul.f32 %v973, 1.442695
    %v1101 = vpow.pop %v1100
    %v1102 = vadd.f32 %v975, 1.0
    %v1103 = vadd.f32 %v977, 1.0
    %v1104 = vadd.f32 %v979, 1.0
    %v1105 = vadd.f32 %v981, 1.0
    %v1106 = vadd.f32 %v983, 1.0
    %v1107 = vadd.f32 %v985, 1.0
    %v1108 = vadd.f32 %v987, 1.0
    %v1109 = vadd.f32 %v989, 1.0
    %v1110 = vadd.f32 %v991, 1.0
    %v1111 = vadd.f32 %v993, 1.0
    %v1112 = vadd.f32 %v995, 1.0
    %v1113 = vadd.f32 %v997, 1.0
    %v1114 = vadd.f32 %v999, 1.0
    %v1115 = vadd.f32 %v1001, 1.0
    %v1116 = vadd.f32 %v1003, 1.0
    %v1117 = vadd.f32 %v1005, 1.0
    %v1118 = vadd.f32 %v1007, 1.0
    %v1119 = vadd.f32 %v1009, 1.0
    %v1120 = vadd.f32 %v1011, 1.0
    %v1121 = vadd.f32 %v1013, 1.0
    %v1122 = vadd.f32 %v1015, 1.0
    %v1123 = vadd.f32 %v1017, 1.0
    %v1124 = vadd.f32 %v1019, 1.0
    %v1125 = vadd.f32 %v1021, 1.0
    %v1126 = vadd.f32 %v1023, 1.0
    %v1127 = vadd.f32 %v1025, 1.0
    %v1128 = vadd.f32 %v1027, 1.0
    %v1129 = vadd.f32 %v1029, 1.0
    %v1130 = vadd.f32 %v1031, 1.0
    %v1131 = vadd.f32 %v1033, 1.0
    %v1132 = vadd.f32 %v1035, 1.0
    %v1133 = vadd.f32 %v1037, 1.0
    %v1134 = vadd.f32 %v1039, 1.0
    %v1135 = vadd.f32 %v1041, 1.0
    %v1136 = vadd.f32 %v1043, 1.0
    %v1137 = vadd.f32 %v1045, 1.0
    %v1138 = vadd.f32 %v1047, 1.0
    %v1139 = vadd.f32 %v1049, 1.0
    %v1140 = vadd.f32 %v1051, 1.0
    %v1141 = vadd.f32 %v1053, 1.0
    %v1142 = vadd.f32 %v1055, 1.0
    %v1143 = vadd.f32 %v1057, 1.0
    %v1144 = vadd.f32 %v1059, 1.0
    %v1145 = vadd.f32 %v1061, 1.0
    %v1146 = vadd.f32 %v1063, 1.0
    %v1147 = vadd.f32 %v1065, 1.0
    %v1148 = vadd.f32 %v1067, 1.0
    %v1149 = vadd.f32 %v1069, 1.0
    %v1150 = vadd.f32 %v1071, 1.0
    %v1151 = vadd.f32 %v1073, 1.0
    %v1152 = vadd.f32 %v1075, 1.0
    %v1153 = vadd.f32 %v1077, 1.0
    %v1154 = vadd.f32 %v1079, 1.0
    %v1155 = vadd.f32 %v1081, 1.0
    %v1156 = vadd.f32 %v1083, 1.0
    %v1157 = vadd.f32 %v1085, 1.0
    %v1158 = vadd.f32 %v1087, 1.0
    %v1159 = vadd.f32 %v1089, 1.0
    %v1160 = vadd.f32 %v1091, 1.0
    %v1161 = vadd.f32 %v1093, 1.0
    %v1162 = vadd.f32 %v1095, 1.0
    %v1163 = vadd.f32 %v1097, 1.0
    %v1164 = vadd.f32 %v1099, 1.0
    %v1165 = vadd.f32 %v1101, 1.0
    %v1166 = vrcp.pop %v1102
    %v1167 = vmul.f32 1.0, %v1166
    %v1168 = vrcp.pop %v1103
    %v1169 = vmul.f32 1.0, %v1168
    %v1170 = vrcp.pop %v1104
    %v1171 = vmul.f32 1.0, %v1170
    %v1172 = vrcp.pop %v1105
    %v1173 = vmul.f32 1.0, %v1172
    %v1174 = vrcp.pop %v1106
    %v1175 = vmul.f32 1.0, %v1174
    %v1176 = vrcp.pop %v1107
    %v1177 = vmul.f32 1.0, %v1176
    %v1178 = vrcp.pop %v1108
    %v1179 = vmul.f32 1.0, %v1178
    %v1180 = vrcp.pop %v1109
    %v1181 = vmul.f32 1.0, %v1180
    %v1182 = vrcp.pop %v1110
    %v1183 = vmul.f32 1.0, %v1182
    %v1184 = vrcp.pop %v1111
    %v1185 = vmul.f32 1.0, %v1184
    %v1186 = vrcp.pop %v1112
    %v1187 = vmul.f32 1.0, %v1186
    %v1188 = vrcp.pop %v1113
    %v1189 = vmul.f32 1.0, %v1188
    %v1190 = vrcp.pop %v1114
    %v1191 = vmul.f32 1.0, %v1190
    %v1192 = vrcp.pop %v1115
    %v1193 = vmul.f32 1.0, %v1192
    %v1194 = vrcp.pop %v1116
    %v1195 = vmul.f32 1.0, %v1194
    %v1196 = vrcp.pop %v1117
    %v1197 = vmul.f32 1.0, %v1196
    %v1198 = vrcp.pop %v1118
    %v1199 = vmul.f32 1.0, %v1198
    %v1200 = vrcp.pop %v1119
    %v1201 = vmul.f32 1.0, %v1200
    %v1202 = vrcp.pop %v1120
    %v1203 = vmul.f32 1.0, %v1202
    %v1204 = vrcp.pop %v1121
    %v1205 = vmul.f32 1.0, %v1204
    %v1206 = vrcp.pop %v1122
    %v1207 = vmul.f32 1.0, %v1206
    %v1208 = vrcp.pop %v1123
    %v1209 = vmul.f32 1.0, %v1208
    %v1210 = vrcp.pop %v1124
    %v1211 = vmul.f32 1.0, %v1210
    %v1212 = vrcp.pop %v1125
    %v1213 = vmul.f32 1.0, %v1212
    %v1214 = vrcp.pop %v1126
    %v1215 = vmul.f32 1.0, %v1214
    %v1216 = vrcp.pop %v1127
    %v1217 = vmul.f32 1.0, %v1216
    %v1218 = vrcp.pop %v1128
    %v1219 = vmul.f32 1.0, %v1218
    %v1220 = vrcp.pop %v1129
    %v1221 = vmul.f32 1.0, %v1220
    %v1222 = vrcp.pop %v1130
    %v1223 = vmul.f32 1.0, %v1222
    %v1224 = vrcp.pop %v1131
    %v1225 = vmul.f32 1.0, %v1224
    %v1226 = vrcp.pop %v1132
    %v1227 = vmul.f32 1.0, %v1226
    %v1228 = vrcp.pop %v1133
    %v1229 = vmul.f32 1.0, %v1228
    %v1230 = vrcp.pop %v1134
    %v1231 = vmul.f32 1.0, %v1230
    %v1232 = vrcp.pop %v1135
    %v1233 = vmul.f32 1.0, %v1232
    %v1234 = vrcp.pop %v1136
    %v1235 = vmul.f32 1.0, %v1234
    %v1236 = vrcp.pop %v1137
    %v1237 = vmul.f32 1.0, %v1236
    %v1238 = vrcp.pop %v1138
    %v1239 = vmul.f32 1.0, %v1238
    %v1240 = vrcp.pop %v1139
    %v1241 = vmul.f32 1.0, %v1240
    %v1242 = vrcp.pop %v1140
    %v1243 = vmul.f32 1.0, %v1242
    %v1244 = vrcp.pop %v1141
    %v1245 = vmul.f32 1.0, %v1244
    %v1246 = vrcp.pop %v1142
    %v1247 = vmul.f32 1.0, %v1246
    %v1248 = vrcp.pop %v1143
    %v1249 = vmul.f32 1.0, %v1248
    %v1250 = vrcp.pop %v1144
    %v1251 = vmul.f32 1.0, %v1250
    %v1252 = vrcp.pop %v1145
    %v1253 = vmul.f32 1.0, %v1252
    %v1254 = vrcp.pop %v1146
    %v1255 = vmul.f32 1.0, %v1254
    %v1256 = vrcp.pop %v1147
    %v1257 = vmul.f32 1.0, %v1256
    %v1258 = vrcp.pop %v1148
    %v1259 = vmul.f32 1.0, %v1258
    %v1260 = vrcp.pop %v1149
    %v1261 = vmul.f32 1.0, %v1260
    %v1262 = vrcp.pop %v1150
    %v1263 = vmul.f32 1.0, %v1262
    %v1264 = vrcp.pop %v1151
    %v1265 = vmul.f32 1.0, %v1264
    %v1266 = vrcp.pop %v1152
    %v1267 = vmul.f32 1.0, %v1266
    %v1268 = vrcp.pop %v1153
    %v1269 = vmul.f32 1.0, %v1268
    %v1270 = vrcp.pop %v1154
    %v1271 = vmul.f32 1.0, %v1270
    %v1272 = vrcp.pop %v1155
    %v1273 = vmul.f32 1.0, %v1272
    %v1274 = vrcp.pop %v1156
    %v1275 = vmul.f32 1.0, %v1274
    %v1276 = vrcp.pop %v1157
    %v1277 = vmul.f32 1.0, %v1276
    %v1278 = vrcp.pop %v1158
    %v1279 = vmul.f32 1.0, %v1278
    %v1280 = vrcp.pop %v1159
    %v1281 = vmul.f32 1.0, %v1280
    %v1282 = vrcp.pop %v1160
    %v1283 = vmul.f32 1.0, %v1282
    %v1284 = vrcp.pop %v1161
    %v1285 = vmul.f32 1.0, %v1284
    %v1286 = vrcp.pop %v1162
    %v1287 = vmul.f32 1.0, %v1286
    %v1288 = vrcp.pop %v1163
    %v1289 = vmul.f32 1.0, %v1288
    %v1290 = vrcp.pop %v1164
    %v1291 = vmul.f32 1.0, %v1290
    %v1292 = vrcp.pop %v1165
    %v1293 = vmul.f32 1.0, %v1292
    %v1294 = vmul.f32 %v846, %v1167
    %v1295 = vmul.f32 %v847, %v1169
    %v1296 = vmul.f32 %v848, %v1171
    %v1297 = vmul.f32 %v849, %v1173
    %v1298 = vmul.f32 %v850, %v1175
    %v1299 = vmul.f32 %v851, %v1177
    %v1300 = vmul.f32 %v852, %v1179
    %v1301 = vmul.f32 %v853, %v1181
    %v1302 = vmul.f32 %v854, %v1183
    %v1303 = vmul.f32 %v855, %v1185
    %v1304 = vmul.f32 %v856, %v1187
    %v1305 = vmul.f32 %v857, %v1189
    %v1306 = vmul.f32 %v858, %v1191
    %v1307 = vmul.f32 %v859, %v1193
    %v1308 = vmul.f32 %v860, %v1195
    %v1309 = vmul.f32 %v861, %v1197
    %v1310 = vmul.f32 %v862, %v1199
    %v1311 = vmul.f32 %v863, %v1201
    %v1312 = vmul.f32 %v864, %v1203
    %v1313 = vmul.f32 %v865, %v1205
    %v1314 = vmul.f32 %v866, %v1207
    %v1315 = vmul.f32 %v867, %v1209
    %v1316 = vmul.f32 %v868, %v1211
    %v1317 = vmul.f32 %v869, %v1213
    %v1318 = vmul.f32 %v870, %v1215
    %v1319 = vmul.f32 %v871, %v1217
    %v1320 = vmul.f32 %v872, %v1219
    %v1321 = vmul.f32 %v873, %v1221
    %v1322 = vmul.f32 %v874, %v1223
    %v1323 = vmul.f32 %v875, %v1225
    %v1324 = vmul.f32 %v876, %v1227
    %v1325 = vmul.f32 %v877, %v1229
    %v1326 = vmul.f32 %v878, %v1231
    %v1327 = vmul.f32 %v879, %v1233
    %v1328 = vmul.f32 %v880, %v1235
    %v1329 = vmul.f32 %v881, %v1237
    %v1330 = vmul.f32 %v882, %v1239
    %v1331 = vmul.f32 %v883, %v1241
    %v1332 = vmul.f32 %v884, %v1243
    %v1333 = vmul.f32 %v885, %v1245
    %v1334 = vmul.f32 %v886, %v1247
    %v1335 = vmul.f32 %v887, %v1249
    %v1336 = vmul.f32 %v888, %v1251
    %v1337 = vmul.f32 %v889, %v1253
    %v1338 = vmul.f32 %v890, %v1255
    %v1339 = vmul.f32 %v891, %v1257
    %v1340 = vmul.f32 %v892, %v1259
    %v1341 = vmul.f32 %v893, %v1261
    %v1342 = vmul.f32 %v894, %v1263
    %v1343 = vmul.f32 %v895, %v1265
    %v1344 = vmul.f32 %v896, %v1267
    %v1345 = vmul.f32 %v897, %v1269
    %v1346 = vmul.f32 %v898, %v1271
    %v1347 = vmul.f32 %v899, %v1273
    %v1348 = vmul.f32 %v900, %v1275
    %v1349 = vmul.f32 %v901, %v1277
    %v1350 = vmul.f32 %v902, %v1279
    %v1351 = vmul.f32 %v903, %v1281
    %v1352 = vmul.f32 %v904, %v1283
    %v1353 = vmul.f32 %v905, %v1285
    %v1354 = vmul.f32 %v906, %v1287
    %v1355 = vmul.f32 %v907, %v1289
    %v1356 = vmul.f32 %v908, %v1291
    %v1357 = vmul.f32 %v909, %v1293
    %1358 = vst [vmem:[%s4] sm:$0xff] %v1294
    %1359 = vst [vmem:[%s4 + $0x8] sm:$0xff] %v1295
    %1360 = vst [vmem:[%s4 + $0x10] sm:$0xff] %v1296
    %1361 = vst [vmem:[%s4 + $0x18] sm:$0xff] %v1297
    %1362 = vst [vmem:[%s4 + $0x20] sm:$0xff] %v1298
    %1363 = vst [vmem:[%s4 + $0x28] sm:$0xff] %v1299
    %1364 = vst [vmem:[%s4 + $0x30] sm:$0xff] %v1300
    %1365 = vst [vmem:[%s4 + $0x38] sm:$0xff] %v1301
    %1366 = vst [vmem:[%s4 + $0x40] sm:$0xff] %v1302
    %1367 = vst [vmem:[%s4 + $0x48] sm:$0xff] %v1303
    %1368 = vst [vmem:[%s4 + $0x50] sm:$0xff] %v1304
    %1369 = vst [vmem:[%s4 + $0x58] sm:$0xff] %v1305
    %1370 = vst [vmem:[%s4 + $0x60] sm:$0xff] %v1306
    %1371 = vst [vmem:[%s4 + $0x68] sm:$0xff] %v1307
    %1372 = vst [vmem:[%s4 + $0x70] sm:$0xff] %v1308
    %1373 = vst [vmem:[%s4 + $0x78] sm:$0xff] %v1309
    %1374 = vst [vmem:[%s4 + $0x80] sm:$0xff] %v1310
    %1375 = vst [vmem:[%s4 + $0x88] sm:$0xff] %v1311
    %1376 = vst [vmem:[%s4 + $0x90] sm:$0xff] %v1312
    %1377 = vst [vmem:[%s4 + $0x98] sm:$0xff] %v1313
    %1378 = vst [vmem:[%s4 + $0xa0] sm:$0xff] %v1314
    %1379 = vst [vmem:[%s4 + $0xa8] sm:$0xff] %v1315
    %1380 = vst [vmem:[%s4 + $0xb0] sm:$0xff] %v1316
    %1381 = vst [vmem:[%s4 + $0xb8] sm:$0xff] %v1317
    %1382 = vst [vmem:[%s4 + $0xc0] sm:$0xff] %v1318
    %1383 = vst [vmem:[%s4 + $0xc8] sm:$0xff] %v1319
    %1384 = vst [vmem:[%s4 + $0xd0] sm:$0xff] %v1320
    %1385 = vst [vmem:[%s4 + $0xd8] sm:$0xff] %v1321
    %1386 = vst [vmem:[%s4 + $0xe0] sm:$0xff] %v1322
    %1387 = vst [vmem:[%s4 + $0xe8] sm:$0xff] %v1323
    %1388 = vst [vmem:[%s4 + $0xf0] sm:$0xff] %v1324
    %1389 = vst [vmem:[%s4 + $0xf8] sm:$0xff] %v1325
    %1390 = vst [vmem:[%s4 + $0x100] sm:$0xff] %v1326
    %1391 = vst [vmem:[%s4 + $0x108] sm:$0xff] %v1327
    %1392 = vst [vmem:[%s4 + $0x110] sm:$0xff] %v1328
    %1393 = vst [vmem:[%s4 + $0x118] sm:$0xff] %v1329
    %1394 = vst [vmem:[%s4 + $0x120] sm:$0xff] %v1330
    %1395 = vst [vmem:[%s4 + $0x128] sm:$0xff] %v1331
    %1396 = vst [vmem:[%s4 + $0x130] sm:$0xff] %v1332
    %1397 = vst [vmem:[%s4 + $0x138] sm:$0xff] %v1333
    %1398 = vst [vmem:[%s4 + $0x140] sm:$0xff] %v1334
    %1399 = vst [vmem:[%s4 + $0x148] sm:$0xff] %v1335
    %1400 = vst [vmem:[%s4 + $0x150] sm:$0xff] %v1336
    %1401 = vst [vmem:[%s4 + $0x158] sm:$0xff] %v1337
    %1402 = vst [vmem:[%s4 + $0x160] sm:$0xff] %v1338
    %1403 = vst [vmem:[%s4 + $0x168] sm:$0xff] %v1339
    %1404 = vst [vmem:[%s4 + $0x170] sm:$0xff] %v1340
    %1405 = vst [vmem:[%s4 + $0x178] sm:$0xff] %v1341
    %1406 = vst [vmem:[%s4 + $0x180] sm:$0xff] %v1342
    %1407 = vst [vmem:[%s4 + $0x188] sm:$0xff] %v1343
    %1408 = vst [vmem:[%s4 + $0x190] sm:$0xff] %v1344
    %1409 = vst [vmem:[%s4 + $0x198] sm:$0xff] %v1345
    %1410 = vst [vmem:[%s4 + $0x1a0] sm:$0xff] %v1346
    %1411 = vst [vmem:[%s4 + $0x1a8] sm:$0xff] %v1347
    %1412 = vst [vmem:[%s4 + $0x1b0] sm:$0xff] %v1348
    %1413 = vst [vmem:[%s4 + $0x1b8] sm:$0xff] %v1349
    %1414 = vst [vmem:[%s4 + $0x1c0] sm:$0xff] %v1350
    %1415 = vst [vmem:[%s4 + $0x1c8] sm:$0xff] %v1351
    %1416 = vst [vmem:[%s4 + $0x1d0] sm:$0xff] %v1352
    %1417 = vst [vmem:[%s4 + $0x1d8] sm:$0xff] %v1353
    %1418 = vst [vmem:[%s4 + $0x1e0] sm:$0xff] %v1354
    %1419 = vst [vmem:[%s4 + $0x1e8] sm:$0xff] %v1355
    %1420 = vst [vmem:[%s4 + $0x1f0] sm:$0xff] %v1356
    %1421 = vst [vmem:[%s4 + $0x1f8] sm:$0xff] %v1357
    // Predicated region
    $region56: #{csp_layer_forward.5} parent=1 // pred_check
      _
    $region57: #{csp_layer_forward.5} parent=1 // pred_check_branch
      %1423 = sbr.rel (0) target = $region59
    $region58: #{csp_layer_forward.5} parent=1 // pred_region
      _
    $region59: #{csp_layer_forward.5} parent=1 // pred_fallthru
      _
    // Predicated region
    $region60: #{csp_layer_forward.5} parent=1 // pred_check
      _
    $region61: #{csp_layer_forward.5} parent=1 // pred_check_branch
      %1425 = sbr.rel (0) target = $region63
    $region62: #{csp_layer_forward.5} parent=1 // pred_region
      _
    $region63: #{csp_layer_forward.5} parent=1 // pred_fallthru
      _

// kernel: csp_layer_forward.4
$region0: #{csp_layer_forward.4}
  #allocation0 [shape = 'u32[]', space=smem, size = 0x4, offset = 0x4, fixed_abs, tag = 'smem constant byte address 0x4 - core index']
  #allocation1 [shape = 'u32[144,128]{1,0:T(1,128)}', space=vmem, size = 0x12000, scoped, tag = 'internal scratch']
  %s0 = inlined_call_operand.vmem [shape: f32[512,128], index: 0, kind: input, shape index: {}]
  %s1 = inlined_call_operand.vmem [shape: f32[128,256], index: 1, kind: input, shape index: {}]
  %s2 = inlined_call_operand.vmem [shape: f32[1,256], index: 2, kind: input, shape index: {}]
  %s3 = inlined_call_operand.vmem [shape: f32[1,256], index: 3, kind: input, shape index: {}]
  %s4 = inlined_call_operand.vmem [shape: f32[512,256], index: 4, kind: output, shape index: {}]
  %s5 = sld [smem:[#allocation0]]
  $region26: #{csp_layer_forward.4} parent=0
    _
  %s7 = ssub.s32 1, %s5
  %s8 = scalar_select 0, %s7, %s5
  // Predicated region
  $region2: #{csp_layer_forward.4} parent=0 // pred_check
    _
  $region3: #{csp_layer_forward.4} parent=0 // pred_check_branch
    %10 = sbr.rel (0) target = $region5
  $region4: #{csp_layer_forward.4} parent=0 // pred_region
    _
  $region5: #{csp_layer_forward.4} parent=0 // pred_fallthru
    _
  // Predicated region
  $region6: #{csp_layer_forward.4} parent=0 // pred_check
    _
  $region7: #{csp_layer_forward.4} parent=0 // pred_check_branch
    %12 = sbr.rel (0) target = $region9
  $region8: #{csp_layer_forward.4} parent=0 // pred_region
    _
  $region9: #{csp_layer_forward.4} parent=0 // pred_fallthru
    _
  // Predicated region
  $region10: #{csp_layer_forward.4} parent=0 // pred_check
    _
  $region11: #{csp_layer_forward.4} parent=0 // pred_check_branch
    %14 = sbr.rel (0) target = $region13
  $region12: #{csp_layer_forward.4} parent=0 // pred_region
    _
  $region13: #{csp_layer_forward.4} parent=0 // pred_fallthru
    _
  // Predicated region
  $region14: #{csp_layer_forward.4} parent=0 // pred_check
    _
  $region15: #{csp_layer_forward.4} parent=0 // pred_check_branch
    %16 = sbr.rel (0) target = $region17
  $region16: #{csp_layer_forward.4} parent=0 // pred_region
    _
  $region17: #{csp_layer_forward.4} parent=0 // pred_fallthru
    _
  %v17 = vld [vmem:[%s0] sm:$0xff]
  %v18 = vld [vmem:[%s0 + $0x8] sm:$0xff]
  %v19 = vld [vmem:[%s0 + $0x10] sm:$0xff]
  %v20 = vld [vmem:[%s0 + $0x18] sm:$0xff]
  %v21 = vld [vmem:[%s0 + $0x20] sm:$0xff]
  %v22 = vld [vmem:[%s0 + $0x28] sm:$0xff]
  %v23 = vld [vmem:[%s0 + $0x30] sm:$0xff]
  %v24 = vld [vmem:[%s0 + $0x38] sm:$0xff]
  %v25 = vld [vmem:[%s0 + $0x40] sm:$0xff]
  %v26 = vld [vmem:[%s0 + $0x48] sm:$0xff]
  %v27 = vld [vmem:[%s0 + $0x50] sm:$0xff]
  %v28 = vld [vmem:[%s0 + $0x58] sm:$0xff]
  %v29 = vld [vmem:[%s0 + $0x60] sm:$0xff]
  %v30 = vld [vmem:[%s0 + $0x68] sm:$0xff]
  %v31 = vld [vmem:[%s0 + $0x70] sm:$0xff]
  %v32 = vld [vmem:[%s0 + $0x78] sm:$0xff]
  %v33 = vld [vmem:[%s0 + $0x80] sm:$0xff]
  %v34 = vld [vmem:[%s0 + $0x88] sm:$0xff]
  %v35 = vld [vmem:[%s0 + $0x90] sm:$0xff]
  %v36 = vld [vmem:[%s0 + $0x98] sm:$0xff]
  %v37 = vld [vmem:[%s0 + $0xa0] sm:$0xff]
  %v38 = vld [vmem:[%s0 + $0xa8] sm:$0xff]
  %v39 = vld [vmem:[%s0 + $0xb0] sm:$0xff]
  %v40 = vld [vmem:[%s0 + $0xb8] sm:$0xff]
  %v41 = vld [vmem:[%s0 + $0xc0] sm:$0xff]
  %v42 = vld [vmem:[%s0 + $0xc8] sm:$0xff]
  %v43 = vld [vmem:[%s0 + $0xd0] sm:$0xff]
  %v44 = vld [vmem:[%s0 + $0xd8] sm:$0xff]
  %v45 = vld [vmem:[%s0 + $0xe0] sm:$0xff]
  %v46 = vld [vmem:[%s0 + $0xe8] sm:$0xff]
  %v47 = vld [vmem:[%s0 + $0xf0] sm:$0xff]
  %v48 = vld [vmem:[%s0 + $0xf8] sm:$0xff]
  %v49 = vld [vmem:[%s0 + $0x100] sm:$0xff]
  %v50 = vld [vmem:[%s0 + $0x108] sm:$0xff]
  %v51 = vld [vmem:[%s0 + $0x110] sm:$0xff]
  %v52 = vld [vmem:[%s0 + $0x118] sm:$0xff]
  %v53 = vld [vmem:[%s0 + $0x120] sm:$0xff]
  %v54 = vld [vmem:[%s0 + $0x128] sm:$0xff]
  %v55 = vld [vmem:[%s0 + $0x130] sm:$0xff]
  %v56 = vld [vmem:[%s0 + $0x138] sm:$0xff]
  %v57 = vld [vmem:[%s0 + $0x140] sm:$0xff]
  %v58 = vld [vmem:[%s0 + $0x148] sm:$0xff]
  %v59 = vld [vmem:[%s0 + $0x150] sm:$0xff]
  %v60 = vld [vmem:[%s0 + $0x158] sm:$0xff]
  %v61 = vld [vmem:[%s0 + $0x160] sm:$0xff]
  %v62 = vld [vmem:[%s0 + $0x168] sm:$0xff]
  %v63 = vld [vmem:[%s0 + $0x170] sm:$0xff]
  %v64 = vld [vmem:[%s0 + $0x178] sm:$0xff]
  %v65 = vld [vmem:[%s0 + $0x180] sm:$0xff]
  %v66 = vld [vmem:[%s0 + $0x188] sm:$0xff]
  %v67 = vld [vmem:[%s0 + $0x190] sm:$0xff]
  %v68 = vld [vmem:[%s0 + $0x198] sm:$0xff]
  %v69 = vld [vmem:[%s0 + $0x1a0] sm:$0xff]
  %v70 = vld [vmem:[%s0 + $0x1a8] sm:$0xff]
  %v71 = vld [vmem:[%s0 + $0x1b0] sm:$0xff]
  %v72 = vld [vmem:[%s0 + $0x1b8] sm:$0xff]
  %v73 = vld [vmem:[%s0 + $0x1c0] sm:$0xff]
  %v74 = vld [vmem:[%s0 + $0x1c8] sm:$0xff]
  %v75 = vld [vmem:[%s0 + $0x1d0] sm:$0xff]
  %v76 = vld [vmem:[%s0 + $0x1d8] sm:$0xff]
  %v77 = vld [vmem:[%s0 + $0x1e0] sm:$0xff]
  %v78 = vld [vmem:[%s0 + $0x1e8] sm:$0xff]
  %v79 = vld [vmem:[%s0 + $0x1f0] sm:$0xff]
  %v80 = vld [vmem:[%s0 + $0x1f8] sm:$0xff]
  %v81 = vld [vmem:[%s1] sm:$0xff]
  %v82 = vld [vmem:[%s1 + $0x8] sm:$0xff]
  %v83 = vld [vmem:[%s1 + $0x10] sm:$0xff]
  %v84 = vld [vmem:[%s1 + $0x18] sm:$0xff]
  %v85 = vld [vmem:[%s1 + $0x20] sm:$0xff]
  %v86 = vld [vmem:[%s1 + $0x28] sm:$0xff]
  %v87 = vld [vmem:[%s1 + $0x30] sm:$0xff]
  %v88 = vld [vmem:[%s1 + $0x38] sm:$0xff]
  %v89 = vld [vmem:[%s1 + $0x40] sm:$0xff]
  %v90 = vld [vmem:[%s1 + $0x48] sm:$0xff]
  %v91 = vld [vmem:[%s1 + $0x50] sm:$0xff]
  %v92 = vld [vmem:[%s1 + $0x58] sm:$0xff]
  %v93 = vld [vmem:[%s1 + $0x60] sm:$0xff]
  %v94 = vld [vmem:[%s1 + $0x68] sm:$0xff]
  %v95 = vld [vmem:[%s1 + $0x70] sm:$0xff]
  %v96 = vld [vmem:[%s1 + $0x78] sm:$0xff]
  %v97 = vld [vmem:[%s1 + $0x80] sm:$0xff]
  %v98 = vld [vmem:[%s1 + $0x88] sm:$0xff]
  %v99 = vld [vmem:[%s1 + $0x90] sm:$0xff]
  %v100 = vld [vmem:[%s1 + $0x98] sm:$0xff]
  %v101 = vld [vmem:[%s1 + $0xa0] sm:$0xff]
  %v102 = vld [vmem:[%s1 + $0xa8] sm:$0xff]
  %v103 = vld [vmem:[%s1 + $0xb0] sm:$0xff]
  %v104 = vld [vmem:[%s1 + $0xb8] sm:$0xff]
  %v105 = vld [vmem:[%s1 + $0xc0] sm:$0xff]
  %v106 = vld [vmem:[%s1 + $0xc8] sm:$0xff]
  %v107 = vld [vmem:[%s1 + $0xd0] sm:$0xff]
  %v108 = vld [vmem:[%s1 + $0xd8] sm:$0xff]
  %v109 = vld [vmem:[%s1 + $0xe0] sm:$0xff]
  %v110 = vld [vmem:[%s1 + $0xe8] sm:$0xff]
  %v111 = vld [vmem:[%s1 + $0xf0] sm:$0xff]
  %v112 = vld [vmem:[%s1 + $0xf8] sm:$0xff]
  %113 = vmatprep.subr.mxu0 %v82
  %114 = vmatpush1.msra.mxu0 %v81
  %115 = vmatprep.subr.mxu0 %v84
  %116 = vmatpush1.msra.mxu0 %v83
  %117 = vmatprep.subr.mxu0 %v86
  %118 = vmatpush1.msra.mxu0 %v85
  %119 = vmatprep.subr.mxu0 %v88
  %120 = vmatpush1.msra.mxu0 %v87
  %121 = vmatprep.subr.mxu0 %v90
  %122 = vmatpush1.msra.mxu0 %v89
  %123 = vmatprep.subr.mxu0 %v92
  %124 = vmatpush1.msra.mxu0 %v91
  %125 = vmatprep.subr.mxu0 %v94
  %126 = vmatpush1.msra.mxu0 %v93
  %127 = vmatprep.subr.mxu0 %v96
  %128 = vmatpush1.msra.mxu0 %v95
  %129 = vmatprep.subr.mxu0 %v98
  %130 = vmatpush1.msra.mxu0 %v97
  %131 = vmatprep.subr.mxu0 %v100
  %132 = vmatpush1.msra.mxu0 %v99
  %133 = vmatprep.subr.mxu0 %v102
  %134 = vmatpush1.msra.mxu0 %v101
  %135 = vmatprep.subr.mxu0 %v104
  %136 = vmatpush1.msra.mxu0 %v103
  %137 = vmatprep.subr.mxu0 %v106
  %138 = vmatpush1.msra.mxu0 %v105
  %139 = vmatprep.subr.mxu0 %v108
  %140 = vmatpush1.msra.mxu0 %v107
  %141 = vmatprep.subr.mxu0 %v110
  %142 = vmatpush1.msra.mxu0 %v109
  %143 = vmatprep.subr.mxu0 %v112
  %144 = vmatpush1.msra.mxu0 %v111
  %145 = vmatprep.subr.mxu0 0.0
  %146 = vmatpush1.msra.mxu0 0.0
  %147 = vmatprep.subr.mxu0 0.0
  %148 = vmatpush1.msra.mxu0 0.0
  %149 = vmatprep.subr.mxu0 0.0
  %150 = vmatpush1.msra.mxu0 0.0
  %151 = vmatprep.subr.mxu0 0.0
  %152 = vmatpush1.msra.mxu0 0.0
  %153 = vmatprep.subr.mxu0 0.0
  %154 = vmatpush1.msra.mxu0 0.0
  %155 = vmatprep.subr.mxu0 0.0
  %156 = vmatpush1.msra.mxu0 0.0
  %157 = vmatprep.subr.mxu0 0.0
  %158 = vmatpush1.msra.mxu0 0.0
  %159 = vmatprep.subr.mxu0 0.0
  %160 = vmatpush1.msra.mxu0 0.0
  %161 = vmatprep.subr.mxu0 0.0
  %162 = vmatpush1.msra.mxu0 0.0
  %163 = vmatprep.subr.mxu0 0.0
  %164 = vmatpush1.msra.mxu0 0.0
  %165 = vmatprep.subr.mxu0 0.0
  %166 = vmatpush1.msra.mxu0 0.0
  %167 = vmatprep.subr.mxu0 0.0
  %168 = vmatpush1.msra.mxu0 0.0
  %169 = vmatprep.subr.mxu0 0.0
  %170 = vmatpush1.msra.mxu0 0.0
  %171 = vmatprep.subr.mxu0 0.0
  %172 = vmatpush1.msra.mxu0 0.0
  %173 = vmatprep.subr.mxu0 0.0
  %174 = vmatpush1.msra.mxu0 0.0
  %175 = vmatprep.subr.mxu0 0.0
  %176 = vmatpush1.msra.mxu0 0.0
  %177 = vmatprep.mubr.f32.mxu0 0.0
  %178 = vmatmul.mubr.f32.gmra.mrb[0].mxu0 %v17
  %v179 = vpop.f32.mrb[0].mxu0
  %v180 = vadd.f32 0.0, %v179
  %v181 = vpop.f32.mrb[0].mxu0
  %v182 = vadd.f32 0.0, %v181
  %183 = vmatprep.mubr.f32.mxu0 0.0
  %184 = vmatmul.mubr.f32.gmra.mrb[0].mxu0 %v18
  %v185 = vpop.f32.mrb[0].mxu0
  %v186 = vadd.f32 0.0, %v185
  %v187 = vpop.f32.mrb[0].mxu0
  %v188 = vadd.f32 0.0, %v187
  %189 = vmatprep.mubr.f32.mxu0 0.0
  %190 = vmatmul.mubr.f32.gmra.mrb[0].mxu0 %v19
  %v191 = vpop.f32.mrb[0].mxu0
  %v192 = vadd.f32 0.0, %v191
  %v193 = vpop.f32.mrb[0].mxu0
  %v194 = vadd.f32 0.0, %v193
  %195 = vmatprep.mubr.f32.mxu0 0.0
  %196 = vmatmul.mubr.f32.gmra.mrb[0].mxu0 %v20
  %v197 = vpop.f32.mrb[0].mxu0
  %v198 = vadd.f32 0.0, %v197
  %v199 = vpop.f32.mrb[0].mxu0
  %v200 = vadd.f32 0.0, %v199
  %201 = vmatprep.mubr.f32.mxu0 0.0
  %202 = vmatmul.mubr.f32.gmra.mrb[0].mxu0 %v21
  %v203 = vpop.f32.mrb[0].mxu0
  %v204 = vadd.f32 0.0, %v203
  %v205 = vpop.f32.mrb[0].mxu0
  %v206 = vadd.f32 0.0, %v205
  %207 = vmatprep.mubr.f32.mxu0 0.0
  %208 = vmatmul.mubr.f32.gmra.mrb[0].mxu0 %v22
  %v209 = vpop.f32.mrb[0].mxu0
  %v210 = vadd.f32 0.0, %v209
  %v211 = vpop.f32.mrb[0].mxu0
  %v212 = vadd.f32 0.0, %v211
  %213 = vmatprep.mubr.f32.mxu0 0.0
  %214 = vmatmul.mubr.f32.gmra.mrb[0].mxu0 %v23
  %v215 = vpop.f32.mrb[0].mxu0
  %v216 = vadd.f32 0.0, %v215
  %v217 = vpop.f32.mrb[0].mxu0
  %v218 = vadd.f32 0.0, %v217
  %219 = vmatprep.mubr.f32.mxu0 0.0
  %220 = vmatmul.mubr.f32.gmra.mrb[0].mxu0 %v24
  %v221 = vpop.f32.mrb[0].mxu0
  %v222 = vadd.f32 0.0, %v221
  %v223 = vpop.f32.mrb[0].mxu0
  %v224 = vadd.f32 0.0, %v223
  %225 = vmatprep.mubr.f32.mxu0 0.0
  %226 = vmatmul.mubr.f32.gmra.mrb[0].mxu0 %v25
  %v227 = vpop.f32.mrb[0].mxu0
  %v228 = vadd.f32 0.0, %v227
  %v229 = vpop.f32.mrb[0].mxu0
  %v230 = vadd.f32 0.0, %v229
  %231 = vmatprep.mubr.f32.mxu0 0.0
  %232 = vmatmul.mubr.f32.gmra.mrb[0].mxu0 %v26
  %v233 = vpop.f32.mrb[0].mxu0
  %v234 = vadd.f32 0.0, %v233
  %v235 = vpop.f32.mrb[0].mxu0
  %v236 = vadd.f32 0.0, %v235
  %237 = vmatprep.mubr.f32.mxu0 0.0
  %238 = vmatmul.mubr.f32.gmra.mrb[0].mxu0 %v27
  %v239 = vpop.f32.mrb[0].mxu0
  %v240 = vadd.f32 0.0, %v239
  %v241 = vpop.f32.mrb[0].mxu0
  %v242 = vadd.f32 0.0, %v241
  %243 = vmatprep.mubr.f32.mxu0 0.0
  %244 = vmatmul.mubr.f32.gmra.mrb[0].mxu0 %v28
  %v245 = vpop.f32.mrb[0].mxu0
  %v246 = vadd.f32 0.0, %v245
  %v247 = vpop.f32.mrb[0].mxu0
  %v248 = vadd.f32 0.0, %v247
  %249 = vmatprep.mubr.f32.mxu0 0.0
  %250 = vmatmul.mubr.f32.gmra.mrb[0].mxu0 %v29
  %v251 = vpop.f32.mrb[0].mxu0
  %v252 = vadd.f32 0.0, %v251
  %v253 = vpop.f32.mrb[0].mxu0
  %v254 = vadd.f32 0.0, %v253
  %255 = vmatprep.mubr.f32.mxu0 0.0
  %256 = vmatmul.mubr.f32.gmra.mrb[0].mxu0 %v30
  %v257 = vpop.f32.mrb[0].mxu0
  %v258 = vadd.f32 0.0, %v257
  %v259 = vpop.f32.mrb[0].mxu0
  %v260 = vadd.f32 0.0, %v259
  %261 = vmatprep.mubr.f32.mxu0 0.0
  %262 = vmatmul.mubr.f32.gmra.mrb[0].mxu0 %v31
  %v263 = vpop.f32.mrb[0].mxu0
  %v264 = vadd.f32 0.0, %v263
  %v265 = vpop.f32.mrb[0].mxu0
  %v266 = vadd.f32 0.0, %v265
  %267 = vmatprep.mubr.f32.mxu0 0.0
  %268 = vmatmul.mubr.f32.gmra.mrb[0].mxu0 %v32
  %v269 = vpop.f32.mrb[0].mxu0
  %v270 = vadd.f32 0.0, %v269
  %v271 = vpop.f32.mrb[0].mxu0
  %v272 = vadd.f32 0.0, %v271
  %273 = vmatprep.mubr.f32.mxu0 0.0
  %274 = vmatmul.mubr.f32.gmra.mrb[0].mxu0 %v33
  %v275 = vpop.f32.mrb[0].mxu0
  %v276 = vadd.f32 0.0, %v275
  %v277 = vpop.f32.mrb[0].mxu0
  %v278 = vadd.f32 0.0, %v277
  %279 = vmatprep.mubr.f32.mxu0 0.0
  %280 = vmatmul.mubr.f32.gmra.mrb[0].mxu0 %v34
  %v281 = vpop.f32.mrb[0].mxu0
  %v282 = vadd.f32 0.0, %v281
  %v283 = vpop.f32.mrb[0].mxu0
  %v284 = vadd.f32 0.0, %v283
  %285 = vmatprep.mubr.f32.mxu0 0.0
  %286 = vmatmul.mubr.f32.gmra.mrb[0].mxu0 %v35
  %v287 = vpop.f32.mrb[0].mxu0
  %v288 = vadd.f32 0.0, %v287
  %v289 = vpop.f32.mrb[0].mxu0
  %v290 = vadd.f32 0.0, %v289
  %291 = vmatprep.mubr.f32.mxu0 0.0
  %292 = vmatmul.mubr.f32.gmra.mrb[0].mxu0 %v36
  %v293 = vpop.f32.mrb[0].mxu0
  %v294 = vadd.f32 0.0, %v293
  %v295 = vpop.f32.mrb[0].mxu0
  %v296 = vadd.f32 0.0, %v295
  %297 = vmatprep.mubr.f32.mxu0 0.0
  %298 = vmatmul.mubr.f32.gmra.mrb[0].mxu0 %v37
  %v299 = vpop.f32.mrb[0].mxu0
  %v300 = vadd.f32 0.0, %v299
  %v301 = vpop.f32.mrb[0].mxu0
  %v302 = vadd.f32 0.0, %v301
  %303 = vmatprep.mubr.f32.mxu0 0.0
  %304 = vmatmul.mubr.f32.gmra.mrb[0].mxu0 %v38
  %v305 = vpop.f32.mrb[0].mxu0
  %v306 = vadd.f32 0.0, %v305
  %v307 = vpop.f32.mrb[0].mxu0
  %v308 = vadd.f32 0.0, %v307
  %309 = vmatprep.mubr.f32.mxu0 0.0
  %310 = vmatmul.mubr.f32.gmra.mrb[0].mxu0 %v39
  %v311 = vpop.f32.mrb[0].mxu0
  %v312 = vadd.f32 0.0, %v311
  %v313 = vpop.f32.mrb[0].mxu0
  %v314 = vadd.f32 0.0, %v313
  %315 = vmatprep.mubr.f32.mxu0 0.0
  %316 = vmatmul.mubr.f32.gmra.mrb[0].mxu0 %v40
  %v317 = vpop.f32.mrb[0].mxu0
  %v318 = vadd.f32 0.0, %v317
  %v319 = vpop.f32.mrb[0].mxu0
  %v320 = vadd.f32 0.0, %v319
  %321 = vmatprep.mubr.f32.mxu0 0.0
  %322 = vmatmul.mubr.f32.gmra.mrb[0].mxu0 %v41
  %v323 = vpop.f32.mrb[0].mxu0
  %v324 = vadd.f32 0.0, %v323
  %v325 = vpop.f32.mrb[0].mxu0
  %v326 = vadd.f32 0.0, %v325
  %327 = vmatprep.mubr.f32.mxu0 0.0
  %328 = vmatmul.mubr.f32.gmra.mrb[0].mxu0 %v42
  %v329 = vpop.f32.mrb[0].mxu0
  %v330 = vadd.f32 0.0, %v329
  %v331 = vpop.f32.mrb[0].mxu0
  %v332 = vadd.f32 0.0, %v331
  %333 = vmatprep.mubr.f32.mxu0 0.0
  %334 = vmatmul.mubr.f32.gmra.mrb[0].mxu0 %v43
  %v335 = vpop.f32.mrb[0].mxu0
  %v336 = vadd.f32 0.0, %v335
  %v337 = vpop.f32.mrb[0].mxu0
  %v338 = vadd.f32 0.0, %v337
  %339 = vmatprep.mubr.f32.mxu0 0.0
  %340 = vmatmul.mubr.f32.gmra.mrb[0].mxu0 %v44
  %v341 = vpop.f32.mrb[0].mxu0
  %v342 = vadd.f32 0.0, %v341
  %v343 = vpop.f32.mrb[0].mxu0
  %v344 = vadd.f32 0.0, %v343
  %345 = vmatprep.mubr.f32.mxu0 0.0
  %346 = vmatmul.mubr.f32.gmra.mrb[0].mxu0 %v45
  %v347 = vpop.f32.mrb[0].mxu0
  %v348 = vadd.f32 0.0, %v347
  %v349 = vpop.f32.mrb[0].mxu0
  %v350 = vadd.f32 0.0, %v349
  %351 = vmatprep.mubr.f32.mxu0 0.0
  %352 = vmatmul.mubr.f32.gmra.mrb[0].mxu0 %v46
  %v353 = vpop.f32.mrb[0].mxu0
  %v354 = vadd.f32 0.0, %v353
  %v355 = vpop.f32.mrb[0].mxu0
  %v356 = vadd.f32 0.0, %v355
  %357 = vmatprep.mubr.f32.mxu0 0.0
  %358 = vmatmul.mubr.f32.gmra.mrb[0].mxu0 %v47
  %v359 = vpop.f32.mrb[0].mxu0
  %v360 = vadd.f32 0.0, %v359
  %v361 = vpop.f32.mrb[0].mxu0
  %v362 = vadd.f32 0.0, %v361
  %363 = vmatprep.mubr.f32.mxu0 0.0
  %364 = vmatmul.mubr.f32.gmra.mrb[0].mxu0 %v48
  %v365 = vpop.f32.mrb[0].mxu0
  %v366 = vadd.f32 0.0, %v365
  %v367 = vpop.f32.mrb[0].mxu0
  %v368 = vadd.f32 0.0, %v367
  %369 = vmatprep.mubr.f32.mxu0 0.0
  %370 = vmatmul.mubr.f32.gmra.mrb[0].mxu0 %v49
  %v371 = vpop.f32.mrb[0].mxu0
  %v372 = vadd.f32 0.0, %v371
  %v373 = vpop.f32.mrb[0].mxu0
  %v374 = vadd.f32 0.0, %v373
  %375 = vmatprep.mubr.f32.mxu0 0.0
  %376 = vmatmul.mubr.f32.gmra.mrb[0].mxu0 %v50
  %v377 = vpop.f32.mrb[0].mxu0
  %v378 = vadd.f32 0.0, %v377
  %v379 = vpop.f32.mrb[0].mxu0
  %v380 = vadd.f32 0.0, %v379
  %381 = vmatprep.mubr.f32.mxu0 0.0
  %382 = vmatmul.mubr.f32.gmra.mrb[0].mxu0 %v51
  %v383 = vpop.f32.mrb[0].mxu0
  %v384 = vadd.f32 0.0, %v383
  %v385 = vpop.f32.mrb[0].mxu0
  %v386 = vadd.f32 0.0, %v385
  %387 = vmatprep.mubr.f32.mxu0 0.0
  %388 = vmatmul.mubr.f32.gmra.mrb[0].mxu0 %v52
  %v389 = vpop.f32.mrb[0].mxu0
  %v390 = vadd.f32 0.0, %v389
  %v391 = vpop.f32.mrb[0].mxu0
  %v392 = vadd.f32 0.0, %v391
  %393 = vmatprep.mubr.f32.mxu0 0.0
  %394 = vmatmul.mubr.f32.gmra.mrb[0].mxu0 %v53
  %v395 = vpop.f32.mrb[0].mxu0
  %v396 = vadd.f32 0.0, %v395
  %v397 = vpop.f32.mrb[0].mxu0
  %v398 = vadd.f32 0.0, %v397
  %399 = vmatprep.mubr.f32.mxu0 0.0
  %400 = vmatmul.mubr.f32.gmra.mrb[0].mxu0 %v54
  %v401 = vpop.f32.mrb[0].mxu0
  %v402 = vadd.f32 0.0, %v401
  %v403 = vpop.f32.mrb[0].mxu0
  %v404 = vadd.f32 0.0, %v403
  %405 = vmatprep.mubr.f32.mxu0 0.0
  %406 = vmatmul.mubr.f32.gmra.mrb[0].mxu0 %v55
  %v407 = vpop.f32.mrb[0].mxu0
  %v408 = vadd.f32 0.0, %v407
  %v409 = vpop.f32.mrb[0].mxu0
  %v410 = vadd.f32 0.0, %v409
  %411 = vmatprep.mubr.f32.mxu0 0.0
  %412 = vmatmul.mubr.f32.gmra.mrb[0].mxu0 %v56
  %v413 = vpop.f32.mrb[0].mxu0
  %v414 = vadd.f32 0.0, %v413
  %v415 = vpop.f32.mrb[0].mxu0
  %v416 = vadd.f32 0.0, %v415
  %417 = vmatprep.mubr.f32.mxu0 0.0
  %418 = vmatmul.mubr.f32.gmra.mrb[0].mxu0 %v57
  %v419 = vpop.f32.mrb[0].mxu0
  %v420 = vadd.f32 0.0, %v419
  %v421 = vpop.f32.mrb[0].mxu0
  %v422 = vadd.f32 0.0, %v421
  %423 = vmatprep.mubr.f32.mxu0 0.0
  %424 = vmatmul.mubr.f32.gmra.mrb[0].mxu0 %v58
  %v425 = vpop.f32.mrb[0].mxu0
  %v426 = vadd.f32 0.0, %v425
  %v427 = vpop.f32.mrb[0].mxu0
  %v428 = vadd.f32 0.0, %v427
  %429 = vmatprep.mubr.f32.mxu0 0.0
  %430 = vmatmul.mubr.f32.gmra.mrb[0].mxu0 %v59
  %v431 = vpop.f32.mrb[0].mxu0
  %v432 = vadd.f32 0.0, %v431
  %v433 = vpop.f32.mrb[0].mxu0
  %v434 = vadd.f32 0.0, %v433
  %435 = vmatprep.mubr.f32.mxu0 0.0
  %436 = vmatmul.mubr.f32.gmra.mrb[0].mxu0 %v60
  %v437 = vpop.f32.mrb[0].mxu0
  %v438 = vadd.f32 0.0, %v437
  %v439 = vpop.f32.mrb[0].mxu0
  %v440 = vadd.f32 0.0, %v439
  %441 = vmatprep.mubr.f32.mxu0 0.0
  %442 = vmatmul.mubr.f32.gmra.mrb[0].mxu0 %v61
  %v443 = vpop.f32.mrb[0].mxu0
  %v444 = vadd.f32 0.0, %v443
  %v445 = vpop.f32.mrb[0].mxu0
  %v446 = vadd.f32 0.0, %v445
  %447 = vmatprep.mubr.f32.mxu0 0.0
  %448 = vmatmul.mubr.f32.gmra.mrb[0].mxu0 %v62
  %v449 = vpop.f32.mrb[0].mxu0
  %v450 = vadd.f32 0.0, %v449
  %v451 = vpop.f32.mrb[0].mxu0
  %v452 = vadd.f32 0.0, %v451
  %453 = vmatprep.mubr.f32.mxu0 0.0
  %454 = vmatmul.mubr.f32.gmra.mrb[0].mxu0 %v63
  %v455 = vpop.f32.mrb[0].mxu0
  %v456 = vadd.f32 0.0, %v455
  %v457 = vpop.f32.mrb[0].mxu0
  %v458 = vadd.f32 0.0, %v457
  %459 = vmatprep.mubr.f32.mxu0 0.0
  %460 = vmatmul.mubr.f32.gmra.mrb[0].mxu0 %v64
  %v461 = vpop.f32.mrb[0].mxu0
  %v462 = vadd.f32 0.0, %v461
  %v463 = vpop.f32.mrb[0].mxu0
  %v464 = vadd.f32 0.0, %v463
  %465 = vmatprep.mubr.f32.mxu0 0.0
  %466 = vmatmul.mubr.f32.gmra.mrb[0].mxu0 %v65
  %v467 = vpop.f32.mrb[0].mxu0
  %v468 = vadd.f32 0.0, %v467
  %v469 = vpop.f32.mrb[0].mxu0
  %v470 = vadd.f32 0.0, %v469
  %471 = vmatprep.mubr.f32.mxu0 0.0
  %472 = vmatmul.mubr.f32.gmra.mrb[0].mxu0 %v66
  %v473 = vpop.f32.mrb[0].mxu0
  %v474 = vadd.f32 0.0, %v473
  %v475 = vpop.f32.mrb[0].mxu0
  %v476 = vadd.f32 0.0, %v475
  %477 = vmatprep.mubr.f32.mxu0 0.0
  %478 = vmatmul.mubr.f32.gmra.mrb[0].mxu0 %v67
  %v479 = vpop.f32.mrb[0].mxu0
  %v480 = vadd.f32 0.0, %v479
  %v481 = vpop.f32.mrb[0].mxu0
  %v482 = vadd.f32 0.0, %v481
  %483 = vmatprep.mubr.f32.mxu0 0.0
  %484 = vmatmul.mubr.f32.gmra.mrb[0].mxu0 %v68
  %v485 = vpop.f32.mrb[0].mxu0
  %v486 = vadd.f32 0.0, %v485
  %v487 = vpop.f32.mrb[0].mxu0
  %v488 = vadd.f32 0.0, %v487
  %489 = vmatprep.mubr.f32.mxu0 0.0
  %490 = vmatmul.mubr.f32.gmra.mrb[0].mxu0 %v69
  %v491 = vpop.f32.mrb[0].mxu0
  %v492 = vadd.f32 0.0, %v491
  %v493 = vpop.f32.mrb[0].mxu0
  %v494 = vadd.f32 0.0, %v493
  %495 = vmatprep.mubr.f32.mxu0 0.0
  %496 = vmatmul.mubr.f32.gmra.mrb[0].mxu0 %v70
  %v497 = vpop.f32.mrb[0].mxu0
  %v498 = vadd.f32 0.0, %v497
  %v499 = vpop.f32.mrb[0].mxu0
  %v500 = vadd.f32 0.0, %v499
  %501 = vmatprep.mubr.f32.mxu0 0.0
  %502 = vmatmul.mubr.f32.gmra.mrb[0].mxu0 %v71
  %v503 = vpop.f32.mrb[0].mxu0
  %v504 = vadd.f32 0.0, %v503
  %v505 = vpop.f32.mrb[0].mxu0
  %v506 = vadd.f32 0.0, %v505
  %507 = vmatprep.mubr.f32.mxu0 0.0
  %508 = vmatmul.mubr.f32.gmra.mrb[0].mxu0 %v72
  %v509 = vpop.f32.mrb[0].mxu0
  %v510 = vadd.f32 0.0, %v509
  %v511 = vpop.f32.mrb[0].mxu0
  %v512 = vadd.f32 0.0, %v511
  %513 = vmatprep.mubr.f32.mxu0 0.0
  %514 = vmatmul.mubr.f32.gmra.mrb[0].mxu0 %v73
  %v515 = vpop.f32.mrb[0].mxu0
  %v516 = vadd.f32 0.0, %v515
  %v517 = vpop.f32.mrb[0].mxu0
  %v518 = vadd.f32 0.0, %v517
  %519 = vmatprep.mubr.f32.mxu0 0.0
  %520 = vmatmul.mubr.f32.gmra.mrb[0].mxu0 %v74
  %v521 = vpop.f32.mrb[0].mxu0
  %v522 = vadd.f32 0.0, %v521
  %v523 = vpop.f32.mrb[0].mxu0
  %v524 = vadd.f32 0.0, %v523
  %525 = vmatprep.mubr.f32.mxu0 0.0
  %526 = vmatmul.mubr.f32.gmra.mrb[0].mxu0 %v75
  %v527 = vpop.f32.mrb[0].mxu0
  %v528 = vadd.f32 0.0, %v527
  %v529 = vpop.f32.mrb[0].mxu0
  %v530 = vadd.f32 0.0, %v529
  %531 = vmatprep.mubr.f32.mxu0 0.0
  %532 = vmatmul.mubr.f32.gmra.mrb[0].mxu0 %v76
  %v533 = vpop.f32.mrb[0].mxu0
  %v534 = vadd.f32 0.0, %v533
  %v535 = vpop.f32.mrb[0].mxu0
  %v536 = vadd.f32 0.0, %v535
  %537 = vmatprep.mubr.f32.mxu0 0.0
  %538 = vmatmul.mubr.f32.gmra.mrb[0].mxu0 %v77
  %v539 = vpop.f32.mrb[0].mxu0
  %v540 = vadd.f32 0.0, %v539
  %v541 = vpop.f32.mrb[0].mxu0
  %v542 = vadd.f32 0.0, %v541
  %543 = vmatprep.mubr.f32.mxu0 0.0
  %544 = vmatmul.mubr.f32.gmra.mrb[0].mxu0 %v78
  %v545 = vpop.f32.mrb[0].mxu0
  %v546 = vadd.f32 0.0, %v545
  %v547 = vpop.f32.mrb[0].mxu0
  %v548 = vadd.f32 0.0, %v547
  %549 = vmatprep.mubr.f32.mxu0 0.0
  %550 = vmatmul.mubr.f32.gmra.mrb[0].mxu0 %v79
  %v551 = vpop.f32.mrb[0].mxu0
  %v552 = vadd.f32 0.0, %v551
  %v553 = vpop.f32.mrb[0].mxu0
  %v554 = vadd.f32 0.0, %v553
  %555 = vmatprep.mubr.f32.mxu0 0.0
  %556 = vmatmul.mubr.f32.gmra.mrb[0].mxu0 %v80
  %v557 = vpop.f32.mrb[0].mxu0
  %v558 = vadd.f32 0.0, %v557
  %v559 = vpop.f32.mrb[0].mxu0
  %v560 = vadd.f32 0.0, %v559
  %561 = vdwg.mxu0
  %v562 = vld [vmem:[%s2] sm:$0x3]
  %v564 = vlaneseq
  %v565 = vshrl.u32 %v564, 7
  %v566 = vsub.s32 0, %v565
  %v567 = vrot.slane %v562, %v566
  %v568 = vlaneseq
  %v569 = vshrl.u32 %v568, 7
  %v570 = vsub.s32 1, %v569
  %v571 = vrot.slane %v562, %v570
  %v574 = vmul.f32 %v180, %v567
  %v575 = vmul.f32 %v182, %v571
  %v576 = vmul.f32 %v186, %v567
  %v577 = vmul.f32 %v188, %v571
  %v578 = vmul.f32 %v192, %v567
  %v579 = vmul.f32 %v194, %v571
  %v580 = vmul.f32 %v198, %v567
  %v581 = vmul.f32 %v200, %v571
  %v582 = vmul.f32 %v204, %v567
  %v583 = vmul.f32 %v206, %v571
  %v584 = vmul.f32 %v210, %v567
  %v585 = vmul.f32 %v212, %v571
  %v586 = vmul.f32 %v216, %v567
  %v587 = vmul.f32 %v218, %v571
  %v588 = vmul.f32 %v222, %v567
  %v589 = vmul.f32 %v224, %v571
  %v590 = vmul.f32 %v228, %v567
  %v591 = vmul.f32 %v230, %v571
  %v592 = vmul.f32 %v234, %v567
  %v593 = vmul.f32 %v236, %v571
  %v594 = vmul.f32 %v240, %v567
  %v595 = vmul.f32 %v242, %v571
  %v596 = vmul.f32 %v246, %v567
  %v597 = vmul.f32 %v248, %v571
  %v598 = vmul.f32 %v252, %v567
  %v599 = vmul.f32 %v254, %v571
  %v600 = vmul.f32 %v258, %v567
  %v601 = vmul.f32 %v260, %v571
  %v602 = vmul.f32 %v264, %v567
  %v603 = vmul.f32 %v266, %v571
  %v604 = vmul.f32 %v270, %v567
  %v605 = vmul.f32 %v272, %v571
  %v606 = vmul.f32 %v276, %v567
  %v607 = vmul.f32 %v278, %v571
  %v608 = vmul.f32 %v282, %v567
  %v609 = vmul.f32 %v284, %v571
  %v610 = vmul.f32 %v288, %v567
  %v611 = vmul.f32 %v290, %v571
  %v612 = vmul.f32 %v294, %v567
  %v613 = vmul.f32 %v296, %v571
  %v614 = vmul.f32 %v300, %v567
  %v615 = vmul.f32 %v302, %v571
  %v616 = vmul.f32 %v306, %v567
  %v617 = vmul.f32 %v308, %v571
  %v618 = vmul.f32 %v312, %v567
  %v619 = vmul.f32 %v314, %v571
  %v620 = vmul.f32 %v318, %v567
  %v621 = vmul.f32 %v320, %v571
  %v622 = vmul.f32 %v324, %v567
  %v623 = vmul.f32 %v326, %v571
  %v624 = vmul.f32 %v330, %v567
  %v625 = vmul.f32 %v332, %v571
  %v626 = vmul.f32 %v336, %v567
  %v627 = vmul.f32 %v338, %v571
  %v628 = vmul.f32 %v342, %v567
  %v629 = vmul.f32 %v344, %v571
  %v630 = vmul.f32 %v348, %v567
  %v631 = vmul.f32 %v350, %v571
  %v632 = vmul.f32 %v354, %v567
  %v633 = vmul.f32 %v356, %v571
  %v634 = vmul.f32 %v360, %v567
  %v635 = vmul.f32 %v362, %v571
  %v636 = vmul.f32 %v366, %v567
  %v637 = vmul.f32 %v368, %v571
  %v638 = vmul.f32 %v372, %v567
  %v639 = vmul.f32 %v374, %v571
  %v640 = vmul.f32 %v378, %v567
  %v641 = vmul.f32 %v380, %v571
  %v642 = vmul.f32 %v384, %v567
  %v643 = vmul.f32 %v386, %v571
  %v644 = vmul.f32 %v390, %v567
  %v645 = vmul.f32 %v392, %v571
  %v646 = vmul.f32 %v396, %v567
  %v647 = vmul.f32 %v398, %v571
  %v648 = vmul.f32 %v402, %v567
  %v649 = vmul.f32 %v404, %v571
  %v650 = vmul.f32 %v408, %v567
  %v651 = vmul.f32 %v410, %v571
  %v652 = vmul.f32 %v414, %v567
  %v653 = vmul.f32 %v416, %v571
  %v654 = vmul.f32 %v420, %v567
  %v655 = vmul.f32 %v422, %v571
  %v656 = vmul.f32 %v426, %v567
  %v657 = vmul.f32 %v428, %v571
  %v658 = vmul.f32 %v432, %v567
  %v659 = vmul.f32 %v434, %v571
  %v660 = vmul.f32 %v438, %v567
  %v661 = vmul.f32 %v440, %v571
  %v662 = vmul.f32 %v444, %v567
  %v663 = vmul.f32 %v446, %v571
  %v664 = vmul.f32 %v450, %v567
  %v665 = vmul.f32 %v452, %v571
  %v666 = vmul.f32 %v456, %v567
  %v667 = vmul.f32 %v458, %v571
  %v668 = vmul.f32 %v462, %v567
  %v669 = vmul.f32 %v464, %v571
  %v670 = vmul.f32 %v468, %v567
  %v671 = vmul.f32 %v470, %v571
  %v672 = vmul.f32 %v474, %v567
  %v673 = vmul.f32 %v476, %v571
  %v674 = vmul.f32 %v480, %v567
  %v675 = vmul.f32 %v482, %v571
  %v676 = vmul.f32 %v486, %v567
  %v677 = vmul.f32 %v488, %v571
  %v678 = vmul.f32 %v492, %v567
  %v679 = vmul.f32 %v494, %v571
  %v680 = vmul.f32 %v498, %v567
  %v681 = vmul.f32 %v500, %v571
  %v682 = vmul.f32 %v504, %v567
  %v683 = vmul.f32 %v506, %v571
  %v684 = vmul.f32 %v510, %v567
  %v685 = vmul.f32 %v512, %v571
  %v686 = vmul.f32 %v516, %v567
  %v687 = vmul.f32 %v518, %v571
  %v688 = vmul.f32 %v522, %v567
  %v689 = vmul.f32 %v524, %v571
  %v690 = vmul.f32 %v528, %v567
  %v691 = vmul.f32 %v530, %v571
  %v692 = vmul.f32 %v534, %v567
  %v693 = vmul.f32 %v536, %v571
  %v694 = vmul.f32 %v540, %v567
  %v695 = vmul.f32 %v542, %v571
  %v696 = vmul.f32 %v546, %v567
  %v697 = vmul.f32 %v548, %v571
  %v698 = vmul.f32 %v552, %v567
  %v699 = vmul.f32 %v554, %v571
  %v700 = vmul.f32 %v558, %v567
  %v701 = vmul.f32 %v560, %v571
  %v702 = vld [vmem:[%s3] sm:$0x3]
  %v704 = vlaneseq
  %v705 = vshrl.u32 %v704, 7
  %v706 = vsub.s32 0, %v705
  %v707 = vrot.slane %v702, %v706
  %v708 = vlaneseq
  %v709 = vshrl.u32 %v708, 7
  %v710 = vsub.s32 1, %v709
  %v711 = vrot.slane %v702, %v710
  %v714 = vadd.f32 %v574, %v707
  %v715 = vadd.f32 %v575, %v711
  %v716 = vadd.f32 %v576, %v707
  %v717 = vadd.f32 %v577, %v711
  %v718 = vadd.f32 %v578, %v707
  %v719 = vadd.f32 %v579, %v711
  %v720 = vadd.f32 %v580, %v707
  %v721 = vadd.f32 %v581, %v711
  %v722 = vadd.f32 %v582, %v707
  %v723 = vadd.f32 %v583, %v711
  %v724 = vadd.f32 %v584, %v707
  %v725 = vadd.f32 %v585, %v711
  %v726 = vadd.f32 %v586, %v707
  %v727 = vadd.f32 %v587, %v711
  %v728 = vadd.f32 %v588, %v707
  %v729 = vadd.f32 %v589, %v711
  %v730 = vadd.f32 %v590, %v707
  %v731 = vadd.f32 %v591, %v711
  %v732 = vadd.f32 %v592, %v707
  %v733 = vadd.f32 %v593, %v711
  %v734 = vadd.f32 %v594, %v707
  %v735 = vadd.f32 %v595, %v711
  %v736 = vadd.f32 %v596, %v707
  %v737 = vadd.f32 %v597, %v711
  %v738 = vadd.f32 %v598, %v707
  %v739 = vadd.f32 %v599, %v711
  %v740 = vadd.f32 %v600, %v707
  %v741 = vadd.f32 %v601, %v711
  %v742 = vadd.f32 %v602, %v707
  %v743 = vadd.f32 %v603, %v711
  %v744 = vadd.f32 %v604, %v707
  %v745 = vadd.f32 %v605, %v711
  %v746 = vadd.f32 %v606, %v707
  %v747 = vadd.f32 %v607, %v711
  %v748 = vadd.f32 %v608, %v707
  %v749 = vadd.f32 %v609, %v711
  %v750 = vadd.f32 %v610, %v707
  %v751 = vadd.f32 %v611, %v711
  %v752 = vadd.f32 %v612, %v707
  %v753 = vadd.f32 %v613, %v711
  %v754 = vadd.f32 %v614, %v707
  %v755 = vadd.f32 %v615, %v711
  %v756 = vadd.f32 %v616, %v707
  %v757 = vadd.f32 %v617, %v711
  %v758 = vadd.f32 %v618, %v707
  %v759 = vadd.f32 %v619, %v711
  %v760 = vadd.f32 %v620, %v707
  %v761 = vadd.f32 %v621, %v711
  %v762 = vadd.f32 %v622, %v707
  %v763 = vadd.f32 %v623, %v711
  %v764 = vadd.f32 %v624, %v707
  %v765 = vadd.f32 %v625, %v711
  %v766 = vadd.f32 %v626, %v707
  %v767 = vadd.f32 %v627, %v711
  %v768 = vadd.f32 %v628, %v707
  %v769 = vadd.f32 %v629, %v711
  %v770 = vadd.f32 %v630, %v707
  %v771 = vadd.f32 %v631, %v711
  %v772 = vadd.f32 %v632, %v707
  %v773 = vadd.f32 %v633, %v711
  %v774 = vadd.f32 %v634, %v707
  %v775 = vadd.f32 %v635, %v711
  %v776 = vadd.f32 %v636, %v707
  %v777 = vadd.f32 %v637, %v711
  %v778 = vadd.f32 %v638, %v707
  %v779 = vadd.f32 %v639, %v711
  %v780 = vadd.f32 %v640, %v707
  %v781 = vadd.f32 %v641, %v711
  %v782 = vadd.f32 %v642, %v707
  %v783 = vadd.f32 %v643, %v711
  %v784 = vadd.f32 %v644, %v707
  %v785 = vadd.f32 %v645, %v711
  %v786 = vadd.f32 %v646, %v707
  %v787 = vadd.f32 %v647, %v711
  %v788 = vadd.f32 %v648, %v707
  %v789 = vadd.f32 %v649, %v711
  %v790 = vadd.f32 %v650, %v707
  %v791 = vadd.f32 %v651, %v711
  %v792 = vadd.f32 %v652, %v707
  %v793 = vadd.f32 %v653, %v711
  %v794 = vadd.f32 %v654, %v707
  %v795 = vadd.f32 %v655, %v711
  %v796 = vadd.f32 %v656, %v707
  %v797 = vadd.f32 %v657, %v711
  %v798 = vadd.f32 %v658, %v707
  %v799 = vadd.f32 %v659, %v711
  %v800 = vadd.f32 %v660, %v707
  %v801 = vadd.f32 %v661, %v711
  %v802 = vadd.f32 %v662, %v707
  %v803 = vadd.f32 %v663, %v711
  %v804 = vadd.f32 %v664, %v707
  %v805 = vadd.f32 %v665, %v711
  %v806 = vadd.f32 %v666, %v707
  %v807 = vadd.f32 %v667, %v711
  %v808 = vadd.f32 %v668, %v707
  %v809 = vadd.f32 %v669, %v711
  %v810 = vadd.f32 %v670, %v707
  %v811 = vadd.f32 %v671, %v711
  %v812 = vadd.f32 %v672, %v707
  %v813 = vadd.f32 %v673, %v711
  %v814 = vadd.f32 %v674, %v707
  %v815 = vadd.f32 %v675, %v711
  %v816 = vadd.f32 %v676, %v707
  %v817 = vadd.f32 %v677, %v711
  %v818 = vadd.f32 %v678, %v707
  %v819 = vadd.f32 %v679, %v711
  %v820 = vadd.f32 %v680, %v707
  %v821 = vadd.f32 %v681, %v711
  %v822 = vadd.f32 %v682, %v707
  %v823 = vadd.f32 %v683, %v711
  %v824 = vadd.f32 %v684, %v707
  %v825 = vadd.f32 %v685, %v711
  %v826 = vadd.f32 %v686, %v707
  %v827 = vadd.f32 %v687, %v711
  %v828 = vadd.f32 %v688, %v707
  %v829 = vadd.f32 %v689, %v711
  %v830 = vadd.f32 %v690, %v707
  %v831 = vadd.f32 %v691, %v711
  %v832 = vadd.f32 %v692, %v707
  %v833 = vadd.f32 %v693, %v711
  %v834 = vadd.f32 %v694, %v707
  %v835 = vadd.f32 %v695, %v711
  %v836 = vadd.f32 %v696, %v707
  %v837 = vadd.f32 %v697, %v711
  %v838 = vadd.f32 %v698, %v707
  %v839 = vadd.f32 %v699, %v711
  %v840 = vadd.f32 %v700, %v707
  %v841 = vadd.f32 %v701, %v711
  %v842 = vxor.u32 %v714, 2147483648
  %v843 = vxor.u32 %v715, 2147483648
  %v844 = vxor.u32 %v716, 2147483648
  %v845 = vxor.u32 %v717, 2147483648
  %v846 = vxor.u32 %v718, 2147483648
  %v847 = vxor.u32 %v719, 2147483648
  %v848 = vxor.u32 %v720, 2147483648
  %v849 = vxor.u32 %v721, 2147483648
  %v850 = vxor.u32 %v722, 2147483648
  %v851 = vxor.u32 %v723, 2147483648
  %v852 = vxor.u32 %v724, 2147483648
  %v853 = vxor.u32 %v725, 2147483648
  %v854 = vxor.u32 %v726, 2147483648
  %v855 = vxor.u32 %v727, 2147483648
  %v856 = vxor.u32 %v728, 2147483648
  %v857 = vxor.u32 %v729, 2147483648
  %v858 = vxor.u32 %v730, 2147483648
  %v859 = vxor.u32 %v731, 2147483648
  %v860 = vxor.u32 %v732, 2147483648
  %v861 = vxor.u32 %v733, 2147483648
  %v862 = vxor.u32 %v734, 2147483648
  %v863 = vxor.u32 %v735, 2147483648
  %v864 = vxor.u32 %v736, 2147483648
  %v865 = vxor.u32 %v737, 2147483648
  %v866 = vxor.u32 %v738, 2147483648
  %v867 = vxor.u32 %v739, 2147483648
  %v868 = vxor.u32 %v740, 2147483648
  %v869 = vxor.u32 %v741, 2147483648
  %v870 = vxor.u32 %v742, 2147483648
  %v871 = vxor.u32 %v743, 2147483648
  %v872 = vxor.u32 %v744, 2147483648
  %v873 = vxor.u32 %v745, 2147483648
  %v874 = vxor.u32 %v746, 2147483648
  %v875 = vxor.u32 %v747, 2147483648
  %v876 = vxor.u32 %v748, 2147483648
  %v877 = vxor.u32 %v749, 2147483648
  %v878 = vxor.u32 %v750, 2147483648
  %v879 = vxor.u32 %v751, 2147483648
  %v880 = vxor.u32 %v752, 2147483648
  %v881 = vxor.u32 %v753, 2147483648
  %v882 = vxor.u32 %v754, 2147483648
  %v883 = vxor.u32 %v755, 2147483648
  %v884 = vxor.u32 %v756, 2147483648
  %v885 = vxor.u32 %v757, 2147483648
  %v886 = vxor.u32 %v758, 2147483648
  %v887 = vxor.u32 %v759, 2147483648
  %v888 = vxor.u32 %v760, 2147483648
  %v889 = vxor.u32 %v761, 2147483648
  %v890 = vxor.u32 %v762, 2147483648
  %v891 = vxor.u32 %v763, 2147483648
  %v892 = vxor.u32 %v764, 2147483648
  %v893 = vxor.u32 %v765, 2147483648
  %v894 = vxor.u32 %v766, 2147483648
  %v895 = vxor.u32 %v767, 2147483648
  %v896 = vxor.u32 %v768, 2147483648
  %v897 = vxor.u32 %v769, 2147483648
  %v898 = vxor.u32 %v770, 2147483648
  %v899 = vxor.u32 %v771, 2147483648
  %v900 = vxor.u32 %v772, 2147483648
  %v901 = vxor.u32 %v773, 2147483648
  %v902 = vxor.u32 %v774, 2147483648
  %v903 = vxor.u32 %v775, 2147483648
  %v904 = vxor.u32 %v776, 2147483648
  %v905 = vxor.u32 %v777, 2147483648
  %v906 = vxor.u32 %v778, 2147483648
  %v907 = vxor.u32 %v779, 2147483648
  %v908 = vxor.u32 %v780, 2147483648
  %v909 = vxor.u32 %v781, 2147483648
  %v910 = vxor.u32 %v782, 2147483648
  %v911 = vxor.u32 %v783, 2147483648
  %v912 = vxor.u32 %v784, 2147483648
  %v913 = vxor.u32 %v785, 2147483648
  %v914 = vxor.u32 %v786, 2147483648
  %v915 = vxor.u32 %v787, 2147483648
  %v916 = vxor.u32 %v788, 2147483648
  %v917 = vxor.u32 %v789, 2147483648
  %v918 = vxor.u32 %v790, 2147483648
  %v919 = vxor.u32 %v791, 2147483648
  %v920 = vxor.u32 %v792, 2147483648
  %v921 = vxor.u32 %v793, 2147483648
  %v922 = vxor.u32 %v794, 2147483648
  %v923 = vxor.u32 %v795, 2147483648
  %v924 = vxor.u32 %v796, 2147483648
  %v925 = vxor.u32 %v797, 2147483648
  %v926 = vxor.u32 %v798, 2147483648
  %v927 = vxor.u32 %v799, 2147483648
  %v928 = vxor.u32 %v800, 2147483648
  %v929 = vxor.u32 %v801, 2147483648
  %v930 = vxor.u32 %v802, 2147483648
  %v931 = vxor.u32 %v803, 2147483648
  %v932 = vxor.u32 %v804, 2147483648
  %v933 = vxor.u32 %v805, 2147483648
  %v934 = vxor.u32 %v806, 2147483648
  %v935 = vxor.u32 %v807, 2147483648
  %v936 = vxor.u32 %v808, 2147483648
  %v937 = vxor.u32 %v809, 2147483648
  %v938 = vxor.u32 %v810, 2147483648
  %v939 = vxor.u32 %v811, 2147483648
  %v940 = vxor.u32 %v812, 2147483648
  %v941 = vxor.u32 %v813, 2147483648
  %v942 = vxor.u32 %v814, 2147483648
  %v943 = vxor.u32 %v815, 2147483648
  %v944 = vxor.u32 %v816, 2147483648
  %v945 = vxor.u32 %v817, 2147483648
  %v946 = vxor.u32 %v818, 2147483648
  %v947 = vxor.u32 %v819, 2147483648
  %v948 = vxor.u32 %v820, 2147483648
  %v949 = vxor.u32 %v821, 2147483648
  %v950 = vxor.u32 %v822, 2147483648
  %v951 = vxor.u32 %v823, 2147483648
  %v952 = vxor.u32 %v824, 2147483648
  %v953 = vxor.u32 %v825, 2147483648
  %v954 = vxor.u32 %v826, 2147483648
  %v955 = vxor.u32 %v827, 2147483648
  %v956 = vxor.u32 %v828, 2147483648
  %v957 = vxor.u32 %v829, 2147483648
  %v958 = vxor.u32 %v830, 2147483648
  %v959 = vxor.u32 %v831, 2147483648
  %v960 = vxor.u32 %v832, 2147483648
  %v961 = vxor.u32 %v833, 2147483648
  %v962 = vxor.u32 %v834, 2147483648
  %v963 = vxor.u32 %v835, 2147483648
  %v964 = vxor.u32 %v836, 2147483648
  %v965 = vxor.u32 %v837, 2147483648
  %v966 = vxor.u32 %v838, 2147483648
  %v967 = vxor.u32 %v839, 2147483648
  %v968 = vxor.u32 %v840, 2147483648
  %v969 = vxor.u32 %v841, 2147483648
  %v970 = vmul.f32 %v842, 1.442695
  %v971 = vpow.pop %v970
  %v972 = vmul.f32 %v843, 1.442695
  %v973 = vpow.pop %v972
  %v974 = vmul.f32 %v844, 1.442695
  %v975 = vpow.pop %v974
  %v976 = vmul.f32 %v845, 1.442695
  %v977 = vpow.pop %v976
  %v978 = vmul.f32 %v846, 1.442695
  %v979 = vpow.pop %v978
  %v980 = vmul.f32 %v847, 1.442695
  %v981 = vpow.pop %v980
  %v982 = vmul.f32 %v848, 1.442695
  %v983 = vpow.pop %v982
  %v984 = vmul.f32 %v849, 1.442695
  %v985 = vpow.pop %v984
  %v986 = vmul.f32 %v850, 1.442695
  %v987 = vpow.pop %v986
  %v988 = vmul.f32 %v851, 1.442695
  %v989 = vpow.pop %v988
  %v990 = vmul.f32 %v852, 1.442695
  %v991 = vpow.pop %v990
  %v992 = vmul.f32 %v853, 1.442695
  %v993 = vpow.pop %v992
  %v994 = vmul.f32 %v854, 1.442695
  %v995 = vpow.pop %v994
  %v996 = vmul.f32 %v855, 1.442695
  %v997 = vpow.pop %v996
  %v998 = vmul.f32 %v856, 1.442695
  %v999 = vpow.pop %v998
  %v1000 = vmul.f32 %v857, 1.442695
  %v1001 = vpow.pop %v1000
  %v1002 = vmul.f32 %v858, 1.442695
  %v1003 = vpow.pop %v1002
  %v1004 = vmul.f32 %v859, 1.442695
  %v1005 = vpow.pop %v1004
  %v1006 = vmul.f32 %v860, 1.442695
  %v1007 = vpow.pop %v1006
  %v1008 = vmul.f32 %v861, 1.442695
  %v1009 = vpow.pop %v1008
  %v1010 = vmul.f32 %v862, 1.442695
  %v1011 = vpow.pop %v1010
  %v1012 = vmul.f32 %v863, 1.442695
  %v1013 = vpow.pop %v1012
  %v1014 = vmul.f32 %v864, 1.442695
  %v1015 = vpow.pop %v1014
  %v1016 = vmul.f32 %v865, 1.442695
  %v1017 = vpow.pop %v1016
  %v1018 = vmul.f32 %v866, 1.442695
  %v1019 = vpow.pop %v1018
  %v1020 = vmul.f32 %v867, 1.442695
  %v1021 = vpow.pop %v1020
  %v1022 = vmul.f32 %v868, 1.442695
  %v1023 = vpow.pop %v1022
  %v1024 = vmul.f32 %v869, 1.442695
  %v1025 = vpow.pop %v1024
  %v1026 = vmul.f32 %v870, 1.442695
  %v1027 = vpow.pop %v1026
  %v1028 = vmul.f32 %v871, 1.442695
  %v1029 = vpow.pop %v1028
  %v1030 = vmul.f32 %v872, 1.442695
  %v1031 = vpow.pop %v1030
  %v1032 = vmul.f32 %v873, 1.442695
  %v1033 = vpow.pop %v1032
  %v1034 = vmul.f32 %v874, 1.442695
  %v1035 = vpow.pop %v1034
  %v1036 = vmul.f32 %v875, 1.442695
  %v1037 = vpow.pop %v1036
  %v1038 = vmul.f32 %v876, 1.442695
  %v1039 = vpow.pop %v1038
  %v1040 = vmul.f32 %v877, 1.442695
  %v1041 = vpow.pop %v1040
  %v1042 = vmul.f32 %v878, 1.442695
  %v1043 = vpow.pop %v1042
  %v1044 = vmul.f32 %v879, 1.442695
  %v1045 = vpow.pop %v1044
  %v1046 = vmul.f32 %v880, 1.442695
  %v1047 = vpow.pop %v1046
  %v1048 = vmul.f32 %v881, 1.442695
  %v1049 = vpow.pop %v1048
  %v1050 = vmul.f32 %v882, 1.442695
  %v1051 = vpow.pop %v1050
  %v1052 = vmul.f32 %v883, 1.442695
  %v1053 = vpow.pop %v1052
  %v1054 = vmul.f32 %v884, 1.442695
  %v1055 = vpow.pop %v1054
  %v1056 = vmul.f32 %v885, 1.442695
  %v1057 = vpow.pop %v1056
  %v1058 = vmul.f32 %v886, 1.442695
  %v1059 = vpow.pop %v1058
  %v1060 = vmul.f32 %v887, 1.442695
  %v1061 = vpow.pop %v1060
  %v1062 = vmul.f32 %v888, 1.442695
  %v1063 = vpow.pop %v1062
  %v1064 = vmul.f32 %v889, 1.442695
  %v1065 = vpow.pop %v1064
  %v1066 = vmul.f32 %v890, 1.442695
  %v1067 = vpow.pop %v1066
  %v1068 = vmul.f32 %v891, 1.442695
  %v1069 = vpow.pop %v1068
  %v1070 = vmul.f32 %v892, 1.442695
  %v1071 = vpow.pop %v1070
  %v1072 = vmul.f32 %v893, 1.442695
  %v1073 = vpow.pop %v1072
  %v1074 = vmul.f32 %v894, 1.442695
  %v1075 = vpow.pop %v1074
  %v1076 = vmul.f32 %v895, 1.442695
  %v1077 = vpow.pop %v1076
  %v1078 = vmul.f32 %v896, 1.442695
  %v1079 = vpow.pop %v1078
  %v1080 = vmul.f32 %v897, 1.442695
  %v1081 = vpow.pop %v1080
  %v1082 = vmul.f32 %v898, 1.442695
  %v1083 = vpow.pop %v1082
  %v1084 = vmul.f32 %v899, 1.442695
  %v1085 = vpow.pop %v1084
  %v1086 = vmul.f32 %v900, 1.442695
  %v1087 = vpow.pop %v1086
  %v1088 = vmul.f32 %v901, 1.442695
  %v1089 = vpow.pop %v1088
  %v1090 = vmul.f32 %v902, 1.442695
  %v1091 = vpow.pop %v1090
  %v1092 = vmul.f32 %v903, 1.442695
  %v1093 = vpow.pop %v1092
  %v1094 = vmul.f32 %v904, 1.442695
  %v1095 = vpow.pop %v1094
  %v1096 = vmul.f32 %v905, 1.442695
  %v1097 = vpow.pop %v1096
  %v1098 = vmul.f32 %v906, 1.442695
  %v1099 = vpow.pop %v1098
  %v1100 = vmul.f32 %v907, 1.442695
  %v1101 = vpow.pop %v1100
  %v1102 = vmul.f32 %v908, 1.442695
  %v1103 = vpow.pop %v1102
  %v1104 = vmul.f32 %v909, 1.442695
  %v1105 = vpow.pop %v1104
  %v1106 = vmul.f32 %v910, 1.442695
  %v1107 = vpow.pop %v1106
  %v1108 = vmul.f32 %v911, 1.442695
  %v1109 = vpow.pop %v1108
  %v1110 = vmul.f32 %v912, 1.442695
  %v1111 = vpow.pop %v1110
  %v1112 = vmul.f32 %v913, 1.442695
  %v1113 = vpow.pop %v1112
  %v1114 = vmul.f32 %v914, 1.442695
  %v1115 = vpow.pop %v1114
  %v1116 = vmul.f32 %v915, 1.442695
  %v1117 = vpow.pop %v1116
  %v1118 = vmul.f32 %v916, 1.442695
  %v1119 = vpow.pop %v1118
  %v1120 = vmul.f32 %v917, 1.442695
  %v1121 = vpow.pop %v1120
  %v1122 = vmul.f32 %v918, 1.442695
  %v1123 = vpow.pop %v1122
  %v1124 = vmul.f32 %v919, 1.442695
  %v1125 = vpow.pop %v1124
  %v1126 = vmul.f32 %v920, 1.442695
  %v1127 = vpow.pop %v1126
  %v1128 = vmul.f32 %v921, 1.442695
  %v1129 = vpow.pop %v1128
  %v1130 = vmul.f32 %v922, 1.442695
  %v1131 = vpow.pop %v1130
  %v1132 = vmul.f32 %v923, 1.442695
  %v1133 = vpow.pop %v1132
  %v1134 = vmul.f32 %v924, 1.442695
  %v1135 = vpow.pop %v1134
  %v1136 = vmul.f32 %v925, 1.442695
  %v1137 = vpow.pop %v1136
  %v1138 = vmul.f32 %v926, 1.442695
  %v1139 = vpow.pop %v1138
  %v1140 = vmul.f32 %v927, 1.442695
  %v1141 = vpow.pop %v1140
  %v1142 = vmul.f32 %v928, 1.442695
  %v1143 = vpow.pop %v1142
  %v1144 = vmul.f32 %v929, 1.442695
  %v1145 = vpow.pop %v1144
  %v1146 = vmul.f32 %v930, 1.442695
  %v1147 = vpow.pop %v1146
  %v1148 = vmul.f32 %v931, 1.442695
  %v1149 = vpow.pop %v1148
  %v1150 = vmul.f32 %v932, 1.442695
  %v1151 = vpow.pop %v1150
  %v1152 = vmul.f32 %v933, 1.442695
  %v1153 = vpow.pop %v1152
  %v1154 = vmul.f32 %v934, 1.442695
  %v1155 = vpow.pop %v1154
  %v1156 = vmul.f32 %v935, 1.442695
  %v1157 = vpow.pop %v1156
  %v1158 = vmul.f32 %v936, 1.442695
  %v1159 = vpow.pop %v1158
  %v1160 = vmul.f32 %v937, 1.442695
  %v1161 = vpow.pop %v1160
  %v1162 = vmul.f32 %v938, 1.442695
  %v1163 = vpow.pop %v1162
  %v1164 = vmul.f32 %v939, 1.442695
  %v1165 = vpow.pop %v1164
  %v1166 = vmul.f32 %v940, 1.442695
  %v1167 = vpow.pop %v1166
  %v1168 = vmul.f32 %v941, 1.442695
  %v1169 = vpow.pop %v1168
  %v1170 = vmul.f32 %v942, 1.442695
  %v1171 = vpow.pop %v1170
  %v1172 = vmul.f32 %v943, 1.442695
  %v1173 = vpow.pop %v1172
  %v1174 = vmul.f32 %v944, 1.442695
  %v1175 = vpow.pop %v1174
  %v1176 = vmul.f32 %v945, 1.442695
  %v1177 = vpow.pop %v1176
  %v1178 = vmul.f32 %v946, 1.442695
  %v1179 = vpow.pop %v1178
  %v1180 = vmul.f32 %v947, 1.442695
  %v1181 = vpow.pop %v1180
  %v1182 = vmul.f32 %v948, 1.442695
  %v1183 = vpow.pop %v1182
  %v1184 = vmul.f32 %v949, 1.442695
  %v1185 = vpow.pop %v1184
  %v1186 = vmul.f32 %v950, 1.442695
  %v1187 = vpow.pop %v1186
  %v1188 = vmul.f32 %v951, 1.442695
  %v1189 = vpow.pop %v1188
  %v1190 = vmul.f32 %v952, 1.442695
  %v1191 = vpow.pop %v1190
  %v1192 = vmul.f32 %v953, 1.442695
  %v1193 = vpow.pop %v1192
  %v1194 = vmul.f32 %v954, 1.442695
  %v1195 = vpow.pop %v1194
  %v1196 = vmul.f32 %v955, 1.442695
  %v1197 = vpow.pop %v1196
  %v1198 = vmul.f32 %v956, 1.442695
  %v1199 = vpow.pop %v1198
  %v1200 = vmul.f32 %v957, 1.442695
  %v1201 = vpow.pop %v1200
  %v1202 = vmul.f32 %v958, 1.442695
  %v1203 = vpow.pop %v1202
  %v1204 = vmul.f32 %v959, 1.442695
  %v1205 = vpow.pop %v1204
  %v1206 = vmul.f32 %v960, 1.442695
  %v1207 = vpow.pop %v1206
  %v1208 = vmul.f32 %v961, 1.442695
  %v1209 = vpow.pop %v1208
  %v1210 = vmul.f32 %v962, 1.442695
  %v1211 = vpow.pop %v1210
  %v1212 = vmul.f32 %v963, 1.442695
  %v1213 = vpow.pop %v1212
  %v1214 = vmul.f32 %v964, 1.442695
  %v1215 = vpow.pop %v1214
  %v1216 = vmul.f32 %v965, 1.442695
  %v1217 = vpow.pop %v1216
  %v1218 = vmul.f32 %v966, 1.442695
  %v1219 = vpow.pop %v1218
  %v1220 = vmul.f32 %v967, 1.442695
  %v1221 = vpow.pop %v1220
  %v1222 = vmul.f32 %v968, 1.442695
  %v1223 = vpow.pop %v1222
  %v1224 = vmul.f32 %v969, 1.442695
  %v1225 = vpow.pop %v1224
  %v1226 = vadd.f32 %v971, 1.0
  %v1227 = vadd.f32 %v973, 1.0
  %v1228 = vadd.f32 %v975, 1.0
  %v1229 = vadd.f32 %v977, 1.0
  %v1230 = vadd.f32 %v979, 1.0
  %v1231 = vadd.f32 %v981, 1.0
  %v1232 = vadd.f32 %v983, 1.0
  %v1233 = vadd.f32 %v985, 1.0
  %v1234 = vadd.f32 %v987, 1.0
  %v1235 = vadd.f32 %v989, 1.0
  %v1236 = vadd.f32 %v991, 1.0
  %v1237 = vadd.f32 %v993, 1.0
  %v1238 = vadd.f32 %v995, 1.0
  %v1239 = vadd.f32 %v997, 1.0
  %v1240 = vadd.f32 %v999, 1.0
  %v1241 = vadd.f32 %v1001, 1.0
  %v1242 = vadd.f32 %v1003, 1.0
  %v1243 = vadd.f32 %v1005, 1.0
  %v1244 = vadd.f32 %v1007, 1.0
  %v1245 = vadd.f32 %v1009, 1.0
  %v1246 = vadd.f32 %v1011, 1.0
  %v1247 = vadd.f32 %v1013, 1.0
  %v1248 = vadd.f32 %v1015, 1.0
  %v1249 = vadd.f32 %v1017, 1.0
  %v1250 = vadd.f32 %v1019, 1.0
  %v1251 = vadd.f32 %v1021, 1.0
  %v1252 = vadd.f32 %v1023, 1.0
  %v1253 = vadd.f32 %v1025, 1.0
  %v1254 = vadd.f32 %v1027, 1.0
  %v1255 = vadd.f32 %v1029, 1.0
  %v1256 = vadd.f32 %v1031, 1.0
  %v1257 = vadd.f32 %v1033, 1.0
  %v1258 = vadd.f32 %v1035, 1.0
  %v1259 = vadd.f32 %v1037, 1.0
  %v1260 = vadd.f32 %v1039, 1.0
  %v1261 = vadd.f32 %v1041, 1.0
  %v1262 = vadd.f32 %v1043, 1.0
  %v1263 = vadd.f32 %v1045, 1.0
  %v1264 = vadd.f32 %v1047, 1.0
  %v1265 = vadd.f32 %v1049, 1.0
  %v1266 = vadd.f32 %v1051, 1.0
  %v1267 = vadd.f32 %v1053, 1.0
  %v1268 = vadd.f32 %v1055, 1.0
  %v1269 = vadd.f32 %v1057, 1.0
  %v1270 = vadd.f32 %v1059, 1.0
  %v1271 = vadd.f32 %v1061, 1.0
  %v1272 = vadd.f32 %v1063, 1.0
  %v1273 = vadd.f32 %v1065, 1.0
  %v1274 = vadd.f32 %v1067, 1.0
  %v1275 = vadd.f32 %v1069, 1.0
  %v1276 = vadd.f32 %v1071, 1.0
  %v1277 = vadd.f32 %v1073, 1.0
  %v1278 = vadd.f32 %v1075, 1.0
  %v1279 = vadd.f32 %v1077, 1.0
  %v1280 = vadd.f32 %v1079, 1.0
  %v1281 = vadd.f32 %v1081, 1.0
  %v1282 = vadd.f32 %v1083, 1.0
  %v1283 = vadd.f32 %v1085, 1.0
  %v1284 = vadd.f32 %v1087, 1.0
  %v1285 = vadd.f32 %v1089, 1.0
  %v1286 = vadd.f32 %v1091, 1.0
  %v1287 = vadd.f32 %v1093, 1.0
  %v1288 = vadd.f32 %v1095, 1.0
  %v1289 = vadd.f32 %v1097, 1.0
  %v1290 = vadd.f32 %v1099, 1.0
  %v1291 = vadd.f32 %v1101, 1.0
  %v1292 = vadd.f32 %v1103, 1.0
  %v1293 = vadd.f32 %v1105, 1.0
  %v1294 = vadd.f32 %v1107, 1.0
  %v1295 = vadd.f32 %v1109, 1.0
  %v1296 = vadd.f32 %v1111, 1.0
  %v1297 = vadd.f32 %v1113, 1.0
  %v1298 = vadd.f32 %v1115, 1.0
  %v1299 = vadd.f32 %v1117, 1.0
  %v1300 = vadd.f32 %v1119, 1.0
  %v1301 = vadd.f32 %v1121, 1.0
  %v1302 = vadd.f32 %v1123, 1.0
  %v1303 = vadd.f32 %v1125, 1.0
  %v1304 = vadd.f32 %v1127, 1.0
  %v1305 = vadd.f32 %v1129, 1.0
  %v1306 = vadd.f32 %v1131, 1.0
  %v1307 = vadd.f32 %v1133, 1.0
  %v1308 = vadd.f32 %v1135, 1.0
  %v1309 = vadd.f32 %v1137, 1.0
  %v1310 = vadd.f32 %v1139, 1.0
  %v1311 = vadd.f32 %v1141, 1.0
  %v1312 = vadd.f32 %v1143, 1.0
  %v1313 = vadd.f32 %v1145, 1.0
  %v1314 = vadd.f32 %v1147, 1.0
  %v1315 = vadd.f32 %v1149, 1.0
  %v1316 = vadd.f32 %v1151, 1.0
  %v1317 = vadd.f32 %v1153, 1.0
  %v1318 = vadd.f32 %v1155, 1.0
  %v1319 = vadd.f32 %v1157, 1.0
  %v1320 = vadd.f32 %v1159, 1.0
  %v1321 = vadd.f32 %v1161, 1.0
  %v1322 = vadd.f32 %v1163, 1.0
  %v1323 = vadd.f32 %v1165, 1.0
  %v1324 = vadd.f32 %v1167, 1.0
  %v1325 = vadd.f32 %v1169, 1.0
  %v1326 = vadd.f32 %v1171, 1.0
  %v1327 = vadd.f32 %v1173, 1.0
  %v1328 = vadd.f32 %v1175, 1.0
  %v1329 = vadd.f32 %v1177, 1.0
  %v1330 = vadd.f32 %v1179, 1.0
  %v1331 = vadd.f32 %v1181, 1.0
  %v1332 = vadd.f32 %v1183, 1.0
  %v1333 = vadd.f32 %v1185, 1.0
  %v1334 = vadd.f32 %v1187, 1.0
  %v1335 = vadd.f32 %v1189, 1.0
  %v1336 = vadd.f32 %v1191, 1.0
  %v1337 = vadd.f32 %v1193, 1.0
  %v1338 = vadd.f32 %v1195, 1.0
  %v1339 = vadd.f32 %v1197, 1.0
  %v1340 = vadd.f32 %v1199, 1.0
  %v1341 = vadd.f32 %v1201, 1.0
  %v1342 = vadd.f32 %v1203, 1.0
  %v1343 = vadd.f32 %v1205, 1.0
  %v1344 = vadd.f32 %v1207, 1.0
  %v1345 = vadd.f32 %v1209, 1.0
  %v1346 = vadd.f32 %v1211, 1.0
  %v1347 = vadd.f32 %v1213, 1.0
  %v1348 = vadd.f32 %v1215, 1.0
  %v1349 = vadd.f32 %v1217, 1.0
  %v1350 = vadd.f32 %v1219, 1.0
  %v1351 = vadd.f32 %v1221, 1.0
  %v1352 = vadd.f32 %v1223, 1.0
  %v1353 = vadd.f32 %v1225, 1.0
  %v1354 = vrcp.pop %v1226
  %v1355 = vmul.f32 1.0, %v1354
  %v1356 = vrcp.pop %v1227
  %v1357 = vmul.f32 1.0, %v1356
  %v1358 = vrcp.pop %v1228
  %v1359 = vmul.f32 1.0, %v1358
  %v1360 = vrcp.pop %v1229
  %v1361 = vmul.f32 1.0, %v1360
  %v1362 = vrcp.pop %v1230
  %v1363 = vmul.f32 1.0, %v1362
  %v1364 = vrcp.pop %v1231
  %v1365 = vmul.f32 1.0, %v1364
  %v1366 = vrcp.pop %v1232
  %v1367 = vmul.f32 1.0, %v1366
  %v1368 = vrcp.pop %v1233
  %v1369 = vmul.f32 1.0, %v1368
  %v1370 = vrcp.pop %v1234
  %v1371 = vmul.f32 1.0, %v1370
  %v1372 = vrcp.pop %v1235
  %v1373 = vmul.f32 1.0, %v1372
  %v1374 = vrcp.pop %v1236
  %v1375 = vmul.f32 1.0, %v1374
  %v1376 = vrcp.pop %v1237
  %v1377 = vmul.f32 1.0, %v1376
  %v1378 = vrcp.pop %v1238
  %v1379 = vmul.f32 1.0, %v1378
  %v1380 = vrcp.pop %v1239
  %v1381 = vmul.f32 1.0, %v1380
  %v1382 = vrcp.pop %v1240
  %v1383 = vmul.f32 1.0, %v1382
  %v1384 = vrcp.pop %v1241
  %v1385 = vmul.f32 1.0, %v1384
  %v1386 = vrcp.pop %v1242
  %v1387 = vmul.f32 1.0, %v1386
  %v1388 = vrcp.pop %v1243
  %v1389 = vmul.f32 1.0, %v1388
  %v1390 = vrcp.pop %v1244
  %v1391 = vmul.f32 1.0, %v1390
  %v1392 = vrcp.pop %v1245
  %v1393 = vmul.f32 1.0, %v1392
  %v1394 = vrcp.pop %v1246
  %v1395 = vmul.f32 1.0, %v1394
  %v1396 = vrcp.pop %v1247
  %v1397 = vmul.f32 1.0, %v1396
  %v1398 = vrcp.pop %v1248
  %v1399 = vmul.f32 1.0, %v1398
  %v1400 = vrcp.pop %v1249
  %v1401 = vmul.f32 1.0, %v1400
  %v1402 = vrcp.pop %v1250
  %v1403 = vmul.f32 1.0, %v1402
  %v1404 = vrcp.pop %v1251
  %v1405 = vmul.f32 1.0, %v1404
  %v1406 = vrcp.pop %v1252
  %v1407 = vmul.f32 1.0, %v1406
  %v1408 = vrcp.pop %v1253
  %v1409 = vmul.f32 1.0, %v1408
  %v1410 = vrcp.pop %v1254
  %v1411 = vmul.f32 1.0, %v1410
  %v1412 = vrcp.pop %v1255
  %v1413 = vmul.f32 1.0, %v1412
  %v1414 = vrcp.pop %v1256
  %v1415 = vmul.f32 1.0, %v1414
  %v1416 = vrcp.pop %v1257
  %v1417 = vmul.f32 1.0, %v1416
  %v1418 = vrcp.pop %v1258
  %v1419 = vmul.f32 1.0, %v1418
  %v1420 = vrcp.pop %v1259
  %v1421 = vmul.f32 1.0, %v1420
  %v1422 = vrcp.pop %v1260
  %v1423 = vmul.f32 1.0, %v1422
  %v1424 = vrcp.pop %v1261
  %v1425 = vmul.f32 1.0, %v1424
  %v1426 = vrcp.pop %v1262
  %v1427 = vmul.f32 1.0, %v1426
  %v1428 = vrcp.pop %v1263
  %v1429 = vmul.f32 1.0, %v1428
  %v1430 = vrcp.pop %v1264
  %v1431 = vmul.f32 1.0, %v1430
  %v1432 = vrcp.pop %v1265
  %v1433 = vmul.f32 1.0, %v1432
  %v1434 = vrcp.pop %v1266
  %v1435 = vmul.f32 1.0, %v1434
  %v1436 = vrcp.pop %v1267
  %v1437 = vmul.f32 1.0, %v1436
  %v1438 = vrcp.pop %v1268
  %v1439 = vmul.f32 1.0, %v1438
  %v1440 = vrcp.pop %v1269
  %v1441 = vmul.f32 1.0, %v1440
  %v1442 = vrcp.pop %v1270
  %v1443 = vmul.f32 1.0, %v1442
  %v1444 = vrcp.pop %v1271
  %v1445 = vmul.f32 1.0, %v1444
  %v1446 = vrcp.pop %v1272
  %v1447 = vmul.f32 1.0, %v1446
  %v1448 = vrcp.pop %v1273
  %v1449 = vmul.f32 1.0, %v1448
  %v1450 = vrcp.pop %v1274
  %v1451 = vmul.f32 1.0, %v1450
  %v1452 = vrcp.pop %v1275
  %v1453 = vmul.f32 1.0, %v1452
  %v1454 = vrcp.pop %v1276
  %v1455 = vmul.f32 1.0, %v1454
  %v1456 = vrcp.pop %v1277
  %v1457 = vmul.f32 1.0, %v1456
  %v1458 = vrcp.pop %v1278
  %v1459 = vmul.f32 1.0, %v1458
  %v1460 = vrcp.pop %v1279
  %v1461 = vmul.f32 1.0, %v1460
  %v1462 = vrcp.pop %v1280
  %v1463 = vmul.f32 1.0, %v1462
  %v1464 = vrcp.pop %v1281
  %v1465 = vmul.f32 1.0, %v1464
  %v1466 = vrcp.pop %v1282
  %v1467 = vmul.f32 1.0, %v1466
  %v1468 = vrcp.pop %v1283
  %v1469 = vmul.f32 1.0, %v1468
  %v1470 = vrcp.pop %v1284
  %v1471 = vmul.f32 1.0, %v1470
  %v1472 = vrcp.pop %v1285
  %v1473 = vmul.f32 1.0, %v1472
  %v1474 = vrcp.pop %v1286
  %v1475 = vmul.f32 1.0, %v1474
  %v1476 = vrcp.pop %v1287
  %v1477 = vmul.f32 1.0, %v1476
  %v1478 = vrcp.pop %v1288
  %v1479 = vmul.f32 1.0, %v1478
  %v1480 = vrcp.pop %v1289
  %v1481 = vmul.f32 1.0, %v1480
  %v1482 = vrcp.pop %v1290
  %v1483 = vmul.f32 1.0, %v1482
  %v1484 = vrcp.pop %v1291
  %v1485 = vmul.f32 1.0, %v1484
  %v1486 = vrcp.pop %v1292
  %v1487 = vmul.f32 1.0, %v1486
  %v1488 = vrcp.pop %v1293
  %v1489 = vmul.f32 1.0, %v1488
  %v1490 = vrcp.pop %v1294
  %v1491 = vmul.f32 1.0, %v1490
  %v1492 = vrcp.pop %v1295
  %v1493 = vmul.f32 1.0, %v1492
  %v1494 = vrcp.pop %v1296
  %v1495 = vmul.f32 1.0, %v1494
  %v1496 = vrcp.pop %v1297
  %v1497 = vmul.f32 1.0, %v1496
  %v1498 = vrcp.pop %v1298
  %v1499 = vmul.f32 1.0, %v1498
  %v1500 = vrcp.pop %v1299
  %v1501 = vmul.f32 1.0, %v1500
  %v1502 = vrcp.pop %v1300
  %v1503 = vmul.f32 1.0, %v1502
  %v1504 = vrcp.pop %v1301
  %v1505 = vmul.f32 1.0, %v1504
  %v1506 = vrcp.pop %v1302
  %v1507 = vmul.f32 1.0, %v1506
  %v1508 = vrcp.pop %v1303
  %v1509 = vmul.f32 1.0, %v1508
  %v1510 = vrcp.pop %v1304
  %v1511 = vmul.f32 1.0, %v1510
  %v1512 = vrcp.pop %v1305
  %v1513 = vmul.f32 1.0, %v1512
  %v1514 = vrcp.pop %v1306
  %v1515 = vmul.f32 1.0, %v1514
  %v1516 = vrcp.pop %v1307
  %v1517 = vmul.f32 1.0, %v1516
  %v1518 = vrcp.pop %v1308
  %v1519 = vmul.f32 1.0, %v1518
  %v1520 = vrcp.pop %v1309
  %v1521 = vmul.f32 1.0, %v1520
  %v1522 = vrcp.pop %v1310
  %v1523 = vmul.f32 1.0, %v1522
  %v1524 = vrcp.pop %v1311
  %v1525 = vmul.f32 1.0, %v1524
  %v1526 = vrcp.pop %v1312
  %v1527 = vmul.f32 1.0, %v1526
  %v1528 = vrcp.pop %v1313
  %v1529 = vmul.f32 1.0, %v1528
  %v1530 = vrcp.pop %v1314
  %v1531 = vmul.f32 1.0, %v1530
  %v1532 = vrcp.pop %v1315
  %v1533 = vmul.f32 1.0, %v1532
  %v1534 = vrcp.pop %v1316
  %v1535 = vmul.f32 1.0, %v1534
  %v1536 = vrcp.pop %v1317
  %v1537 = vmul.f32 1.0, %v1536
  %v1538 = vrcp.pop %v1318
  %v1539 = vmul.f32 1.0, %v1538
  %v1540 = vrcp.pop %v1319
  %v1541 = vmul.f32 1.0, %v1540
  %v1542 = vrcp.pop %v1320
  %v1543 = vmul.f32 1.0, %v1542
  %v1544 = vrcp.pop %v1321
  %v1545 = vmul.f32 1.0, %v1544
  %v1546 = vrcp.pop %v1322
  %v1547 = vmul.f32 1.0, %v1546
  %v1548 = vrcp.pop %v1323
  %v1549 = vmul.f32 1.0, %v1548
  %v1550 = vrcp.pop %v1324
  %v1551 = vmul.f32 1.0, %v1550
  %v1552 = vrcp.pop %v1325
  %v1553 = vmul.f32 1.0, %v1552
  %v1554 = vrcp.pop %v1326
  %v1555 = vmul.f32 1.0, %v1554
  %v1556 = vrcp.pop %v1327
  %v1557 = vmul.f32 1.0, %v1556
  %v1558 = vrcp.pop %v1328
  %v1559 = vmul.f32 1.0, %v1558
  %v1560 = vrcp.pop %v1329
  %v1561 = vmul.f32 1.0, %v1560
  %v1562 = vrcp.pop %v1330
  %v1563 = vmul.f32 1.0, %v1562
  %v1564 = vrcp.pop %v1331
  %v1565 = vmul.f32 1.0, %v1564
  %v1566 = vrcp.pop %v1332
  %v1567 = vmul.f32 1.0, %v1566
  %v1568 = vrcp.pop %v1333
  %v1569 = vmul.f32 1.0, %v1568
  %v1570 = vrcp.pop %v1334
  %v1571 = vmul.f32 1.0, %v1570
  %v1572 = vrcp.pop %v1335
  %v1573 = vmul.f32 1.0, %v1572
  %v1574 = vrcp.pop %v1336
  %v1575 = vmul.f32 1.0, %v1574
  %v1576 = vrcp.pop %v1337
  %v1577 = vmul.f32 1.0, %v1576
  %v1578 = vrcp.pop %v1338
  %v1579 = vmul.f32 1.0, %v1578
  %v1580 = vrcp.pop %v1339
  %v1581 = vmul.f32 1.0, %v1580
  %v1582 = vrcp.pop %v1340
  %v1583 = vmul.f32 1.0, %v1582
  %v1584 = vrcp.pop %v1341
  %v1585 = vmul.f32 1.0, %v1584
  %v1586 = vrcp.pop %v1342
  %v1587 = vmul.f32 1.0, %v1586
  %v1588 = vrcp.pop %v1343
  %v1589 = vmul.f32 1.0, %v1588
  %v1590 = vrcp.pop %v1344
  %v1591 = vmul.f32 1.0, %v1590
  %v1592 = vrcp.pop %v1345
  %v1593 = vmul.f32 1.0, %v1592
  %v1594 = vrcp.pop %v1346
  %v1595 = vmul.f32 1.0, %v1594
  %v1596 = vrcp.pop %v1347
  %v1597 = vmul.f32 1.0, %v1596
  %v1598 = vrcp.pop %v1348
  %v1599 = vmul.f32 1.0, %v1598
  %v1600 = vrcp.pop %v1349
  %v1601 = vmul.f32 1.0, %v1600
  %v1602 = vrcp.pop %v1350
  %v1603 = vmul.f32 1.0, %v1602
  %v1604 = vrcp.pop %v1351
  %v1605 = vmul.f32 1.0, %v1604
  %v1606 = vrcp.pop %v1352
  %v1607 = vmul.f32 1.0, %v1606
  %v1608 = vrcp.pop %v1353
  %v1609 = vmul.f32 1.0, %v1608
  %v1610 = vmul.f32 %v714, %v1355
  %v1611 = vmul.f32 %v715, %v1357
  %v1612 = vmul.f32 %v716, %v1359
  %v1613 = vmul.f32 %v717, %v1361
  %v1614 = vmul.f32 %v718, %v1363
  %v1615 = vmul.f32 %v719, %v1365
  %v1616 = vmul.f32 %v720, %v1367
  %v1617 = vmul.f32 %v721, %v1369
  %v1618 = vmul.f32 %v722, %v1371
  %v1619 = vmul.f32 %v723, %v1373
  %v1620 = vmul.f32 %v724, %v1375
  %v1621 = vmul.f32 %v725, %v1377
  %v1622 = vmul.f32 %v726, %v1379
  %v1623 = vmul.f32 %v727, %v1381
  %v1624 = vmul.f32 %v728, %v1383
  %v1625 = vmul.f32 %v729, %v1385
  %v1626 = vmul.f32 %v730, %v1387
  %v1627 = vmul.f32 %v731, %v1389
  %v1628 = vmul.f32 %v732, %v1391
  %v1629 = vmul.f32 %v733, %v1393
  %v1630 = vmul.f32 %v734, %v1395
  %v1631 = vmul.f32 %v735, %v1397
  %v1632 = vmul.f32 %v736, %v1399
  %v1633 = vmul.f32 %v737, %v1401
  %v1634 = vmul.f32 %v738, %v1403
  %v1635 = vmul.f32 %v739, %v1405
  %v1636 = vmul.f32 %v740, %v1407
  %v1637 = vmul.f32 %v741, %v1409
  %v1638 = vmul.f32 %v742, %v1411
  %v1639 = vmul.f32 %v743, %v1413
  %v1640 = vmul.f32 %v744, %v1415
  %v1641 = vmul.f32 %v745, %v1417
  %v1642 = vmul.f32 %v746, %v1419
  %v1643 = vmul.f32 %v747, %v1421
  %v1644 = vmul.f32 %v748, %v1423
  %v1645 = vmul.f32 %v749, %v1425
  %v1646 = vmul.f32 %v750, %v1427
  %v1647 = vmul.f32 %v751, %v1429
  %v1648 = vmul.f32 %v752, %v1431
  %v1649 = vmul.f32 %v753, %v1433
  %v1650 = vmul.f32 %v754, %v1435
  %v1651 = vmul.f32 %v755, %v1437
  %v1652 = vmul.f32 %v756, %v1439
  %v1653 = vmul.f32 %v757, %v1441
  %v1654 = vmul.f32 %v758, %v1443
  %v1655 = vmul.f32 %v759, %v1445
  %v1656 = vmul.f32 %v760, %v1447
  %v1657 = vmul.f32 %v761, %v1449
  %v1658 = vmul.f32 %v762, %v1451
  %v1659 = vmul.f32 %v763, %v1453
  %v1660 = vmul.f32 %v764, %v1455
  %v1661 = vmul.f32 %v765, %v1457
  %v1662 = vmul.f32 %v766, %v1459
  %v1663 = vmul.f32 %v767, %v1461
  %v1664 = vmul.f32 %v768, %v1463
  %v1665 = vmul.f32 %v769, %v1465
  %v1666 = vmul.f32 %v770, %v1467
  %v1667 = vmul.f32 %v771, %v1469
  %v1668 = vmul.f32 %v772, %v1471
  %v1669 = vmul.f32 %v773, %v1473
  %v1670 = vmul.f32 %v774, %v1475
  %v1671 = vmul.f32 %v775, %v1477
  %v1672 = vmul.f32 %v776, %v1479
  %v1673 = vmul.f32 %v777, %v1481
  %v1674 = vmul.f32 %v778, %v1483
  %v1675 = vmul.f32 %v779, %v1485
  %v1676 = vmul.f32 %v780, %v1487
  %v1677 = vmul.f32 %v781, %v1489
  %v1678 = vmul.f32 %v782, %v1491
  %v1679 = vmul.f32 %v783, %v1493
  %v1680 = vmul.f32 %v784, %v1495
  %v1681 = vmul.f32 %v785, %v1497
  %v1682 = vmul.f32 %v786, %v1499
  %v1683 = vmul.f32 %v787, %v1501
  %v1684 = vmul.f32 %v788, %v1503
  %v1685 = vmul.f32 %v789, %v1505
  %v1686 = vmul.f32 %v790, %v1507
  %v1687 = vmul.f32 %v791, %v1509
  %v1688 = vmul.f32 %v792, %v1511
  %v1689 = vmul.f32 %v793, %v1513
  %v1690 = vmul.f32 %v794, %v1515
  %v1691 = vmul.f32 %v795, %v1517
  %v1692 = vmul.f32 %v796, %v1519
  %v1693 = vmul.f32 %v797, %v1521
  %v1694 = vmul.f32 %v798, %v1523
  %v1695 = vmul.f32 %v799, %v1525
  %v1696 = vmul.f32 %v800, %v1527
  %v1697 = vmul.f32 %v801, %v1529
  %v1698 = vmul.f32 %v802, %v1531
  %v1699 = vmul.f32 %v803, %v1533
  %v1700 = vmul.f32 %v804, %v1535
  %v1701 = vmul.f32 %v805, %v1537
  %v1702 = vmul.f32 %v806, %v1539
  %v1703 = vmul.f32 %v807, %v1541
  %v1704 = vmul.f32 %v808, %v1543
  %v1705 = vmul.f32 %v809, %v1545
  %v1706 = vmul.f32 %v810, %v1547
  %v1707 = vmul.f32 %v811, %v1549
  %v1708 = vmul.f32 %v812, %v1551
  %v1709 = vmul.f32 %v813, %v1553
  %v1710 = vmul.f32 %v814, %v1555
  %v1711 = vmul.f32 %v815, %v1557
  %v1712 = vmul.f32 %v816, %v1559
  %v1713 = vmul.f32 %v817, %v1561
  %v1714 = vmul.f32 %v818, %v1563
  %v1715 = vmul.f32 %v819, %v1565
  %v1716 = vmul.f32 %v820, %v1567
  %v1717 = vmul.f32 %v821, %v1569
  %v1718 = vmul.f32 %v822, %v1571
  %v1719 = vmul.f32 %v823, %v1573
  %v1720 = vmul.f32 %v824, %v1575
  %v1721 = vmul.f32 %v825, %v1577
  %v1722 = vmul.f32 %v826, %v1579
  %v1723 = vmul.f32 %v827, %v1581
  %v1724 = vmul.f32 %v828, %v1583
  %v1725 = vmul.f32 %v829, %v1585
  %v1726 = vmul.f32 %v830, %v1587
  %v1727 = vmul.f32 %v831, %v1589
  %v1728 = vmul.f32 %v832, %v1591
  %v1729 = vmul.f32 %v833, %v1593
  %v1730 = vmul.f32 %v834, %v1595
  %v1731 = vmul.f32 %v835, %v1597
  %v1732 = vmul.f32 %v836, %v1599
  %v1733 = vmul.f32 %v837, %v1601
  %v1734 = vmul.f32 %v838, %v1603
  %v1735 = vmul.f32 %v839, %v1605
  %v1736 = vmul.f32 %v840, %v1607
  %v1737 = vmul.f32 %v841, %v1609
  %1738 = vst [vmem:[%s4] sm:$0xff] %v1610
  %1739 = vst [vmem:[%s4 + $0x8] sm:$0xff] %v1611
  %1740 = vst [vmem:[%s4 + $0x10] sm:$0xff] %v1612
  %1741 = vst [vmem:[%s4 + $0x18] sm:$0xff] %v1613
  %1742 = vst [vmem:[%s4 + $0x20] sm:$0xff] %v1614
  %1743 = vst [vmem:[%s4 + $0x28] sm:$0xff] %v1615
  %1744 = vst [vmem:[%s4 + $0x30] sm:$0xff] %v1616
  %1745 = vst [vmem:[%s4 + $0x38] sm:$0xff] %v1617
  %1746 = vst [vmem:[%s4 + $0x40] sm:$0xff] %v1618
  %1747 = vst [vmem:[%s4 + $0x48] sm:$0xff] %v1619
  %1748 = vst [vmem:[%s4 + $0x50] sm:$0xff] %v1620
  %1749 = vst [vmem:[%s4 + $0x58] sm:$0xff] %v1621
  %1750 = vst [vmem:[%s4 + $0x60] sm:$0xff] %v1622
  %1751 = vst [vmem:[%s4 + $0x68] sm:$0xff] %v1623
  %1752 = vst [vmem:[%s4 + $0x70] sm:$0xff] %v1624
  %1753 = vst [vmem:[%s4 + $0x78] sm:$0xff] %v1625
  %1754 = vst [vmem:[%s4 + $0x80] sm:$0xff] %v1626
  %1755 = vst [vmem:[%s4 + $0x88] sm:$0xff] %v1627
  %1756 = vst [vmem:[%s4 + $0x90] sm:$0xff] %v1628
  %1757 = vst [vmem:[%s4 + $0x98] sm:$0xff] %v1629
  %1758 = vst [vmem:[%s4 + $0xa0] sm:$0xff] %v1630
  %1759 = vst [vmem:[%s4 + $0xa8] sm:$0xff] %v1631
  %1760 = vst [vmem:[%s4 + $0xb0] sm:$0xff] %v1632
  %1761 = vst [vmem:[%s4 + $0xb8] sm:$0xff] %v1633
  %1762 = vst [vmem:[%s4 + $0xc0] sm:$0xff] %v1634
  %1763 = vst [vmem:[%s4 + $0xc8] sm:$0xff] %v1635
  %1764 = vst [vmem:[%s4 + $0xd0] sm:$0xff] %v1636
  %1765 = vst [vmem:[%s4 + $0xd8] sm:$0xff] %v1637
  %1766 = vst [vmem:[%s4 + $0xe0] sm:$0xff] %v1638
  %1767 = vst [vmem:[%s4 + $0xe8] sm:$0xff] %v1639
  %1768 = vst [vmem:[%s4 + $0xf0] sm:$0xff] %v1640
  %1769 = vst [vmem:[%s4 + $0xf8] sm:$0xff] %v1641
  %1770 = vst [vmem:[%s4 + $0x100] sm:$0xff] %v1642
  %1771 = vst [vmem:[%s4 + $0x108] sm:$0xff] %v1643
  %1772 = vst [vmem:[%s4 + $0x110] sm:$0xff] %v1644
  %1773 = vst [vmem:[%s4 + $0x118] sm:$0xff] %v1645
  %1774 = vst [vmem:[%s4 + $0x120] sm:$0xff] %v1646
  %1775 = vst [vmem:[%s4 + $0x128] sm:$0xff] %v1647
  %1776 = vst [vmem:[%s4 + $0x130] sm:$0xff] %v1648
  %1777 = vst [vmem:[%s4 + $0x138] sm:$0xff] %v1649
  %1778 = vst [vmem:[%s4 + $0x140] sm:$0xff] %v1650
  %1779 = vst [vmem:[%s4 + $0x148] sm:$0xff] %v1651
  %1780 = vst [vmem:[%s4 + $0x150] sm:$0xff] %v1652
  %1781 = vst [vmem:[%s4 + $0x158] sm:$0xff] %v1653
  %1782 = vst [vmem:[%s4 + $0x160] sm:$0xff] %v1654
  %1783 = vst [vmem:[%s4 + $0x168] sm:$0xff] %v1655
  %1784 = vst [vmem:[%s4 + $0x170] sm:$0xff] %v1656
  %1785 = vst [vmem:[%s4 + $0x178] sm:$0xff] %v1657
  %1786 = vst [vmem:[%s4 + $0x180] sm:$0xff] %v1658
  %1787 = vst [vmem:[%s4 + $0x188] sm:$0xff] %v1659
  %1788 = vst [vmem:[%s4 + $0x190] sm:$0xff] %v1660
  %1789 = vst [vmem:[%s4 + $0x198] sm:$0xff] %v1661
  %1790 = vst [vmem:[%s4 + $0x1a0] sm:$0xff] %v1662
  %1791 = vst [vmem:[%s4 + $0x1a8] sm:$0xff] %v1663
  %1792 = vst [vmem:[%s4 + $0x1b0] sm:$0xff] %v1664
  %1793 = vst [vmem:[%s4 + $0x1b8] sm:$0xff] %v1665
  %1794 = vst [vmem:[%s4 + $0x1c0] sm:$0xff] %v1666
  %1795 = vst [vmem:[%s4 + $0x1c8] sm:$0xff] %v1667
  %1796 = vst [vmem:[%s4 + $0x1d0] sm:$0xff] %v1668
  %1797 = vst [vmem:[%s4 + $0x1d8] sm:$0xff] %v1669
  %1798 = vst [vmem:[%s4 + $0x1e0] sm:$0xff] %v1670
  %1799 = vst [vmem:[%s4 + $0x1e8] sm:$0xff] %v1671
  %1800 = vst [vmem:[%s4 + $0x1f0] sm:$0xff] %v1672
  %1801 = vst [vmem:[%s4 + $0x1f8] sm:$0xff] %v1673
  %1802 = vst [vmem:[%s4 + $0x200] sm:$0xff] %v1674
  %1803 = vst [vmem:[%s4 + $0x208] sm:$0xff] %v1675
  %1804 = vst [vmem:[%s4 + $0x210] sm:$0xff] %v1676
  %1805 = vst [vmem:[%s4 + $0x218] sm:$0xff] %v1677
  %1806 = vst [vmem:[%s4 + $0x220] sm:$0xff] %v1678
  %1807 = vst [vmem:[%s4 + $0x228] sm:$0xff] %v1679
  %1808 = vst [vmem:[%s4 + $0x230] sm:$0xff] %v1680
  %1809 = vst [vmem:[%s4 + $0x238] sm:$0xff] %v1681
  %1810 = vst [vmem:[%s4 + $0x240] sm:$0xff] %v1682
  %1811 = vst [vmem:[%s4 + $0x248] sm:$0xff] %v1683
  %1812 = vst [vmem:[%s4 + $0x250] sm:$0xff] %v1684
  %1813 = vst [vmem:[%s4 + $0x258] sm:$0xff] %v1685
  %1814 = vst [vmem:[%s4 + $0x260] sm:$0xff] %v1686
  %1815 = vst [vmem:[%s4 + $0x268] sm:$0xff] %v1687
  %1816 = vst [vmem:[%s4 + $0x270] sm:$0xff] %v1688
  %1817 = vst [vmem:[%s4 + $0x278] sm:$0xff] %v1689
  %1818 = vst [vmem:[%s4 + $0x280] sm:$0xff] %v1690
  %1819 = vst [vmem:[%s4 + $0x288] sm:$0xff] %v1691
  %1820 = vst [vmem:[%s4 + $0x290] sm:$0xff] %v1692
  %1821 = vst [vmem:[%s4 + $0x298] sm:$0xff] %v1693
  %1822 = vst [vmem:[%s4 + $0x2a0] sm:$0xff] %v1694
  %1823 = vst [vmem:[%s4 + $0x2a8] sm:$0xff] %v1695
  %1824 = vst [vmem:[%s4 + $0x2b0] sm:$0xff] %v1696
  %1825 = vst [vmem:[%s4 + $0x2b8] sm:$0xff] %v1697
  %1826 = vst [vmem:[%s4 + $0x2c0] sm:$0xff] %v1698
  %1827 = vst [vmem:[%s4 + $0x2c8] sm:$0xff] %v1699
  %1828 = vst [vmem:[%s4 + $0x2d0] sm:$0xff] %v1700
  %1829 = vst [vmem:[%s4 + $0x2d8] sm:$0xff] %v1701
  %1830 = vst [vmem:[%s4 + $0x2e0] sm:$0xff] %v1702
  %1831 = vst [vmem:[%s4 + $0x2e8] sm:$0xff] %v1703
  %1832 = vst [vmem:[%s4 + $0x2f0] sm:$0xff] %v1704
  %1833 = vst [vmem:[%s4 + $0x2f8] sm:$0xff] %v1705
  %1834 = vst [vmem:[%s4 + $0x300] sm:$0xff] %v1706
  %1835 = vst [vmem:[%s4 + $0x308] sm:$0xff] %v1707
  %1836 = vst [vmem:[%s4 + $0x310] sm:$0xff] %v1708
  %1837 = vst [vmem:[%s4 + $0x318] sm:$0xff] %v1709
  %1838 = vst [vmem:[%s4 + $0x320] sm:$0xff] %v1710
  %1839 = vst [vmem:[%s4 + $0x328] sm:$0xff] %v1711
  %1840 = vst [vmem:[%s4 + $0x330] sm:$0xff] %v1712
  %1841 = vst [vmem:[%s4 + $0x338] sm:$0xff] %v1713
  %1842 = vst [vmem:[%s4 + $0x340] sm:$0xff] %v1714
  %1843 = vst [vmem:[%s4 + $0x348] sm:$0xff] %v1715
  %1844 = vst [vmem:[%s4 + $0x350] sm:$0xff] %v1716
  %1845 = vst [vmem:[%s4 + $0x358] sm:$0xff] %v1717
  %1846 = vst [vmem:[%s4 + $0x360] sm:$0xff] %v1718
  %1847 = vst [vmem:[%s4 + $0x368] sm:$0xff] %v1719
  %1848 = vst [vmem:[%s4 + $0x370] sm:$0xff] %v1720
  %1849 = vst [vmem:[%s4 + $0x378] sm:$0xff] %v1721
  %1850 = vst [vmem:[%s4 + $0x380] sm:$0xff] %v1722
  %1851 = vst [vmem:[%s4 + $0x388] sm:$0xff] %v1723
  %1852 = vst [vmem:[%s4 + $0x390] sm:$0xff] %v1724
  %1853 = vst [vmem:[%s4 + $0x398] sm:$0xff] %v1725
  %1854 = vst [vmem:[%s4 + $0x3a0] sm:$0xff] %v1726
  %1855 = vst [vmem:[%s4 + $0x3a8] sm:$0xff] %v1727
  %1856 = vst [vmem:[%s4 + $0x3b0] sm:$0xff] %v1728
  %1857 = vst [vmem:[%s4 + $0x3b8] sm:$0xff] %v1729
  %1858 = vst [vmem:[%s4 + $0x3c0] sm:$0xff] %v1730
  %1859 = vst [vmem:[%s4 + $0x3c8] sm:$0xff] %v1731
  %1860 = vst [vmem:[%s4 + $0x3d0] sm:$0xff] %v1732
  %1861 = vst [vmem:[%s4 + $0x3d8] sm:$0xff] %v1733
  %1862 = vst [vmem:[%s4 + $0x3e0] sm:$0xff] %v1734
  %1863 = vst [vmem:[%s4 + $0x3e8] sm:$0xff] %v1735
  %1864 = vst [vmem:[%s4 + $0x3f0] sm:$0xff] %v1736
  %1865 = vst [vmem:[%s4 + $0x3f8] sm:$0xff] %v1737
  // Predicated region
  $region18: #{csp_layer_forward.4} parent=0 // pred_check
    _
  $region19: #{csp_layer_forward.4} parent=0 // pred_check_branch
    %1867 = sbr.rel (0) target = $region21
  $region20: #{csp_layer_forward.4} parent=0 // pred_region
    _
  $region21: #{csp_layer_forward.4} parent=0 // pred_fallthru
    _
  // Predicated region
  $region22: #{csp_layer_forward.4} parent=0 // pred_check
    _
  $region23: #{csp_layer_forward.4} parent=0 // pred_check_branch
    %1869 = sbr.rel (0) target = $region25
  $region24: #{csp_layer_forward.4} parent=0 // pred_region
    _
  $region25: #{csp_layer_forward.4} parent=0 // pred_fallthru
    _

// kernel: csp_layer_forward.7
$region0: #{csp_layer_forward.7}
  #allocation0 [shape = 'u32[]', space=smem, size = 0x4, offset = 0x4, fixed_abs, tag = 'smem constant byte address 0x4 - core index']
  #allocation1 [shape = 'u32[144,128]{1,0:T(1,128)}', space=vmem, size = 0x12000, scoped, tag = 'internal scratch']
  %s0 = inlined_call_operand.vmem [shape: f32[512,128], index: 0, kind: input, shape index: {}]
  %s1 = inlined_call_operand.vmem [shape: f32[512,256], index: 1, kind: input, shape index: {}]
  %s2 = inlined_call_operand.vmem [shape: f32[128,128], index: 2, kind: input, shape index: {}]
  %s3 = inlined_call_operand.vmem [shape: f32[128,128], index: 3, kind: input, shape index: {}]
  %s4 = inlined_call_operand.vmem [shape: f32[1,128], index: 4, kind: input, shape index: {}]
  %s5 = inlined_call_operand.vmem [shape: f32[1,128], index: 5, kind: input, shape index: {}]
  %s6 = inlined_call_operand.vmem [shape: f32[512,128], index: 6, kind: output, shape index: {}]
  %s7 = sld [smem:[#allocation0]]
  $region72: #{csp_layer_forward.7} parent=0
    _
  %s9 = ssub.s32 1, %s7
  %s10 = scalar_select 0, %s9, %s7
  $region1: #{csp_layer_forward.7} parent=0
    #allocation2 [shape = 'u8[262144]{0}', space=vmem, size = 0x40000, scoped, tag = 'input window, operand 1, single buffered']
    // Predicated region
    $region2: #{csp_layer_forward.7} parent=1 // pred_check
      _
    $region3: #{csp_layer_forward.7} parent=1 // pred_check_branch
      %12 = sbr.rel (0) target = $region5
    $region4: #{csp_layer_forward.7} parent=1 // pred_region
      _
    $region5: #{csp_layer_forward.7} parent=1 // pred_fallthru
      _
    // Predicated region
    $region6: #{csp_layer_forward.7} parent=1 // pred_check
      _
    $region7: #{csp_layer_forward.7} parent=1 // pred_check_branch
      %14 = sbr.rel (0) target = $region9
    $region8: #{csp_layer_forward.7} parent=1 // pred_region
      %s15 = scalar_lea.vmem %s1, 8
      // Predicated region
      $region10: #{csp_layer_forward.7} parent=8 // pred_check
        _
      $region11: #{csp_layer_forward.7} parent=8 // pred_check_branch
        %17 = sbr.rel (0) target = $region13
      $region12: #{csp_layer_forward.7} parent=8 // pred_region
        // Predicated region
        $region14: #{csp_layer_forward.7} parent=12 // pred_check
          _
        $region15: #{csp_layer_forward.7} parent=12 // pred_check_branch
          %19 = sbr.rel (0) target = $region17
        $region16: #{csp_layer_forward.7} parent=12 // pred_region
          // Predicated region
          $region29: #{csp_layer_forward.7} parent=16 // pred_check
            _
          $region30: #{csp_layer_forward.7} parent=16 // pred_check_branch
            %160 = sbr.rel (0) target = $region32
          $region31: #{csp_layer_forward.7} parent=16 // pred_region
            loop: start=0, step=1, limit=1
            $region33: #{csp_layer_forward.7} parent=31 // loop_pre_header
              _
            $region34: #{csp_layer_forward.7} parent=31 // loop_header
              %s162 = sphi 0, %s166
              %p163 = scmp.ge.s32.totalorder %s162, 1
              %s167 = sphi %s15, %s15
              %s168 = sphi [#allocation2], [#allocation2]
            $region35: #{csp_layer_forward.7} parent=31 // loop_header_branch
              %165 = sbr.rel (%p163) target = $region39
            $region36: #{csp_layer_forward.7} parent=31 // loop_body
              %v169 = vld [vmem:[%s167] sm:$0xff]
              %170 = vst [vmem:[%s168] sm:$0xff] %v169
              %v171 = vld [vmem:[%s167 + $0x10] sm:$0xff]
              %172 = vst [vmem:[%s168 + $0x8] sm:$0xff] %v171
              %v173 = vld [vmem:[%s167 + $0x20] sm:$0xff]
              %174 = vst [vmem:[%s168 + $0x10] sm:$0xff] %v173
              %v175 = vld [vmem:[%s167 + $0x30] sm:$0xff]
              %176 = vst [vmem:[%s168 + $0x18] sm:$0xff] %v175
              %v177 = vld [vmem:[%s167 + $0x40] sm:$0xff]
              %178 = vst [vmem:[%s168 + $0x20] sm:$0xff] %v177
              %v179 = vld [vmem:[%s167 + $0x50] sm:$0xff]
              %180 = vst [vmem:[%s168 + $0x28] sm:$0xff] %v179
              %v181 = vld [vmem:[%s167 + $0x60] sm:$0xff]
              %182 = vst [vmem:[%s168 + $0x30] sm:$0xff] %v181
              %v183 = vld [vmem:[%s167 + $0x70] sm:$0xff]
              %184 = vst [vmem:[%s168 + $0x38] sm:$0xff] %v183
              %v185 = vld [vmem:[%s167 + $0x80] sm:$0xff]
              %186 = vst [vmem:[%s168 + $0x40] sm:$0xff] %v185
              %v187 = vld [vmem:[%s167 + $0x90] sm:$0xff]
              %188 = vst [vmem:[%s168 + $0x48] sm:$0xff] %v187
              %v189 = vld [vmem:[%s167 + $0xa0] sm:$0xff]
              %190 = vst [vmem:[%s168 + $0x50] sm:$0xff] %v189
              %v191 = vld [vmem:[%s167 + $0xb0] sm:$0xff]
              %192 = vst [vmem:[%s168 + $0x58] sm:$0xff] %v191
              %v193 = vld [vmem:[%s167 + $0xc0] sm:$0xff]
              %194 = vst [vmem:[%s168 + $0x60] sm:$0xff] %v193
              %v195 = vld [vmem:[%s167 + $0xd0] sm:$0xff]
              %196 = vst [vmem:[%s168 + $0x68] sm:$0xff] %v195
              %v197 = vld [vmem:[%s167 + $0xe0] sm:$0xff]
              %198 = vst [vmem:[%s168 + $0x70] sm:$0xff] %v197
              %v199 = vld [vmem:[%s167 + $0xf0] sm:$0xff]
              %200 = vst [vmem:[%s168 + $0x78] sm:$0xff] %v199
              %v201 = vld [vmem:[%s167 + $0x100] sm:$0xff]
              %202 = vst [vmem:[%s168 + $0x80] sm:$0xff] %v201
              %v203 = vld [vmem:[%s167 + $0x110] sm:$0xff]
              %204 = vst [vmem:[%s168 + $0x88] sm:$0xff] %v203
              %v205 = vld [vmem:[%s167 + $0x120] sm:$0xff]
              %206 = vst [vmem:[%s168 + $0x90] sm:$0xff] %v205
              %v207 = vld [vmem:[%s167 + $0x130] sm:$0xff]
              %208 = vst [vmem:[%s168 + $0x98] sm:$0xff] %v207
              %v209 = vld [vmem:[%s167 + $0x140] sm:$0xff]
              %210 = vst [vmem:[%s168 + $0xa0] sm:$0xff] %v209
              %v211 = vld [vmem:[%s167 + $0x150] sm:$0xff]
              %212 = vst [vmem:[%s168 + $0xa8] sm:$0xff] %v211
              %v213 = vld [vmem:[%s167 + $0x160] sm:$0xff]
              %214 = vst [vmem:[%s168 + $0xb0] sm:$0xff] %v213
              %v215 = vld [vmem:[%s167 + $0x170] sm:$0xff]
              %216 = vst [vmem:[%s168 + $0xb8] sm:$0xff] %v215
              %v217 = vld [vmem:[%s167 + $0x180] sm:$0xff]
              %218 = vst [vmem:[%s168 + $0xc0] sm:$0xff] %v217
              %v219 = vld [vmem:[%s167 + $0x190] sm:$0xff]
              %220 = vst [vmem:[%s168 + $0xc8] sm:$0xff] %v219
              %v221 = vld [vmem:[%s167 + $0x1a0] sm:$0xff]
              %222 = vst [vmem:[%s168 + $0xd0] sm:$0xff] %v221
              %v223 = vld [vmem:[%s167 + $0x1b0] sm:$0xff]
              %224 = vst [vmem:[%s168 + $0xd8] sm:$0xff] %v223
              %v225 = vld [vmem:[%s167 + $0x1c0] sm:$0xff]
              %226 = vst [vmem:[%s168 + $0xe0] sm:$0xff] %v225
              %v227 = vld [vmem:[%s167 + $0x1d0] sm:$0xff]
              %228 = vst [vmem:[%s168 + $0xe8] sm:$0xff] %v227
              %v229 = vld [vmem:[%s167 + $0x1e0] sm:$0xff]
              %230 = vst [vmem:[%s168 + $0xf0] sm:$0xff] %v229
              %v231 = vld [vmem:[%s167 + $0x1f0] sm:$0xff]
              %232 = vst [vmem:[%s168 + $0xf8] sm:$0xff] %v231
              %v233 = vld [vmem:[%s167 + $0x200] sm:$0xff]
              %234 = vst [vmem:[%s168 + $0x100] sm:$0xff] %v233
              %v235 = vld [vmem:[%s167 + $0x210] sm:$0xff]
              %236 = vst [vmem:[%s168 + $0x108] sm:$0xff] %v235
              %v237 = vld [vmem:[%s167 + $0x220] sm:$0xff]
              %238 = vst [vmem:[%s168 + $0x110] sm:$0xff] %v237
              %v239 = vld [vmem:[%s167 + $0x230] sm:$0xff]
              %240 = vst [vmem:[%s168 + $0x118] sm:$0xff] %v239
              %v241 = vld [vmem:[%s167 + $0x240] sm:$0xff]
              %242 = vst [vmem:[%s168 + $0x120] sm:$0xff] %v241
              %v243 = vld [vmem:[%s167 + $0x250] sm:$0xff]
              %244 = vst [vmem:[%s168 + $0x128] sm:$0xff] %v243
              %v245 = vld [vmem:[%s167 + $0x260] sm:$0xff]
              %246 = vst [vmem:[%s168 + $0x130] sm:$0xff] %v245
              %v247 = vld [vmem:[%s167 + $0x270] sm:$0xff]
              %248 = vst [vmem:[%s168 + $0x138] sm:$0xff] %v247
              %v249 = vld [vmem:[%s167 + $0x280] sm:$0xff]
              %250 = vst [vmem:[%s168 + $0x140] sm:$0xff] %v249
              %v251 = vld [vmem:[%s167 + $0x290] sm:$0xff]
              %252 = vst [vmem:[%s168 + $0x148] sm:$0xff] %v251
              %v253 = vld [vmem:[%s167 + $0x2a0] sm:$0xff]
              %254 = vst [vmem:[%s168 + $0x150] sm:$0xff] %v253
              %v255 = vld [vmem:[%s167 + $0x2b0] sm:$0xff]
              %256 = vst [vmem:[%s168 + $0x158] sm:$0xff] %v255
              %v257 = vld [vmem:[%s167 + $0x2c0] sm:$0xff]
              %258 = vst [vmem:[%s168 + $0x160] sm:$0xff] %v257
              %v259 = vld [vmem:[%s167 + $0x2d0] sm:$0xff]
              %260 = vst [vmem:[%s168 + $0x168] sm:$0xff] %v259
              %v261 = vld [vmem:[%s167 + $0x2e0] sm:$0xff]
              %262 = vst [vmem:[%s168 + $0x170] sm:$0xff] %v261
              %v263 = vld [vmem:[%s167 + $0x2f0] sm:$0xff]
              %264 = vst [vmem:[%s168 + $0x178] sm:$0xff] %v263
              %v265 = vld [vmem:[%s167 + $0x300] sm:$0xff]
              %266 = vst [vmem:[%s168 + $0x180] sm:$0xff] %v265
              %v267 = vld [vmem:[%s167 + $0x310] sm:$0xff]
              %268 = vst [vmem:[%s168 + $0x188] sm:$0xff] %v267
              %v269 = vld [vmem:[%s167 + $0x320] sm:$0xff]
              %270 = vst [vmem:[%s168 + $0x190] sm:$0xff] %v269
              %v271 = vld [vmem:[%s167 + $0x330] sm:$0xff]
              %272 = vst [vmem:[%s168 + $0x198] sm:$0xff] %v271
              %v273 = vld [vmem:[%s167 + $0x340] sm:$0xff]
              %274 = vst [vmem:[%s168 + $0x1a0] sm:$0xff] %v273
              %v275 = vld [vmem:[%s167 + $0x350] sm:$0xff]
              %276 = vst [vmem:[%s168 + $0x1a8] sm:$0xff] %v275
              %v277 = vld [vmem:[%s167 + $0x360] sm:$0xff]
              %278 = vst [vmem:[%s168 + $0x1b0] sm:$0xff] %v277
              %v279 = vld [vmem:[%s167 + $0x370] sm:$0xff]
              %280 = vst [vmem:[%s168 + $0x1b8] sm:$0xff] %v279
              %v281 = vld [vmem:[%s167 + $0x380] sm:$0xff]
              %282 = vst [vmem:[%s168 + $0x1c0] sm:$0xff] %v281
              %v283 = vld [vmem:[%s167 + $0x390] sm:$0xff]
              %284 = vst [vmem:[%s168 + $0x1c8] sm:$0xff] %v283
              %v285 = vld [vmem:[%s167 + $0x3a0] sm:$0xff]
              %286 = vst [vmem:[%s168 + $0x1d0] sm:$0xff] %v285
              %v287 = vld [vmem:[%s167 + $0x3b0] sm:$0xff]
              %288 = vst [vmem:[%s168 + $0x1d8] sm:$0xff] %v287
              %v289 = vld [vmem:[%s167 + $0x3c0] sm:$0xff]
              %290 = vst [vmem:[%s168 + $0x1e0] sm:$0xff] %v289
              %v291 = vld [vmem:[%s167 + $0x3d0] sm:$0xff]
              %292 = vst [vmem:[%s168 + $0x1e8] sm:$0xff] %v291
              %v293 = vld [vmem:[%s167 + $0x3e0] sm:$0xff]
              %294 = vst [vmem:[%s168 + $0x1f0] sm:$0xff] %v293
              %v295 = vld [vmem:[%s167 + $0x3f0] sm:$0xff]
              %296 = vst [vmem:[%s168 + $0x1f8] sm:$0xff] %v295
            $region37: #{csp_layer_forward.7} parent=31 // loop_footer
              %s166 = sadd.s32 1, %s162
            $region38: #{csp_layer_forward.7} parent=31 // loop_footer_branch
              %161 = sbr.rel target = $region34
            $region39: #{csp_layer_forward.7} parent=31 // loop_exit
              _
          $region32: #{csp_layer_forward.7} parent=16 // pred_fallthru
            _
          // Predicated region
          $region40: #{csp_layer_forward.7} parent=16 // pred_check
            _
          $region41: #{csp_layer_forward.7} parent=16 // pred_check_branch
            %298 = sbr.rel target = $region43
          $region42: #{csp_layer_forward.7} parent=16 // pred_region
            _
          $region43: #{csp_layer_forward.7} parent=16 // pred_fallthru
            _
        $region17: #{csp_layer_forward.7} parent=12 // pred_fallthru
          _
        // Predicated region
        $region18: #{csp_layer_forward.7} parent=12 // pred_check
          _
        $region19: #{csp_layer_forward.7} parent=12 // pred_check_branch
          %21 = sbr.rel target = $region21
        $region20: #{csp_layer_forward.7} parent=12 // pred_region
          loop: start=0, step=1, limit=1
          $region22: #{csp_layer_forward.7} parent=20 // loop_pre_header
            _
          $region23: #{csp_layer_forward.7} parent=20 // loop_header
            %s24 = sphi 0, %s28
            %p25 = scmp.ge.s32.totalorder %s24, 1
            %s29 = sphi %s15, %s15
            %s30 = sphi [#allocation2], [#allocation2]
          $region24: #{csp_layer_forward.7} parent=20 // loop_header_branch
            %27 = sbr.rel (%p25) target = $region28
          $region25: #{csp_layer_forward.7} parent=20 // loop_body
            %v31 = vld [vmem:[%s29] sm:$0xff]
            %32 = vst [vmem:[%s30] sm:$0xff] %v31
            %v33 = vld [vmem:[%s29 + $0x10] sm:$0xff]
            %34 = vst [vmem:[%s30 + $0x8] sm:$0xff] %v33
            %v35 = vld [vmem:[%s29 + $0x20] sm:$0xff]
            %36 = vst [vmem:[%s30 + $0x10] sm:$0xff] %v35
            %v37 = vld [vmem:[%s29 + $0x30] sm:$0xff]
            %38 = vst [vmem:[%s30 + $0x18] sm:$0xff] %v37
            %v39 = vld [vmem:[%s29 + $0x40] sm:$0xff]
            %40 = vst [vmem:[%s30 + $0x20] sm:$0xff] %v39
            %v41 = vld [vmem:[%s29 + $0x50] sm:$0xff]
            %42 = vst [vmem:[%s30 + $0x28] sm:$0xff] %v41
            %v43 = vld [vmem:[%s29 + $0x60] sm:$0xff]
            %44 = vst [vmem:[%s30 + $0x30] sm:$0xff] %v43
            %v45 = vld [vmem:[%s29 + $0x70] sm:$0xff]
            %46 = vst [vmem:[%s30 + $0x38] sm:$0xff] %v45
            %v47 = vld [vmem:[%s29 + $0x80] sm:$0xff]
            %48 = vst [vmem:[%s30 + $0x40] sm:$0xff] %v47
            %v49 = vld [vmem:[%s29 + $0x90] sm:$0xff]
            %50 = vst [vmem:[%s30 + $0x48] sm:$0xff] %v49
            %v51 = vld [vmem:[%s29 + $0xa0] sm:$0xff]
            %52 = vst [vmem:[%s30 + $0x50] sm:$0xff] %v51
            %v53 = vld [vmem:[%s29 + $0xb0] sm:$0xff]
            %54 = vst [vmem:[%s30 + $0x58] sm:$0xff] %v53
            %v55 = vld [vmem:[%s29 + $0xc0] sm:$0xff]
            %56 = vst [vmem:[%s30 + $0x60] sm:$0xff] %v55
            %v57 = vld [vmem:[%s29 + $0xd0] sm:$0xff]
            %58 = vst [vmem:[%s30 + $0x68] sm:$0xff] %v57
            %v59 = vld [vmem:[%s29 + $0xe0] sm:$0xff]
            %60 = vst [vmem:[%s30 + $0x70] sm:$0xff] %v59
            %v61 = vld [vmem:[%s29 + $0xf0] sm:$0xff]
            %62 = vst [vmem:[%s30 + $0x78] sm:$0xff] %v61
            %v63 = vld [vmem:[%s29 + $0x100] sm:$0xff]
            %64 = vst [vmem:[%s30 + $0x80] sm:$0xff] %v63
            %v65 = vld [vmem:[%s29 + $0x110] sm:$0xff]
            %66 = vst [vmem:[%s30 + $0x88] sm:$0xff] %v65
            %v67 = vld [vmem:[%s29 + $0x120] sm:$0xff]
            %68 = vst [vmem:[%s30 + $0x90] sm:$0xff] %v67
            %v69 = vld [vmem:[%s29 + $0x130] sm:$0xff]
            %70 = vst [vmem:[%s30 + $0x98] sm:$0xff] %v69
            %v71 = vld [vmem:[%s29 + $0x140] sm:$0xff]
            %72 = vst [vmem:[%s30 + $0xa0] sm:$0xff] %v71
            %v73 = vld [vmem:[%s29 + $0x150] sm:$0xff]
            %74 = vst [vmem:[%s30 + $0xa8] sm:$0xff] %v73
            %v75 = vld [vmem:[%s29 + $0x160] sm:$0xff]
            %76 = vst [vmem:[%s30 + $0xb0] sm:$0xff] %v75
            %v77 = vld [vmem:[%s29 + $0x170] sm:$0xff]
            %78 = vst [vmem:[%s30 + $0xb8] sm:$0xff] %v77
            %v79 = vld [vmem:[%s29 + $0x180] sm:$0xff]
            %80 = vst [vmem:[%s30 + $0xc0] sm:$0xff] %v79
            %v81 = vld [vmem:[%s29 + $0x190] sm:$0xff]
            %82 = vst [vmem:[%s30 + $0xc8] sm:$0xff] %v81
            %v83 = vld [vmem:[%s29 + $0x1a0] sm:$0xff]
            %84 = vst [vmem:[%s30 + $0xd0] sm:$0xff] %v83
            %v85 = vld [vmem:[%s29 + $0x1b0] sm:$0xff]
            %86 = vst [vmem:[%s30 + $0xd8] sm:$0xff] %v85
            %v87 = vld [vmem:[%s29 + $0x1c0] sm:$0xff]
            %88 = vst [vmem:[%s30 + $0xe0] sm:$0xff] %v87
            %v89 = vld [vmem:[%s29 + $0x1d0] sm:$0xff]
            %90 = vst [vmem:[%s30 + $0xe8] sm:$0xff] %v89
            %v91 = vld [vmem:[%s29 + $0x1e0] sm:$0xff]
            %92 = vst [vmem:[%s30 + $0xf0] sm:$0xff] %v91
            %v93 = vld [vmem:[%s29 + $0x1f0] sm:$0xff]
            %94 = vst [vmem:[%s30 + $0xf8] sm:$0xff] %v93
            %v95 = vld [vmem:[%s29 + $0x200] sm:$0xff]
            %96 = vst [vmem:[%s30 + $0x100] sm:$0xff] %v95
            %v97 = vld [vmem:[%s29 + $0x210] sm:$0xff]
            %98 = vst [vmem:[%s30 + $0x108] sm:$0xff] %v97
            %v99 = vld [vmem:[%s29 + $0x220] sm:$0xff]
            %100 = vst [vmem:[%s30 + $0x110] sm:$0xff] %v99
            %v101 = vld [vmem:[%s29 + $0x230] sm:$0xff]
            %102 = vst [vmem:[%s30 + $0x118] sm:$0xff] %v101
            %v103 = vld [vmem:[%s29 + $0x240] sm:$0xff]
            %104 = vst [vmem:[%s30 + $0x120] sm:$0xff] %v103
            %v105 = vld [vmem:[%s29 + $0x250] sm:$0xff]
            %106 = vst [vmem:[%s30 + $0x128] sm:$0xff] %v105
            %v107 = vld [vmem:[%s29 + $0x260] sm:$0xff]
            %108 = vst [vmem:[%s30 + $0x130] sm:$0xff] %v107
            %v109 = vld [vmem:[%s29 + $0x270] sm:$0xff]
            %110 = vst [vmem:[%s30 + $0x138] sm:$0xff] %v109
            %v111 = vld [vmem:[%s29 + $0x280] sm:$0xff]
            %112 = vst [vmem:[%s30 + $0x140] sm:$0xff] %v111
            %v113 = vld [vmem:[%s29 + $0x290] sm:$0xff]
            %114 = vst [vmem:[%s30 + $0x148] sm:$0xff] %v113
            %v115 = vld [vmem:[%s29 + $0x2a0] sm:$0xff]
            %116 = vst [vmem:[%s30 + $0x150] sm:$0xff] %v115
            %v117 = vld [vmem:[%s29 + $0x2b0] sm:$0xff]
            %118 = vst [vmem:[%s30 + $0x158] sm:$0xff] %v117
            %v119 = vld [vmem:[%s29 + $0x2c0] sm:$0xff]
            %120 = vst [vmem:[%s30 + $0x160] sm:$0xff] %v119
            %v121 = vld [vmem:[%s29 + $0x2d0] sm:$0xff]
            %122 = vst [vmem:[%s30 + $0x168] sm:$0xff] %v121
            %v123 = vld [vmem:[%s29 + $0x2e0] sm:$0xff]
            %124 = vst [vmem:[%s30 + $0x170] sm:$0xff] %v123
            %v125 = vld [vmem:[%s29 + $0x2f0] sm:$0xff]
            %126 = vst [vmem:[%s30 + $0x178] sm:$0xff] %v125
            %v127 = vld [vmem:[%s29 + $0x300] sm:$0xff]
            %128 = vst [vmem:[%s30 + $0x180] sm:$0xff] %v127
            %v129 = vld [vmem:[%s29 + $0x310] sm:$0xff]
            %130 = vst [vmem:[%s30 + $0x188] sm:$0xff] %v129
            %v131 = vld [vmem:[%s29 + $0x320] sm:$0xff]
            %132 = vst [vmem:[%s30 + $0x190] sm:$0xff] %v131
            %v133 = vld [vmem:[%s29 + $0x330] sm:$0xff]
            %134 = vst [vmem:[%s30 + $0x198] sm:$0xff] %v133
            %v135 = vld [vmem:[%s29 + $0x340] sm:$0xff]
            %136 = vst [vmem:[%s30 + $0x1a0] sm:$0xff] %v135
            %v137 = vld [vmem:[%s29 + $0x350] sm:$0xff]
            %138 = vst [vmem:[%s30 + $0x1a8] sm:$0xff] %v137
            %v139 = vld [vmem:[%s29 + $0x360] sm:$0xff]
            %140 = vst [vmem:[%s30 + $0x1b0] sm:$0xff] %v139
            %v141 = vld [vmem:[%s29 + $0x370] sm:$0xff]
            %142 = vst [vmem:[%s30 + $0x1b8] sm:$0xff] %v141
            %v143 = vld [vmem:[%s29 + $0x380] sm:$0xff]
            %144 = vst [vmem:[%s30 + $0x1c0] sm:$0xff] %v143
            %v145 = vld [vmem:[%s29 + $0x390] sm:$0xff]
            %146 = vst [vmem:[%s30 + $0x1c8] sm:$0xff] %v145
            %v147 = vld [vmem:[%s29 + $0x3a0] sm:$0xff]
            %148 = vst [vmem:[%s30 + $0x1d0] sm:$0xff] %v147
            %v149 = vld [vmem:[%s29 + $0x3b0] sm:$0xff]
            %150 = vst [vmem:[%s30 + $0x1d8] sm:$0xff] %v149
            %v151 = vld [vmem:[%s29 + $0x3c0] sm:$0xff]
            %152 = vst [vmem:[%s30 + $0x1e0] sm:$0xff] %v151
            %v153 = vld [vmem:[%s29 + $0x3d0] sm:$0xff]
            %154 = vst [vmem:[%s30 + $0x1e8] sm:$0xff] %v153
            %v155 = vld [vmem:[%s29 + $0x3e0] sm:$0xff]
            %156 = vst [vmem:[%s30 + $0x1f0] sm:$0xff] %v155
            %v157 = vld [vmem:[%s29 + $0x3f0] sm:$0xff]
            %158 = vst [vmem:[%s30 + $0x1f8] sm:$0xff] %v157
          $region26: #{csp_layer_forward.7} parent=20 // loop_footer
            %s28 = sadd.s32 1, %s24
          $region27: #{csp_layer_forward.7} parent=20 // loop_footer_branch
            %23 = sbr.rel target = $region23
          $region28: #{csp_layer_forward.7} parent=20 // loop_exit
            _
        $region21: #{csp_layer_forward.7} parent=12 // pred_fallthru
          _
      $region13: #{csp_layer_forward.7} parent=8 // pred_fallthru
        _
      %299 = vnop
    $region9: #{csp_layer_forward.7} parent=1 // pred_fallthru
      _
    // Predicated region
    $region44: #{csp_layer_forward.7} parent=1 // pred_check
      _
    $region45: #{csp_layer_forward.7} parent=1 // pred_check_branch
      %301 = sbr.rel (0) target = $region47
    $region46: #{csp_layer_forward.7} parent=1 // pred_region
      _
    $region47: #{csp_layer_forward.7} parent=1 // pred_fallthru
      _
    // Predicated region
    $region48: #{csp_layer_forward.7} parent=1 // pred_check
      _
    $region49: #{csp_layer_forward.7} parent=1 // pred_check_branch
      %303 = sbr.rel (0) target = $region51
    $region50: #{csp_layer_forward.7} parent=1 // pred_region
      _
    $region51: #{csp_layer_forward.7} parent=1 // pred_fallthru
      _
    // Predicated region
    $region52: #{csp_layer_forward.7} parent=1 // pred_check
      _
    $region53: #{csp_layer_forward.7} parent=1 // pred_check_branch
      %305 = sbr.rel (0) target = $region55
    $region54: #{csp_layer_forward.7} parent=1 // pred_region
      _
    $region55: #{csp_layer_forward.7} parent=1 // pred_fallthru
      _
    // Predicated region
    $region56: #{csp_layer_forward.7} parent=1 // pred_check
      _
    $region57: #{csp_layer_forward.7} parent=1 // pred_check_branch
      %307 = sbr.rel (0) target = $region59
    $region58: #{csp_layer_forward.7} parent=1 // pred_region
      _
    $region59: #{csp_layer_forward.7} parent=1 // pred_fallthru
      _
    // Predicated region
    $region60: #{csp_layer_forward.7} parent=1 // pred_check
      _
    $region61: #{csp_layer_forward.7} parent=1 // pred_check_branch
      %309 = sbr.rel (0) target = $region63
    $region62: #{csp_layer_forward.7} parent=1 // pred_region
      _
    $region63: #{csp_layer_forward.7} parent=1 // pred_fallthru
      _
    %v310 = vld [vmem:[%s0] sm:$0xff]
    %v311 = vld [vmem:[%s0 + $0x8] sm:$0xff]
    %v312 = vld [vmem:[%s0 + $0x10] sm:$0xff]
    %v313 = vld [vmem:[%s0 + $0x18] sm:$0xff]
    %v314 = vld [vmem:[%s0 + $0x20] sm:$0xff]
    %v315 = vld [vmem:[%s0 + $0x28] sm:$0xff]
    %v316 = vld [vmem:[%s0 + $0x30] sm:$0xff]
    %v317 = vld [vmem:[%s0 + $0x38] sm:$0xff]
    %v318 = vld [vmem:[%s0 + $0x40] sm:$0xff]
    %v319 = vld [vmem:[%s0 + $0x48] sm:$0xff]
    %v320 = vld [vmem:[%s0 + $0x50] sm:$0xff]
    %v321 = vld [vmem:[%s0 + $0x58] sm:$0xff]
    %v322 = vld [vmem:[%s0 + $0x60] sm:$0xff]
    %v323 = vld [vmem:[%s0 + $0x68] sm:$0xff]
    %v324 = vld [vmem:[%s0 + $0x70] sm:$0xff]
    %v325 = vld [vmem:[%s0 + $0x78] sm:$0xff]
    %v326 = vld [vmem:[%s0 + $0x80] sm:$0xff]
    %v327 = vld [vmem:[%s0 + $0x88] sm:$0xff]
    %v328 = vld [vmem:[%s0 + $0x90] sm:$0xff]
    %v329 = vld [vmem:[%s0 + $0x98] sm:$0xff]
    %v330 = vld [vmem:[%s0 + $0xa0] sm:$0xff]
    %v331 = vld [vmem:[%s0 + $0xa8] sm:$0xff]
    %v332 = vld [vmem:[%s0 + $0xb0] sm:$0xff]
    %v333 = vld [vmem:[%s0 + $0xb8] sm:$0xff]
    %v334 = vld [vmem:[%s0 + $0xc0] sm:$0xff]
    %v335 = vld [vmem:[%s0 + $0xc8] sm:$0xff]
    %v336 = vld [vmem:[%s0 + $0xd0] sm:$0xff]
    %v337 = vld [vmem:[%s0 + $0xd8] sm:$0xff]
    %v338 = vld [vmem:[%s0 + $0xe0] sm:$0xff]
    %v339 = vld [vmem:[%s0 + $0xe8] sm:$0xff]
    %v340 = vld [vmem:[%s0 + $0xf0] sm:$0xff]
    %v341 = vld [vmem:[%s0 + $0xf8] sm:$0xff]
    %v342 = vld [vmem:[%s0 + $0x100] sm:$0xff]
    %v343 = vld [vmem:[%s0 + $0x108] sm:$0xff]
    %v344 = vld [vmem:[%s0 + $0x110] sm:$0xff]
    %v345 = vld [vmem:[%s0 + $0x118] sm:$0xff]
    %v346 = vld [vmem:[%s0 + $0x120] sm:$0xff]
    %v347 = vld [vmem:[%s0 + $0x128] sm:$0xff]
    %v348 = vld [vmem:[%s0 + $0x130] sm:$0xff]
    %v349 = vld [vmem:[%s0 + $0x138] sm:$0xff]
    %v350 = vld [vmem:[%s0 + $0x140] sm:$0xff]
    %v351 = vld [vmem:[%s0 + $0x148] sm:$0xff]
    %v352 = vld [vmem:[%s0 + $0x150] sm:$0xff]
    %v353 = vld [vmem:[%s0 + $0x158] sm:$0xff]
    %v354 = vld [vmem:[%s0 + $0x160] sm:$0xff]
    %v355 = vld [vmem:[%s0 + $0x168] sm:$0xff]
    %v356 = vld [vmem:[%s0 + $0x170] sm:$0xff]
    %v357 = vld [vmem:[%s0 + $0x178] sm:$0xff]
    %v358 = vld [vmem:[%s0 + $0x180] sm:$0xff]
    %v359 = vld [vmem:[%s0 + $0x188] sm:$0xff]
    %v360 = vld [vmem:[%s0 + $0x190] sm:$0xff]
    %v361 = vld [vmem:[%s0 + $0x198] sm:$0xff]
    %v362 = vld [vmem:[%s0 + $0x1a0] sm:$0xff]
    %v363 = vld [vmem:[%s0 + $0x1a8] sm:$0xff]
    %v364 = vld [vmem:[%s0 + $0x1b0] sm:$0xff]
    %v365 = vld [vmem:[%s0 + $0x1b8] sm:$0xff]
    %v366 = vld [vmem:[%s0 + $0x1c0] sm:$0xff]
    %v367 = vld [vmem:[%s0 + $0x1c8] sm:$0xff]
    %v368 = vld [vmem:[%s0 + $0x1d0] sm:$0xff]
    %v369 = vld [vmem:[%s0 + $0x1d8] sm:$0xff]
    %v370 = vld [vmem:[%s0 + $0x1e0] sm:$0xff]
    %v371 = vld [vmem:[%s0 + $0x1e8] sm:$0xff]
    %v372 = vld [vmem:[%s0 + $0x1f0] sm:$0xff]
    %v373 = vld [vmem:[%s0 + $0x1f8] sm:$0xff]
    %v374 = vld [vmem:[%s2] sm:$0xff]
    %v375 = vld [vmem:[%s2 + $0x8] sm:$0xff]
    %v376 = vld [vmem:[%s2 + $0x10] sm:$0xff]
    %v377 = vld [vmem:[%s2 + $0x18] sm:$0xff]
    %v378 = vld [vmem:[%s2 + $0x20] sm:$0xff]
    %v379 = vld [vmem:[%s2 + $0x28] sm:$0xff]
    %v380 = vld [vmem:[%s2 + $0x30] sm:$0xff]
    %v381 = vld [vmem:[%s2 + $0x38] sm:$0xff]
    %v382 = vld [vmem:[%s2 + $0x40] sm:$0xff]
    %v383 = vld [vmem:[%s2 + $0x48] sm:$0xff]
    %v384 = vld [vmem:[%s2 + $0x50] sm:$0xff]
    %v385 = vld [vmem:[%s2 + $0x58] sm:$0xff]
    %v386 = vld [vmem:[%s2 + $0x60] sm:$0xff]
    %v387 = vld [vmem:[%s2 + $0x68] sm:$0xff]
    %v388 = vld [vmem:[%s2 + $0x70] sm:$0xff]
    %v389 = vld [vmem:[%s2 + $0x78] sm:$0xff]
    %v390 = vld [vmem:[#allocation2] sm:$0xff]
    %v391 = vld [vmem:[#allocation2 + $0x8] sm:$0xff]
    %v392 = vld [vmem:[#allocation2 + $0x10] sm:$0xff]
    %v393 = vld [vmem:[#allocation2 + $0x18] sm:$0xff]
    %v394 = vld [vmem:[#allocation2 + $0x20] sm:$0xff]
    %v395 = vld [vmem:[#allocation2 + $0x28] sm:$0xff]
    %v396 = vld [vmem:[#allocation2 + $0x30] sm:$0xff]
    %v397 = vld [vmem:[#allocation2 + $0x38] sm:$0xff]
    %v398 = vld [vmem:[#allocation2 + $0x40] sm:$0xff]
    %v399 = vld [vmem:[#allocation2 + $0x48] sm:$0xff]
    %v400 = vld [vmem:[#allocation2 + $0x50] sm:$0xff]
    %v401 = vld [vmem:[#allocation2 + $0x58] sm:$0xff]
    %v402 = vld [vmem:[#allocation2 + $0x60] sm:$0xff]
    %v403 = vld [vmem:[#allocation2 + $0x68] sm:$0xff]
    %v404 = vld [vmem:[#allocation2 + $0x70] sm:$0xff]
    %v405 = vld [vmem:[#allocation2 + $0x78] sm:$0xff]
    %v406 = vld [vmem:[#allocation2 + $0x80] sm:$0xff]
    %v407 = vld [vmem:[#allocation2 + $0x88] sm:$0xff]
    %v408 = vld [vmem:[#allocation2 + $0x90] sm:$0xff]
    %v409 = vld [vmem:[#allocation2 + $0x98] sm:$0xff]
    %v410 = vld [vmem:[#allocation2 + $0xa0] sm:$0xff]
    %v411 = vld [vmem:[#allocation2 + $0xa8] sm:$0xff]
    %v412 = vld [vmem:[#allocation2 + $0xb0] sm:$0xff]
    %v413 = vld [vmem:[#allocation2 + $0xb8] sm:$0xff]
    %v414 = vld [vmem:[#allocation2 + $0xc0] sm:$0xff]
    %v415 = vld [vmem:[#allocation2 + $0xc8] sm:$0xff]
    %v416 = vld [vmem:[#allocation2 + $0xd0] sm:$0xff]
    %v417 = vld [vmem:[#allocation2 + $0xd8] sm:$0xff]
    %v418 = vld [vmem:[#allocation2 + $0xe0] sm:$0xff]
    %v419 = vld [vmem:[#allocation2 + $0xe8] sm:$0xff]
    %v420 = vld [vmem:[#allocation2 + $0xf0] sm:$0xff]
    %v421 = vld [vmem:[#allocation2 + $0xf8] sm:$0xff]
    %v422 = vld [vmem:[#allocation2 + $0x100] sm:$0xff]
    %v423 = vld [vmem:[#allocation2 + $0x108] sm:$0xff]
    %v424 = vld [vmem:[#allocation2 + $0x110] sm:$0xff]
    %v425 = vld [vmem:[#allocation2 + $0x118] sm:$0xff]
    %v426 = vld [vmem:[#allocation2 + $0x120] sm:$0xff]
    %v427 = vld [vmem:[#allocation2 + $0x128] sm:$0xff]
    %v428 = vld [vmem:[#allocation2 + $0x130] sm:$0xff]
    %v429 = vld [vmem:[#allocation2 + $0x138] sm:$0xff]
    %v430 = vld [vmem:[#allocation2 + $0x140] sm:$0xff]
    %v431 = vld [vmem:[#allocation2 + $0x148] sm:$0xff]
    %v432 = vld [vmem:[#allocation2 + $0x150] sm:$0xff]
    %v433 = vld [vmem:[#allocation2 + $0x158] sm:$0xff]
    %v434 = vld [vmem:[#allocation2 + $0x160] sm:$0xff]
    %v435 = vld [vmem:[#allocation2 + $0x168] sm:$0xff]
    %v436 = vld [vmem:[#allocation2 + $0x170] sm:$0xff]
    %v437 = vld [vmem:[#allocation2 + $0x178] sm:$0xff]
    %v438 = vld [vmem:[#allocation2 + $0x180] sm:$0xff]
    %v439 = vld [vmem:[#allocation2 + $0x188] sm:$0xff]
    %v440 = vld [vmem:[#allocation2 + $0x190] sm:$0xff]
    %v441 = vld [vmem:[#allocation2 + $0x198] sm:$0xff]
    %v442 = vld [vmem:[#allocation2 + $0x1a0] sm:$0xff]
    %v443 = vld [vmem:[#allocation2 + $0x1a8] sm:$0xff]
    %v444 = vld [vmem:[#allocation2 + $0x1b0] sm:$0xff]
    %v445 = vld [vmem:[#allocation2 + $0x1b8] sm:$0xff]
    %v446 = vld [vmem:[#allocation2 + $0x1c0] sm:$0xff]
    %v447 = vld [vmem:[#allocation2 + $0x1c8] sm:$0xff]
    %v448 = vld [vmem:[#allocation2 + $0x1d0] sm:$0xff]
    %v449 = vld [vmem:[#allocation2 + $0x1d8] sm:$0xff]
    %v450 = vld [vmem:[#allocation2 + $0x1e0] sm:$0xff]
    %v451 = vld [vmem:[#allocation2 + $0x1e8] sm:$0xff]
    %v452 = vld [vmem:[#allocation2 + $0x1f0] sm:$0xff]
    %v453 = vld [vmem:[#allocation2 + $0x1f8] sm:$0xff]
    %v454 = vld [vmem:[%s3] sm:$0xff]
    %v455 = vld [vmem:[%s3 + $0x8] sm:$0xff]
    %v456 = vld [vmem:[%s3 + $0x10] sm:$0xff]
    %v457 = vld [vmem:[%s3 + $0x18] sm:$0xff]
    %v458 = vld [vmem:[%s3 + $0x20] sm:$0xff]
    %v459 = vld [vmem:[%s3 + $0x28] sm:$0xff]
    %v460 = vld [vmem:[%s3 + $0x30] sm:$0xff]
    %v461 = vld [vmem:[%s3 + $0x38] sm:$0xff]
    %v462 = vld [vmem:[%s3 + $0x40] sm:$0xff]
    %v463 = vld [vmem:[%s3 + $0x48] sm:$0xff]
    %v464 = vld [vmem:[%s3 + $0x50] sm:$0xff]
    %v465 = vld [vmem:[%s3 + $0x58] sm:$0xff]
    %v466 = vld [vmem:[%s3 + $0x60] sm:$0xff]
    %v467 = vld [vmem:[%s3 + $0x68] sm:$0xff]
    %v468 = vld [vmem:[%s3 + $0x70] sm:$0xff]
    %v469 = vld [vmem:[%s3 + $0x78] sm:$0xff]
    %470 = vmatprep.subr.mxu0 0.0
    %471 = vmatpush1.msra.mxu0 %v454
    %472 = vmatprep.subr.mxu0 0.0
    %473 = vmatpush1.msra.mxu0 %v455
    %474 = vmatprep.subr.mxu0 0.0
    %475 = vmatpush1.msra.mxu0 %v456
    %476 = vmatprep.subr.mxu0 0.0
    %477 = vmatpush1.msra.mxu0 %v457
    %478 = vmatprep.subr.mxu0 0.0
    %479 = vmatpush1.msra.mxu0 %v458
    %480 = vmatprep.subr.mxu0 0.0
    %481 = vmatpush1.msra.mxu0 %v459
    %482 = vmatprep.subr.mxu0 0.0
    %483 = vmatpush1.msra.mxu0 %v460
    %484 = vmatprep.subr.mxu0 0.0
    %485 = vmatpush1.msra.mxu0 %v461
    %486 = vmatprep.subr.mxu0 0.0
    %487 = vmatpush1.msra.mxu0 %v462
    %488 = vmatprep.subr.mxu0 0.0
    %489 = vmatpush1.msra.mxu0 %v463
    %490 = vmatprep.subr.mxu0 0.0
    %491 = vmatpush1.msra.mxu0 %v464
    %492 = vmatprep.subr.mxu0 0.0
    %493 = vmatpush1.msra.mxu0 %v465
    %494 = vmatprep.subr.mxu0 0.0
    %495 = vmatpush1.msra.mxu0 %v466
    %496 = vmatprep.subr.mxu0 0.0
    %497 = vmatpush1.msra.mxu0 %v467
    %498 = vmatprep.subr.mxu0 0.0
    %499 = vmatpush1.msra.mxu0 %v468
    %500 = vmatprep.subr.mxu0 0.0
    %501 = vmatpush1.msra.mxu0 %v469
    %502 = vmatprep.subr.mxu0 0.0
    %503 = vmatpush1.msra.mxu0 0.0
    %504 = vmatprep.subr.mxu0 0.0
    %505 = vmatpush1.msra.mxu0 0.0
    %506 = vmatprep.subr.mxu0 0.0
    %507 = vmatpush1.msra.mxu0 0.0
    %508 = vmatprep.subr.mxu0 0.0
    %509 = vmatpush1.msra.mxu0 0.0
    %510 = vmatprep.subr.mxu0 0.0
    %511 = vmatpush1.msra.mxu0 0.0
    %512 = vmatprep.subr.mxu0 0.0
    %513 = vmatpush1.msra.mxu0 0.0
    %514 = vmatprep.subr.mxu0 0.0
    %515 = vmatpush1.msra.mxu0 0.0
    %516 = vmatprep.subr.mxu0 0.0
    %517 = vmatpush1.msra.mxu0 0.0
    %518 = vmatprep.subr.mxu0 0.0
    %519 = vmatpush1.msra.mxu0 0.0
    %520 = vmatprep.subr.mxu0 0.0
    %521 = vmatpush1.msra.mxu0 0.0
    %522 = vmatprep.subr.mxu0 0.0
    %523 = vmatpush1.msra.mxu0 0.0
    %524 = vmatprep.subr.mxu0 0.0
    %525 = vmatpush1.msra.mxu0 0.0
    %526 = vmatprep.subr.mxu0 0.0
    %527 = vmatpush1.msra.mxu0 0.0
    %528 = vmatprep.subr.mxu0 0.0
    %529 = vmatpush1.msra.mxu0 0.0
    %530 = vmatprep.subr.mxu0 0.0
    %531 = vmatpush1.msra.mxu0 0.0
    %532 = vmatprep.subr.mxu0 0.0
    %533 = vmatpush1.msra.mxu0 0.0
    %534 = vmatprep.mubr.f32.mxu0 0.0
    %535 = vmatmul.mubr.f32.gmra.mrb[0].mxu0 %v390
    %v536 = vpop.f32.mrb[0].mxu0
    %v537 = vadd.f32 0.0, %v536
    %v538 = vpop.f32.mrb[0].mxu0
    %539 = vmatprep.mubr.f32.mxu0 0.0
    %540 = vmatmul.mubr.f32.gmra.mrb[0].mxu0 %v391
    %v541 = vpop.f32.mrb[0].mxu0
    %v542 = vadd.f32 0.0, %v541
    %v543 = vpop.f32.mrb[0].mxu0
    %544 = vmatprep.mubr.f32.mxu0 0.0
    %545 = vmatmul.mubr.f32.gmra.mrb[0].mxu0 %v392
    %v546 = vpop.f32.mrb[0].mxu0
    %v547 = vadd.f32 0.0, %v546
    %v548 = vpop.f32.mrb[0].mxu0
    %549 = vmatprep.mubr.f32.mxu0 0.0
    %550 = vmatmul.mubr.f32.gmra.mrb[0].mxu0 %v393
    %v551 = vpop.f32.mrb[0].mxu0
    %v552 = vadd.f32 0.0, %v551
    %v553 = vpop.f32.mrb[0].mxu0
    %554 = vmatprep.mubr.f32.mxu0 0.0
    %555 = vmatmul.mubr.f32.gmra.mrb[0].mxu0 %v394
    %v556 = vpop.f32.mrb[0].mxu0
    %v557 = vadd.f32 0.0, %v556
    %v558 = vpop.f32.mrb[0].mxu0
    %559 = vmatprep.mubr.f32.mxu0 0.0
    %560 = vmatmul.mubr.f32.gmra.mrb[0].mxu0 %v395
    %v561 = vpop.f32.mrb[0].mxu0
    %v562 = vadd.f32 0.0, %v561
    %v563 = vpop.f32.mrb[0].mxu0
    %564 = vmatprep.mubr.f32.mxu0 0.0
    %565 = vmatmul.mubr.f32.gmra.mrb[0].mxu0 %v396
    %v566 = vpop.f32.mrb[0].mxu0
    %v567 = vadd.f32 0.0, %v566
    %v568 = vpop.f32.mrb[0].mxu0
    %569 = vmatprep.mubr.f32.mxu0 0.0
    %570 = vmatmul.mubr.f32.gmra.mrb[0].mxu0 %v397
    %v571 = vpop.f32.mrb[0].mxu0
    %v572 = vadd.f32 0.0, %v571
    %v573 = vpop.f32.mrb[0].mxu0
    %574 = vmatprep.mubr.f32.mxu0 0.0
    %575 = vmatmul.mubr.f32.gmra.mrb[0].mxu0 %v398
    %v576 = vpop.f32.mrb[0].mxu0
    %v577 = vadd.f32 0.0, %v576
    %v578 = vpop.f32.mrb[0].mxu0
    %579 = vmatprep.mubr.f32.mxu0 0.0
    %580 = vmatmul.mubr.f32.gmra.mrb[0].mxu0 %v399
    %v581 = vpop.f32.mrb[0].mxu0
    %v582 = vadd.f32 0.0, %v581
    %v583 = vpop.f32.mrb[0].mxu0
    %584 = vmatprep.mubr.f32.mxu0 0.0
    %585 = vmatmul.mubr.f32.gmra.mrb[0].mxu0 %v400
    %v586 = vpop.f32.mrb[0].mxu0
    %v587 = vadd.f32 0.0, %v586
    %v588 = vpop.f32.mrb[0].mxu0
    %589 = vmatprep.mubr.f32.mxu0 0.0
    %590 = vmatmul.mubr.f32.gmra.mrb[0].mxu0 %v401
    %v591 = vpop.f32.mrb[0].mxu0
    %v592 = vadd.f32 0.0, %v591
    %v593 = vpop.f32.mrb[0].mxu0
    %594 = vmatprep.mubr.f32.mxu0 0.0
    %595 = vmatmul.mubr.f32.gmra.mrb[0].mxu0 %v402
    %v596 = vpop.f32.mrb[0].mxu0
    %v597 = vadd.f32 0.0, %v596
    %v598 = vpop.f32.mrb[0].mxu0
    %599 = vmatprep.mubr.f32.mxu0 0.0
    %600 = vmatmul.mubr.f32.gmra.mrb[0].mxu0 %v403
    %v601 = vpop.f32.mrb[0].mxu0
    %v602 = vadd.f32 0.0, %v601
    %v603 = vpop.f32.mrb[0].mxu0
    %604 = vmatprep.mubr.f32.mxu0 0.0
    %605 = vmatmul.mubr.f32.gmra.mrb[0].mxu0 %v404
    %v606 = vpop.f32.mrb[0].mxu0
    %v607 = vadd.f32 0.0, %v606
    %v608 = vpop.f32.mrb[0].mxu0
    %609 = vmatprep.mubr.f32.mxu0 0.0
    %610 = vmatmul.mubr.f32.gmra.mrb[0].mxu0 %v405
    %v611 = vpop.f32.mrb[0].mxu0
    %v612 = vadd.f32 0.0, %v611
    %v613 = vpop.f32.mrb[0].mxu0
    %614 = vmatprep.mubr.f32.mxu0 0.0
    %615 = vmatmul.mubr.f32.gmra.mrb[0].mxu0 %v406
    %v616 = vpop.f32.mrb[0].mxu0
    %v617 = vadd.f32 0.0, %v616
    %v618 = vpop.f32.mrb[0].mxu0
    %619 = vmatprep.mubr.f32.mxu0 0.0
    %620 = vmatmul.mubr.f32.gmra.mrb[0].mxu0 %v407
    %v621 = vpop.f32.mrb[0].mxu0
    %v622 = vadd.f32 0.0, %v621
    %v623 = vpop.f32.mrb[0].mxu0
    %624 = vmatprep.mubr.f32.mxu0 0.0
    %625 = vmatmul.mubr.f32.gmra.mrb[0].mxu0 %v408
    %v626 = vpop.f32.mrb[0].mxu0
    %v627 = vadd.f32 0.0, %v626
    %v628 = vpop.f32.mrb[0].mxu0
    %629 = vmatprep.mubr.f32.mxu0 0.0
    %630 = vmatmul.mubr.f32.gmra.mrb[0].mxu0 %v409
    %v631 = vpop.f32.mrb[0].mxu0
    %v632 = vadd.f32 0.0, %v631
    %v633 = vpop.f32.mrb[0].mxu0
    %634 = vmatprep.mubr.f32.mxu0 0.0
    %635 = vmatmul.mubr.f32.gmra.mrb[0].mxu0 %v410
    %v636 = vpop.f32.mrb[0].mxu0
    %v637 = vadd.f32 0.0, %v636
    %v638 = vpop.f32.mrb[0].mxu0
    %639 = vmatprep.mubr.f32.mxu0 0.0
    %640 = vmatmul.mubr.f32.gmra.mrb[0].mxu0 %v411
    %v641 = vpop.f32.mrb[0].mxu0
    %v642 = vadd.f32 0.0, %v641
    %v643 = vpop.f32.mrb[0].mxu0
    %644 = vmatprep.mubr.f32.mxu0 0.0
    %645 = vmatmul.mubr.f32.gmra.mrb[0].mxu0 %v412
    %v646 = vpop.f32.mrb[0].mxu0
    %v647 = vadd.f32 0.0, %v646
    %v648 = vpop.f32.mrb[0].mxu0
    %649 = vmatprep.mubr.f32.mxu0 0.0
    %650 = vmatmul.mubr.f32.gmra.mrb[0].mxu0 %v413
    %v651 = vpop.f32.mrb[0].mxu0
    %v652 = vadd.f32 0.0, %v651
    %v653 = vpop.f32.mrb[0].mxu0
    %654 = vmatprep.mubr.f32.mxu0 0.0
    %655 = vmatmul.mubr.f32.gmra.mrb[0].mxu0 %v414
    %v656 = vpop.f32.mrb[0].mxu0
    %v657 = vadd.f32 0.0, %v656
    %v658 = vpop.f32.mrb[0].mxu0
    %659 = vmatprep.mubr.f32.mxu0 0.0
    %660 = vmatmul.mubr.f32.gmra.mrb[0].mxu0 %v415
    %v661 = vpop.f32.mrb[0].mxu0
    %v662 = vadd.f32 0.0, %v661
    %v663 = vpop.f32.mrb[0].mxu0
    %664 = vmatprep.mubr.f32.mxu0 0.0
    %665 = vmatmul.mubr.f32.gmra.mrb[0].mxu0 %v416
    %v666 = vpop.f32.mrb[0].mxu0
    %v667 = vadd.f32 0.0, %v666
    %v668 = vpop.f32.mrb[0].mxu0
    %669 = vmatprep.mubr.f32.mxu0 0.0
    %670 = vmatmul.mubr.f32.gmra.mrb[0].mxu0 %v417
    %v671 = vpop.f32.mrb[0].mxu0
    %v672 = vadd.f32 0.0, %v671
    %v673 = vpop.f32.mrb[0].mxu0
    %674 = vmatprep.mubr.f32.mxu0 0.0
    %675 = vmatmul.mubr.f32.gmra.mrb[0].mxu0 %v418
    %v676 = vpop.f32.mrb[0].mxu0
    %v677 = vadd.f32 0.0, %v676
    %v678 = vpop.f32.mrb[0].mxu0
    %679 = vmatprep.mubr.f32.mxu0 0.0
    %680 = vmatmul.mubr.f32.gmra.mrb[0].mxu0 %v419
    %v681 = vpop.f32.mrb[0].mxu0
    %v682 = vadd.f32 0.0, %v681
    %v683 = vpop.f32.mrb[0].mxu0
    %684 = vmatprep.mubr.f32.mxu0 0.0
    %685 = vmatmul.mubr.f32.gmra.mrb[0].mxu0 %v420
    %v686 = vpop.f32.mrb[0].mxu0
    %v687 = vadd.f32 0.0, %v686
    %v688 = vpop.f32.mrb[0].mxu0
    %689 = vmatprep.mubr.f32.mxu0 0.0
    %690 = vmatmul.mubr.f32.gmra.mrb[0].mxu0 %v421
    %v691 = vpop.f32.mrb[0].mxu0
    %v692 = vadd.f32 0.0, %v691
    %v693 = vpop.f32.mrb[0].mxu0
    %694 = vmatprep.mubr.f32.mxu0 0.0
    %695 = vmatmul.mubr.f32.gmra.mrb[0].mxu0 %v422
    %v696 = vpop.f32.mrb[0].mxu0
    %v697 = vadd.f32 0.0, %v696
    %v698 = vpop.f32.mrb[0].mxu0
    %699 = vmatprep.mubr.f32.mxu0 0.0
    %700 = vmatmul.mubr.f32.gmra.mrb[0].mxu0 %v423
    %v701 = vpop.f32.mrb[0].mxu0
    %v702 = vadd.f32 0.0, %v701
    %v703 = vpop.f32.mrb[0].mxu0
    %704 = vmatprep.mubr.f32.mxu0 0.0
    %705 = vmatmul.mubr.f32.gmra.mrb[0].mxu0 %v424
    %v706 = vpop.f32.mrb[0].mxu0
    %v707 = vadd.f32 0.0, %v706
    %v708 = vpop.f32.mrb[0].mxu0
    %709 = vmatprep.mubr.f32.mxu0 0.0
    %710 = vmatmul.mubr.f32.gmra.mrb[0].mxu0 %v425
    %v711 = vpop.f32.mrb[0].mxu0
    %v712 = vadd.f32 0.0, %v711
    %v713 = vpop.f32.mrb[0].mxu0
    %714 = vmatprep.mubr.f32.mxu0 0.0
    %715 = vmatmul.mubr.f32.gmra.mrb[0].mxu0 %v426
    %v716 = vpop.f32.mrb[0].mxu0
    %v717 = vadd.f32 0.0, %v716
    %v718 = vpop.f32.mrb[0].mxu0
    %719 = vmatprep.mubr.f32.mxu0 0.0
    %720 = vmatmul.mubr.f32.gmra.mrb[0].mxu0 %v427
    %v721 = vpop.f32.mrb[0].mxu0
    %v722 = vadd.f32 0.0, %v721
    %v723 = vpop.f32.mrb[0].mxu0
    %724 = vmatprep.mubr.f32.mxu0 0.0
    %725 = vmatmul.mubr.f32.gmra.mrb[0].mxu0 %v428
    %v726 = vpop.f32.mrb[0].mxu0
    %v727 = vadd.f32 0.0, %v726
    %v728 = vpop.f32.mrb[0].mxu0
    %729 = vmatprep.mubr.f32.mxu0 0.0
    %730 = vmatmul.mubr.f32.gmra.mrb[0].mxu0 %v429
    %v731 = vpop.f32.mrb[0].mxu0
    %v732 = vadd.f32 0.0, %v731
    %v733 = vpop.f32.mrb[0].mxu0
    %734 = vmatprep.mubr.f32.mxu0 0.0
    %735 = vmatmul.mubr.f32.gmra.mrb[0].mxu0 %v430
    %v736 = vpop.f32.mrb[0].mxu0
    %v737 = vadd.f32 0.0, %v736
    %v738 = vpop.f32.mrb[0].mxu0
    %739 = vmatprep.mubr.f32.mxu0 0.0
    %740 = vmatmul.mubr.f32.gmra.mrb[0].mxu0 %v431
    %v741 = vpop.f32.mrb[0].mxu0
    %v742 = vadd.f32 0.0, %v741
    %v743 = vpop.f32.mrb[0].mxu0
    %744 = vmatprep.mubr.f32.mxu0 0.0
    %745 = vmatmul.mubr.f32.gmra.mrb[0].mxu0 %v432
    %v746 = vpop.f32.mrb[0].mxu0
    %v747 = vadd.f32 0.0, %v746
    %v748 = vpop.f32.mrb[0].mxu0
    %749 = vmatprep.mubr.f32.mxu0 0.0
    %750 = vmatmul.mubr.f32.gmra.mrb[0].mxu0 %v433
    %v751 = vpop.f32.mrb[0].mxu0
    %v752 = vadd.f32 0.0, %v751
    %v753 = vpop.f32.mrb[0].mxu0
    %754 = vmatprep.mubr.f32.mxu0 0.0
    %755 = vmatmul.mubr.f32.gmra.mrb[0].mxu0 %v434
    %v756 = vpop.f32.mrb[0].mxu0
    %v757 = vadd.f32 0.0, %v756
    %v758 = vpop.f32.mrb[0].mxu0
    %759 = vmatprep.mubr.f32.mxu0 0.0
    %760 = vmatmul.mubr.f32.gmra.mrb[0].mxu0 %v435
    %v761 = vpop.f32.mrb[0].mxu0
    %v762 = vadd.f32 0.0, %v761
    %v763 = vpop.f32.mrb[0].mxu0
    %764 = vmatprep.mubr.f32.mxu0 0.0
    %765 = vmatmul.mubr.f32.gmra.mrb[0].mxu0 %v436
    %v766 = vpop.f32.mrb[0].mxu0
    %v767 = vadd.f32 0.0, %v766
    %v768 = vpop.f32.mrb[0].mxu0
    %769 = vmatprep.mubr.f32.mxu0 0.0
    %770 = vmatmul.mubr.f32.gmra.mrb[0].mxu0 %v437
    %v771 = vpop.f32.mrb[0].mxu0
    %v772 = vadd.f32 0.0, %v771
    %v773 = vpop.f32.mrb[0].mxu0
    %774 = vmatprep.mubr.f32.mxu0 0.0
    %775 = vmatmul.mubr.f32.gmra.mrb[0].mxu0 %v438
    %v776 = vpop.f32.mrb[0].mxu0
    %v777 = vadd.f32 0.0, %v776
    %v778 = vpop.f32.mrb[0].mxu0
    %779 = vmatprep.mubr.f32.mxu0 0.0
    %780 = vmatmul.mubr.f32.gmra.mrb[0].mxu0 %v439
    %v781 = vpop.f32.mrb[0].mxu0
    %v782 = vadd.f32 0.0, %v781
    %v783 = vpop.f32.mrb[0].mxu0
    %784 = vmatprep.mubr.f32.mxu0 0.0
    %785 = vmatmul.mubr.f32.gmra.mrb[0].mxu0 %v440
    %v786 = vpop.f32.mrb[0].mxu0
    %v787 = vadd.f32 0.0, %v786
    %v788 = vpop.f32.mrb[0].mxu0
    %789 = vmatprep.mubr.f32.mxu0 0.0
    %790 = vmatmul.mubr.f32.gmra.mrb[0].mxu0 %v441
    %v791 = vpop.f32.mrb[0].mxu0
    %v792 = vadd.f32 0.0, %v791
    %v793 = vpop.f32.mrb[0].mxu0
    %794 = vmatprep.mubr.f32.mxu0 0.0
    %795 = vmatmul.mubr.f32.gmra.mrb[0].mxu0 %v442
    %v796 = vpop.f32.mrb[0].mxu0
    %v797 = vadd.f32 0.0, %v796
    %v798 = vpop.f32.mrb[0].mxu0
    %799 = vmatprep.mubr.f32.mxu0 0.0
    %800 = vmatmul.mubr.f32.gmra.mrb[0].mxu0 %v443
    %v801 = vpop.f32.mrb[0].mxu0
    %v802 = vadd.f32 0.0, %v801
    %v803 = vpop.f32.mrb[0].mxu0
    %804 = vmatprep.mubr.f32.mxu0 0.0
    %805 = vmatmul.mubr.f32.gmra.mrb[0].mxu0 %v444
    %v806 = vpop.f32.mrb[0].mxu0
    %v807 = vadd.f32 0.0, %v806
    %v808 = vpop.f32.mrb[0].mxu0
    %809 = vmatprep.mubr.f32.mxu0 0.0
    %810 = vmatmul.mubr.f32.gmra.mrb[0].mxu0 %v445
    %v811 = vpop.f32.mrb[0].mxu0
    %v812 = vadd.f32 0.0, %v811
    %v813 = vpop.f32.mrb[0].mxu0
    %814 = vmatprep.mubr.f32.mxu0 0.0
    %815 = vmatmul.mubr.f32.gmra.mrb[0].mxu0 %v446
    %v816 = vpop.f32.mrb[0].mxu0
    %v817 = vadd.f32 0.0, %v816
    %v818 = vpop.f32.mrb[0].mxu0
    %819 = vmatprep.mubr.f32.mxu0 0.0
    %820 = vmatmul.mubr.f32.gmra.mrb[0].mxu0 %v447
    %v821 = vpop.f32.mrb[0].mxu0
    %v822 = vadd.f32 0.0, %v821
    %v823 = vpop.f32.mrb[0].mxu0
    %824 = vmatprep.mubr.f32.mxu0 0.0
    %825 = vmatmul.mubr.f32.gmra.mrb[0].mxu0 %v448
    %v826 = vpop.f32.mrb[0].mxu0
    %v827 = vadd.f32 0.0, %v826
    %v828 = vpop.f32.mrb[0].mxu0
    %829 = vmatprep.mubr.f32.mxu0 0.0
    %830 = vmatmul.mubr.f32.gmra.mrb[0].mxu0 %v449
    %v831 = vpop.f32.mrb[0].mxu0
    %v832 = vadd.f32 0.0, %v831
    %v833 = vpop.f32.mrb[0].mxu0
    %834 = vmatprep.mubr.f32.mxu0 0.0
    %835 = vmatmul.mubr.f32.gmra.mrb[0].mxu0 %v450
    %v836 = vpop.f32.mrb[0].mxu0
    %v837 = vadd.f32 0.0, %v836
    %v838 = vpop.f32.mrb[0].mxu0
    %839 = vmatprep.mubr.f32.mxu0 0.0
    %840 = vmatmul.mubr.f32.gmra.mrb[0].mxu0 %v451
    %v841 = vpop.f32.mrb[0].mxu0
    %v842 = vadd.f32 0.0, %v841
    %v843 = vpop.f32.mrb[0].mxu0
    %844 = vmatprep.mubr.f32.mxu0 0.0
    %845 = vmatmul.mubr.f32.gmra.mrb[0].mxu0 %v452
    %v846 = vpop.f32.mrb[0].mxu0
    %v847 = vadd.f32 0.0, %v846
    %v848 = vpop.f32.mrb[0].mxu0
    %849 = vmatprep.mubr.f32.mxu0 0.0
    %850 = vmatmul.mubr.f32.gmra.mrb[0].mxu0 %v453
    %v851 = vpop.f32.mrb[0].mxu0
    %v852 = vadd.f32 0.0, %v851
    %v853 = vpop.f32.mrb[0].mxu0
    %854 = vdwg.mxu0
    %855 = vmatprep.subr.mxu0 0.0
    %856 = vmatpush1.msra.mxu0 %v374
    %857 = vmatprep.subr.mxu0 0.0
    %858 = vmatpush1.msra.mxu0 %v375
    %859 = vmatprep.subr.mxu0 0.0
    %860 = vmatpush1.msra.mxu0 %v376
    %861 = vmatprep.subr.mxu0 0.0
    %862 = vmatpush1.msra.mxu0 %v377
    %863 = vmatprep.subr.mxu0 0.0
    %864 = vmatpush1.msra.mxu0 %v378
    %865 = vmatprep.subr.mxu0 0.0
    %866 = vmatpush1.msra.mxu0 %v379
    %867 = vmatprep.subr.mxu0 0.0
    %868 = vmatpush1.msra.mxu0 %v380
    %869 = vmatprep.subr.mxu0 0.0
    %870 = vmatpush1.msra.mxu0 %v381
    %871 = vmatprep.subr.mxu0 0.0
    %872 = vmatpush1.msra.mxu0 %v382
    %873 = vmatprep.subr.mxu0 0.0
    %874 = vmatpush1.msra.mxu0 %v383
    %875 = vmatprep.subr.mxu0 0.0
    %876 = vmatpush1.msra.mxu0 %v384
    %877 = vmatprep.subr.mxu0 0.0
    %878 = vmatpush1.msra.mxu0 %v385
    %879 = vmatprep.subr.mxu0 0.0
    %880 = vmatpush1.msra.mxu0 %v386
    %881 = vmatprep.subr.mxu0 0.0
    %882 = vmatpush1.msra.mxu0 %v387
    %883 = vmatprep.subr.mxu0 0.0
    %884 = vmatpush1.msra.mxu0 %v388
    %885 = vmatprep.subr.mxu0 0.0
    %886 = vmatpush1.msra.mxu0 %v389
    %887 = vmatprep.subr.mxu0 0.0
    %888 = vmatpush1.msra.mxu0 0.0
    %889 = vmatprep.subr.mxu0 0.0
    %890 = vmatpush1.msra.mxu0 0.0
    %891 = vmatprep.subr.mxu0 0.0
    %892 = vmatpush1.msra.mxu0 0.0
    %893 = vmatprep.subr.mxu0 0.0
    %894 = vmatpush1.msra.mxu0 0.0
    %895 = vmatprep.subr.mxu0 0.0
    %896 = vmatpush1.msra.mxu0 0.0
    %897 = vmatprep.subr.mxu0 0.0
    %898 = vmatpush1.msra.mxu0 0.0
    %899 = vmatprep.subr.mxu0 0.0
    %900 = vmatpush1.msra.mxu0 0.0
    %901 = vmatprep.subr.mxu0 0.0
    %902 = vmatpush1.msra.mxu0 0.0
    %903 = vmatprep.subr.mxu0 0.0
    %904 = vmatpush1.msra.mxu0 0.0
    %905 = vmatprep.subr.mxu0 0.0
    %906 = vmatpush1.msra.mxu0 0.0
    %907 = vmatprep.subr.mxu0 0.0
    %908 = vmatpush1.msra.mxu0 0.0
    %909 = vmatprep.subr.mxu0 0.0
    %910 = vmatpush1.msra.mxu0 0.0
    %911 = vmatprep.subr.mxu0 0.0
    %912 = vmatpush1.msra.mxu0 0.0
    %913 = vmatprep.subr.mxu0 0.0
    %914 = vmatpush1.msra.mxu0 0.0
    %915 = vmatprep.subr.mxu0 0.0
    %916 = vmatpush1.msra.mxu0 0.0
    %917 = vmatprep.subr.mxu0 0.0
    %918 = vmatpush1.msra.mxu0 0.0
    %919 = vmatprep.mubr.f32.mxu0 0.0
    %920 = vmatmul.mubr.f32.gmra.mrb[0].mxu0 %v310
    %v921 = vpop.f32.mrb[0].mxu0
    %v922 = vadd.f32 %v537, %v921
    %v923 = vpop.f32.mrb[0].mxu0
    %924 = vmatprep.mubr.f32.mxu0 0.0
    %925 = vmatmul.mubr.f32.gmra.mrb[0].mxu0 %v311
    %v926 = vpop.f32.mrb[0].mxu0
    %v927 = vadd.f32 %v542, %v926
    %v928 = vpop.f32.mrb[0].mxu0
    %929 = vmatprep.mubr.f32.mxu0 0.0
    %930 = vmatmul.mubr.f32.gmra.mrb[0].mxu0 %v312
    %v931 = vpop.f32.mrb[0].mxu0
    %v932 = vadd.f32 %v547, %v931
    %v933 = vpop.f32.mrb[0].mxu0
    %934 = vmatprep.mubr.f32.mxu0 0.0
    %935 = vmatmul.mubr.f32.gmra.mrb[0].mxu0 %v313
    %v936 = vpop.f32.mrb[0].mxu0
    %v937 = vadd.f32 %v552, %v936
    %v938 = vpop.f32.mrb[0].mxu0
    %939 = vmatprep.mubr.f32.mxu0 0.0
    %940 = vmatmul.mubr.f32.gmra.mrb[0].mxu0 %v314
    %v941 = vpop.f32.mrb[0].mxu0
    %v942 = vadd.f32 %v557, %v941
    %v943 = vpop.f32.mrb[0].mxu0
    %944 = vmatprep.mubr.f32.mxu0 0.0
    %945 = vmatmul.mubr.f32.gmra.mrb[0].mxu0 %v315
    %v946 = vpop.f32.mrb[0].mxu0
    %v947 = vadd.f32 %v562, %v946
    %v948 = vpop.f32.mrb[0].mxu0
    %949 = vmatprep.mubr.f32.mxu0 0.0
    %950 = vmatmul.mubr.f32.gmra.mrb[0].mxu0 %v316
    %v951 = vpop.f32.mrb[0].mxu0
    %v952 = vadd.f32 %v567, %v951
    %v953 = vpop.f32.mrb[0].mxu0
    %954 = vmatprep.mubr.f32.mxu0 0.0
    %955 = vmatmul.mubr.f32.gmra.mrb[0].mxu0 %v317
    %v956 = vpop.f32.mrb[0].mxu0
    %v957 = vadd.f32 %v572, %v956
    %v958 = vpop.f32.mrb[0].mxu0
    %959 = vmatprep.mubr.f32.mxu0 0.0
    %960 = vmatmul.mubr.f32.gmra.mrb[0].mxu0 %v318
    %v961 = vpop.f32.mrb[0].mxu0
    %v962 = vadd.f32 %v577, %v961
    %v963 = vpop.f32.mrb[0].mxu0
    %964 = vmatprep.mubr.f32.mxu0 0.0
    %965 = vmatmul.mubr.f32.gmra.mrb[0].mxu0 %v319
    %v966 = vpop.f32.mrb[0].mxu0
    %v967 = vadd.f32 %v582, %v966
    %v968 = vpop.f32.mrb[0].mxu0
    %969 = vmatprep.mubr.f32.mxu0 0.0
    %970 = vmatmul.mubr.f32.gmra.mrb[0].mxu0 %v320
    %v971 = vpop.f32.mrb[0].mxu0
    %v972 = vadd.f32 %v587, %v971
    %v973 = vpop.f32.mrb[0].mxu0
    %974 = vmatprep.mubr.f32.mxu0 0.0
    %975 = vmatmul.mubr.f32.gmra.mrb[0].mxu0 %v321
    %v976 = vpop.f32.mrb[0].mxu0
    %v977 = vadd.f32 %v592, %v976
    %v978 = vpop.f32.mrb[0].mxu0
    %979 = vmatprep.mubr.f32.mxu0 0.0
    %980 = vmatmul.mubr.f32.gmra.mrb[0].mxu0 %v322
    %v981 = vpop.f32.mrb[0].mxu0
    %v982 = vadd.f32 %v597, %v981
    %v983 = vpop.f32.mrb[0].mxu0
    %984 = vmatprep.mubr.f32.mxu0 0.0
    %985 = vmatmul.mubr.f32.gmra.mrb[0].mxu0 %v323
    %v986 = vpop.f32.mrb[0].mxu0
    %v987 = vadd.f32 %v602, %v986
    %v988 = vpop.f32.mrb[0].mxu0
    %989 = vmatprep.mubr.f32.mxu0 0.0
    %990 = vmatmul.mubr.f32.gmra.mrb[0].mxu0 %v324
    %v991 = vpop.f32.mrb[0].mxu0
    %v992 = vadd.f32 %v607, %v991
    %v993 = vpop.f32.mrb[0].mxu0
    %994 = vmatprep.mubr.f32.mxu0 0.0
    %995 = vmatmul.mubr.f32.gmra.mrb[0].mxu0 %v325
    %v996 = vpop.f32.mrb[0].mxu0
    %v997 = vadd.f32 %v612, %v996
    %v998 = vpop.f32.mrb[0].mxu0
    %999 = vmatprep.mubr.f32.mxu0 0.0
    %1000 = vmatmul.mubr.f32.gmra.mrb[0].mxu0 %v326
    %v1001 = vpop.f32.mrb[0].mxu0
    %v1002 = vadd.f32 %v617, %v1001
    %v1003 = vpop.f32.mrb[0].mxu0
    %1004 = vmatprep.mubr.f32.mxu0 0.0
    %1005 = vmatmul.mubr.f32.gmra.mrb[0].mxu0 %v327
    %v1006 = vpop.f32.mrb[0].mxu0
    %v1007 = vadd.f32 %v622, %v1006
    %v1008 = vpop.f32.mrb[0].mxu0
    %1009 = vmatprep.mubr.f32.mxu0 0.0
    %1010 = vmatmul.mubr.f32.gmra.mrb[0].mxu0 %v328
    %v1011 = vpop.f32.mrb[0].mxu0
    %v1012 = vadd.f32 %v627, %v1011
    %v1013 = vpop.f32.mrb[0].mxu0
    %1014 = vmatprep.mubr.f32.mxu0 0.0
    %1015 = vmatmul.mubr.f32.gmra.mrb[0].mxu0 %v329
    %v1016 = vpop.f32.mrb[0].mxu0
    %v1017 = vadd.f32 %v632, %v1016
    %v1018 = vpop.f32.mrb[0].mxu0
    %1019 = vmatprep.mubr.f32.mxu0 0.0
    %1020 = vmatmul.mubr.f32.gmra.mrb[0].mxu0 %v330
    %v1021 = vpop.f32.mrb[0].mxu0
    %v1022 = vadd.f32 %v637, %v1021
    %v1023 = vpop.f32.mrb[0].mxu0
    %1024 = vmatprep.mubr.f32.mxu0 0.0
    %1025 = vmatmul.mubr.f32.gmra.mrb[0].mxu0 %v331
    %v1026 = vpop.f32.mrb[0].mxu0
    %v1027 = vadd.f32 %v642, %v1026
    %v1028 = vpop.f32.mrb[0].mxu0
    %1029 = vmatprep.mubr.f32.mxu0 0.0
    %1030 = vmatmul.mubr.f32.gmra.mrb[0].mxu0 %v332
    %v1031 = vpop.f32.mrb[0].mxu0
    %v1032 = vadd.f32 %v647, %v1031
    %v1033 = vpop.f32.mrb[0].mxu0
    %1034 = vmatprep.mubr.f32.mxu0 0.0
    %1035 = vmatmul.mubr.f32.gmra.mrb[0].mxu0 %v333
    %v1036 = vpop.f32.mrb[0].mxu0
    %v1037 = vadd.f32 %v652, %v1036
    %v1038 = vpop.f32.mrb[0].mxu0
    %1039 = vmatprep.mubr.f32.mxu0 0.0
    %1040 = vmatmul.mubr.f32.gmra.mrb[0].mxu0 %v334
    %v1041 = vpop.f32.mrb[0].mxu0
    %v1042 = vadd.f32 %v657, %v1041
    %v1043 = vpop.f32.mrb[0].mxu0
    %1044 = vmatprep.mubr.f32.mxu0 0.0
    %1045 = vmatmul.mubr.f32.gmra.mrb[0].mxu0 %v335
    %v1046 = vpop.f32.mrb[0].mxu0
    %v1047 = vadd.f32 %v662, %v1046
    %v1048 = vpop.f32.mrb[0].mxu0
    %1049 = vmatprep.mubr.f32.mxu0 0.0
    %1050 = vmatmul.mubr.f32.gmra.mrb[0].mxu0 %v336
    %v1051 = vpop.f32.mrb[0].mxu0
    %v1052 = vadd.f32 %v667, %v1051
    %v1053 = vpop.f32.mrb[0].mxu0
    %1054 = vmatprep.mubr.f32.mxu0 0.0
    %1055 = vmatmul.mubr.f32.gmra.mrb[0].mxu0 %v337
    %v1056 = vpop.f32.mrb[0].mxu0
    %v1057 = vadd.f32 %v672, %v1056
    %v1058 = vpop.f32.mrb[0].mxu0
    %1059 = vmatprep.mubr.f32.mxu0 0.0
    %1060 = vmatmul.mubr.f32.gmra.mrb[0].mxu0 %v338
    %v1061 = vpop.f32.mrb[0].mxu0
    %v1062 = vadd.f32 %v677, %v1061
    %v1063 = vpop.f32.mrb[0].mxu0
    %1064 = vmatprep.mubr.f32.mxu0 0.0
    %1065 = vmatmul.mubr.f32.gmra.mrb[0].mxu0 %v339
    %v1066 = vpop.f32.mrb[0].mxu0
    %v1067 = vadd.f32 %v682, %v1066
    %v1068 = vpop.f32.mrb[0].mxu0
    %1069 = vmatprep.mubr.f32.mxu0 0.0
    %1070 = vmatmul.mubr.f32.gmra.mrb[0].mxu0 %v340
    %v1071 = vpop.f32.mrb[0].mxu0
    %v1072 = vadd.f32 %v687, %v1071
    %v1073 = vpop.f32.mrb[0].mxu0
    %1074 = vmatprep.mubr.f32.mxu0 0.0
    %1075 = vmatmul.mubr.f32.gmra.mrb[0].mxu0 %v341
    %v1076 = vpop.f32.mrb[0].mxu0
    %v1077 = vadd.f32 %v692, %v1076
    %v1078 = vpop.f32.mrb[0].mxu0
    %1079 = vmatprep.mubr.f32.mxu0 0.0
    %1080 = vmatmul.mubr.f32.gmra.mrb[0].mxu0 %v342
    %v1081 = vpop.f32.mrb[0].mxu0
    %v1082 = vadd.f32 %v697, %v1081
    %v1083 = vpop.f32.mrb[0].mxu0
    %1084 = vmatprep.mubr.f32.mxu0 0.0
    %1085 = vmatmul.mubr.f32.gmra.mrb[0].mxu0 %v343
    %v1086 = vpop.f32.mrb[0].mxu0
    %v1087 = vadd.f32 %v702, %v1086
    %v1088 = vpop.f32.mrb[0].mxu0
    %1089 = vmatprep.mubr.f32.mxu0 0.0
    %1090 = vmatmul.mubr.f32.gmra.mrb[0].mxu0 %v344
    %v1091 = vpop.f32.mrb[0].mxu0
    %v1092 = vadd.f32 %v707, %v1091
    %v1093 = vpop.f32.mrb[0].mxu0
    %1094 = vmatprep.mubr.f32.mxu0 0.0
    %1095 = vmatmul.mubr.f32.gmra.mrb[0].mxu0 %v345
    %v1096 = vpop.f32.mrb[0].mxu0
    %v1097 = vadd.f32 %v712, %v1096
    %v1098 = vpop.f32.mrb[0].mxu0
    %1099 = vmatprep.mubr.f32.mxu0 0.0
    %1100 = vmatmul.mubr.f32.gmra.mrb[0].mxu0 %v346
    %v1101 = vpop.f32.mrb[0].mxu0
    %v1102 = vadd.f32 %v717, %v1101
    %v1103 = vpop.f32.mrb[0].mxu0
    %1104 = vmatprep.mubr.f32.mxu0 0.0
    %1105 = vmatmul.mubr.f32.gmra.mrb[0].mxu0 %v347
    %v1106 = vpop.f32.mrb[0].mxu0
    %v1107 = vadd.f32 %v722, %v1106
    %v1108 = vpop.f32.mrb[0].mxu0
    %1109 = vmatprep.mubr.f32.mxu0 0.0
    %1110 = vmatmul.mubr.f32.gmra.mrb[0].mxu0 %v348
    %v1111 = vpop.f32.mrb[0].mxu0
    %v1112 = vadd.f32 %v727, %v1111
    %v1113 = vpop.f32.mrb[0].mxu0
    %1114 = vmatprep.mubr.f32.mxu0 0.0
    %1115 = vmatmul.mubr.f32.gmra.mrb[0].mxu0 %v349
    %v1116 = vpop.f32.mrb[0].mxu0
    %v1117 = vadd.f32 %v732, %v1116
    %v1118 = vpop.f32.mrb[0].mxu0
    %1119 = vmatprep.mubr.f32.mxu0 0.0
    %1120 = vmatmul.mubr.f32.gmra.mrb[0].mxu0 %v350
    %v1121 = vpop.f32.mrb[0].mxu0
    %v1122 = vadd.f32 %v737, %v1121
    %v1123 = vpop.f32.mrb[0].mxu0
    %1124 = vmatprep.mubr.f32.mxu0 0.0
    %1125 = vmatmul.mubr.f32.gmra.mrb[0].mxu0 %v351
    %v1126 = vpop.f32.mrb[0].mxu0
    %v1127 = vadd.f32 %v742, %v1126
    %v1128 = vpop.f32.mrb[0].mxu0
    %1129 = vmatprep.mubr.f32.mxu0 0.0
    %1130 = vmatmul.mubr.f32.gmra.mrb[0].mxu0 %v352
    %v1131 = vpop.f32.mrb[0].mxu0
    %v1132 = vadd.f32 %v747, %v1131
    %v1133 = vpop.f32.mrb[0].mxu0
    %1134 = vmatprep.mubr.f32.mxu0 0.0
    %1135 = vmatmul.mubr.f32.gmra.mrb[0].mxu0 %v353
    %v1136 = vpop.f32.mrb[0].mxu0
    %v1137 = vadd.f32 %v752, %v1136
    %v1138 = vpop.f32.mrb[0].mxu0
    %1139 = vmatprep.mubr.f32.mxu0 0.0
    %1140 = vmatmul.mubr.f32.gmra.mrb[0].mxu0 %v354
    %v1141 = vpop.f32.mrb[0].mxu0
    %v1142 = vadd.f32 %v757, %v1141
    %v1143 = vpop.f32.mrb[0].mxu0
    %1144 = vmatprep.mubr.f32.mxu0 0.0
    %1145 = vmatmul.mubr.f32.gmra.mrb[0].mxu0 %v355
    %v1146 = vpop.f32.mrb[0].mxu0
    %v1147 = vadd.f32 %v762, %v1146
    %v1148 = vpop.f32.mrb[0].mxu0
    %1149 = vmatprep.mubr.f32.mxu0 0.0
    %1150 = vmatmul.mubr.f32.gmra.mrb[0].mxu0 %v356
    %v1151 = vpop.f32.mrb[0].mxu0
    %v1152 = vadd.f32 %v767, %v1151
    %v1153 = vpop.f32.mrb[0].mxu0
    %1154 = vmatprep.mubr.f32.mxu0 0.0
    %1155 = vmatmul.mubr.f32.gmra.mrb[0].mxu0 %v357
    %v1156 = vpop.f32.mrb[0].mxu0
    %v1157 = vadd.f32 %v772, %v1156
    %v1158 = vpop.f32.mrb[0].mxu0
    %1159 = vmatprep.mubr.f32.mxu0 0.0
    %1160 = vmatmul.mubr.f32.gmra.mrb[0].mxu0 %v358
    %v1161 = vpop.f32.mrb[0].mxu0
    %v1162 = vadd.f32 %v777, %v1161
    %v1163 = vpop.f32.mrb[0].mxu0
    %1164 = vmatprep.mubr.f32.mxu0 0.0
    %1165 = vmatmul.mubr.f32.gmra.mrb[0].mxu0 %v359
    %v1166 = vpop.f32.mrb[0].mxu0
    %v1167 = vadd.f32 %v782, %v1166
    %v1168 = vpop.f32.mrb[0].mxu0
    %1169 = vmatprep.mubr.f32.mxu0 0.0
    %1170 = vmatmul.mubr.f32.gmra.mrb[0].mxu0 %v360
    %v1171 = vpop.f32.mrb[0].mxu0
    %v1172 = vadd.f32 %v787, %v1171
    %v1173 = vpop.f32.mrb[0].mxu0
    %1174 = vmatprep.mubr.f32.mxu0 0.0
    %1175 = vmatmul.mubr.f32.gmra.mrb[0].mxu0 %v361
    %v1176 = vpop.f32.mrb[0].mxu0
    %v1177 = vadd.f32 %v792, %v1176
    %v1178 = vpop.f32.mrb[0].mxu0
    %1179 = vmatprep.mubr.f32.mxu0 0.0
    %1180 = vmatmul.mubr.f32.gmra.mrb[0].mxu0 %v362
    %v1181 = vpop.f32.mrb[0].mxu0
    %v1182 = vadd.f32 %v797, %v1181
    %v1183 = vpop.f32.mrb[0].mxu0
    %1184 = vmatprep.mubr.f32.mxu0 0.0
    %1185 = vmatmul.mubr.f32.gmra.mrb[0].mxu0 %v363
    %v1186 = vpop.f32.mrb[0].mxu0
    %v1187 = vadd.f32 %v802, %v1186
    %v1188 = vpop.f32.mrb[0].mxu0
    %1189 = vmatprep.mubr.f32.mxu0 0.0
    %1190 = vmatmul.mubr.f32.gmra.mrb[0].mxu0 %v364
    %v1191 = vpop.f32.mrb[0].mxu0
    %v1192 = vadd.f32 %v807, %v1191
    %v1193 = vpop.f32.mrb[0].mxu0
    %1194 = vmatprep.mubr.f32.mxu0 0.0
    %1195 = vmatmul.mubr.f32.gmra.mrb[0].mxu0 %v365
    %v1196 = vpop.f32.mrb[0].mxu0
    %v1197 = vadd.f32 %v812, %v1196
    %v1198 = vpop.f32.mrb[0].mxu0
    %1199 = vmatprep.mubr.f32.mxu0 0.0
    %1200 = vmatmul.mubr.f32.gmra.mrb[0].mxu0 %v366
    %v1201 = vpop.f32.mrb[0].mxu0
    %v1202 = vadd.f32 %v817, %v1201
    %v1203 = vpop.f32.mrb[0].mxu0
    %1204 = vmatprep.mubr.f32.mxu0 0.0
    %1205 = vmatmul.mubr.f32.gmra.mrb[0].mxu0 %v367
    %v1206 = vpop.f32.mrb[0].mxu0
    %v1207 = vadd.f32 %v822, %v1206
    %v1208 = vpop.f32.mrb[0].mxu0
    %1209 = vmatprep.mubr.f32.mxu0 0.0
    %1210 = vmatmul.mubr.f32.gmra.mrb[0].mxu0 %v368
    %v1211 = vpop.f32.mrb[0].mxu0
    %v1212 = vadd.f32 %v827, %v1211
    %v1213 = vpop.f32.mrb[0].mxu0
    %1214 = vmatprep.mubr.f32.mxu0 0.0
    %1215 = vmatmul.mubr.f32.gmra.mrb[0].mxu0 %v369
    %v1216 = vpop.f32.mrb[0].mxu0
    %v1217 = vadd.f32 %v832, %v1216
    %v1218 = vpop.f32.mrb[0].mxu0
    %1219 = vmatprep.mubr.f32.mxu0 0.0
    %1220 = vmatmul.mubr.f32.gmra.mrb[0].mxu0 %v370
    %v1221 = vpop.f32.mrb[0].mxu0
    %v1222 = vadd.f32 %v837, %v1221
    %v1223 = vpop.f32.mrb[0].mxu0
    %1224 = vmatprep.mubr.f32.mxu0 0.0
    %1225 = vmatmul.mubr.f32.gmra.mrb[0].mxu0 %v371
    %v1226 = vpop.f32.mrb[0].mxu0
    %v1227 = vadd.f32 %v842, %v1226
    %v1228 = vpop.f32.mrb[0].mxu0
    %1229 = vmatprep.mubr.f32.mxu0 0.0
    %1230 = vmatmul.mubr.f32.gmra.mrb[0].mxu0 %v372
    %v1231 = vpop.f32.mrb[0].mxu0
    %v1232 = vadd.f32 %v847, %v1231
    %v1233 = vpop.f32.mrb[0].mxu0
    %1234 = vmatprep.mubr.f32.mxu0 0.0
    %1235 = vmatmul.mubr.f32.gmra.mrb[0].mxu0 %v373
    %v1236 = vpop.f32.mrb[0].mxu0
    %v1237 = vadd.f32 %v852, %v1236
    %v1238 = vpop.f32.mrb[0].mxu0
    %1239 = vdwg.mxu0
    %v1240 = vld [vmem:[%s4] sm:$0x1]
    %v1242 = vlaneseq
    %v1243 = vshrl.u32 %v1242, 7
    %v1244 = vsub.s32 0, %v1243
    %v1245 = vrot.slane %v1240, %v1244
    %v1247 = vmul.f32 %v922, %v1245
    %v1248 = vmul.f32 %v927, %v1245
    %v1249 = vmul.f32 %v932, %v1245
    %v1250 = vmul.f32 %v937, %v1245
    %v1251 = vmul.f32 %v942, %v1245
    %v1252 = vmul.f32 %v947, %v1245
    %v1253 = vmul.f32 %v952, %v1245
    %v1254 = vmul.f32 %v957, %v1245
    %v1255 = vmul.f32 %v962, %v1245
    %v1256 = vmul.f32 %v967, %v1245
    %v1257 = vmul.f32 %v972, %v1245
    %v1258 = vmul.f32 %v977, %v1245
    %v1259 = vmul.f32 %v982, %v1245
    %v1260 = vmul.f32 %v987, %v1245
    %v1261 = vmul.f32 %v992, %v1245
    %v1262 = vmul.f32 %v997, %v1245
    %v1263 = vmul.f32 %v1002, %v1245
    %v1264 = vmul.f32 %v1007, %v1245
    %v1265 = vmul.f32 %v1012, %v1245
    %v1266 = vmul.f32 %v1017, %v1245
    %v1267 = vmul.f32 %v1022, %v1245
    %v1268 = vmul.f32 %v1027, %v1245
    %v1269 = vmul.f32 %v1032, %v1245
    %v1270 = vmul.f32 %v1037, %v1245
    %v1271 = vmul.f32 %v1042, %v1245
    %v1272 = vmul.f32 %v1047, %v1245
    %v1273 = vmul.f32 %v1052, %v1245
    %v1274 = vmul.f32 %v1057, %v1245
    %v1275 = vmul.f32 %v1062, %v1245
    %v1276 = vmul.f32 %v1067, %v1245
    %v1277 = vmul.f32 %v1072, %v1245
    %v1278 = vmul.f32 %v1077, %v1245
    %v1279 = vmul.f32 %v1082, %v1245
    %v1280 = vmul.f32 %v1087, %v1245
    %v1281 = vmul.f32 %v1092, %v1245
    %v1282 = vmul.f32 %v1097, %v1245
    %v1283 = vmul.f32 %v1102, %v1245
    %v1284 = vmul.f32 %v1107, %v1245
    %v1285 = vmul.f32 %v1112, %v1245
    %v1286 = vmul.f32 %v1117, %v1245
    %v1287 = vmul.f32 %v1122, %v1245
    %v1288 = vmul.f32 %v1127, %v1245
    %v1289 = vmul.f32 %v1132, %v1245
    %v1290 = vmul.f32 %v1137, %v1245
    %v1291 = vmul.f32 %v1142, %v1245
    %v1292 = vmul.f32 %v1147, %v1245
    %v1293 = vmul.f32 %v1152, %v1245
    %v1294 = vmul.f32 %v1157, %v1245
    %v1295 = vmul.f32 %v1162, %v1245
    %v1296 = vmul.f32 %v1167, %v1245
    %v1297 = vmul.f32 %v1172, %v1245
    %v1298 = vmul.f32 %v1177, %v1245
    %v1299 = vmul.f32 %v1182, %v1245
    %v1300 = vmul.f32 %v1187, %v1245
    %v1301 = vmul.f32 %v1192, %v1245
    %v1302 = vmul.f32 %v1197, %v1245
    %v1303 = vmul.f32 %v1202, %v1245
    %v1304 = vmul.f32 %v1207, %v1245
    %v1305 = vmul.f32 %v1212, %v1245
    %v1306 = vmul.f32 %v1217, %v1245
    %v1307 = vmul.f32 %v1222, %v1245
    %v1308 = vmul.f32 %v1227, %v1245
    %v1309 = vmul.f32 %v1232, %v1245
    %v1310 = vmul.f32 %v1237, %v1245
    %v1311 = vld [vmem:[%s5] sm:$0x1]
    %v1313 = vlaneseq
    %v1314 = vshrl.u32 %v1313, 7
    %v1315 = vsub.s32 0, %v1314
    %v1316 = vrot.slane %v1311, %v1315
    %v1318 = vadd.f32 %v1247, %v1316
    %v1319 = vadd.f32 %v1248, %v1316
    %v1320 = vadd.f32 %v1249, %v1316
    %v1321 = vadd.f32 %v1250, %v1316
    %v1322 = vadd.f32 %v1251, %v1316
    %v1323 = vadd.f32 %v1252, %v1316
    %v1324 = vadd.f32 %v1253, %v1316
    %v1325 = vadd.f32 %v1254, %v1316
    %v1326 = vadd.f32 %v1255, %v1316
    %v1327 = vadd.f32 %v1256, %v1316
    %v1328 = vadd.f32 %v1257, %v1316
    %v1329 = vadd.f32 %v1258, %v1316
    %v1330 = vadd.f32 %v1259, %v1316
    %v1331 = vadd.f32 %v1260, %v1316
    %v1332 = vadd.f32 %v1261, %v1316
    %v1333 = vadd.f32 %v1262, %v1316
    %v1334 = vadd.f32 %v1263, %v1316
    %v1335 = vadd.f32 %v1264, %v1316
    %v1336 = vadd.f32 %v1265, %v1316
    %v1337 = vadd.f32 %v1266, %v1316
    %v1338 = vadd.f32 %v1267, %v1316
    %v1339 = vadd.f32 %v1268, %v1316
    %v1340 = vadd.f32 %v1269, %v1316
    %v1341 = vadd.f32 %v1270, %v1316
    %v1342 = vadd.f32 %v1271, %v1316
    %v1343 = vadd.f32 %v1272, %v1316
    %v1344 = vadd.f32 %v1273, %v1316
    %v1345 = vadd.f32 %v1274, %v1316
    %v1346 = vadd.f32 %v1275, %v1316
    %v1347 = vadd.f32 %v1276, %v1316
    %v1348 = vadd.f32 %v1277, %v1316
    %v1349 = vadd.f32 %v1278, %v1316
    %v1350 = vadd.f32 %v1279, %v1316
    %v1351 = vadd.f32 %v1280, %v1316
    %v1352 = vadd.f32 %v1281, %v1316
    %v1353 = vadd.f32 %v1282, %v1316
    %v1354 = vadd.f32 %v1283, %v1316
    %v1355 = vadd.f32 %v1284, %v1316
    %v1356 = vadd.f32 %v1285, %v1316
    %v1357 = vadd.f32 %v1286, %v1316
    %v1358 = vadd.f32 %v1287, %v1316
    %v1359 = vadd.f32 %v1288, %v1316
    %v1360 = vadd.f32 %v1289, %v1316
    %v1361 = vadd.f32 %v1290, %v1316
    %v1362 = vadd.f32 %v1291, %v1316
    %v1363 = vadd.f32 %v1292, %v1316
    %v1364 = vadd.f32 %v1293, %v1316
    %v1365 = vadd.f32 %v1294, %v1316
    %v1366 = vadd.f32 %v1295, %v1316
    %v1367 = vadd.f32 %v1296, %v1316
    %v1368 = vadd.f32 %v1297, %v1316
    %v1369 = vadd.f32 %v1298, %v1316
    %v1370 = vadd.f32 %v1299, %v1316
    %v1371 = vadd.f32 %v1300, %v1316
    %v1372 = vadd.f32 %v1301, %v1316
    %v1373 = vadd.f32 %v1302, %v1316
    %v1374 = vadd.f32 %v1303, %v1316
    %v1375 = vadd.f32 %v1304, %v1316
    %v1376 = vadd.f32 %v1305, %v1316
    %v1377 = vadd.f32 %v1306, %v1316
    %v1378 = vadd.f32 %v1307, %v1316
    %v1379 = vadd.f32 %v1308, %v1316
    %v1380 = vadd.f32 %v1309, %v1316
    %v1381 = vadd.f32 %v1310, %v1316
    %v1382 = vxor.u32 %v1318, 2147483648
    %v1383 = vxor.u32 %v1319, 2147483648
    %v1384 = vxor.u32 %v1320, 2147483648
    %v1385 = vxor.u32 %v1321, 2147483648
    %v1386 = vxor.u32 %v1322, 2147483648
    %v1387 = vxor.u32 %v1323, 2147483648
    %v1388 = vxor.u32 %v1324, 2147483648
    %v1389 = vxor.u32 %v1325, 2147483648
    %v1390 = vxor.u32 %v1326, 2147483648
    %v1391 = vxor.u32 %v1327, 2147483648
    %v1392 = vxor.u32 %v1328, 2147483648
    %v1393 = vxor.u32 %v1329, 2147483648
    %v1394 = vxor.u32 %v1330, 2147483648
    %v1395 = vxor.u32 %v1331, 2147483648
    %v1396 = vxor.u32 %v1332, 2147483648
    %v1397 = vxor.u32 %v1333, 2147483648
    %v1398 = vxor.u32 %v1334, 2147483648
    %v1399 = vxor.u32 %v1335, 2147483648
    %v1400 = vxor.u32 %v1336, 2147483648
    %v1401 = vxor.u32 %v1337, 2147483648
    %v1402 = vxor.u32 %v1338, 2147483648
    %v1403 = vxor.u32 %v1339, 2147483648
    %v1404 = vxor.u32 %v1340, 2147483648
    %v1405 = vxor.u32 %v1341, 2147483648
    %v1406 = vxor.u32 %v1342, 2147483648
    %v1407 = vxor.u32 %v1343, 2147483648
    %v1408 = vxor.u32 %v1344, 2147483648
    %v1409 = vxor.u32 %v1345, 2147483648
    %v1410 = vxor.u32 %v1346, 2147483648
    %v1411 = vxor.u32 %v1347, 2147483648
    %v1412 = vxor.u32 %v1348, 2147483648
    %v1413 = vxor.u32 %v1349, 2147483648
    %v1414 = vxor.u32 %v1350, 2147483648
    %v1415 = vxor.u32 %v1351, 2147483648
    %v1416 = vxor.u32 %v1352, 2147483648
    %v1417 = vxor.u32 %v1353, 2147483648
    %v1418 = vxor.u32 %v1354, 2147483648
    %v1419 = vxor.u32 %v1355, 2147483648
    %v1420 = vxor.u32 %v1356, 2147483648
    %v1421 = vxor.u32 %v1357, 2147483648
    %v1422 = vxor.u32 %v1358, 2147483648
    %v1423 = vxor.u32 %v1359, 2147483648
    %v1424 = vxor.u32 %v1360, 2147483648
    %v1425 = vxor.u32 %v1361, 2147483648
    %v1426 = vxor.u32 %v1362, 2147483648
    %v1427 = vxor.u32 %v1363, 2147483648
    %v1428 = vxor.u32 %v1364, 2147483648
    %v1429 = vxor.u32 %v1365, 2147483648
    %v1430 = vxor.u32 %v1366, 2147483648
    %v1431 = vxor.u32 %v1367, 2147483648
    %v1432 = vxor.u32 %v1368, 2147483648
    %v1433 = vxor.u32 %v1369, 2147483648
    %v1434 = vxor.u32 %v1370, 2147483648
    %v1435 = vxor.u32 %v1371, 2147483648
    %v1436 = vxor.u32 %v1372, 2147483648
    %v1437 = vxor.u32 %v1373, 2147483648
    %v1438 = vxor.u32 %v1374, 2147483648
    %v1439 = vxor.u32 %v1375, 2147483648
    %v1440 = vxor.u32 %v1376, 2147483648
    %v1441 = vxor.u32 %v1377, 2147483648
    %v1442 = vxor.u32 %v1378, 2147483648
    %v1443 = vxor.u32 %v1379, 2147483648
    %v1444 = vxor.u32 %v1380, 2147483648
    %v1445 = vxor.u32 %v1381, 2147483648
    %v1446 = vmul.f32 %v1382, 1.442695
    %v1447 = vpow.pop %v1446
    %v1448 = vmul.f32 %v1383, 1.442695
    %v1449 = vpow.pop %v1448
    %v1450 = vmul.f32 %v1384, 1.442695
    %v1451 = vpow.pop %v1450
    %v1452 = vmul.f32 %v1385, 1.442695
    %v1453 = vpow.pop %v1452
    %v1454 = vmul.f32 %v1386, 1.442695
    %v1455 = vpow.pop %v1454
    %v1456 = vmul.f32 %v1387, 1.442695
    %v1457 = vpow.pop %v1456
    %v1458 = vmul.f32 %v1388, 1.442695
    %v1459 = vpow.pop %v1458
    %v1460 = vmul.f32 %v1389, 1.442695
    %v1461 = vpow.pop %v1460
    %v1462 = vmul.f32 %v1390, 1.442695
    %v1463 = vpow.pop %v1462
    %v1464 = vmul.f32 %v1391, 1.442695
    %v1465 = vpow.pop %v1464
    %v1466 = vmul.f32 %v1392, 1.442695
    %v1467 = vpow.pop %v1466
    %v1468 = vmul.f32 %v1393, 1.442695
    %v1469 = vpow.pop %v1468
    %v1470 = vmul.f32 %v1394, 1.442695
    %v1471 = vpow.pop %v1470
    %v1472 = vmul.f32 %v1395, 1.442695
    %v1473 = vpow.pop %v1472
    %v1474 = vmul.f32 %v1396, 1.442695
    %v1475 = vpow.pop %v1474
    %v1476 = vmul.f32 %v1397, 1.442695
    %v1477 = vpow.pop %v1476
    %v1478 = vmul.f32 %v1398, 1.442695
    %v1479 = vpow.pop %v1478
    %v1480 = vmul.f32 %v1399, 1.442695
    %v1481 = vpow.pop %v1480
    %v1482 = vmul.f32 %v1400, 1.442695
    %v1483 = vpow.pop %v1482
    %v1484 = vmul.f32 %v1401, 1.442695
    %v1485 = vpow.pop %v1484
    %v1486 = vmul.f32 %v1402, 1.442695
    %v1487 = vpow.pop %v1486
    %v1488 = vmul.f32 %v1403, 1.442695
    %v1489 = vpow.pop %v1488
    %v1490 = vmul.f32 %v1404, 1.442695
    %v1491 = vpow.pop %v1490
    %v1492 = vmul.f32 %v1405, 1.442695
    %v1493 = vpow.pop %v1492
    %v1494 = vmul.f32 %v1406, 1.442695
    %v1495 = vpow.pop %v1494
    %v1496 = vmul.f32 %v1407, 1.442695
    %v1497 = vpow.pop %v1496
    %v1498 = vmul.f32 %v1408, 1.442695
    %v1499 = vpow.pop %v1498
    %v1500 = vmul.f32 %v1409, 1.442695
    %v1501 = vpow.pop %v1500
    %v1502 = vmul.f32 %v1410, 1.442695
    %v1503 = vpow.pop %v1502
    %v1504 = vmul.f32 %v1411, 1.442695
    %v1505 = vpow.pop %v1504
    %v1506 = vmul.f32 %v1412, 1.442695
    %v1507 = vpow.pop %v1506
    %v1508 = vmul.f32 %v1413, 1.442695
    %v1509 = vpow.pop %v1508
    %v1510 = vmul.f32 %v1414, 1.442695
    %v1511 = vpow.pop %v1510
    %v1512 = vmul.f32 %v1415, 1.442695
    %v1513 = vpow.pop %v1512
    %v1514 = vmul.f32 %v1416, 1.442695
    %v1515 = vpow.pop %v1514
    %v1516 = vmul.f32 %v1417, 1.442695
    %v1517 = vpow.pop %v1516
    %v1518 = vmul.f32 %v1418, 1.442695
    %v1519 = vpow.pop %v1518
    %v1520 = vmul.f32 %v1419, 1.442695
    %v1521 = vpow.pop %v1520
    %v1522 = vmul.f32 %v1420, 1.442695
    %v1523 = vpow.pop %v1522
    %v1524 = vmul.f32 %v1421, 1.442695
    %v1525 = vpow.pop %v1524
    %v1526 = vmul.f32 %v1422, 1.442695
    %v1527 = vpow.pop %v1526
    %v1528 = vmul.f32 %v1423, 1.442695
    %v1529 = vpow.pop %v1528
    %v1530 = vmul.f32 %v1424, 1.442695
    %v1531 = vpow.pop %v1530
    %v1532 = vmul.f32 %v1425, 1.442695
    %v1533 = vpow.pop %v1532
    %v1534 = vmul.f32 %v1426, 1.442695
    %v1535 = vpow.pop %v1534
    %v1536 = vmul.f32 %v1427, 1.442695
    %v1537 = vpow.pop %v1536
    %v1538 = vmul.f32 %v1428, 1.442695
    %v1539 = vpow.pop %v1538
    %v1540 = vmul.f32 %v1429, 1.442695
    %v1541 = vpow.pop %v1540
    %v1542 = vmul.f32 %v1430, 1.442695
    %v1543 = vpow.pop %v1542
    %v1544 = vmul.f32 %v1431, 1.442695
    %v1545 = vpow.pop %v1544
    %v1546 = vmul.f32 %v1432, 1.442695
    %v1547 = vpow.pop %v1546
    %v1548 = vmul.f32 %v1433, 1.442695
    %v1549 = vpow.pop %v1548
    %v1550 = vmul.f32 %v1434, 1.442695
    %v1551 = vpow.pop %v1550
    %v1552 = vmul.f32 %v1435, 1.442695
    %v1553 = vpow.pop %v1552
    %v1554 = vmul.f32 %v1436, 1.442695
    %v1555 = vpow.pop %v1554
    %v1556 = vmul.f32 %v1437, 1.442695
    %v1557 = vpow.pop %v1556
    %v1558 = vmul.f32 %v1438, 1.442695
    %v1559 = vpow.pop %v1558
    %v1560 = vmul.f32 %v1439, 1.442695
    %v1561 = vpow.pop %v1560
    %v1562 = vmul.f32 %v1440, 1.442695
    %v1563 = vpow.pop %v1562
    %v1564 = vmul.f32 %v1441, 1.442695
    %v1565 = vpow.pop %v1564
    %v1566 = vmul.f32 %v1442, 1.442695
    %v1567 = vpow.pop %v1566
    %v1568 = vmul.f32 %v1443, 1.442695
    %v1569 = vpow.pop %v1568
    %v1570 = vmul.f32 %v1444, 1.442695
    %v1571 = vpow.pop %v1570
    %v1572 = vmul.f32 %v1445, 1.442695
    %v1573 = vpow.pop %v1572
    %v1574 = vadd.f32 %v1447, 1.0
    %v1575 = vadd.f32 %v1449, 1.0
    %v1576 = vadd.f32 %v1451, 1.0
    %v1577 = vadd.f32 %v1453, 1.0
    %v1578 = vadd.f32 %v1455, 1.0
    %v1579 = vadd.f32 %v1457, 1.0
    %v1580 = vadd.f32 %v1459, 1.0
    %v1581 = vadd.f32 %v1461, 1.0
    %v1582 = vadd.f32 %v1463, 1.0
    %v1583 = vadd.f32 %v1465, 1.0
    %v1584 = vadd.f32 %v1467, 1.0
    %v1585 = vadd.f32 %v1469, 1.0
    %v1586 = vadd.f32 %v1471, 1.0
    %v1587 = vadd.f32 %v1473, 1.0
    %v1588 = vadd.f32 %v1475, 1.0
    %v1589 = vadd.f32 %v1477, 1.0
    %v1590 = vadd.f32 %v1479, 1.0
    %v1591 = vadd.f32 %v1481, 1.0
    %v1592 = vadd.f32 %v1483, 1.0
    %v1593 = vadd.f32 %v1485, 1.0
    %v1594 = vadd.f32 %v1487, 1.0
    %v1595 = vadd.f32 %v1489, 1.0
    %v1596 = vadd.f32 %v1491, 1.0
    %v1597 = vadd.f32 %v1493, 1.0
    %v1598 = vadd.f32 %v1495, 1.0
    %v1599 = vadd.f32 %v1497, 1.0
    %v1600 = vadd.f32 %v1499, 1.0
    %v1601 = vadd.f32 %v1501, 1.0
    %v1602 = vadd.f32 %v1503, 1.0
    %v1603 = vadd.f32 %v1505, 1.0
    %v1604 = vadd.f32 %v1507, 1.0
    %v1605 = vadd.f32 %v1509, 1.0
    %v1606 = vadd.f32 %v1511, 1.0
    %v1607 = vadd.f32 %v1513, 1.0
    %v1608 = vadd.f32 %v1515, 1.0
    %v1609 = vadd.f32 %v1517, 1.0
    %v1610 = vadd.f32 %v1519, 1.0
    %v1611 = vadd.f32 %v1521, 1.0
    %v1612 = vadd.f32 %v1523, 1.0
    %v1613 = vadd.f32 %v1525, 1.0
    %v1614 = vadd.f32 %v1527, 1.0
    %v1615 = vadd.f32 %v1529, 1.0
    %v1616 = vadd.f32 %v1531, 1.0
    %v1617 = vadd.f32 %v1533, 1.0
    %v1618 = vadd.f32 %v1535, 1.0
    %v1619 = vadd.f32 %v1537, 1.0
    %v1620 = vadd.f32 %v1539, 1.0
    %v1621 = vadd.f32 %v1541, 1.0
    %v1622 = vadd.f32 %v1543, 1.0
    %v1623 = vadd.f32 %v1545, 1.0
    %v1624 = vadd.f32 %v1547, 1.0
    %v1625 = vadd.f32 %v1549, 1.0
    %v1626 = vadd.f32 %v1551, 1.0
    %v1627 = vadd.f32 %v1553, 1.0
    %v1628 = vadd.f32 %v1555, 1.0
    %v1629 = vadd.f32 %v1557, 1.0
    %v1630 = vadd.f32 %v1559, 1.0
    %v1631 = vadd.f32 %v1561, 1.0
    %v1632 = vadd.f32 %v1563, 1.0
    %v1633 = vadd.f32 %v1565, 1.0
    %v1634 = vadd.f32 %v1567, 1.0
    %v1635 = vadd.f32 %v1569, 1.0
    %v1636 = vadd.f32 %v1571, 1.0
    %v1637 = vadd.f32 %v1573, 1.0
    %v1638 = vrcp.pop %v1574
    %v1639 = vmul.f32 1.0, %v1638
    %v1640 = vrcp.pop %v1575
    %v1641 = vmul.f32 1.0, %v1640
    %v1642 = vrcp.pop %v1576
    %v1643 = vmul.f32 1.0, %v1642
    %v1644 = vrcp.pop %v1577
    %v1645 = vmul.f32 1.0, %v1644
    %v1646 = vrcp.pop %v1578
    %v1647 = vmul.f32 1.0, %v1646
    %v1648 = vrcp.pop %v1579
    %v1649 = vmul.f32 1.0, %v1648
    %v1650 = vrcp.pop %v1580
    %v1651 = vmul.f32 1.0, %v1650
    %v1652 = vrcp.pop %v1581
    %v1653 = vmul.f32 1.0, %v1652
    %v1654 = vrcp.pop %v1582
    %v1655 = vmul.f32 1.0, %v1654
    %v1656 = vrcp.pop %v1583
    %v1657 = vmul.f32 1.0, %v1656
    %v1658 = vrcp.pop %v1584
    %v1659 = vmul.f32 1.0, %v1658
    %v1660 = vrcp.pop %v1585
    %v1661 = vmul.f32 1.0, %v1660
    %v1662 = vrcp.pop %v1586
    %v1663 = vmul.f32 1.0, %v1662
    %v1664 = vrcp.pop %v1587
    %v1665 = vmul.f32 1.0, %v1664
    %v1666 = vrcp.pop %v1588
    %v1667 = vmul.f32 1.0, %v1666
    %v1668 = vrcp.pop %v1589
    %v1669 = vmul.f32 1.0, %v1668
    %v1670 = vrcp.pop %v1590
    %v1671 = vmul.f32 1.0, %v1670
    %v1672 = vrcp.pop %v1591
    %v1673 = vmul.f32 1.0, %v1672
    %v1674 = vrcp.pop %v1592
    %v1675 = vmul.f32 1.0, %v1674
    %v1676 = vrcp.pop %v1593
    %v1677 = vmul.f32 1.0, %v1676
    %v1678 = vrcp.pop %v1594
    %v1679 = vmul.f32 1.0, %v1678
    %v1680 = vrcp.pop %v1595
    %v1681 = vmul.f32 1.0, %v1680
    %v1682 = vrcp.pop %v1596
    %v1683 = vmul.f32 1.0, %v1682
    %v1684 = vrcp.pop %v1597
    %v1685 = vmul.f32 1.0, %v1684
    %v1686 = vrcp.pop %v1598
    %v1687 = vmul.f32 1.0, %v1686
    %v1688 = vrcp.pop %v1599
    %v1689 = vmul.f32 1.0, %v1688
    %v1690 = vrcp.pop %v1600
    %v1691 = vmul.f32 1.0, %v1690
    %v1692 = vrcp.pop %v1601
    %v1693 = vmul.f32 1.0, %v1692
    %v1694 = vrcp.pop %v1602
    %v1695 = vmul.f32 1.0, %v1694
    %v1696 = vrcp.pop %v1603
    %v1697 = vmul.f32 1.0, %v1696
    %v1698 = vrcp.pop %v1604
    %v1699 = vmul.f32 1.0, %v1698
    %v1700 = vrcp.pop %v1605
    %v1701 = vmul.f32 1.0, %v1700
    %v1702 = vrcp.pop %v1606
    %v1703 = vmul.f32 1.0, %v1702
    %v1704 = vrcp.pop %v1607
    %v1705 = vmul.f32 1.0, %v1704
    %v1706 = vrcp.pop %v1608
    %v1707 = vmul.f32 1.0, %v1706
    %v1708 = vrcp.pop %v1609
    %v1709 = vmul.f32 1.0, %v1708
    %v1710 = vrcp.pop %v1610
    %v1711 = vmul.f32 1.0, %v1710
    %v1712 = vrcp.pop %v1611
    %v1713 = vmul.f32 1.0, %v1712
    %v1714 = vrcp.pop %v1612
    %v1715 = vmul.f32 1.0, %v1714
    %v1716 = vrcp.pop %v1613
    %v1717 = vmul.f32 1.0, %v1716
    %v1718 = vrcp.pop %v1614
    %v1719 = vmul.f32 1.0, %v1718
    %v1720 = vrcp.pop %v1615
    %v1721 = vmul.f32 1.0, %v1720
    %v1722 = vrcp.pop %v1616
    %v1723 = vmul.f32 1.0, %v1722
    %v1724 = vrcp.pop %v1617
    %v1725 = vmul.f32 1.0, %v1724
    %v1726 = vrcp.pop %v1618
    %v1727 = vmul.f32 1.0, %v1726
    %v1728 = vrcp.pop %v1619
    %v1729 = vmul.f32 1.0, %v1728
    %v1730 = vrcp.pop %v1620
    %v1731 = vmul.f32 1.0, %v1730
    %v1732 = vrcp.pop %v1621
    %v1733 = vmul.f32 1.0, %v1732
    %v1734 = vrcp.pop %v1622
    %v1735 = vmul.f32 1.0, %v1734
    %v1736 = vrcp.pop %v1623
    %v1737 = vmul.f32 1.0, %v1736
    %v1738 = vrcp.pop %v1624
    %v1739 = vmul.f32 1.0, %v1738
    %v1740 = vrcp.pop %v1625
    %v1741 = vmul.f32 1.0, %v1740
    %v1742 = vrcp.pop %v1626
    %v1743 = vmul.f32 1.0, %v1742
    %v1744 = vrcp.pop %v1627
    %v1745 = vmul.f32 1.0, %v1744
    %v1746 = vrcp.pop %v1628
    %v1747 = vmul.f32 1.0, %v1746
    %v1748 = vrcp.pop %v1629
    %v1749 = vmul.f32 1.0, %v1748
    %v1750 = vrcp.pop %v1630
    %v1751 = vmul.f32 1.0, %v1750
    %v1752 = vrcp.pop %v1631
    %v1753 = vmul.f32 1.0, %v1752
    %v1754 = vrcp.pop %v1632
    %v1755 = vmul.f32 1.0, %v1754
    %v1756 = vrcp.pop %v1633
    %v1757 = vmul.f32 1.0, %v1756
    %v1758 = vrcp.pop %v1634
    %v1759 = vmul.f32 1.0, %v1758
    %v1760 = vrcp.pop %v1635
    %v1761 = vmul.f32 1.0, %v1760
    %v1762 = vrcp.pop %v1636
    %v1763 = vmul.f32 1.0, %v1762
    %v1764 = vrcp.pop %v1637
    %v1765 = vmul.f32 1.0, %v1764
    %v1766 = vmul.f32 %v1318, %v1639
    %v1767 = vmul.f32 %v1319, %v1641
    %v1768 = vmul.f32 %v1320, %v1643
    %v1769 = vmul.f32 %v1321, %v1645
    %v1770 = vmul.f32 %v1322, %v1647
    %v1771 = vmul.f32 %v1323, %v1649
    %v1772 = vmul.f32 %v1324, %v1651
    %v1773 = vmul.f32 %v1325, %v1653
    %v1774 = vmul.f32 %v1326, %v1655
    %v1775 = vmul.f32 %v1327, %v1657
    %v1776 = vmul.f32 %v1328, %v1659
    %v1777 = vmul.f32 %v1329, %v1661
    %v1778 = vmul.f32 %v1330, %v1663
    %v1779 = vmul.f32 %v1331, %v1665
    %v1780 = vmul.f32 %v1332, %v1667
    %v1781 = vmul.f32 %v1333, %v1669
    %v1782 = vmul.f32 %v1334, %v1671
    %v1783 = vmul.f32 %v1335, %v1673
    %v1784 = vmul.f32 %v1336, %v1675
    %v1785 = vmul.f32 %v1337, %v1677
    %v1786 = vmul.f32 %v1338, %v1679
    %v1787 = vmul.f32 %v1339, %v1681
    %v1788 = vmul.f32 %v1340, %v1683
    %v1789 = vmul.f32 %v1341, %v1685
    %v1790 = vmul.f32 %v1342, %v1687
    %v1791 = vmul.f32 %v1343, %v1689
    %v1792 = vmul.f32 %v1344, %v1691
    %v1793 = vmul.f32 %v1345, %v1693
    %v1794 = vmul.f32 %v1346, %v1695
    %v1795 = vmul.f32 %v1347, %v1697
    %v1796 = vmul.f32 %v1348, %v1699
    %v1797 = vmul.f32 %v1349, %v1701
    %v1798 = vmul.f32 %v1350, %v1703
    %v1799 = vmul.f32 %v1351, %v1705
    %v1800 = vmul.f32 %v1352, %v1707
    %v1801 = vmul.f32 %v1353, %v1709
    %v1802 = vmul.f32 %v1354, %v1711
    %v1803 = vmul.f32 %v1355, %v1713
    %v1804 = vmul.f32 %v1356, %v1715
    %v1805 = vmul.f32 %v1357, %v1717
    %v1806 = vmul.f32 %v1358, %v1719
    %v1807 = vmul.f32 %v1359, %v1721
    %v1808 = vmul.f32 %v1360, %v1723
    %v1809 = vmul.f32 %v1361, %v1725
    %v1810 = vmul.f32 %v1362, %v1727
    %v1811 = vmul.f32 %v1363, %v1729
    %v1812 = vmul.f32 %v1364, %v1731
    %v1813 = vmul.f32 %v1365, %v1733
    %v1814 = vmul.f32 %v1366, %v1735
    %v1815 = vmul.f32 %v1367, %v1737
    %v1816 = vmul.f32 %v1368, %v1739
    %v1817 = vmul.f32 %v1369, %v1741
    %v1818 = vmul.f32 %v1370, %v1743
    %v1819 = vmul.f32 %v1371, %v1745
    %v1820 = vmul.f32 %v1372, %v1747
    %v1821 = vmul.f32 %v1373, %v1749
    %v1822 = vmul.f32 %v1374, %v1751
    %v1823 = vmul.f32 %v1375, %v1753
    %v1824 = vmul.f32 %v1376, %v1755
    %v1825 = vmul.f32 %v1377, %v1757
    %v1826 = vmul.f32 %v1378, %v1759
    %v1827 = vmul.f32 %v1379, %v1761
    %v1828 = vmul.f32 %v1380, %v1763
    %v1829 = vmul.f32 %v1381, %v1765
    %1830 = vst [vmem:[%s6] sm:$0xff] %v1766
    %1831 = vst [vmem:[%s6 + $0x8] sm:$0xff] %v1767
    %1832 = vst [vmem:[%s6 + $0x10] sm:$0xff] %v1768
    %1833 = vst [vmem:[%s6 + $0x18] sm:$0xff] %v1769
    %1834 = vst [vmem:[%s6 + $0x20] sm:$0xff] %v1770
    %1835 = vst [vmem:[%s6 + $0x28] sm:$0xff] %v1771
    %1836 = vst [vmem:[%s6 + $0x30] sm:$0xff] %v1772
    %1837 = vst [vmem:[%s6 + $0x38] sm:$0xff] %v1773
    %1838 = vst [vmem:[%s6 + $0x40] sm:$0xff] %v1774
    %1839 = vst [vmem:[%s6 + $0x48] sm:$0xff] %v1775
    %1840 = vst [vmem:[%s6 + $0x50] sm:$0xff] %v1776
    %1841 = vst [vmem:[%s6 + $0x58] sm:$0xff] %v1777
    %1842 = vst [vmem:[%s6 + $0x60] sm:$0xff] %v1778
    %1843 = vst [vmem:[%s6 + $0x68] sm:$0xff] %v1779
    %1844 = vst [vmem:[%s6 + $0x70] sm:$0xff] %v1780
    %1845 = vst [vmem:[%s6 + $0x78] sm:$0xff] %v1781
    %1846 = vst [vmem:[%s6 + $0x80] sm:$0xff] %v1782
    %1847 = vst [vmem:[%s6 + $0x88] sm:$0xff] %v1783
    %1848 = vst [vmem:[%s6 + $0x90] sm:$0xff] %v1784
    %1849 = vst [vmem:[%s6 + $0x98] sm:$0xff] %v1785
    %1850 = vst [vmem:[%s6 + $0xa0] sm:$0xff] %v1786
    %1851 = vst [vmem:[%s6 + $0xa8] sm:$0xff] %v1787
    %1852 = vst [vmem:[%s6 + $0xb0] sm:$0xff] %v1788
    %1853 = vst [vmem:[%s6 + $0xb8] sm:$0xff] %v1789
    %1854 = vst [vmem:[%s6 + $0xc0] sm:$0xff] %v1790
    %1855 = vst [vmem:[%s6 + $0xc8] sm:$0xff] %v1791
    %1856 = vst [vmem:[%s6 + $0xd0] sm:$0xff] %v1792
    %1857 = vst [vmem:[%s6 + $0xd8] sm:$0xff] %v1793
    %1858 = vst [vmem:[%s6 + $0xe0] sm:$0xff] %v1794
    %1859 = vst [vmem:[%s6 + $0xe8] sm:$0xff] %v1795
    %1860 = vst [vmem:[%s6 + $0xf0] sm:$0xff] %v1796
    %1861 = vst [vmem:[%s6 + $0xf8] sm:$0xff] %v1797
    %1862 = vst [vmem:[%s6 + $0x100] sm:$0xff] %v1798
    %1863 = vst [vmem:[%s6 + $0x108] sm:$0xff] %v1799
    %1864 = vst [vmem:[%s6 + $0x110] sm:$0xff] %v1800
    %1865 = vst [vmem:[%s6 + $0x118] sm:$0xff] %v1801
    %1866 = vst [vmem:[%s6 + $0x120] sm:$0xff] %v1802
    %1867 = vst [vmem:[%s6 + $0x128] sm:$0xff] %v1803
    %1868 = vst [vmem:[%s6 + $0x130] sm:$0xff] %v1804
    %1869 = vst [vmem:[%s6 + $0x138] sm:$0xff] %v1805
    %1870 = vst [vmem:[%s6 + $0x140] sm:$0xff] %v1806
    %1871 = vst [vmem:[%s6 + $0x148] sm:$0xff] %v1807
    %1872 = vst [vmem:[%s6 + $0x150] sm:$0xff] %v1808
    %1873 = vst [vmem:[%s6 + $0x158] sm:$0xff] %v1809
    %1874 = vst [vmem:[%s6 + $0x160] sm:$0xff] %v1810
    %1875 = vst [vmem:[%s6 + $0x168] sm:$0xff] %v1811
    %1876 = vst [vmem:[%s6 + $0x170] sm:$0xff] %v1812
    %1877 = vst [vmem:[%s6 + $0x178] sm:$0xff] %v1813
    %1878 = vst [vmem:[%s6 + $0x180] sm:$0xff] %v1814
    %1879 = vst [vmem:[%s6 + $0x188] sm:$0xff] %v1815
    %1880 = vst [vmem:[%s6 + $0x190] sm:$0xff] %v1816
    %1881 = vst [vmem:[%s6 + $0x198] sm:$0xff] %v1817
    %1882 = vst [vmem:[%s6 + $0x1a0] sm:$0xff] %v1818
    %1883 = vst [vmem:[%s6 + $0x1a8] sm:$0xff] %v1819
    %1884 = vst [vmem:[%s6 + $0x1b0] sm:$0xff] %v1820
    %1885 = vst [vmem:[%s6 + $0x1b8] sm:$0xff] %v1821
    %1886 = vst [vmem:[%s6 + $0x1c0] sm:$0xff] %v1822
    %1887 = vst [vmem:[%s6 + $0x1c8] sm:$0xff] %v1823
    %1888 = vst [vmem:[%s6 + $0x1d0] sm:$0xff] %v1824
    %1889 = vst [vmem:[%s6 + $0x1d8] sm:$0xff] %v1825
    %1890 = vst [vmem:[%s6 + $0x1e0] sm:$0xff] %v1826
    %1891 = vst [vmem:[%s6 + $0x1e8] sm:$0xff] %v1827
    %1892 = vst [vmem:[%s6 + $0x1f0] sm:$0xff] %v1828
    %1893 = vst [vmem:[%s6 + $0x1f8] sm:$0xff] %v1829
    // Predicated region
    $region64: #{csp_layer_forward.7} parent=1 // pred_check
      _
    $region65: #{csp_layer_forward.7} parent=1 // pred_check_branch
      %1895 = sbr.rel (0) target = $region67
    $region66: #{csp_layer_forward.7} parent=1 // pred_region
      _
    $region67: #{csp_layer_forward.7} parent=1 // pred_fallthru
      _
    // Predicated region
    $region68: #{csp_layer_forward.7} parent=1 // pred_check
      _
    $region69: #{csp_layer_forward.7} parent=1 // pred_check_branch
      %1897 = sbr.rel (0) target = $region71
    $region70: #{csp_layer_forward.7} parent=1 // pred_region
      _
    $region71: #{csp_layer_forward.7} parent=1 // pred_fallthru
      _

// kernel: csp_layer_forward.6
$region0: #{csp_layer_forward.6}
  #allocation0 [shape = 'u32[]', space=smem, size = 0x4, offset = 0x4, fixed_abs, tag = 'smem constant byte address 0x4 - core index']
  #allocation1 [shape = 'u32[144,128]{1,0:T(1,128)}', space=vmem, size = 0x12000, scoped, tag = 'internal scratch']
  %s0 = inlined_call_operand.vmem [shape: f32[2,432,128], index: 0, kind: input, shape index: {}]
  %s1 = inlined_call_operand.vmem [shape: f32[3,128,384], index: 1, kind: input, shape index: {}]
  %s2 = inlined_call_operand.vmem [shape: f32[1,128], index: 2, kind: input, shape index: {}]
  %s3 = inlined_call_operand.vmem [shape: f32[1,128], index: 3, kind: input, shape index: {}]
  %s4 = inlined_call_operand.vmem [shape: f32[2,16,16,256], index: 4, kind: input, shape index: {}]
  %s5 = inlined_call_operand.vmem [shape: f32[2,16,16,128], index: 5, kind: output, shape index: {}]
  %s6 = sld [smem:[#allocation0]]
  $region91: #{csp_layer_forward.6} parent=0
    _
  %s8 = ssub.s32 1, %s6
  %s9 = scalar_select 0, %s8, %s6
  $region1: #{csp_layer_forward.6} parent=0
    #allocation2 [shape = 'u8[262144]{0}', space=vmem, size = 0x40000, scoped, tag = 'input window, operand 4']
    loop: start=0, step=1, limit=4
    $region2: #{csp_layer_forward.6} parent=1 // loop_pre_header
      _
    $region3: #{csp_layer_forward.6} parent=1 // loop_header
      %s11 = sphi 0, %s15
      %p12 = scmp.ge.s32.totalorder %s11, 4
      %s21 = sphi 0, %s23
      %s24 = sphi 0, %s21
      %s25 = sphi 0, %s24
      %s41 = sphi 0, %s25
      %s45 = sphi 0, %s45
      %s47 = sphi 0, %s45
      %s48 = sphi 0, %s47
      %s62 = sphi 0, %s48
      %s66 = sphi 0, %s66
      %s68 = sphi 0, %s66
      %s69 = sphi 0, %s68
      %s83 = sphi 0, %s69
      %s87 = sphi 0, %s87
      %s89 = sphi 0, %s87
      %s90 = sphi 0, %s89
      %s104 = sphi 0, %s90
      %s110 = sphi 0, %s112
      %s113 = sphi 0, %s110
      %s114 = sphi 0, %s113
      %s130 = sphi 0, %s114
      %s136 = sphi 0, %s138
      %s139 = sphi 0, %s136
      %s140 = sphi 0, %s139
      %s156 = sphi 0, %s140
    $region4: #{csp_layer_forward.6} parent=1 // loop_header_branch
      %14 = sbr.rel (%p12) target = $region8
    $region5: #{csp_layer_forward.6} parent=1 // loop_body
      %s16 = ssub.s32 %s11, 1
      %s17 = ssub.s32 %s11, 2
      %s18 = sadd.s32 %s11, 1
      %s19 = ssub.s32 %s11, %s18
      %p20 = scmp.eq.s32.totalorder %s19, 0
      %s22 = sadd.s32 %s21, 1
      %s23 = scalar_select %p20, %s21, %s22
      %p26 = pneg %p20
      %p27 = scmp.eq.s32.totalorder %s11, 1
      %p28 = por %p26, %p27
      %p29 = scmp.ne.s32.totalorder %s21, %s24
      %p30 = scmp.eq.s32.totalorder %s11, 0
      %p31 = por %p29, %p30
      %p32 = scmp.ne.s32.totalorder %s21, %s24
      %p33 = scmp.eq.s32.totalorder %s16, 1
      %p34 = por %p32, %p33
      %p35 = scmp.ne.s32.totalorder %s24, %s25
      %p36 = scmp.eq.s32.totalorder %s16, 0
      %p37 = por %p35, %p36
      %p38 = scmp.ne.s32.totalorder %s24, %s25
      %p39 = scmp.eq.s32.totalorder %s17, 1
      %p40 = por %p38, %p39
      %p42 = scmp.ne.s32.totalorder %s25, %s41
      %p43 = scmp.eq.s32.totalorder %s17, 0
      %p44 = por %p42, %p43
      %s46 = sadd.s32 %s45, 1
      %p49 = scmp.eq.s32.totalorder %s11, 1
      %p50 = scmp.ne.s32.totalorder %s45, %s47
      %p51 = scmp.eq.s32.totalorder %s11, 0
      %p52 = por %p50, %p51
      %p53 = scmp.ne.s32.totalorder %s45, %s47
      %p54 = scmp.eq.s32.totalorder %s16, 1
      %p55 = por %p53, %p54
      %p56 = scmp.ne.s32.totalorder %s47, %s48
      %p57 = scmp.eq.s32.totalorder %s16, 0
      %p58 = por %p56, %p57
      %p59 = scmp.ne.s32.totalorder %s47, %s48
      %p60 = scmp.eq.s32.totalorder %s17, 1
      %p61 = por %p59, %p60
      %p63 = scmp.ne.s32.totalorder %s48, %s62
      %p64 = scmp.eq.s32.totalorder %s17, 0
      %p65 = por %p63, %p64
      %s67 = sadd.s32 %s66, 1
      %p70 = scmp.eq.s32.totalorder %s11, 1
      %p71 = scmp.ne.s32.totalorder %s66, %s68
      %p72 = scmp.eq.s32.totalorder %s11, 0
      %p73 = por %p71, %p72
      %p74 = scmp.ne.s32.totalorder %s66, %s68
      %p75 = scmp.eq.s32.totalorder %s16, 1
      %p76 = por %p74, %p75
      %p77 = scmp.ne.s32.totalorder %s68, %s69
      %p78 = scmp.eq.s32.totalorder %s16, 0
      %p79 = por %p77, %p78
      %p80 = scmp.ne.s32.totalorder %s68, %s69
      %p81 = scmp.eq.s32.totalorder %s17, 1
      %p82 = por %p80, %p81
      %p84 = scmp.ne.s32.totalorder %s69, %s83
      %p85 = scmp.eq.s32.totalorder %s17, 0
      %p86 = por %p84, %p85
      %s88 = sadd.s32 %s87, 1
      %p91 = scmp.eq.s32.totalorder %s11, 1
      %p92 = scmp.ne.s32.totalorder %s87, %s89
      %p93 = scmp.eq.s32.totalorder %s11, 0
      %p94 = por %p92, %p93
      %p95 = scmp.ne.s32.totalorder %s87, %s89
      %p96 = scmp.eq.s32.totalorder %s16, 1
      %p97 = por %p95, %p96
      %p98 = scmp.ne.s32.totalorder %s89, %s90
      %p99 = scmp.eq.s32.totalorder %s16, 0
      %p100 = por %p98, %p99
      %p101 = scmp.ne.s32.totalorder %s89, %s90
      %p102 = scmp.eq.s32.totalorder %s17, 1
      %p103 = por %p101, %p102
      %p105 = scmp.ne.s32.totalorder %s90, %s104
      %p106 = scmp.eq.s32.totalorder %s17, 0
      %p107 = por %p105, %p106
      %s108 = ssub.s32 %s11, %s18
      %p109 = scmp.eq.s32.totalorder %s108, 0
      %s111 = sadd.s32 %s110, 1
      %s112 = scalar_select %p109, %s110, %s111
      %p115 = pneg %p109
      %p116 = scmp.eq.s32.totalorder %s11, 1
      %p117 = por %p115, %p116
      %p118 = scmp.ne.s32.totalorder %s110, %s113
      %p119 = scmp.eq.s32.totalorder %s11, 0
      %p120 = por %p118, %p119
      %p121 = scmp.ne.s32.totalorder %s110, %s113
      %p122 = scmp.eq.s32.totalorder %s16, 1
      %p123 = por %p121, %p122
      %p124 = scmp.ne.s32.totalorder %s113, %s114
      %p125 = scmp.eq.s32.totalorder %s16, 0
      %p126 = por %p124, %p125
      %p127 = scmp.ne.s32.totalorder %s113, %s114
      %p128 = scmp.eq.s32.totalorder %s17, 1
      %p129 = por %p127, %p128
      %p131 = scmp.ne.s32.totalorder %s114, %s130
      %p132 = scmp.eq.s32.totalorder %s17, 0
      %p133 = por %p131, %p132
      %s134 = ssub.s32 %s11, %s18
      %p135 = scmp.eq.s32.totalorder %s134, 0
      %s137 = sadd.s32 %s136, 1
      %s138 = scalar_select %p135, %s136, %s137
      %p141 = pneg %p135
      %p142 = scmp.eq.s32.totalorder %s11, 1
      %p143 = por %p141, %p142
      %p144 = scmp.ne.s32.totalorder %s136, %s139
      %p145 = scmp.eq.s32.totalorder %s11, 0
      %p146 = por %p144, %p145
      %p147 = scmp.ne.s32.totalorder %s136, %s139
      %p148 = scmp.eq.s32.totalorder %s16, 1
      %p149 = por %p147, %p148
      %p150 = scmp.ne.s32.totalorder %s139, %s140
      %p151 = scmp.eq.s32.totalorder %s16, 0
      %p152 = por %p150, %p151
      %p153 = scmp.ne.s32.totalorder %s139, %s140
      %p154 = scmp.eq.s32.totalorder %s17, 1
      %p155 = por %p153, %p154
      %p157 = scmp.ne.s32.totalorder %s140, %s156
      %p158 = scmp.eq.s32.totalorder %s17, 0
      %p159 = por %p157, %p158
      %p160 = scmp.le.s32.totalorder 1, %s11
      %p161 = scmp.lt.s32.totalorder %s11, 3
      %p162 = pnand %p160, %p161
      %p163 = pneg %p162
      // Predicated region
      $region9: #{csp_layer_forward.6} parent=5 // pred_check
        _
      $region10: #{csp_layer_forward.6} parent=5 // pred_check_branch
        %165 = sbr.rel (%p162) target = $region12
      $region11: #{csp_layer_forward.6} parent=5 // pred_region
        %s166 = ssub.s32 %s11, 1
        // Predicated region
        $region13: #{csp_layer_forward.6} parent=11 // pred_check
          %p167 = pneg %p58
        $region14: #{csp_layer_forward.6} parent=11 // pred_check_branch
          %169 = sbr.rel (%p167) target = $region16
        $region15: #{csp_layer_forward.6} parent=11 // pred_region
          _
        $region16: #{csp_layer_forward.6} parent=11 // pred_fallthru
          _
        // Predicated region
        $region17: #{csp_layer_forward.6} parent=11 // pred_check
          %p170 = pneg %p79
        $region18: #{csp_layer_forward.6} parent=11 // pred_check_branch
          %172 = sbr.rel (%p170) target = $region20
        $region19: #{csp_layer_forward.6} parent=11 // pred_region
          _
        $region20: #{csp_layer_forward.6} parent=11 // pred_fallthru
          _
        // Predicated region
        $region21: #{csp_layer_forward.6} parent=11 // pred_check
          %p173 = pneg %p100
        $region22: #{csp_layer_forward.6} parent=11 // pred_check_branch
          %175 = sbr.rel (%p173) target = $region24
        $region23: #{csp_layer_forward.6} parent=11 // pred_region
          _
        $region24: #{csp_layer_forward.6} parent=11 // pred_fallthru
          _
      $region12: #{csp_layer_forward.6} parent=5 // pred_fallthru
        _
      %p176 = scmp.lt.s32.totalorder %s11, 2
      // Predicated region
      $region25: #{csp_layer_forward.6} parent=5 // pred_check
        %p177 = pneg %p176
      $region26: #{csp_layer_forward.6} parent=5 // pred_check_branch
        %179 = sbr.rel (%p177) target = $region28
      $region27: #{csp_layer_forward.6} parent=5 // pred_region
        // Predicated region
        $region29: #{csp_layer_forward.6} parent=27 // pred_check
          %p180 = pneg %p31
        $region30: #{csp_layer_forward.6} parent=27 // pred_check_branch
          %182 = sbr.rel (%p180) target = $region32
        $region31: #{csp_layer_forward.6} parent=27 // pred_region
          %p183 = scmp.lt.s32.totalorder %s11, 1
          %s184 = scalar_select %p183, %s11, 1
          %s185 = smul.addr %s184, 54
          %s186 = smul.addr %s185, 8
          %s187 = scalar_lea.vmem %s0, %s186
        $region32: #{csp_layer_forward.6} parent=27 // pred_fallthru
          _
        // Predicated region
        $region33: #{csp_layer_forward.6} parent=27 // pred_check
          %p188 = pneg %p120
        $region34: #{csp_layer_forward.6} parent=27 // pred_check_branch
          %190 = sbr.rel (%p188) target = $region36
        $region35: #{csp_layer_forward.6} parent=27 // pred_region
          %s191 = sand.u32 %s110, 1
          %s192 = sand.u32 %s110, 1
          %s193 = smul.addr %s192, 256
          %s194 = scalar_lea.vmem [#allocation2], %s193
          %s195 = smul.addr %s11, 64
          %s196 = smul.addr %s195, 8
          %s197 = scalar_lea.vmem %s4, %s196
          // Predicated region
          $region37: #{csp_layer_forward.6} parent=35 // pred_check
            _
          $region38: #{csp_layer_forward.6} parent=35 // pred_check_branch
            %199 = sbr.rel (0) target = $region40
          $region39: #{csp_layer_forward.6} parent=35 // pred_region
            // Predicated region
            $region41: #{csp_layer_forward.6} parent=39 // pred_check
              _
            $region42: #{csp_layer_forward.6} parent=39 // pred_check_branch
              %201 = sbr.rel (0) target = $region44
            $region43: #{csp_layer_forward.6} parent=39 // pred_region
              // Predicated region
              $region56: #{csp_layer_forward.6} parent=43 // pred_check
                _
              $region57: #{csp_layer_forward.6} parent=43 // pred_check_branch
                %278 = sbr.rel (0) target = $region59
              $region58: #{csp_layer_forward.6} parent=43 // pred_region
                loop: start=0, step=1, limit=1
                $region60: #{csp_layer_forward.6} parent=58 // loop_pre_header
                  _
                $region61: #{csp_layer_forward.6} parent=58 // loop_header
                  %s280 = sphi 0, %s284
                  %p281 = scmp.ge.s32.totalorder %s280, 1
                  %s285 = sphi %s197, %s197
                  %s286 = sphi %s194, %s194
                $region62: #{csp_layer_forward.6} parent=58 // loop_header_branch
                  %283 = sbr.rel (%p281) target = $region66
                $region63: #{csp_layer_forward.6} parent=58 // loop_body
                  %v287 = vld [vmem:[%s285] sm:$0xff]
                  %288 = vst [vmem:[%s286] sm:$0xff] %v287
                  %v289 = vld [vmem:[%s285 + $0x10] sm:$0xff]
                  %290 = vst [vmem:[%s286 + $0x8] sm:$0xff] %v289
                  %v291 = vld [vmem:[%s285 + $0x20] sm:$0xff]
                  %292 = vst [vmem:[%s286 + $0x10] sm:$0xff] %v291
                  %v293 = vld [vmem:[%s285 + $0x30] sm:$0xff]
                  %294 = vst [vmem:[%s286 + $0x18] sm:$0xff] %v293
                  %v295 = vld [vmem:[%s285 + $0x40] sm:$0xff]
                  %296 = vst [vmem:[%s286 + $0x20] sm:$0xff] %v295
                  %v297 = vld [vmem:[%s285 + $0x50] sm:$0xff]
                  %298 = vst [vmem:[%s286 + $0x28] sm:$0xff] %v297
                  %v299 = vld [vmem:[%s285 + $0x60] sm:$0xff]
                  %300 = vst [vmem:[%s286 + $0x30] sm:$0xff] %v299
                  %v301 = vld [vmem:[%s285 + $0x70] sm:$0xff]
                  %302 = vst [vmem:[%s286 + $0x38] sm:$0xff] %v301
                  %v303 = vld [vmem:[%s285 + $0x80] sm:$0xff]
                  %304 = vst [vmem:[%s286 + $0x40] sm:$0xff] %v303
                  %v305 = vld [vmem:[%s285 + $0x90] sm:$0xff]
                  %306 = vst [vmem:[%s286 + $0x48] sm:$0xff] %v305
                  %v307 = vld [vmem:[%s285 + $0xa0] sm:$0xff]
                  %308 = vst [vmem:[%s286 + $0x50] sm:$0xff] %v307
                  %v309 = vld [vmem:[%s285 + $0xb0] sm:$0xff]
                  %310 = vst [vmem:[%s286 + $0x58] sm:$0xff] %v309
                  %v311 = vld [vmem:[%s285 + $0xc0] sm:$0xff]
                  %312 = vst [vmem:[%s286 + $0x60] sm:$0xff] %v311
                  %v313 = vld [vmem:[%s285 + $0xd0] sm:$0xff]
                  %314 = vst [vmem:[%s286 + $0x68] sm:$0xff] %v313
                  %v315 = vld [vmem:[%s285 + $0xe0] sm:$0xff]
                  %316 = vst [vmem:[%s286 + $0x70] sm:$0xff] %v315
                  %v317 = vld [vmem:[%s285 + $0xf0] sm:$0xff]
                  %318 = vst [vmem:[%s286 + $0x78] sm:$0xff] %v317
                  %v319 = vld [vmem:[%s285 + $0x100] sm:$0xff]
                  %320 = vst [vmem:[%s286 + $0x80] sm:$0xff] %v319
                  %v321 = vld [vmem:[%s285 + $0x110] sm:$0xff]
                  %322 = vst [vmem:[%s286 + $0x88] sm:$0xff] %v321
                  %v323 = vld [vmem:[%s285 + $0x120] sm:$0xff]
                  %324 = vst [vmem:[%s286 + $0x90] sm:$0xff] %v323
                  %v325 = vld [vmem:[%s285 + $0x130] sm:$0xff]
                  %326 = vst [vmem:[%s286 + $0x98] sm:$0xff] %v325
                  %v327 = vld [vmem:[%s285 + $0x140] sm:$0xff]
                  %328 = vst [vmem:[%s286 + $0xa0] sm:$0xff] %v327
                  %v329 = vld [vmem:[%s285 + $0x150] sm:$0xff]
                  %330 = vst [vmem:[%s286 + $0xa8] sm:$0xff] %v329
                  %v331 = vld [vmem:[%s285 + $0x160] sm:$0xff]
                  %332 = vst [vmem:[%s286 + $0xb0] sm:$0xff] %v331
                  %v333 = vld [vmem:[%s285 + $0x170] sm:$0xff]
                  %334 = vst [vmem:[%s286 + $0xb8] sm:$0xff] %v333
                  %v335 = vld [vmem:[%s285 + $0x180] sm:$0xff]
                  %336 = vst [vmem:[%s286 + $0xc0] sm:$0xff] %v335
                  %v337 = vld [vmem:[%s285 + $0x190] sm:$0xff]
                  %338 = vst [vmem:[%s286 + $0xc8] sm:$0xff] %v337
                  %v339 = vld [vmem:[%s285 + $0x1a0] sm:$0xff]
                  %340 = vst [vmem:[%s286 + $0xd0] sm:$0xff] %v339
                  %v341 = vld [vmem:[%s285 + $0x1b0] sm:$0xff]
                  %342 = vst [vmem:[%s286 + $0xd8] sm:$0xff] %v341
                  %v343 = vld [vmem:[%s285 + $0x1c0] sm:$0xff]
                  %344 = vst [vmem:[%s286 + $0xe0] sm:$0xff] %v343
                  %v345 = vld [vmem:[%s285 + $0x1d0] sm:$0xff]
                  %346 = vst [vmem:[%s286 + $0xe8] sm:$0xff] %v345
                  %v347 = vld [vmem:[%s285 + $0x1e0] sm:$0xff]
                  %348 = vst [vmem:[%s286 + $0xf0] sm:$0xff] %v347
                  %v349 = vld [vmem:[%s285 + $0x1f0] sm:$0xff]
                  %350 = vst [vmem:[%s286 + $0xf8] sm:$0xff] %v349
                $region64: #{csp_layer_forward.6} parent=58 // loop_footer
                  %s284 = sadd.s32 1, %s280
                $region65: #{csp_layer_forward.6} parent=58 // loop_footer_branch
                  %279 = sbr.rel target = $region61
                $region66: #{csp_layer_forward.6} parent=58 // loop_exit
                  _
              $region59: #{csp_layer_forward.6} parent=43 // pred_fallthru
                _
              // Predicated region
              $region67: #{csp_layer_forward.6} parent=43 // pred_check
                _
              $region68: #{csp_layer_forward.6} parent=43 // pred_check_branch
                %352 = sbr.rel target = $region70
              $region69: #{csp_layer_forward.6} parent=43 // pred_region
                _
              $region70: #{csp_layer_forward.6} parent=43 // pred_fallthru
                _
            $region44: #{csp_layer_forward.6} parent=39 // pred_fallthru
              _
            // Predicated region
            $region45: #{csp_layer_forward.6} parent=39 // pred_check
              _
            $region46: #{csp_layer_forward.6} parent=39 // pred_check_branch
              %203 = sbr.rel target = $region48
            $region47: #{csp_layer_forward.6} parent=39 // pred_region
              loop: start=0, step=1, limit=1
              $region49: #{csp_layer_forward.6} parent=47 // loop_pre_header
                _
              $region50: #{csp_layer_forward.6} parent=47 // loop_header
                %s206 = sphi 0, %s210
                %p207 = scmp.ge.s32.totalorder %s206, 1
                %s211 = sphi %s197, %s197
                %s212 = sphi %s194, %s194
              $region51: #{csp_layer_forward.6} parent=47 // loop_header_branch
                %209 = sbr.rel (%p207) target = $region55
              $region52: #{csp_layer_forward.6} parent=47 // loop_body
                %v213 = vld [vmem:[%s211] sm:$0xff]
                %214 = vst [vmem:[%s212] sm:$0xff] %v213
                %v215 = vld [vmem:[%s211 + $0x10] sm:$0xff]
                %216 = vst [vmem:[%s212 + $0x8] sm:$0xff] %v215
                %v217 = vld [vmem:[%s211 + $0x20] sm:$0xff]
                %218 = vst [vmem:[%s212 + $0x10] sm:$0xff] %v217
                %v219 = vld [vmem:[%s211 + $0x30] sm:$0xff]
                %220 = vst [vmem:[%s212 + $0x18] sm:$0xff] %v219
                %v221 = vld [vmem:[%s211 + $0x40] sm:$0xff]
                %222 = vst [vmem:[%s212 + $0x20] sm:$0xff] %v221
                %v223 = vld [vmem:[%s211 + $0x50] sm:$0xff]
                %224 = vst [vmem:[%s212 + $0x28] sm:$0xff] %v223
                %v225 = vld [vmem:[%s211 + $0x60] sm:$0xff]
                %226 = vst [vmem:[%s212 + $0x30] sm:$0xff] %v225
                %v227 = vld [vmem:[%s211 + $0x70] sm:$0xff]
                %228 = vst [vmem:[%s212 + $0x38] sm:$0xff] %v227
                %v229 = vld [vmem:[%s211 + $0x80] sm:$0xff]
                %230 = vst [vmem:[%s212 + $0x40] sm:$0xff] %v229
                %v231 = vld [vmem:[%s211 + $0x90] sm:$0xff]
                %232 = vst [vmem:[%s212 + $0x48] sm:$0xff] %v231
                %v233 = vld [vmem:[%s211 + $0xa0] sm:$0xff]
                %234 = vst [vmem:[%s212 + $0x50] sm:$0xff] %v233
                %v235 = vld [vmem:[%s211 + $0xb0] sm:$0xff]
                %236 = vst [vmem:[%s212 + $0x58] sm:$0xff] %v235
                %v237 = vld [vmem:[%s211 + $0xc0] sm:$0xff]
                %238 = vst [vmem:[%s212 + $0x60] sm:$0xff] %v237
                %v239 = vld [vmem:[%s211 + $0xd0] sm:$0xff]
                %240 = vst [vmem:[%s212 + $0x68] sm:$0xff] %v239
                %v241 = vld [vmem:[%s211 + $0xe0] sm:$0xff]
                %242 = vst [vmem:[%s212 + $0x70] sm:$0xff] %v241
                %v243 = vld [vmem:[%s211 + $0xf0] sm:$0xff]
                %244 = vst [vmem:[%s212 + $0x78] sm:$0xff] %v243
                %v245 = vld [vmem:[%s211 + $0x100] sm:$0xff]
                %246 = vst [vmem:[%s212 + $0x80] sm:$0xff] %v245
                %v247 = vld [vmem:[%s211 + $0x110] sm:$0xff]
                %248 = vst [vmem:[%s212 + $0x88] sm:$0xff] %v247
                %v249 = vld [vmem:[%s211 + $0x120] sm:$0xff]
                %250 = vst [vmem:[%s212 + $0x90] sm:$0xff] %v249
                %v251 = vld [vmem:[%s211 + $0x130] sm:$0xff]
                %252 = vst [vmem:[%s212 + $0x98] sm:$0xff] %v251
                %v253 = vld [vmem:[%s211 + $0x140] sm:$0xff]
                %254 = vst [vmem:[%s212 + $0xa0] sm:$0xff] %v253
                %v255 = vld [vmem:[%s211 + $0x150] sm:$0xff]
                %256 = vst [vmem:[%s212 + $0xa8] sm:$0xff] %v255
                %v257 = vld [vmem:[%s211 + $0x160] sm:$0xff]
                %258 = vst [vmem:[%s212 + $0xb0] sm:$0xff] %v257
                %v259 = vld [vmem:[%s211 + $0x170] sm:$0xff]
                %260 = vst [vmem:[%s212 + $0xb8] sm:$0xff] %v259
                %v261 = vld [vmem:[%s211 + $0x180] sm:$0xff]
                %262 = vst [vmem:[%s212 + $0xc0] sm:$0xff] %v261
                %v263 = vld [vmem:[%s211 + $0x190] sm:$0xff]
                %264 = vst [vmem:[%s212 + $0xc8] sm:$0xff] %v263
                %v265 = vld [vmem:[%s211 + $0x1a0] sm:$0xff]
                %266 = vst [vmem:[%s212 + $0xd0] sm:$0xff] %v265
                %v267 = vld [vmem:[%s211 + $0x1b0] sm:$0xff]
                %268 = vst [vmem:[%s212 + $0xd8] sm:$0xff] %v267
                %v269 = vld [vmem:[%s211 + $0x1c0] sm:$0xff]
                %270 = vst [vmem:[%s212 + $0xe0] sm:$0xff] %v269
                %v271 = vld [vmem:[%s211 + $0x1d0] sm:$0xff]
                %272 = vst [vmem:[%s212 + $0xe8] sm:$0xff] %v271
                %v273 = vld [vmem:[%s211 + $0x1e0] sm:$0xff]
                %274 = vst [vmem:[%s212 + $0xf0] sm:$0xff] %v273
                %v275 = vld [vmem:[%s211 + $0x1f0] sm:$0xff]
                %276 = vst [vmem:[%s212 + $0xf8] sm:$0xff] %v275
              $region53: #{csp_layer_forward.6} parent=47 // loop_footer
                %s210 = sadd.s32 1, %s206
              $region54: #{csp_layer_forward.6} parent=47 // loop_footer_branch
                %205 = sbr.rel target = $region50
              $region55: #{csp_layer_forward.6} parent=47 // loop_exit
                _
            $region48: #{csp_layer_forward.6} parent=39 // pred_fallthru
              _
          $region40: #{csp_layer_forward.6} parent=35 // pred_fallthru
            _
          %353 = vnop
        $region36: #{csp_layer_forward.6} parent=27 // pred_fallthru
          _
      $region28: #{csp_layer_forward.6} parent=5 // pred_fallthru
        _
      %p354 = scmp.le.s32.totalorder 1, %s11
      %p355 = scmp.lt.s32.totalorder %s11, 3
      %p356 = pnand %p354, %p355
      %p357 = pneg %p356
      // Predicated region
      $region71: #{csp_layer_forward.6} parent=5 // pred_check
        _
      $region72: #{csp_layer_forward.6} parent=5 // pred_check_branch
        %359 = sbr.rel (%p356) target = $region74
      $region73: #{csp_layer_forward.6} parent=5 // pred_region
        %s360 = ssub.s32 %s11, 1
        %s361 = sand.u32 %s113, 1
        %s362 = sand.u32 %s113, 1
        %s363 = smul.addr %s362, 256
        %s364 = scalar_lea.vmem [#allocation2], %s363
        // Predicated region
        $region75: #{csp_layer_forward.6} parent=73 // pred_check
          %p365 = pneg %p126
        $region76: #{csp_layer_forward.6} parent=73 // pred_check_branch
          %367 = sbr.rel (%p365) target = $region78
        $region77: #{csp_layer_forward.6} parent=73 // pred_region
          _
        $region78: #{csp_layer_forward.6} parent=73 // pred_fallthru
          _
        %p368 = scmp.lt.s32.totalorder %s16, 1
        %s369 = scalar_select %p368, %s16, 1
        %s370 = smul.addr %s369, 54
        %s371 = smul.addr %s370, 8
        %s372 = scalar_lea.vmem %s0, %s371
        %p373 = pneg %p37
        %p374 = pneg %p34
        %p375 = pneg %p58
        %p376 = pneg %p55
        %p377 = pneg %p79
        %p378 = pneg %p76
        %p379 = pneg %p100
        %p380 = pneg %p97
        %s381 = sand.u32 %s113, 1
        %s382 = sand.u32 %s113, 1
        %s383 = smul.addr %s382, 256
        %s384 = scalar_lea.vmem [#allocation2], %s383
        %p385 = pneg %p126
        %p386 = pneg %p123
        %p387 = pneg %p152
        %p388 = pneg %p149
        %p389 = scmp.lt.s32.totalorder %s16, 1
        %s390 = scalar_select %p389, %s16, 1
        %s391 = smul.addr %s390, 32
        %s392 = smul.addr %s391, 8
        %s393 = scalar_lea.vmem %s5, %s392
        %p394 = scmp.lt.s32.totalorder %s16, 1
        %s395 = scalar_select %p394, %s16, 1
        %s396 = smul.addr %s395, 54
        %s397 = smul.addr %s396, 8
        %s398 = scalar_lea.vmem %s0, %s397
        %p399 = scmp.lt.s32.totalorder %s16, 1
        %s400 = scalar_select %p399, %s16, 1
        %s401 = smul.addr %s400, 32
        %s402 = smul.addr %s401, 8
        %s403 = scalar_lea.vmem %s5, %s402
        %v404 = vld [vmem:[%s398] sm:$0xff]
        %v405 = vld [vmem:[%s398 + $0x8] sm:$0xff]
        %v406 = vld [vmem:[%s398 + $0x10] sm:$0xff]
        %v407 = vld [vmem:[%s398 + $0x18] sm:$0xff]
        %v408 = vld [vmem:[%s398 + $0x20] sm:$0xff]
        %v409 = vld [vmem:[%s398 + $0x28] sm:$0xff]
        %v410 = vld [vmem:[%s398 + $0x30] sm:$0xff]
        %v411 = vld [vmem:[%s398 + $0x38] sm:$0xff]
        %v412 = vld [vmem:[%s398 + $0x40] sm:$0xff]
        %v413 = vld [vmem:[%s398 + $0x48] sm:$0xff]
        %v414 = vld [vmem:[%s398 + $0x50] sm:$0xff]
        %v415 = vld [vmem:[%s398 + $0x58] sm:$0xff]
        %v416 = vld [vmem:[%s398 + $0x60] sm:$0xff]
        %v417 = vld [vmem:[%s398 + $0x68] sm:$0xff]
        %v418 = vld [vmem:[%s398 + $0x70] sm:$0xff]
        %v419 = vld [vmem:[%s398 + $0x78] sm:$0xff]
        %v420 = vld [vmem:[%s398 + $0x80] sm:$0xff]
        %v421 = vld [vmem:[%s398 + $0x88] sm:$0xff]
        %v422 = vld [vmem:[%s398 + $0x90] sm:$0xff]
        %v423 = vld [vmem:[%s398 + $0x98] sm:$0xff]
        %v424 = vld [vmem:[%s398 + $0xa0] sm:$0xff]
        %v425 = vld [vmem:[%s398 + $0xa8] sm:$0xff]
        %v426 = vld [vmem:[%s398 + $0xb0] sm:$0xff]
        %v427 = vld [vmem:[%s398 + $0xb8] sm:$0xff]
        %v428 = vld [vmem:[%s398 + $0xc0] sm:$0xff]
        %v429 = vld [vmem:[%s398 + $0xc8] sm:$0xff]
        %v430 = vld [vmem:[%s398 + $0xd0] sm:$0xff]
        %v431 = vld [vmem:[%s398 + $0xd8] sm:$0xff]
        %v432 = vld [vmem:[%s398 + $0xe0] sm:$0xff]
        %v433 = vld [vmem:[%s398 + $0xe8] sm:$0xff]
        %v434 = vld [vmem:[%s398 + $0xf0] sm:$0xff]
        %v435 = vld [vmem:[%s398 + $0xf8] sm:$0xff]
        %v436 = vld [vmem:[%s398 + $0x100] sm:$0xff]
        %v437 = vld [vmem:[%s398 + $0x108] sm:$0xff]
        %v438 = vld [vmem:[%s398 + $0x110] sm:$0xff]
        %v439 = vld [vmem:[%s398 + $0x118] sm:$0xff]
        %v440 = vld [vmem:[%s398 + $0x120] sm:$0xff]
        %v441 = vld [vmem:[%s398 + $0x128] sm:$0xff]
        %v442 = vld [vmem:[%s398 + $0x130] sm:$0xff]
        %v443 = vld [vmem:[%s398 + $0x138] sm:$0xff]
        %v444 = vld [vmem:[%s398 + $0x140] sm:$0xff]
        %v445 = vld [vmem:[%s398 + $0x148] sm:$0xff]
        %v446 = vld [vmem:[%s398 + $0x150] sm:$0xff]
        %v447 = vld [vmem:[%s398 + $0x158] sm:$0xff]
        %v448 = vld [vmem:[%s398 + $0x160] sm:$0xff]
        %v449 = vld [vmem:[%s398 + $0x168] sm:$0xff]
        %v450 = vld [vmem:[%s398 + $0x170] sm:$0xff]
        %v451 = vld [vmem:[%s398 + $0x178] sm:$0xff]
        %v452 = vld [vmem:[%s1] sm:$0xff]
        %v453 = vld [vmem:[%s1 + $0x8] sm:$0xff]
        %v454 = vld [vmem:[%s1 + $0x10] sm:$0xff]
        %v455 = vld [vmem:[%s1 + $0x18] sm:$0xff]
        %v456 = vld [vmem:[%s1 + $0x20] sm:$0xff]
        %v457 = vld [vmem:[%s1 + $0x28] sm:$0xff]
        %v458 = vld [vmem:[%s1 + $0x30] sm:$0xff]
        %v459 = vld [vmem:[%s1 + $0x38] sm:$0xff]
        %v460 = vld [vmem:[%s1 + $0x40] sm:$0xff]
        %v461 = vld [vmem:[%s1 + $0x48] sm:$0xff]
        %v462 = vld [vmem:[%s1 + $0x50] sm:$0xff]
        %v463 = vld [vmem:[%s1 + $0x58] sm:$0xff]
        %v464 = vld [vmem:[%s1 + $0x60] sm:$0xff]
        %v465 = vld [vmem:[%s1 + $0x68] sm:$0xff]
        %v466 = vld [vmem:[%s1 + $0x70] sm:$0xff]
        %v467 = vld [vmem:[%s1 + $0x78] sm:$0xff]
        %v468 = vld [vmem:[%s1 + $0x80] sm:$0xff]
        %v469 = vld [vmem:[%s1 + $0x88] sm:$0xff]
        %v470 = vld [vmem:[%s1 + $0x90] sm:$0xff]
        %v471 = vld [vmem:[%s1 + $0x98] sm:$0xff]
        %v472 = vld [vmem:[%s1 + $0xa0] sm:$0xff]
        %v473 = vld [vmem:[%s1 + $0xa8] sm:$0xff]
        %v474 = vld [vmem:[%s1 + $0xb0] sm:$0xff]
        %v475 = vld [vmem:[%s1 + $0xb8] sm:$0xff]
        %v476 = vld [vmem:[%s1 + $0xc0] sm:$0xff]
        %v477 = vld [vmem:[%s1 + $0xc8] sm:$0xff]
        %v478 = vld [vmem:[%s1 + $0xd0] sm:$0xff]
        %v479 = vld [vmem:[%s1 + $0xd8] sm:$0xff]
        %v480 = vld [vmem:[%s1 + $0xe0] sm:$0xff]
        %v481 = vld [vmem:[%s1 + $0xe8] sm:$0xff]
        %v482 = vld [vmem:[%s1 + $0xf0] sm:$0xff]
        %v483 = vld [vmem:[%s1 + $0xf8] sm:$0xff]
        %v484 = vld [vmem:[%s1 + $0x100] sm:$0xff]
        %v485 = vld [vmem:[%s1 + $0x108] sm:$0xff]
        %v486 = vld [vmem:[%s1 + $0x110] sm:$0xff]
        %v487 = vld [vmem:[%s1 + $0x118] sm:$0xff]
        %v488 = vld [vmem:[%s1 + $0x120] sm:$0xff]
        %v489 = vld [vmem:[%s1 + $0x128] sm:$0xff]
        %v490 = vld [vmem:[%s1 + $0x130] sm:$0xff]
        %v491 = vld [vmem:[%s1 + $0x138] sm:$0xff]
        %v492 = vld [vmem:[%s1 + $0x140] sm:$0xff]
        %v493 = vld [vmem:[%s1 + $0x148] sm:$0xff]
        %v494 = vld [vmem:[%s1 + $0x150] sm:$0xff]
        %v495 = vld [vmem:[%s1 + $0x158] sm:$0xff]
        %v496 = vld [vmem:[%s1 + $0x160] sm:$0xff]
        %v497 = vld [vmem:[%s1 + $0x168] sm:$0xff]
        %v498 = vld [vmem:[%s1 + $0x170] sm:$0xff]
        %v499 = vld [vmem:[%s1 + $0x178] sm:$0xff]
        %v500 = vld [vmem:[%s398 + $0x180] sm:$0xff]
        %v501 = vld [vmem:[%s398 + $0x188] sm:$0xff]
        %v502 = vld [vmem:[%s398 + $0x190] sm:$0xff]
        %s503 = scalar_lea.vmem %s1, 384
        %v504 = vld [vmem:[%s503] sm:$0xff]
        %v505 = vld [vmem:[%s503 + $0x8] sm:$0xff]
        %v506 = vld [vmem:[%s503 + $0x10] sm:$0xff]
        %v507 = vld [vmem:[%s503 + $0x18] sm:$0xff]
        %v508 = vld [vmem:[%s503 + $0x20] sm:$0xff]
        %v509 = vld [vmem:[%s503 + $0x28] sm:$0xff]
        %v510 = vld [vmem:[%s503 + $0x30] sm:$0xff]
        %v511 = vld [vmem:[%s503 + $0x38] sm:$0xff]
        %v512 = vld [vmem:[%s503 + $0x40] sm:$0xff]
        %v513 = vld [vmem:[%s503 + $0x48] sm:$0xff]
        %v514 = vld [vmem:[%s503 + $0x50] sm:$0xff]
        %v515 = vld [vmem:[%s503 + $0x58] sm:$0xff]
        %v516 = vld [vmem:[%s503 + $0x60] sm:$0xff]
        %v517 = vld [vmem:[%s503 + $0x68] sm:$0xff]
        %v518 = vld [vmem:[%s503 + $0x70] sm:$0xff]
        %v519 = vld [vmem:[%s503 + $0x78] sm:$0xff]
        %v520 = vld [vmem:[%s503 + $0x80] sm:$0xff]
        %v521 = vld [vmem:[%s503 + $0x88] sm:$0xff]
        %v522 = vld [vmem:[%s503 + $0x90] sm:$0xff]
        %v523 = vld [vmem:[%s503 + $0x98] sm:$0xff]
        %v524 = vld [vmem:[%s503 + $0xa0] sm:$0xff]
        %v525 = vld [vmem:[%s503 + $0xa8] sm:$0xff]
        %v526 = vld [vmem:[%s503 + $0xb0] sm:$0xff]
        %v527 = vld [vmem:[%s503 + $0xb8] sm:$0xff]
        %v528 = vld [vmem:[%s503 + $0xc0] sm:$0xff]
        %v529 = vld [vmem:[%s503 + $0xc8] sm:$0xff]
        %v530 = vld [vmem:[%s503 + $0xd0] sm:$0xff]
        %v531 = vld [vmem:[%s503 + $0xd8] sm:$0xff]
        %v532 = vld [vmem:[%s503 + $0xe0] sm:$0xff]
        %v533 = vld [vmem:[%s503 + $0xe8] sm:$0xff]
        %v534 = vld [vmem:[%s503 + $0xf0] sm:$0xff]
        %v535 = vld [vmem:[%s503 + $0xf8] sm:$0xff]
        %v536 = vld [vmem:[%s503 + $0x100] sm:$0xff]
        %v537 = vld [vmem:[%s503 + $0x108] sm:$0xff]
        %v538 = vld [vmem:[%s503 + $0x110] sm:$0xff]
        %v539 = vld [vmem:[%s503 + $0x118] sm:$0xff]
        %v540 = vld [vmem:[%s503 + $0x120] sm:$0xff]
        %v541 = vld [vmem:[%s503 + $0x128] sm:$0xff]
        %v542 = vld [vmem:[%s503 + $0x130] sm:$0xff]
        %v543 = vld [vmem:[%s503 + $0x138] sm:$0xff]
        %v544 = vld [vmem:[%s503 + $0x140] sm:$0xff]
        %v545 = vld [vmem:[%s503 + $0x148] sm:$0xff]
        %v546 = vld [vmem:[%s503 + $0x150] sm:$0xff]
        %v547 = vld [vmem:[%s503 + $0x158] sm:$0xff]
        %v548 = vld [vmem:[%s503 + $0x160] sm:$0xff]
        %v549 = vld [vmem:[%s503 + $0x168] sm:$0xff]
        %v550 = vld [vmem:[%s503 + $0x170] sm:$0xff]
        %v551 = vld [vmem:[%s503 + $0x178] sm:$0xff]
        %552 = vmatprep.subr.mxu0 %v505
        %553 = vmatpush1.msra.mxu0 %v504
        %554 = vmatprep.subr.mxu0 %v508
        %555 = vmatpush1.msra.mxu0 %v507
        %556 = vmatprep.subr.mxu0 %v511
        %557 = vmatpush1.msra.mxu0 %v510
        %558 = vmatprep.subr.mxu0 %v514
        %559 = vmatpush1.msra.mxu0 %v513
        %560 = vmatprep.subr.mxu0 %v517
        %561 = vmatpush1.msra.mxu0 %v516
        %562 = vmatprep.subr.mxu0 %v520
        %563 = vmatpush1.msra.mxu0 %v519
        %564 = vmatprep.subr.mxu0 %v523
        %565 = vmatpush1.msra.mxu0 %v522
        %566 = vmatprep.subr.mxu0 %v526
        %567 = vmatpush1.msra.mxu0 %v525
        %568 = vmatprep.subr.mxu0 %v529
        %569 = vmatpush1.msra.mxu0 %v528
        %570 = vmatprep.subr.mxu0 %v532
        %571 = vmatpush1.msra.mxu0 %v531
        %572 = vmatprep.subr.mxu0 %v535
        %573 = vmatpush1.msra.mxu0 %v534
        %574 = vmatprep.subr.mxu0 %v538
        %575 = vmatpush1.msra.mxu0 %v537
        %576 = vmatprep.subr.mxu0 %v541
        %577 = vmatpush1.msra.mxu0 %v540
        %578 = vmatprep.subr.mxu0 %v544
        %579 = vmatpush1.msra.mxu0 %v543
        %580 = vmatprep.subr.mxu0 %v547
        %581 = vmatpush1.msra.mxu0 %v546
        %582 = vmatprep.subr.mxu0 %v550
        %583 = vmatpush1.msra.mxu0 %v549
        %584 = vmatprep.subr.mxu0 0.0
        %585 = vmatpush1.msra.mxu0 0.0
        %586 = vmatprep.subr.mxu0 0.0
        %587 = vmatpush1.msra.mxu0 0.0
        %588 = vmatprep.subr.mxu0 0.0
        %589 = vmatpush1.msra.mxu0 0.0
        %590 = vmatprep.subr.mxu0 0.0
        %591 = vmatpush1.msra.mxu0 0.0
        %592 = vmatprep.subr.mxu0 0.0
        %593 = vmatpush1.msra.mxu0 0.0
        %594 = vmatprep.subr.mxu0 0.0
        %595 = vmatpush1.msra.mxu0 0.0
        %596 = vmatprep.subr.mxu0 0.0
        %597 = vmatpush1.msra.mxu0 0.0
        %598 = vmatprep.subr.mxu0 0.0
        %599 = vmatpush1.msra.mxu0 0.0
        %600 = vmatprep.subr.mxu0 0.0
        %601 = vmatpush1.msra.mxu0 0.0
        %602 = vmatprep.subr.mxu0 0.0
        %603 = vmatpush1.msra.mxu0 0.0
        %604 = vmatprep.subr.mxu0 0.0
        %605 = vmatpush1.msra.mxu0 0.0
        %606 = vmatprep.subr.mxu0 0.0
        %607 = vmatpush1.msra.mxu0 0.0
        %608 = vmatprep.subr.mxu0 0.0
        %609 = vmatpush1.msra.mxu0 0.0
        %610 = vmatprep.subr.mxu0 0.0
        %611 = vmatpush1.msra.mxu0 0.0
        %612 = vmatprep.subr.mxu0 0.0
        %613 = vmatpush1.msra.mxu0 0.0
        %614 = vmatprep.subr.mxu0 0.0
        %615 = vmatpush1.msra.mxu0 0.0
        %616 = vmatprep.mubr.f32.mxu0 0.0
        %617 = vmatmul.mubr.f32.gmra.mrb[0].mxu0 %v407
        %v618 = vpop.f32.mrb[0].mxu0
        %v619 = vadd.f32 0.0, %v618
        %v620 = vpop.f32.mrb[0].mxu0
        %v621 = vadd.f32 0.0, %v620
        %622 = vmatprep.mubr.f32.mxu0 0.0
        %623 = vmatmul.mubr.f32.gmra.mrb[0].mxu0 %v408
        %v624 = vpop.f32.mrb[0].mxu0
        %v625 = vadd.f32 0.0, %v624
        %v626 = vpop.f32.mrb[0].mxu0
        %v627 = vadd.f32 0.0, %v626
        %628 = vmatprep.mubr.f32.mxu0 0.0
        %629 = vmatmul.mubr.f32.gmra.mrb[0].mxu0 %v409
        %v630 = vpop.f32.mrb[0].mxu0
        %v631 = vadd.f32 0.0, %v630
        %v632 = vpop.f32.mrb[0].mxu0
        %v633 = vadd.f32 0.0, %v632
        %634 = vmatprep.mubr.f32.mxu0 0.0
        %635 = vmatmul.mubr.f32.gmra.mrb[0].mxu0 %v410
        %v636 = vpop.f32.mrb[0].mxu0
        %v637 = vadd.f32 0.0, %v636
        %v638 = vpop.f32.mrb[0].mxu0
        %v639 = vadd.f32 0.0, %v638
        %640 = vmatprep.mubr.f32.mxu0 0.0
        %641 = vmatmul.mubr.f32.gmra.mrb[0].mxu0 %v411
        %v642 = vpop.f32.mrb[0].mxu0
        %v643 = vadd.f32 0.0, %v642
        %v644 = vpop.f32.mrb[0].mxu0
        %v645 = vadd.f32 0.0, %v644
        %646 = vmatprep.mubr.f32.mxu0 0.0
        %647 = vmatmul.mubr.f32.gmra.mrb[0].mxu0 %v412
        %v648 = vpop.f32.mrb[0].mxu0
        %v649 = vadd.f32 0.0, %v648
        %v650 = vpop.f32.mrb[0].mxu0
        %v651 = vadd.f32 0.0, %v650
        %652 = vmatprep.mubr.f32.mxu0 0.0
        %653 = vmatmul.mubr.f32.gmra.mrb[0].mxu0 %v413
        %v654 = vpop.f32.mrb[0].mxu0
        %v655 = vadd.f32 0.0, %v654
        %v656 = vpop.f32.mrb[0].mxu0
        %v657 = vadd.f32 0.0, %v656
        %658 = vmatprep.mubr.f32.mxu0 0.0
        %659 = vmatmul.mubr.f32.gmra.mrb[0].mxu0 %v414
        %v660 = vpop.f32.mrb[0].mxu0
        %v661 = vadd.f32 0.0, %v660
        %v662 = vpop.f32.mrb[0].mxu0
        %v663 = vadd.f32 0.0, %v662
        %664 = vmatprep.mubr.f32.mxu0 0.0
        %665 = vmatmul.mubr.f32.gmra.mrb[0].mxu0 %v415
        %v666 = vpop.f32.mrb[0].mxu0
        %v667 = vadd.f32 0.0, %v666
        %v668 = vpop.f32.mrb[0].mxu0
        %v669 = vadd.f32 0.0, %v668
        %670 = vmatprep.mubr.f32.mxu0 0.0
        %671 = vmatmul.mubr.f32.gmra.mrb[0].mxu0 %v416
        %v672 = vpop.f32.mrb[0].mxu0
        %v673 = vadd.f32 0.0, %v672
        %v674 = vpop.f32.mrb[0].mxu0
        %v675 = vadd.f32 0.0, %v674
        %676 = vmatprep.mubr.f32.mxu0 0.0
        %677 = vmatmul.mubr.f32.gmra.mrb[0].mxu0 %v417
        %v678 = vpop.f32.mrb[0].mxu0
        %v679 = vadd.f32 0.0, %v678
        %v680 = vpop.f32.mrb[0].mxu0
        %v681 = vadd.f32 0.0, %v680
        %682 = vmatprep.mubr.f32.mxu0 0.0
        %683 = vmatmul.mubr.f32.gmra.mrb[0].mxu0 %v418
        %v684 = vpop.f32.mrb[0].mxu0
        %v685 = vadd.f32 0.0, %v684
        %v686 = vpop.f32.mrb[0].mxu0
        %v687 = vadd.f32 0.0, %v686
        %688 = vmatprep.mubr.f32.mxu0 0.0
        %689 = vmatmul.mubr.f32.gmra.mrb[0].mxu0 %v419
        %v690 = vpop.f32.mrb[0].mxu0
        %v691 = vadd.f32 0.0, %v690
        %v692 = vpop.f32.mrb[0].mxu0
        %v693 = vadd.f32 0.0, %v692
        %694 = vmatprep.mubr.f32.mxu0 0.0
        %695 = vmatmul.mubr.f32.gmra.mrb[0].mxu0 %v420
        %v696 = vpop.f32.mrb[0].mxu0
        %v697 = vadd.f32 0.0, %v696
        %v698 = vpop.f32.mrb[0].mxu0
        %v699 = vadd.f32 0.0, %v698
        %700 = vmatprep.mubr.f32.mxu0 0.0
        %701 = vmatmul.mubr.f32.gmra.mrb[0].mxu0 %v421
        %v702 = vpop.f32.mrb[0].mxu0
        %v703 = vadd.f32 0.0, %v702
        %v704 = vpop.f32.mrb[0].mxu0
        %v705 = vadd.f32 0.0, %v704
        %706 = vmatprep.mubr.f32.mxu0 0.0
        %707 = vmatmul.mubr.f32.gmra.mrb[0].mxu0 %v422
        %v708 = vpop.f32.mrb[0].mxu0
        %v709 = vadd.f32 0.0, %v708
        %v710 = vpop.f32.mrb[0].mxu0
        %v711 = vadd.f32 0.0, %v710
        %712 = vmatprep.mubr.f32.mxu0 0.0
        %713 = vmatmul.mubr.f32.gmra.mrb[0].mxu0 %v423
        %v714 = vpop.f32.mrb[0].mxu0
        %v715 = vadd.f32 0.0, %v714
        %v716 = vpop.f32.mrb[0].mxu0
        %v717 = vadd.f32 0.0, %v716
        %718 = vmatprep.mubr.f32.mxu0 0.0
        %719 = vmatmul.mubr.f32.gmra.mrb[0].mxu0 %v424
        %v720 = vpop.f32.mrb[0].mxu0
        %v721 = vadd.f32 0.0, %v720
        %v722 = vpop.f32.mrb[0].mxu0
        %v723 = vadd.f32 0.0, %v722
        %724 = vmatprep.mubr.f32.mxu0 0.0
        %725 = vmatmul.mubr.f32.gmra.mrb[0].mxu0 %v425
        %v726 = vpop.f32.mrb[0].mxu0
        %v727 = vadd.f32 0.0, %v726
        %v728 = vpop.f32.mrb[0].mxu0
        %v729 = vadd.f32 0.0, %v728
        %730 = vmatprep.mubr.f32.mxu0 0.0
        %731 = vmatmul.mubr.f32.gmra.mrb[0].mxu0 %v426
        %v732 = vpop.f32.mrb[0].mxu0
        %v733 = vadd.f32 0.0, %v732
        %v734 = vpop.f32.mrb[0].mxu0
        %v735 = vadd.f32 0.0, %v734
        %736 = vmatprep.mubr.f32.mxu0 0.0
        %737 = vmatmul.mubr.f32.gmra.mrb[0].mxu0 %v427
        %v738 = vpop.f32.mrb[0].mxu0
        %v739 = vadd.f32 0.0, %v738
        %v740 = vpop.f32.mrb[0].mxu0
        %v741 = vadd.f32 0.0, %v740
        %742 = vmatprep.mubr.f32.mxu0 0.0
        %743 = vmatmul.mubr.f32.gmra.mrb[0].mxu0 %v428
        %v744 = vpop.f32.mrb[0].mxu0
        %v745 = vadd.f32 0.0, %v744
        %v746 = vpop.f32.mrb[0].mxu0
        %v747 = vadd.f32 0.0, %v746
        %748 = vmatprep.mubr.f32.mxu0 0.0
        %749 = vmatmul.mubr.f32.gmra.mrb[0].mxu0 %v429
        %v750 = vpop.f32.mrb[0].mxu0
        %v751 = vadd.f32 0.0, %v750
        %v752 = vpop.f32.mrb[0].mxu0
        %v753 = vadd.f32 0.0, %v752
        %754 = vmatprep.mubr.f32.mxu0 0.0
        %755 = vmatmul.mubr.f32.gmra.mrb[0].mxu0 %v430
        %v756 = vpop.f32.mrb[0].mxu0
        %v757 = vadd.f32 0.0, %v756
        %v758 = vpop.f32.mrb[0].mxu0
        %v759 = vadd.f32 0.0, %v758
        %760 = vmatprep.mubr.f32.mxu0 0.0
        %761 = vmatmul.mubr.f32.gmra.mrb[0].mxu0 %v431
        %v762 = vpop.f32.mrb[0].mxu0
        %v763 = vadd.f32 0.0, %v762
        %v764 = vpop.f32.mrb[0].mxu0
        %v765 = vadd.f32 0.0, %v764
        %766 = vmatprep.mubr.f32.mxu0 0.0
        %767 = vmatmul.mubr.f32.gmra.mrb[0].mxu0 %v432
        %v768 = vpop.f32.mrb[0].mxu0
        %v769 = vadd.f32 0.0, %v768
        %v770 = vpop.f32.mrb[0].mxu0
        %v771 = vadd.f32 0.0, %v770
        %772 = vmatprep.mubr.f32.mxu0 0.0
        %773 = vmatmul.mubr.f32.gmra.mrb[0].mxu0 %v433
        %v774 = vpop.f32.mrb[0].mxu0
        %v775 = vadd.f32 0.0, %v774
        %v776 = vpop.f32.mrb[0].mxu0
        %v777 = vadd.f32 0.0, %v776
        %778 = vmatprep.mubr.f32.mxu0 0.0
        %779 = vmatmul.mubr.f32.gmra.mrb[0].mxu0 %v434
        %v780 = vpop.f32.mrb[0].mxu0
        %v781 = vadd.f32 0.0, %v780
        %v782 = vpop.f32.mrb[0].mxu0
        %v783 = vadd.f32 0.0, %v782
        %784 = vmatprep.mubr.f32.mxu0 0.0
        %785 = vmatmul.mubr.f32.gmra.mrb[0].mxu0 %v435
        %v786 = vpop.f32.mrb[0].mxu0
        %v787 = vadd.f32 0.0, %v786
        %v788 = vpop.f32.mrb[0].mxu0
        %v789 = vadd.f32 0.0, %v788
        %790 = vmatprep.mubr.f32.mxu0 0.0
        %791 = vmatmul.mubr.f32.gmra.mrb[0].mxu0 %v436
        %v792 = vpop.f32.mrb[0].mxu0
        %v793 = vadd.f32 0.0, %v792
        %v794 = vpop.f32.mrb[0].mxu0
        %v795 = vadd.f32 0.0, %v794
        %796 = vmatprep.mubr.f32.mxu0 0.0
        %797 = vmatmul.mubr.f32.gmra.mrb[0].mxu0 %v437
        %v798 = vpop.f32.mrb[0].mxu0
        %v799 = vadd.f32 0.0, %v798
        %v800 = vpop.f32.mrb[0].mxu0
        %v801 = vadd.f32 0.0, %v800
        %802 = vmatprep.mubr.f32.mxu0 0.0
        %803 = vmatmul.mubr.f32.gmra.mrb[0].mxu0 %v438
        %v804 = vpop.f32.mrb[0].mxu0
        %v805 = vadd.f32 0.0, %v804
        %v806 = vpop.f32.mrb[0].mxu0
        %v807 = vadd.f32 0.0, %v806
        %808 = vmatprep.mubr.f32.mxu0 0.0
        %809 = vmatmul.mubr.f32.gmra.mrb[0].mxu0 %v439
        %v810 = vpop.f32.mrb[0].mxu0
        %v811 = vadd.f32 0.0, %v810
        %v812 = vpop.f32.mrb[0].mxu0
        %v813 = vadd.f32 0.0, %v812
        %814 = vmatprep.mubr.f32.mxu0 0.0
        %815 = vmatmul.mubr.f32.gmra.mrb[0].mxu0 %v440
        %v816 = vpop.f32.mrb[0].mxu0
        %v817 = vadd.f32 0.0, %v816
        %v818 = vpop.f32.mrb[0].mxu0
        %v819 = vadd.f32 0.0, %v818
        %820 = vmatprep.mubr.f32.mxu0 0.0
        %821 = vmatmul.mubr.f32.gmra.mrb[0].mxu0 %v441
        %v822 = vpop.f32.mrb[0].mxu0
        %v823 = vadd.f32 0.0, %v822
        %v824 = vpop.f32.mrb[0].mxu0
        %v825 = vadd.f32 0.0, %v824
        %826 = vmatprep.mubr.f32.mxu0 0.0
        %827 = vmatmul.mubr.f32.gmra.mrb[0].mxu0 %v442
        %v828 = vpop.f32.mrb[0].mxu0
        %v829 = vadd.f32 0.0, %v828
        %v830 = vpop.f32.mrb[0].mxu0
        %v831 = vadd.f32 0.0, %v830
        %832 = vmatprep.mubr.f32.mxu0 0.0
        %833 = vmatmul.mubr.f32.gmra.mrb[0].mxu0 %v443
        %v834 = vpop.f32.mrb[0].mxu0
        %v835 = vadd.f32 0.0, %v834
        %v836 = vpop.f32.mrb[0].mxu0
        %v837 = vadd.f32 0.0, %v836
        %838 = vmatprep.mubr.f32.mxu0 0.0
        %839 = vmatmul.mubr.f32.gmra.mrb[0].mxu0 %v444
        %v840 = vpop.f32.mrb[0].mxu0
        %v841 = vadd.f32 0.0, %v840
        %v842 = vpop.f32.mrb[0].mxu0
        %v843 = vadd.f32 0.0, %v842
        %844 = vmatprep.mubr.f32.mxu0 0.0
        %845 = vmatmul.mubr.f32.gmra.mrb[0].mxu0 %v445
        %v846 = vpop.f32.mrb[0].mxu0
        %v847 = vadd.f32 0.0, %v846
        %v848 = vpop.f32.mrb[0].mxu0
        %v849 = vadd.f32 0.0, %v848
        %850 = vmatprep.mubr.f32.mxu0 0.0
        %851 = vmatmul.mubr.f32.gmra.mrb[0].mxu0 %v446
        %v852 = vpop.f32.mrb[0].mxu0
        %v853 = vadd.f32 0.0, %v852
        %v854 = vpop.f32.mrb[0].mxu0
        %v855 = vadd.f32 0.0, %v854
        %856 = vmatprep.mubr.f32.mxu0 0.0
        %857 = vmatmul.mubr.f32.gmra.mrb[0].mxu0 %v447
        %v858 = vpop.f32.mrb[0].mxu0
        %v859 = vadd.f32 0.0, %v858
        %v860 = vpop.f32.mrb[0].mxu0
        %v861 = vadd.f32 0.0, %v860
        %862 = vmatprep.mubr.f32.mxu0 0.0
        %863 = vmatmul.mubr.f32.gmra.mrb[0].mxu0 %v448
        %v864 = vpop.f32.mrb[0].mxu0
        %v865 = vadd.f32 0.0, %v864
        %v866 = vpop.f32.mrb[0].mxu0
        %v867 = vadd.f32 0.0, %v866
        %868 = vmatprep.mubr.f32.mxu0 0.0
        %869 = vmatmul.mubr.f32.gmra.mrb[0].mxu0 %v449
        %v870 = vpop.f32.mrb[0].mxu0
        %v871 = vadd.f32 0.0, %v870
        %v872 = vpop.f32.mrb[0].mxu0
        %v873 = vadd.f32 0.0, %v872
        %874 = vmatprep.mubr.f32.mxu0 0.0
        %875 = vmatmul.mubr.f32.gmra.mrb[0].mxu0 %v450
        %v876 = vpop.f32.mrb[0].mxu0
        %v877 = vadd.f32 0.0, %v876
        %v878 = vpop.f32.mrb[0].mxu0
        %v879 = vadd.f32 0.0, %v878
        %880 = vmatprep.mubr.f32.mxu0 0.0
        %881 = vmatmul.mubr.f32.gmra.mrb[0].mxu0 %v451
        %v882 = vpop.f32.mrb[0].mxu0
        %v883 = vadd.f32 0.0, %v882
        %v884 = vpop.f32.mrb[0].mxu0
        %v885 = vadd.f32 0.0, %v884
        %886 = vmatprep.mubr.f32.mxu0 0.0
        %887 = vmatmul.mubr.f32.gmra.mrb[0].mxu0 %v500
        %v888 = vpop.f32.mrb[0].mxu0
        %v889 = vadd.f32 0.0, %v888
        %v890 = vpop.f32.mrb[0].mxu0
        %v891 = vadd.f32 0.0, %v890
        %892 = vmatprep.mubr.f32.mxu0 0.0
        %893 = vmatmul.mubr.f32.gmra.mrb[0].mxu0 %v501
        %v894 = vpop.f32.mrb[0].mxu0
        %v895 = vadd.f32 0.0, %v894
        %v896 = vpop.f32.mrb[0].mxu0
        %v897 = vadd.f32 0.0, %v896
        %898 = vmatprep.mubr.f32.mxu0 0.0
        %899 = vmatmul.mubr.f32.gmra.mrb[0].mxu0 %v502
        %v900 = vpop.f32.mrb[0].mxu0
        %v901 = vadd.f32 0.0, %v900
        %v902 = vpop.f32.mrb[0].mxu0
        %v903 = vadd.f32 0.0, %v902
        %904 = vdwg.mxu0
        %905 = vmatprep.subr.mxu0 0.0
        %906 = vmatpush1.msra.mxu0 %v506
        %907 = vmatprep.subr.mxu0 0.0
        %908 = vmatpush1.msra.mxu0 %v509
        %909 = vmatprep.subr.mxu0 0.0
        %910 = vmatpush1.msra.mxu0 %v512
        %911 = vmatprep.subr.mxu0 0.0
        %912 = vmatpush1.msra.mxu0 %v515
        %913 = vmatprep.subr.mxu0 0.0
        %914 = vmatpush1.msra.mxu0 %v518
        %915 = vmatprep.subr.mxu0 0.0
        %916 = vmatpush1.msra.mxu0 %v521
        %917 = vmatprep.subr.mxu0 0.0
        %918 = vmatpush1.msra.mxu0 %v524
        %919 = vmatprep.subr.mxu0 0.0
        %920 = vmatpush1.msra.mxu0 %v527
        %921 = vmatprep.subr.mxu0 0.0
        %922 = vmatpush1.msra.mxu0 %v530
        %923 = vmatprep.subr.mxu0 0.0
        %924 = vmatpush1.msra.mxu0 %v533
        %925 = vmatprep.subr.mxu0 0.0
        %926 = vmatpush1.msra.mxu0 %v536
        %927 = vmatprep.subr.mxu0 0.0
        %928 = vmatpush1.msra.mxu0 %v539
        %929 = vmatprep.subr.mxu0 0.0
        %930 = vmatpush1.msra.mxu0 %v542
        %931 = vmatprep.subr.mxu0 0.0
        %932 = vmatpush1.msra.mxu0 %v545
        %933 = vmatprep.subr.mxu0 0.0
        %934 = vmatpush1.msra.mxu0 %v548
        %935 = vmatprep.subr.mxu0 0.0
        %936 = vmatpush1.msra.mxu0 %v551
        %937 = vmatprep.subr.mxu0 0.0
        %938 = vmatpush1.msra.mxu0 0.0
        %939 = vmatprep.subr.mxu0 0.0
        %940 = vmatpush1.msra.mxu0 0.0
        %941 = vmatprep.subr.mxu0 0.0
        %942 = vmatpush1.msra.mxu0 0.0
        %943 = vmatprep.subr.mxu0 0.0
        %944 = vmatpush1.msra.mxu0 0.0
        %945 = vmatprep.subr.mxu0 0.0
        %946 = vmatpush1.msra.mxu0 0.0
        %947 = vmatprep.subr.mxu0 0.0
        %948 = vmatpush1.msra.mxu0 0.0
        %949 = vmatprep.subr.mxu0 0.0
        %950 = vmatpush1.msra.mxu0 0.0
        %951 = vmatprep.subr.mxu0 0.0
        %952 = vmatpush1.msra.mxu0 0.0
        %953 = vmatprep.subr.mxu0 0.0
        %954 = vmatpush1.msra.mxu0 0.0
        %955 = vmatprep.subr.mxu0 0.0
        %956 = vmatpush1.msra.mxu0 0.0
        %957 = vmatprep.subr.mxu0 0.0
        %958 = vmatpush1.msra.mxu0 0.0
        %959 = vmatprep.subr.mxu0 0.0
        %960 = vmatpush1.msra.mxu0 0.0
        %961 = vmatprep.subr.mxu0 0.0
        %962 = vmatpush1.msra.mxu0 0.0
        %963 = vmatprep.subr.mxu0 0.0
        %964 = vmatpush1.msra.mxu0 0.0
        %965 = vmatprep.subr.mxu0 0.0
        %966 = vmatpush1.msra.mxu0 0.0
        %967 = vmatprep.subr.mxu0 0.0
        %968 = vmatpush1.msra.mxu0 0.0
        %969 = vmatprep.mubr.f32.mxu0 0.0
        %970 = vmatmul.mubr.f32.gmra.mrb[0].mxu0 %v407
        %v971 = vpop.f32.mrb[0].mxu0
        %v972 = vadd.f32 0.0, %v971
        %v973 = vpop.f32.mrb[0].mxu0
        %974 = vmatprep.mubr.f32.mxu0 0.0
        %975 = vmatmul.mubr.f32.gmra.mrb[0].mxu0 %v408
        %v976 = vpop.f32.mrb[0].mxu0
        %v977 = vadd.f32 0.0, %v976
        %v978 = vpop.f32.mrb[0].mxu0
        %979 = vmatprep.mubr.f32.mxu0 0.0
        %980 = vmatmul.mubr.f32.gmra.mrb[0].mxu0 %v409
        %v981 = vpop.f32.mrb[0].mxu0
        %v982 = vadd.f32 0.0, %v981
        %v983 = vpop.f32.mrb[0].mxu0
        %984 = vmatprep.mubr.f32.mxu0 0.0
        %985 = vmatmul.mubr.f32.gmra.mrb[0].mxu0 %v410
        %v986 = vpop.f32.mrb[0].mxu0
        %v987 = vadd.f32 0.0, %v986
        %v988 = vpop.f32.mrb[0].mxu0
        %989 = vmatprep.mubr.f32.mxu0 0.0
        %990 = vmatmul.mubr.f32.gmra.mrb[0].mxu0 %v411
        %v991 = vpop.f32.mrb[0].mxu0
        %v992 = vadd.f32 0.0, %v991
        %v993 = vpop.f32.mrb[0].mxu0
        %994 = vmatprep.mubr.f32.mxu0 0.0
        %995 = vmatmul.mubr.f32.gmra.mrb[0].mxu0 %v412
        %v996 = vpop.f32.mrb[0].mxu0
        %v997 = vadd.f32 0.0, %v996
        %v998 = vpop.f32.mrb[0].mxu0
        %999 = vmatprep.mubr.f32.mxu0 0.0
        %1000 = vmatmul.mubr.f32.gmra.mrb[0].mxu0 %v413
        %v1001 = vpop.f32.mrb[0].mxu0
        %v1002 = vadd.f32 0.0, %v1001
        %v1003 = vpop.f32.mrb[0].mxu0
        %1004 = vmatprep.mubr.f32.mxu0 0.0
        %1005 = vmatmul.mubr.f32.gmra.mrb[0].mxu0 %v414
        %v1006 = vpop.f32.mrb[0].mxu0
        %v1007 = vadd.f32 0.0, %v1006
        %v1008 = vpop.f32.mrb[0].mxu0
        %1009 = vmatprep.mubr.f32.mxu0 0.0
        %1010 = vmatmul.mubr.f32.gmra.mrb[0].mxu0 %v415
        %v1011 = vpop.f32.mrb[0].mxu0
        %v1012 = vadd.f32 0.0, %v1011
        %v1013 = vpop.f32.mrb[0].mxu0
        %1014 = vmatprep.mubr.f32.mxu0 0.0
        %1015 = vmatmul.mubr.f32.gmra.mrb[0].mxu0 %v416
        %v1016 = vpop.f32.mrb[0].mxu0
        %v1017 = vadd.f32 0.0, %v1016
        %v1018 = vpop.f32.mrb[0].mxu0
        %1019 = vmatprep.mubr.f32.mxu0 0.0
        %1020 = vmatmul.mubr.f32.gmra.mrb[0].mxu0 %v417
        %v1021 = vpop.f32.mrb[0].mxu0
        %v1022 = vadd.f32 0.0, %v1021
        %v1023 = vpop.f32.mrb[0].mxu0
        %1024 = vmatprep.mubr.f32.mxu0 0.0
        %1025 = vmatmul.mubr.f32.gmra.mrb[0].mxu0 %v418
        %v1026 = vpop.f32.mrb[0].mxu0
        %v1027 = vadd.f32 0.0, %v1026
        %v1028 = vpop.f32.mrb[0].mxu0
        %1029 = vmatprep.mubr.f32.mxu0 0.0
        %1030 = vmatmul.mubr.f32.gmra.mrb[0].mxu0 %v419
        %v1031 = vpop.f32.mrb[0].mxu0
        %v1032 = vadd.f32 0.0, %v1031
        %v1033 = vpop.f32.mrb[0].mxu0
        %1034 = vmatprep.mubr.f32.mxu0 0.0
        %1035 = vmatmul.mubr.f32.gmra.mrb[0].mxu0 %v420
        %v1036 = vpop.f32.mrb[0].mxu0
        %v1037 = vadd.f32 0.0, %v1036
        %v1038 = vpop.f32.mrb[0].mxu0
        %1039 = vmatprep.mubr.f32.mxu0 0.0
        %1040 = vmatmul.mubr.f32.gmra.mrb[0].mxu0 %v421
        %v1041 = vpop.f32.mrb[0].mxu0
        %v1042 = vadd.f32 0.0, %v1041
        %v1043 = vpop.f32.mrb[0].mxu0
        %1044 = vmatprep.mubr.f32.mxu0 0.0
        %1045 = vmatmul.mubr.f32.gmra.mrb[0].mxu0 %v422
        %v1046 = vpop.f32.mrb[0].mxu0
        %v1047 = vadd.f32 0.0, %v1046
        %v1048 = vpop.f32.mrb[0].mxu0
        %1049 = vmatprep.mubr.f32.mxu0 0.0
        %1050 = vmatmul.mubr.f32.gmra.mrb[0].mxu0 %v423
        %v1051 = vpop.f32.mrb[0].mxu0
        %v1052 = vadd.f32 0.0, %v1051
        %v1053 = vpop.f32.mrb[0].mxu0
        %1054 = vmatprep.mubr.f32.mxu0 0.0
        %1055 = vmatmul.mubr.f32.gmra.mrb[0].mxu0 %v424
        %v1056 = vpop.f32.mrb[0].mxu0
        %v1057 = vadd.f32 0.0, %v1056
        %v1058 = vpop.f32.mrb[0].mxu0
        %1059 = vmatprep.mubr.f32.mxu0 0.0
        %1060 = vmatmul.mubr.f32.gmra.mrb[0].mxu0 %v425
        %v1061 = vpop.f32.mrb[0].mxu0
        %v1062 = vadd.f32 0.0, %v1061
        %v1063 = vpop.f32.mrb[0].mxu0
        %1064 = vmatprep.mubr.f32.mxu0 0.0
        %1065 = vmatmul.mubr.f32.gmra.mrb[0].mxu0 %v426
        %v1066 = vpop.f32.mrb[0].mxu0
        %v1067 = vadd.f32 0.0, %v1066
        %v1068 = vpop.f32.mrb[0].mxu0
        %1069 = vmatprep.mubr.f32.mxu0 0.0
        %1070 = vmatmul.mubr.f32.gmra.mrb[0].mxu0 %v427
        %v1071 = vpop.f32.mrb[0].mxu0
        %v1072 = vadd.f32 0.0, %v1071
        %v1073 = vpop.f32.mrb[0].mxu0
        %1074 = vmatprep.mubr.f32.mxu0 0.0
        %1075 = vmatmul.mubr.f32.gmra.mrb[0].mxu0 %v428
        %v1076 = vpop.f32.mrb[0].mxu0
        %v1077 = vadd.f32 0.0, %v1076
        %v1078 = vpop.f32.mrb[0].mxu0
        %1079 = vmatprep.mubr.f32.mxu0 0.0
        %1080 = vmatmul.mubr.f32.gmra.mrb[0].mxu0 %v429
        %v1081 = vpop.f32.mrb[0].mxu0
        %v1082 = vadd.f32 0.0, %v1081
        %v1083 = vpop.f32.mrb[0].mxu0
        %1084 = vmatprep.mubr.f32.mxu0 0.0
        %1085 = vmatmul.mubr.f32.gmra.mrb[0].mxu0 %v430
        %v1086 = vpop.f32.mrb[0].mxu0
        %v1087 = vadd.f32 0.0, %v1086
        %v1088 = vpop.f32.mrb[0].mxu0
        %1089 = vmatprep.mubr.f32.mxu0 0.0
        %1090 = vmatmul.mubr.f32.gmra.mrb[0].mxu0 %v431
        %v1091 = vpop.f32.mrb[0].mxu0
        %v1092 = vadd.f32 0.0, %v1091
        %v1093 = vpop.f32.mrb[0].mxu0
        %1094 = vmatprep.mubr.f32.mxu0 0.0
        %1095 = vmatmul.mubr.f32.gmra.mrb[0].mxu0 %v432
        %v1096 = vpop.f32.mrb[0].mxu0
        %v1097 = vadd.f32 0.0, %v1096
        %v1098 = vpop.f32.mrb[0].mxu0
        %1099 = vmatprep.mubr.f32.mxu0 0.0
        %1100 = vmatmul.mubr.f32.gmra.mrb[0].mxu0 %v433
        %v1101 = vpop.f32.mrb[0].mxu0
        %v1102 = vadd.f32 0.0, %v1101
        %v1103 = vpop.f32.mrb[0].mxu0
        %1104 = vmatprep.mubr.f32.mxu0 0.0
        %1105 = vmatmul.mubr.f32.gmra.mrb[0].mxu0 %v434
        %v1106 = vpop.f32.mrb[0].mxu0
        %v1107 = vadd.f32 0.0, %v1106
        %v1108 = vpop.f32.mrb[0].mxu0
        %1109 = vmatprep.mubr.f32.mxu0 0.0
        %1110 = vmatmul.mubr.f32.gmra.mrb[0].mxu0 %v435
        %v1111 = vpop.f32.mrb[0].mxu0
        %v1112 = vadd.f32 0.0, %v1111
        %v1113 = vpop.f32.mrb[0].mxu0
        %1114 = vmatprep.mubr.f32.mxu0 0.0
        %1115 = vmatmul.mubr.f32.gmra.mrb[0].mxu0 %v436
        %v1116 = vpop.f32.mrb[0].mxu0
        %v1117 = vadd.f32 0.0, %v1116
        %v1118 = vpop.f32.mrb[0].mxu0
        %1119 = vmatprep.mubr.f32.mxu0 0.0
        %1120 = vmatmul.mubr.f32.gmra.mrb[0].mxu0 %v437
        %v1121 = vpop.f32.mrb[0].mxu0
        %v1122 = vadd.f32 0.0, %v1121
        %v1123 = vpop.f32.mrb[0].mxu0
        %1124 = vmatprep.mubr.f32.mxu0 0.0
        %1125 = vmatmul.mubr.f32.gmra.mrb[0].mxu0 %v438
        %v1126 = vpop.f32.mrb[0].mxu0
        %v1127 = vadd.f32 0.0, %v1126
        %v1128 = vpop.f32.mrb[0].mxu0
        %1129 = vmatprep.mubr.f32.mxu0 0.0
        %1130 = vmatmul.mubr.f32.gmra.mrb[0].mxu0 %v439
        %v1131 = vpop.f32.mrb[0].mxu0
        %v1132 = vadd.f32 0.0, %v1131
        %v1133 = vpop.f32.mrb[0].mxu0
        %1134 = vmatprep.mubr.f32.mxu0 0.0
        %1135 = vmatmul.mubr.f32.gmra.mrb[0].mxu0 %v440
        %v1136 = vpop.f32.mrb[0].mxu0
        %v1137 = vadd.f32 0.0, %v1136
        %v1138 = vpop.f32.mrb[0].mxu0
        %1139 = vmatprep.mubr.f32.mxu0 0.0
        %1140 = vmatmul.mubr.f32.gmra.mrb[0].mxu0 %v441
        %v1141 = vpop.f32.mrb[0].mxu0
        %v1142 = vadd.f32 0.0, %v1141
        %v1143 = vpop.f32.mrb[0].mxu0
        %1144 = vmatprep.mubr.f32.mxu0 0.0
        %1145 = vmatmul.mubr.f32.gmra.mrb[0].mxu0 %v442
        %v1146 = vpop.f32.mrb[0].mxu0
        %v1147 = vadd.f32 0.0, %v1146
        %v1148 = vpop.f32.mrb[0].mxu0
        %1149 = vmatprep.mubr.f32.mxu0 0.0
        %1150 = vmatmul.mubr.f32.gmra.mrb[0].mxu0 %v443
        %v1151 = vpop.f32.mrb[0].mxu0
        %v1152 = vadd.f32 0.0, %v1151
        %v1153 = vpop.f32.mrb[0].mxu0
        %1154 = vmatprep.mubr.f32.mxu0 0.0
        %1155 = vmatmul.mubr.f32.gmra.mrb[0].mxu0 %v444
        %v1156 = vpop.f32.mrb[0].mxu0
        %v1157 = vadd.f32 0.0, %v1156
        %v1158 = vpop.f32.mrb[0].mxu0
        %1159 = vmatprep.mubr.f32.mxu0 0.0
        %1160 = vmatmul.mubr.f32.gmra.mrb[0].mxu0 %v445
        %v1161 = vpop.f32.mrb[0].mxu0
        %v1162 = vadd.f32 0.0, %v1161
        %v1163 = vpop.f32.mrb[0].mxu0
        %1164 = vmatprep.mubr.f32.mxu0 0.0
        %1165 = vmatmul.mubr.f32.gmra.mrb[0].mxu0 %v446
        %v1166 = vpop.f32.mrb[0].mxu0
        %v1167 = vadd.f32 0.0, %v1166
        %v1168 = vpop.f32.mrb[0].mxu0
        %1169 = vmatprep.mubr.f32.mxu0 0.0
        %1170 = vmatmul.mubr.f32.gmra.mrb[0].mxu0 %v447
        %v1171 = vpop.f32.mrb[0].mxu0
        %v1172 = vadd.f32 0.0, %v1171
        %v1173 = vpop.f32.mrb[0].mxu0
        %1174 = vmatprep.mubr.f32.mxu0 0.0
        %1175 = vmatmul.mubr.f32.gmra.mrb[0].mxu0 %v448
        %v1176 = vpop.f32.mrb[0].mxu0
        %v1177 = vadd.f32 0.0, %v1176
        %v1178 = vpop.f32.mrb[0].mxu0
        %1179 = vmatprep.mubr.f32.mxu0 0.0
        %1180 = vmatmul.mubr.f32.gmra.mrb[0].mxu0 %v449
        %v1181 = vpop.f32.mrb[0].mxu0
        %v1182 = vadd.f32 0.0, %v1181
        %v1183 = vpop.f32.mrb[0].mxu0
        %1184 = vmatprep.mubr.f32.mxu0 0.0
        %1185 = vmatmul.mubr.f32.gmra.mrb[0].mxu0 %v450
        %v1186 = vpop.f32.mrb[0].mxu0
        %v1187 = vadd.f32 0.0, %v1186
        %v1188 = vpop.f32.mrb[0].mxu0
        %1189 = vmatprep.mubr.f32.mxu0 0.0
        %1190 = vmatmul.mubr.f32.gmra.mrb[0].mxu0 %v451
        %v1191 = vpop.f32.mrb[0].mxu0
        %v1192 = vadd.f32 0.0, %v1191
        %v1193 = vpop.f32.mrb[0].mxu0
        %1194 = vmatprep.mubr.f32.mxu0 0.0
        %1195 = vmatmul.mubr.f32.gmra.mrb[0].mxu0 %v500
        %v1196 = vpop.f32.mrb[0].mxu0
        %v1197 = vadd.f32 0.0, %v1196
        %v1198 = vpop.f32.mrb[0].mxu0
        %1199 = vmatprep.mubr.f32.mxu0 0.0
        %1200 = vmatmul.mubr.f32.gmra.mrb[0].mxu0 %v501
        %v1201 = vpop.f32.mrb[0].mxu0
        %v1202 = vadd.f32 0.0, %v1201
        %v1203 = vpop.f32.mrb[0].mxu0
        %1204 = vmatprep.mubr.f32.mxu0 0.0
        %1205 = vmatmul.mubr.f32.gmra.mrb[0].mxu0 %v502
        %v1206 = vpop.f32.mrb[0].mxu0
        %v1207 = vadd.f32 0.0, %v1206
        %v1208 = vpop.f32.mrb[0].mxu0
        %1209 = vdwg.mxu0
        %1210 = vmatprep.subr.mxu0 %v453
        %1211 = vmatpush1.msra.mxu0 %v452
        %1212 = vmatprep.subr.mxu0 %v456
        %1213 = vmatpush1.msra.mxu0 %v455
        %1214 = vmatprep.subr.mxu0 %v459
        %1215 = vmatpush1.msra.mxu0 %v458
        %1216 = vmatprep.subr.mxu0 %v462
        %1217 = vmatpush1.msra.mxu0 %v461
        %1218 = vmatprep.subr.mxu0 %v465
        %1219 = vmatpush1.msra.mxu0 %v464
        %1220 = vmatprep.subr.mxu0 %v468
        %1221 = vmatpush1.msra.mxu0 %v467
        %1222 = vmatprep.subr.mxu0 %v471
        %1223 = vmatpush1.msra.mxu0 %v470
        %1224 = vmatprep.subr.mxu0 %v474
        %1225 = vmatpush1.msra.mxu0 %v473
        %1226 = vmatprep.subr.mxu0 %v477
        %1227 = vmatpush1.msra.mxu0 %v476
        %1228 = vmatprep.subr.mxu0 %v480
        %1229 = vmatpush1.msra.mxu0 %v479
        %1230 = vmatprep.subr.mxu0 %v483
        %1231 = vmatpush1.msra.mxu0 %v482
        %1232 = vmatprep.subr.mxu0 %v486
        %1233 = vmatpush1.msra.mxu0 %v485
        %1234 = vmatprep.subr.mxu0 %v489
        %1235 = vmatpush1.msra.mxu0 %v488
        %1236 = vmatprep.subr.mxu0 %v492
        %1237 = vmatpush1.msra.mxu0 %v491
        %1238 = vmatprep.subr.mxu0 %v495
        %1239 = vmatpush1.msra.mxu0 %v494
        %1240 = vmatprep.subr.mxu0 %v498
        %1241 = vmatpush1.msra.mxu0 %v497
        %1242 = vmatprep.subr.mxu0 0.0
        %1243 = vmatpush1.msra.mxu0 0.0
        %1244 = vmatprep.subr.mxu0 0.0
        %1245 = vmatpush1.msra.mxu0 0.0
        %1246 = vmatprep.subr.mxu0 0.0
        %1247 = vmatpush1.msra.mxu0 0.0
        %1248 = vmatprep.subr.mxu0 0.0
        %1249 = vmatpush1.msra.mxu0 0.0
        %1250 = vmatprep.subr.mxu0 0.0
        %1251 = vmatpush1.msra.mxu0 0.0
        %1252 = vmatprep.subr.mxu0 0.0
        %1253 = vmatpush1.msra.mxu0 0.0
        %1254 = vmatprep.subr.mxu0 0.0
        %1255 = vmatpush1.msra.mxu0 0.0
        %1256 = vmatprep.subr.mxu0 0.0
        %1257 = vmatpush1.msra.mxu0 0.0
        %1258 = vmatprep.subr.mxu0 0.0
        %1259 = vmatpush1.msra.mxu0 0.0
        %1260 = vmatprep.subr.mxu0 0.0
        %1261 = vmatpush1.msra.mxu0 0.0
        %1262 = vmatprep.subr.mxu0 0.0
        %1263 = vmatpush1.msra.mxu0 0.0
        %1264 = vmatprep.subr.mxu0 0.0
        %1265 = vmatpush1.msra.mxu0 0.0
        %1266 = vmatprep.subr.mxu0 0.0
        %1267 = vmatpush1.msra.mxu0 0.0
        %1268 = vmatprep.subr.mxu0 0.0
        %1269 = vmatpush1.msra.mxu0 0.0
        %1270 = vmatprep.subr.mxu0 0.0
        %1271 = vmatpush1.msra.mxu0 0.0
        %1272 = vmatprep.subr.mxu0 0.0
        %1273 = vmatpush1.msra.mxu0 0.0
        %1274 = vmatprep.mubr.f32.mxu0 0.0
        %1275 = vmatmul.mubr.f32.gmra.mrb[0].mxu0 %v404
        %v1276 = vpop.f32.mrb[0].mxu0
        %v1277 = vadd.f32 %v619, %v1276
        %v1278 = vpop.f32.mrb[0].mxu0
        %v1279 = vadd.f32 %v621, %v1278
        %1280 = vmatprep.mubr.f32.mxu0 0.0
        %1281 = vmatmul.mubr.f32.gmra.mrb[0].mxu0 %v405
        %v1282 = vpop.f32.mrb[0].mxu0
        %v1283 = vadd.f32 %v625, %v1282
        %v1284 = vpop.f32.mrb[0].mxu0
        %v1285 = vadd.f32 %v627, %v1284
        %1286 = vmatprep.mubr.f32.mxu0 0.0
        %1287 = vmatmul.mubr.f32.gmra.mrb[0].mxu0 %v406
        %v1288 = vpop.f32.mrb[0].mxu0
        %v1289 = vadd.f32 %v631, %v1288
        %v1290 = vpop.f32.mrb[0].mxu0
        %v1291 = vadd.f32 %v633, %v1290
        %1292 = vmatprep.mubr.f32.mxu0 0.0
        %1293 = vmatmul.mubr.f32.gmra.mrb[0].mxu0 %v407
        %v1294 = vpop.f32.mrb[0].mxu0
        %v1295 = vadd.f32 %v637, %v1294
        %v1296 = vpop.f32.mrb[0].mxu0
        %v1297 = vadd.f32 %v639, %v1296
        %1298 = vmatprep.mubr.f32.mxu0 0.0
        %1299 = vmatmul.mubr.f32.gmra.mrb[0].mxu0 %v408
        %v1300 = vpop.f32.mrb[0].mxu0
        %v1301 = vadd.f32 %v643, %v1300
        %v1302 = vpop.f32.mrb[0].mxu0
        %v1303 = vadd.f32 %v645, %v1302
        %1304 = vmatprep.mubr.f32.mxu0 0.0
        %1305 = vmatmul.mubr.f32.gmra.mrb[0].mxu0 %v409
        %v1306 = vpop.f32.mrb[0].mxu0
        %v1307 = vadd.f32 %v649, %v1306
        %v1308 = vpop.f32.mrb[0].mxu0
        %v1309 = vadd.f32 %v651, %v1308
        %1310 = vmatprep.mubr.f32.mxu0 0.0
        %1311 = vmatmul.mubr.f32.gmra.mrb[0].mxu0 %v410
        %v1312 = vpop.f32.mrb[0].mxu0
        %v1313 = vadd.f32 %v655, %v1312
        %v1314 = vpop.f32.mrb[0].mxu0
        %v1315 = vadd.f32 %v657, %v1314
        %1316 = vmatprep.mubr.f32.mxu0 0.0
        %1317 = vmatmul.mubr.f32.gmra.mrb[0].mxu0 %v411
        %v1318 = vpop.f32.mrb[0].mxu0
        %v1319 = vadd.f32 %v661, %v1318
        %v1320 = vpop.f32.mrb[0].mxu0
        %v1321 = vadd.f32 %v663, %v1320
        %1322 = vmatprep.mubr.f32.mxu0 0.0
        %1323 = vmatmul.mubr.f32.gmra.mrb[0].mxu0 %v412
        %v1324 = vpop.f32.mrb[0].mxu0
        %v1325 = vadd.f32 %v667, %v1324
        %v1326 = vpop.f32.mrb[0].mxu0
        %v1327 = vadd.f32 %v669, %v1326
        %1328 = vmatprep.mubr.f32.mxu0 0.0
        %1329 = vmatmul.mubr.f32.gmra.mrb[0].mxu0 %v413
        %v1330 = vpop.f32.mrb[0].mxu0
        %v1331 = vadd.f32 %v673, %v1330
        %v1332 = vpop.f32.mrb[0].mxu0
        %v1333 = vadd.f32 %v675, %v1332
        %1334 = vmatprep.mubr.f32.mxu0 0.0
        %1335 = vmatmul.mubr.f32.gmra.mrb[0].mxu0 %v414
        %v1336 = vpop.f32.mrb[0].mxu0
        %v1337 = vadd.f32 %v679, %v1336
        %v1338 = vpop.f32.mrb[0].mxu0
        %v1339 = vadd.f32 %v681, %v1338
        %1340 = vmatprep.mubr.f32.mxu0 0.0
        %1341 = vmatmul.mubr.f32.gmra.mrb[0].mxu0 %v415
        %v1342 = vpop.f32.mrb[0].mxu0
        %v1343 = vadd.f32 %v685, %v1342
        %v1344 = vpop.f32.mrb[0].mxu0
        %v1345 = vadd.f32 %v687, %v1344
        %1346 = vmatprep.mubr.f32.mxu0 0.0
        %1347 = vmatmul.mubr.f32.gmra.mrb[0].mxu0 %v416
        %v1348 = vpop.f32.mrb[0].mxu0
        %v1349 = vadd.f32 %v691, %v1348
        %v1350 = vpop.f32.mrb[0].mxu0
        %v1351 = vadd.f32 %v693, %v1350
        %1352 = vmatprep.mubr.f32.mxu0 0.0
        %1353 = vmatmul.mubr.f32.gmra.mrb[0].mxu0 %v417
        %v1354 = vpop.f32.mrb[0].mxu0
        %v1355 = vadd.f32 %v697, %v1354
        %v1356 = vpop.f32.mrb[0].mxu0
        %v1357 = vadd.f32 %v699, %v1356
        %1358 = vmatprep.mubr.f32.mxu0 0.0
        %1359 = vmatmul.mubr.f32.gmra.mrb[0].mxu0 %v418
        %v1360 = vpop.f32.mrb[0].mxu0
        %v1361 = vadd.f32 %v703, %v1360
        %v1362 = vpop.f32.mrb[0].mxu0
        %v1363 = vadd.f32 %v705, %v1362
        %1364 = vmatprep.mubr.f32.mxu0 0.0
        %1365 = vmatmul.mubr.f32.gmra.mrb[0].mxu0 %v419
        %v1366 = vpop.f32.mrb[0].mxu0
        %v1367 = vadd.f32 %v709, %v1366
        %v1368 = vpop.f32.mrb[0].mxu0
        %v1369 = vadd.f32 %v711, %v1368
        %1370 = vmatprep.mubr.f32.mxu0 0.0
        %1371 = vmatmul.mubr.f32.gmra.mrb[0].mxu0 %v420
        %v1372 = vpop.f32.mrb[0].mxu0
        %v1373 = vadd.f32 %v715, %v1372
        %v1374 = vpop.f32.mrb[0].mxu0
        %v1375 = vadd.f32 %v717, %v1374
        %1376 = vmatprep.mubr.f32.mxu0 0.0
        %1377 = vmatmul.mubr.f32.gmra.mrb[0].mxu0 %v421
        %v1378 = vpop.f32.mrb[0].mxu0
        %v1379 = vadd.f32 %v721, %v1378
        %v1380 = vpop.f32.mrb[0].mxu0
        %v1381 = vadd.f32 %v723, %v1380
        %1382 = vmatprep.mubr.f32.mxu0 0.0
        %1383 = vmatmul.mubr.f32.gmra.mrb[0].mxu0 %v422
        %v1384 = vpop.f32.mrb[0].mxu0
        %v1385 = vadd.f32 %v727, %v1384
        %v1386 = vpop.f32.mrb[0].mxu0
        %v1387 = vadd.f32 %v729, %v1386
        %1388 = vmatprep.mubr.f32.mxu0 0.0
        %1389 = vmatmul.mubr.f32.gmra.mrb[0].mxu0 %v423
        %v1390 = vpop.f32.mrb[0].mxu0
        %v1391 = vadd.f32 %v733, %v1390
        %v1392 = vpop.f32.mrb[0].mxu0
        %v1393 = vadd.f32 %v735, %v1392
        %1394 = vmatprep.mubr.f32.mxu0 0.0
        %1395 = vmatmul.mubr.f32.gmra.mrb[0].mxu0 %v424
        %v1396 = vpop.f32.mrb[0].mxu0
        %v1397 = vadd.f32 %v739, %v1396
        %v1398 = vpop.f32.mrb[0].mxu0
        %v1399 = vadd.f32 %v741, %v1398
        %1400 = vmatprep.mubr.f32.mxu0 0.0
        %1401 = vmatmul.mubr.f32.gmra.mrb[0].mxu0 %v425
        %v1402 = vpop.f32.mrb[0].mxu0
        %v1403 = vadd.f32 %v745, %v1402
        %v1404 = vpop.f32.mrb[0].mxu0
        %v1405 = vadd.f32 %v747, %v1404
        %1406 = vmatprep.mubr.f32.mxu0 0.0
        %1407 = vmatmul.mubr.f32.gmra.mrb[0].mxu0 %v426
        %v1408 = vpop.f32.mrb[0].mxu0
        %v1409 = vadd.f32 %v751, %v1408
        %v1410 = vpop.f32.mrb[0].mxu0
        %v1411 = vadd.f32 %v753, %v1410
        %1412 = vmatprep.mubr.f32.mxu0 0.0
        %1413 = vmatmul.mubr.f32.gmra.mrb[0].mxu0 %v427
        %v1414 = vpop.f32.mrb[0].mxu0
        %v1415 = vadd.f32 %v757, %v1414
        %v1416 = vpop.f32.mrb[0].mxu0
        %v1417 = vadd.f32 %v759, %v1416
        %1418 = vmatprep.mubr.f32.mxu0 0.0
        %1419 = vmatmul.mubr.f32.gmra.mrb[0].mxu0 %v428
        %v1420 = vpop.f32.mrb[0].mxu0
        %v1421 = vadd.f32 %v763, %v1420
        %v1422 = vpop.f32.mrb[0].mxu0
        %v1423 = vadd.f32 %v765, %v1422
        %1424 = vmatprep.mubr.f32.mxu0 0.0
        %1425 = vmatmul.mubr.f32.gmra.mrb[0].mxu0 %v429
        %v1426 = vpop.f32.mrb[0].mxu0
        %v1427 = vadd.f32 %v769, %v1426
        %v1428 = vpop.f32.mrb[0].mxu0
        %v1429 = vadd.f32 %v771, %v1428
        %1430 = vmatprep.mubr.f32.mxu0 0.0
        %1431 = vmatmul.mubr.f32.gmra.mrb[0].mxu0 %v430
        %v1432 = vpop.f32.mrb[0].mxu0
        %v1433 = vadd.f32 %v775, %v1432
        %v1434 = vpop.f32.mrb[0].mxu0
        %v1435 = vadd.f32 %v777, %v1434
        %1436 = vmatprep.mubr.f32.mxu0 0.0
        %1437 = vmatmul.mubr.f32.gmra.mrb[0].mxu0 %v431
        %v1438 = vpop.f32.mrb[0].mxu0
        %v1439 = vadd.f32 %v781, %v1438
        %v1440 = vpop.f32.mrb[0].mxu0
        %v1441 = vadd.f32 %v783, %v1440
        %1442 = vmatprep.mubr.f32.mxu0 0.0
        %1443 = vmatmul.mubr.f32.gmra.mrb[0].mxu0 %v432
        %v1444 = vpop.f32.mrb[0].mxu0
        %v1445 = vadd.f32 %v787, %v1444
        %v1446 = vpop.f32.mrb[0].mxu0
        %v1447 = vadd.f32 %v789, %v1446
        %1448 = vmatprep.mubr.f32.mxu0 0.0
        %1449 = vmatmul.mubr.f32.gmra.mrb[0].mxu0 %v433
        %v1450 = vpop.f32.mrb[0].mxu0
        %v1451 = vadd.f32 %v793, %v1450
        %v1452 = vpop.f32.mrb[0].mxu0
        %v1453 = vadd.f32 %v795, %v1452
        %1454 = vmatprep.mubr.f32.mxu0 0.0
        %1455 = vmatmul.mubr.f32.gmra.mrb[0].mxu0 %v434
        %v1456 = vpop.f32.mrb[0].mxu0
        %v1457 = vadd.f32 %v799, %v1456
        %v1458 = vpop.f32.mrb[0].mxu0
        %v1459 = vadd.f32 %v801, %v1458
        %1460 = vmatprep.mubr.f32.mxu0 0.0
        %1461 = vmatmul.mubr.f32.gmra.mrb[0].mxu0 %v435
        %v1462 = vpop.f32.mrb[0].mxu0
        %v1463 = vadd.f32 %v805, %v1462
        %v1464 = vpop.f32.mrb[0].mxu0
        %v1465 = vadd.f32 %v807, %v1464
        %1466 = vmatprep.mubr.f32.mxu0 0.0
        %1467 = vmatmul.mubr.f32.gmra.mrb[0].mxu0 %v436
        %v1468 = vpop.f32.mrb[0].mxu0
        %v1469 = vadd.f32 %v811, %v1468
        %v1470 = vpop.f32.mrb[0].mxu0
        %v1471 = vadd.f32 %v813, %v1470
        %1472 = vmatprep.mubr.f32.mxu0 0.0
        %1473 = vmatmul.mubr.f32.gmra.mrb[0].mxu0 %v437
        %v1474 = vpop.f32.mrb[0].mxu0
        %v1475 = vadd.f32 %v817, %v1474
        %v1476 = vpop.f32.mrb[0].mxu0
        %v1477 = vadd.f32 %v819, %v1476
        %1478 = vmatprep.mubr.f32.mxu0 0.0
        %1479 = vmatmul.mubr.f32.gmra.mrb[0].mxu0 %v438
        %v1480 = vpop.f32.mrb[0].mxu0
        %v1481 = vadd.f32 %v823, %v1480
        %v1482 = vpop.f32.mrb[0].mxu0
        %v1483 = vadd.f32 %v825, %v1482
        %1484 = vmatprep.mubr.f32.mxu0 0.0
        %1485 = vmatmul.mubr.f32.gmra.mrb[0].mxu0 %v439
        %v1486 = vpop.f32.mrb[0].mxu0
        %v1487 = vadd.f32 %v829, %v1486
        %v1488 = vpop.f32.mrb[0].mxu0
        %v1489 = vadd.f32 %v831, %v1488
        %1490 = vmatprep.mubr.f32.mxu0 0.0
        %1491 = vmatmul.mubr.f32.gmra.mrb[0].mxu0 %v440
        %v1492 = vpop.f32.mrb[0].mxu0
        %v1493 = vadd.f32 %v835, %v1492
        %v1494 = vpop.f32.mrb[0].mxu0
        %v1495 = vadd.f32 %v837, %v1494
        %1496 = vmatprep.mubr.f32.mxu0 0.0
        %1497 = vmatmul.mubr.f32.gmra.mrb[0].mxu0 %v441
        %v1498 = vpop.f32.mrb[0].mxu0
        %v1499 = vadd.f32 %v841, %v1498
        %v1500 = vpop.f32.mrb[0].mxu0
        %v1501 = vadd.f32 %v843, %v1500
        %1502 = vmatprep.mubr.f32.mxu0 0.0
        %1503 = vmatmul.mubr.f32.gmra.mrb[0].mxu0 %v442
        %v1504 = vpop.f32.mrb[0].mxu0
        %v1505 = vadd.f32 %v847, %v1504
        %v1506 = vpop.f32.mrb[0].mxu0
        %v1507 = vadd.f32 %v849, %v1506
        %1508 = vmatprep.mubr.f32.mxu0 0.0
        %1509 = vmatmul.mubr.f32.gmra.mrb[0].mxu0 %v443
        %v1510 = vpop.f32.mrb[0].mxu0
        %v1511 = vadd.f32 %v853, %v1510
        %v1512 = vpop.f32.mrb[0].mxu0
        %v1513 = vadd.f32 %v855, %v1512
        %1514 = vmatprep.mubr.f32.mxu0 0.0
        %1515 = vmatmul.mubr.f32.gmra.mrb[0].mxu0 %v444
        %v1516 = vpop.f32.mrb[0].mxu0
        %v1517 = vadd.f32 %v859, %v1516
        %v1518 = vpop.f32.mrb[0].mxu0
        %v1519 = vadd.f32 %v861, %v1518
        %1520 = vmatprep.mubr.f32.mxu0 0.0
        %1521 = vmatmul.mubr.f32.gmra.mrb[0].mxu0 %v445
        %v1522 = vpop.f32.mrb[0].mxu0
        %v1523 = vadd.f32 %v865, %v1522
        %v1524 = vpop.f32.mrb[0].mxu0
        %v1525 = vadd.f32 %v867, %v1524
        %1526 = vmatprep.mubr.f32.mxu0 0.0
        %1527 = vmatmul.mubr.f32.gmra.mrb[0].mxu0 %v446
        %v1528 = vpop.f32.mrb[0].mxu0
        %v1529 = vadd.f32 %v871, %v1528
        %v1530 = vpop.f32.mrb[0].mxu0
        %v1531 = vadd.f32 %v873, %v1530
        %1532 = vmatprep.mubr.f32.mxu0 0.0
        %1533 = vmatmul.mubr.f32.gmra.mrb[0].mxu0 %v447
        %v1534 = vpop.f32.mrb[0].mxu0
        %v1535 = vadd.f32 %v877, %v1534
        %v1536 = vpop.f32.mrb[0].mxu0
        %v1537 = vadd.f32 %v879, %v1536
        %1538 = vmatprep.mubr.f32.mxu0 0.0
        %1539 = vmatmul.mubr.f32.gmra.mrb[0].mxu0 %v448
        %v1540 = vpop.f32.mrb[0].mxu0
        %v1541 = vadd.f32 %v883, %v1540
        %v1542 = vpop.f32.mrb[0].mxu0
        %v1543 = vadd.f32 %v885, %v1542
        %1544 = vmatprep.mubr.f32.mxu0 0.0
        %1545 = vmatmul.mubr.f32.gmra.mrb[0].mxu0 %v449
        %v1546 = vpop.f32.mrb[0].mxu0
        %v1547 = vadd.f32 %v889, %v1546
        %v1548 = vpop.f32.mrb[0].mxu0
        %v1549 = vadd.f32 %v891, %v1548
        %1550 = vmatprep.mubr.f32.mxu0 0.0
        %1551 = vmatmul.mubr.f32.gmra.mrb[0].mxu0 %v450
        %v1552 = vpop.f32.mrb[0].mxu0
        %v1553 = vadd.f32 %v895, %v1552
        %v1554 = vpop.f32.mrb[0].mxu0
        %v1555 = vadd.f32 %v897, %v1554
        %1556 = vmatprep.mubr.f32.mxu0 0.0
        %1557 = vmatmul.mubr.f32.gmra.mrb[0].mxu0 %v451
        %v1558 = vpop.f32.mrb[0].mxu0
        %v1559 = vadd.f32 %v901, %v1558
        %v1560 = vpop.f32.mrb[0].mxu0
        %v1561 = vadd.f32 %v903, %v1560
        %1562 = vdwg.mxu0
        %1563 = vmatprep.subr.mxu0 0.0
        %1564 = vmatpush1.msra.mxu0 %v454
        %1565 = vmatprep.subr.mxu0 0.0
        %1566 = vmatpush1.msra.mxu0 %v457
        %1567 = vmatprep.subr.mxu0 0.0
        %1568 = vmatpush1.msra.mxu0 %v460
        %1569 = vmatprep.subr.mxu0 0.0
        %1570 = vmatpush1.msra.mxu0 %v463
        %1571 = vmatprep.subr.mxu0 0.0
        %1572 = vmatpush1.msra.mxu0 %v466
        %1573 = vmatprep.subr.mxu0 0.0
        %1574 = vmatpush1.msra.mxu0 %v469
        %1575 = vmatprep.subr.mxu0 0.0
        %1576 = vmatpush1.msra.mxu0 %v472
        %1577 = vmatprep.subr.mxu0 0.0
        %1578 = vmatpush1.msra.mxu0 %v475
        %1579 = vmatprep.subr.mxu0 0.0
        %1580 = vmatpush1.msra.mxu0 %v478
        %1581 = vmatprep.subr.mxu0 0.0
        %1582 = vmatpush1.msra.mxu0 %v481
        %1583 = vmatprep.subr.mxu0 0.0
        %1584 = vmatpush1.msra.mxu0 %v484
        %1585 = vmatprep.subr.mxu0 0.0
        %1586 = vmatpush1.msra.mxu0 %v487
        %1587 = vmatprep.subr.mxu0 0.0
        %1588 = vmatpush1.msra.mxu0 %v490
        %1589 = vmatprep.subr.mxu0 0.0
        %1590 = vmatpush1.msra.mxu0 %v493
        %1591 = vmatprep.subr.mxu0 0.0
        %1592 = vmatpush1.msra.mxu0 %v496
        %1593 = vmatprep.subr.mxu0 0.0
        %1594 = vmatpush1.msra.mxu0 %v499
        %1595 = vmatprep.subr.mxu0 0.0
        %1596 = vmatpush1.msra.mxu0 0.0
        %1597 = vmatprep.subr.mxu0 0.0
        %1598 = vmatpush1.msra.mxu0 0.0
        %1599 = vmatprep.subr.mxu0 0.0
        %1600 = vmatpush1.msra.mxu0 0.0
        %1601 = vmatprep.subr.mxu0 0.0
        %1602 = vmatpush1.msra.mxu0 0.0
        %1603 = vmatprep.subr.mxu0 0.0
        %1604 = vmatpush1.msra.mxu0 0.0
        %1605 = vmatprep.subr.mxu0 0.0
        %1606 = vmatpush1.msra.mxu0 0.0
        %1607 = vmatprep.subr.mxu0 0.0
        %1608 = vmatpush1.msra.mxu0 0.0
        %1609 = vmatprep.subr.mxu0 0.0
        %1610 = vmatpush1.msra.mxu0 0.0
        %1611 = vmatprep.subr.mxu0 0.0
        %1612 = vmatpush1.msra.mxu0 0.0
        %1613 = vmatprep.subr.mxu0 0.0
        %1614 = vmatpush1.msra.mxu0 0.0
        %1615 = vmatprep.subr.mxu0 0.0
        %1616 = vmatpush1.msra.mxu0 0.0
        %1617 = vmatprep.subr.mxu0 0.0
        %1618 = vmatpush1.msra.mxu0 0.0
        %1619 = vmatprep.subr.mxu0 0.0
        %1620 = vmatpush1.msra.mxu0 0.0
        %1621 = vmatprep.subr.mxu0 0.0
        %1622 = vmatpush1.msra.mxu0 0.0
        %1623 = vmatprep.subr.mxu0 0.0
        %1624 = vmatpush1.msra.mxu0 0.0
        %1625 = vmatprep.subr.mxu0 0.0
        %1626 = vmatpush1.msra.mxu0 0.0
        %1627 = vmatprep.mubr.f32.mxu0 0.0
        %1628 = vmatmul.mubr.f32.gmra.mrb[0].mxu0 %v404
        %v1629 = vpop.f32.mrb[0].mxu0
        %v1630 = vadd.f32 %v972, %v1629
        %v1631 = vpop.f32.mrb[0].mxu0
        %1632 = vmatprep.mubr.f32.mxu0 0.0
        %1633 = vmatmul.mubr.f32.gmra.mrb[0].mxu0 %v405
        %v1634 = vpop.f32.mrb[0].mxu0
        %v1635 = vadd.f32 %v977, %v1634
        %v1636 = vpop.f32.mrb[0].mxu0
        %1637 = vmatprep.mubr.f32.mxu0 0.0
        %1638 = vmatmul.mubr.f32.gmra.mrb[0].mxu0 %v406
        %v1639 = vpop.f32.mrb[0].mxu0
        %v1640 = vadd.f32 %v982, %v1639
        %v1641 = vpop.f32.mrb[0].mxu0
        %1642 = vmatprep.mubr.f32.mxu0 0.0
        %1643 = vmatmul.mubr.f32.gmra.mrb[0].mxu0 %v407
        %v1644 = vpop.f32.mrb[0].mxu0
        %v1645 = vadd.f32 %v987, %v1644
        %v1646 = vpop.f32.mrb[0].mxu0
        %1647 = vmatprep.mubr.f32.mxu0 0.0
        %1648 = vmatmul.mubr.f32.gmra.mrb[0].mxu0 %v408
        %v1649 = vpop.f32.mrb[0].mxu0
        %v1650 = vadd.f32 %v992, %v1649
        %v1651 = vpop.f32.mrb[0].mxu0
        %1652 = vmatprep.mubr.f32.mxu0 0.0
        %1653 = vmatmul.mubr.f32.gmra.mrb[0].mxu0 %v409
        %v1654 = vpop.f32.mrb[0].mxu0
        %v1655 = vadd.f32 %v997, %v1654
        %v1656 = vpop.f32.mrb[0].mxu0
        %1657 = vmatprep.mubr.f32.mxu0 0.0
        %1658 = vmatmul.mubr.f32.gmra.mrb[0].mxu0 %v410
        %v1659 = vpop.f32.mrb[0].mxu0
        %v1660 = vadd.f32 %v1002, %v1659
        %v1661 = vpop.f32.mrb[0].mxu0
        %1662 = vmatprep.mubr.f32.mxu0 0.0
        %1663 = vmatmul.mubr.f32.gmra.mrb[0].mxu0 %v411
        %v1664 = vpop.f32.mrb[0].mxu0
        %v1665 = vadd.f32 %v1007, %v1664
        %v1666 = vpop.f32.mrb[0].mxu0
        %1667 = vmatprep.mubr.f32.mxu0 0.0
        %1668 = vmatmul.mubr.f32.gmra.mrb[0].mxu0 %v412
        %v1669 = vpop.f32.mrb[0].mxu0
        %v1670 = vadd.f32 %v1012, %v1669
        %v1671 = vpop.f32.mrb[0].mxu0
        %1672 = vmatprep.mubr.f32.mxu0 0.0
        %1673 = vmatmul.mubr.f32.gmra.mrb[0].mxu0 %v413
        %v1674 = vpop.f32.mrb[0].mxu0
        %v1675 = vadd.f32 %v1017, %v1674
        %v1676 = vpop.f32.mrb[0].mxu0
        %1677 = vmatprep.mubr.f32.mxu0 0.0
        %1678 = vmatmul.mubr.f32.gmra.mrb[0].mxu0 %v414
        %v1679 = vpop.f32.mrb[0].mxu0
        %v1680 = vadd.f32 %v1022, %v1679
        %v1681 = vpop.f32.mrb[0].mxu0
        %1682 = vmatprep.mubr.f32.mxu0 0.0
        %1683 = vmatmul.mubr.f32.gmra.mrb[0].mxu0 %v415
        %v1684 = vpop.f32.mrb[0].mxu0
        %v1685 = vadd.f32 %v1027, %v1684
        %v1686 = vpop.f32.mrb[0].mxu0
        %1687 = vmatprep.mubr.f32.mxu0 0.0
        %1688 = vmatmul.mubr.f32.gmra.mrb[0].mxu0 %v416
        %v1689 = vpop.f32.mrb[0].mxu0
        %v1690 = vadd.f32 %v1032, %v1689
        %v1691 = vpop.f32.mrb[0].mxu0
        %1692 = vmatprep.mubr.f32.mxu0 0.0
        %1693 = vmatmul.mubr.f32.gmra.mrb[0].mxu0 %v417
        %v1694 = vpop.f32.mrb[0].mxu0
        %v1695 = vadd.f32 %v1037, %v1694
        %v1696 = vpop.f32.mrb[0].mxu0
        %1697 = vmatprep.mubr.f32.mxu0 0.0
        %1698 = vmatmul.mubr.f32.gmra.mrb[0].mxu0 %v418
        %v1699 = vpop.f32.mrb[0].mxu0
        %v1700 = vadd.f32 %v1042, %v1699
        %v1701 = vpop.f32.mrb[0].mxu0
        %1702 = vmatprep.mubr.f32.mxu0 0.0
        %1703 = vmatmul.mubr.f32.gmra.mrb[0].mxu0 %v419
        %v1704 = vpop.f32.mrb[0].mxu0
        %v1705 = vadd.f32 %v1047, %v1704
        %v1706 = vpop.f32.mrb[0].mxu0
        %1707 = vmatprep.mubr.f32.mxu0 0.0
        %1708 = vmatmul.mubr.f32.gmra.mrb[0].mxu0 %v420
        %v1709 = vpop.f32.mrb[0].mxu0
        %v1710 = vadd.f32 %v1052, %v1709
        %v1711 = vpop.f32.mrb[0].mxu0
        %1712 = vmatprep.mubr.f32.mxu0 0.0
        %1713 = vmatmul.mubr.f32.gmra.mrb[0].mxu0 %v421
        %v1714 = vpop.f32.mrb[0].mxu0
        %v1715 = vadd.f32 %v1057, %v1714
        %v1716 = vpop.f32.mrb[0].mxu0
        %1717 = vmatprep.mubr.f32.mxu0 0.0
        %1718 = vmatmul.mubr.f32.gmra.mrb[0].mxu0 %v422
        %v1719 = vpop.f32.mrb[0].mxu0
        %v1720 = vadd.f32 %v1062, %v1719
        %v1721 = vpop.f32.mrb[0].mxu0
        %1722 = vmatprep.mubr.f32.mxu0 0.0
        %1723 = vmatmul.mubr.f32.gmra.mrb[0].mxu0 %v423
        %v1724 = vpop.f32.mrb[0].mxu0
        %v1725 = vadd.f32 %v1067, %v1724
        %v1726 = vpop.f32.mrb[0].mxu0
        %1727 = vmatprep.mubr.f32.mxu0 0.0
        %1728 = vmatmul.mubr.f32.gmra.mrb[0].mxu0 %v424
        %v1729 = vpop.f32.mrb[0].mxu0
        %v1730 = vadd.f32 %v1072, %v1729
        %v1731 = vpop.f32.mrb[0].mxu0
        %1732 = vmatprep.mubr.f32.mxu0 0.0
        %1733 = vmatmul.mubr.f32.gmra.mrb[0].mxu0 %v425
        %v1734 = vpop.f32.mrb[0].mxu0
        %v1735 = vadd.f32 %v1077, %v1734
        %v1736 = vpop.f32.mrb[0].mxu0
        %1737 = vmatprep.mubr.f32.mxu0 0.0
        %1738 = vmatmul.mubr.f32.gmra.mrb[0].mxu0 %v426
        %v1739 = vpop.f32.mrb[0].mxu0
        %v1740 = vadd.f32 %v1082, %v1739
        %v1741 = vpop.f32.mrb[0].mxu0
        %1742 = vmatprep.mubr.f32.mxu0 0.0
        %1743 = vmatmul.mubr.f32.gmra.mrb[0].mxu0 %v427
        %v1744 = vpop.f32.mrb[0].mxu0
        %v1745 = vadd.f32 %v1087, %v1744
        %v1746 = vpop.f32.mrb[0].mxu0
        %1747 = vmatprep.mubr.f32.mxu0 0.0
        %1748 = vmatmul.mubr.f32.gmra.mrb[0].mxu0 %v428
        %v1749 = vpop.f32.mrb[0].mxu0
        %v1750 = vadd.f32 %v1092, %v1749
        %v1751 = vpop.f32.mrb[0].mxu0
        %1752 = vmatprep.mubr.f32.mxu0 0.0
        %1753 = vmatmul.mubr.f32.gmra.mrb[0].mxu0 %v429
        %v1754 = vpop.f32.mrb[0].mxu0
        %v1755 = vadd.f32 %v1097, %v1754
        %v1756 = vpop.f32.mrb[0].mxu0
        %1757 = vmatprep.mubr.f32.mxu0 0.0
        %1758 = vmatmul.mubr.f32.gmra.mrb[0].mxu0 %v430
        %v1759 = vpop.f32.mrb[0].mxu0
        %v1760 = vadd.f32 %v1102, %v1759
        %v1761 = vpop.f32.mrb[0].mxu0
        %1762 = vmatprep.mubr.f32.mxu0 0.0
        %1763 = vmatmul.mubr.f32.gmra.mrb[0].mxu0 %v431
        %v1764 = vpop.f32.mrb[0].mxu0
        %v1765 = vadd.f32 %v1107, %v1764
        %v1766 = vpop.f32.mrb[0].mxu0
        %1767 = vmatprep.mubr.f32.mxu0 0.0
        %1768 = vmatmul.mubr.f32.gmra.mrb[0].mxu0 %v432
        %v1769 = vpop.f32.mrb[0].mxu0
        %v1770 = vadd.f32 %v1112, %v1769
        %v1771 = vpop.f32.mrb[0].mxu0
        %1772 = vmatprep.mubr.f32.mxu0 0.0
        %1773 = vmatmul.mubr.f32.gmra.mrb[0].mxu0 %v433
        %v1774 = vpop.f32.mrb[0].mxu0
        %v1775 = vadd.f32 %v1117, %v1774
        %v1776 = vpop.f32.mrb[0].mxu0
        %1777 = vmatprep.mubr.f32.mxu0 0.0
        %1778 = vmatmul.mubr.f32.gmra.mrb[0].mxu0 %v434
        %v1779 = vpop.f32.mrb[0].mxu0
        %v1780 = vadd.f32 %v1122, %v1779
        %v1781 = vpop.f32.mrb[0].mxu0
        %1782 = vmatprep.mubr.f32.mxu0 0.0
        %1783 = vmatmul.mubr.f32.gmra.mrb[0].mxu0 %v435
        %v1784 = vpop.f32.mrb[0].mxu0
        %v1785 = vadd.f32 %v1127, %v1784
        %v1786 = vpop.f32.mrb[0].mxu0
        %1787 = vmatprep.mubr.f32.mxu0 0.0
        %1788 = vmatmul.mubr.f32.gmra.mrb[0].mxu0 %v436
        %v1789 = vpop.f32.mrb[0].mxu0
        %v1790 = vadd.f32 %v1132, %v1789
        %v1791 = vpop.f32.mrb[0].mxu0
        %1792 = vmatprep.mubr.f32.mxu0 0.0
        %1793 = vmatmul.mubr.f32.gmra.mrb[0].mxu0 %v437
        %v1794 = vpop.f32.mrb[0].mxu0
        %v1795 = vadd.f32 %v1137, %v1794
        %v1796 = vpop.f32.mrb[0].mxu0
        %1797 = vmatprep.mubr.f32.mxu0 0.0
        %1798 = vmatmul.mubr.f32.gmra.mrb[0].mxu0 %v438
        %v1799 = vpop.f32.mrb[0].mxu0
        %v1800 = vadd.f32 %v1142, %v1799
        %v1801 = vpop.f32.mrb[0].mxu0
        %1802 = vmatprep.mubr.f32.mxu0 0.0
        %1803 = vmatmul.mubr.f32.gmra.mrb[0].mxu0 %v439
        %v1804 = vpop.f32.mrb[0].mxu0
        %v1805 = vadd.f32 %v1147, %v1804
        %v1806 = vpop.f32.mrb[0].mxu0
        %1807 = vmatprep.mubr.f32.mxu0 0.0
        %1808 = vmatmul.mubr.f32.gmra.mrb[0].mxu0 %v440
        %v1809 = vpop.f32.mrb[0].mxu0
        %v1810 = vadd.f32 %v1152, %v1809
        %v1811 = vpop.f32.mrb[0].mxu0
        %1812 = vmatprep.mubr.f32.mxu0 0.0
        %1813 = vmatmul.mubr.f32.gmra.mrb[0].mxu0 %v441
        %v1814 = vpop.f32.mrb[0].mxu0
        %v1815 = vadd.f32 %v1157, %v1814
        %v1816 = vpop.f32.mrb[0].mxu0
        %1817 = vmatprep.mubr.f32.mxu0 0.0
        %1818 = vmatmul.mubr.f32.gmra.mrb[0].mxu0 %v442
        %v1819 = vpop.f32.mrb[0].mxu0
        %v1820 = vadd.f32 %v1162, %v1819
        %v1821 = vpop.f32.mrb[0].mxu0
        %1822 = vmatprep.mubr.f32.mxu0 0.0
        %1823 = vmatmul.mubr.f32.gmra.mrb[0].mxu0 %v443
        %v1824 = vpop.f32.mrb[0].mxu0
        %v1825 = vadd.f32 %v1167, %v1824
        %v1826 = vpop.f32.mrb[0].mxu0
        %1827 = vmatprep.mubr.f32.mxu0 0.0
        %1828 = vmatmul.mubr.f32.gmra.mrb[0].mxu0 %v444
        %v1829 = vpop.f32.mrb[0].mxu0
        %v1830 = vadd.f32 %v1172, %v1829
        %v1831 = vpop.f32.mrb[0].mxu0
        %1832 = vmatprep.mubr.f32.mxu0 0.0
        %1833 = vmatmul.mubr.f32.gmra.mrb[0].mxu0 %v445
        %v1834 = vpop.f32.mrb[0].mxu0
        %v1835 = vadd.f32 %v1177, %v1834
        %v1836 = vpop.f32.mrb[0].mxu0
        %1837 = vmatprep.mubr.f32.mxu0 0.0
        %1838 = vmatmul.mubr.f32.gmra.mrb[0].mxu0 %v446
        %v1839 = vpop.f32.mrb[0].mxu0
        %v1840 = vadd.f32 %v1182, %v1839
        %v1841 = vpop.f32.mrb[0].mxu0
        %1842 = vmatprep.mubr.f32.mxu0 0.0
        %1843 = vmatmul.mubr.f32.gmra.mrb[0].mxu0 %v447
        %v1844 = vpop.f32.mrb[0].mxu0
        %v1845 = vadd.f32 %v1187, %v1844
        %v1846 = vpop.f32.mrb[0].mxu0
        %1847 = vmatprep.mubr.f32.mxu0 0.0
        %1848 = vmatmul.mubr.f32.gmra.mrb[0].mxu0 %v448
        %v1849 = vpop.f32.mrb[0].mxu0
        %v1850 = vadd.f32 %v1192, %v1849
        %v1851 = vpop.f32.mrb[0].mxu0
        %1852 = vmatprep.mubr.f32.mxu0 0.0
        %1853 = vmatmul.mubr.f32.gmra.mrb[0].mxu0 %v449
        %v1854 = vpop.f32.mrb[0].mxu0
        %v1855 = vadd.f32 %v1197, %v1854
        %v1856 = vpop.f32.mrb[0].mxu0
        %1857 = vmatprep.mubr.f32.mxu0 0.0
        %1858 = vmatmul.mubr.f32.gmra.mrb[0].mxu0 %v450
        %v1859 = vpop.f32.mrb[0].mxu0
        %v1860 = vadd.f32 %v1202, %v1859
        %v1861 = vpop.f32.mrb[0].mxu0
        %1862 = vmatprep.mubr.f32.mxu0 0.0
        %1863 = vmatmul.mubr.f32.gmra.mrb[0].mxu0 %v451
        %v1864 = vpop.f32.mrb[0].mxu0
        %v1865 = vadd.f32 %v1207, %v1864
        %v1866 = vpop.f32.mrb[0].mxu0
        %1867 = vdwg.mxu0
        %v1868 = vld [vmem:[%s398 + $0x30] sm:$0xff]
        %v1869 = vld [vmem:[%s398 + $0x38] sm:$0xff]
        %v1870 = vld [vmem:[%s398 + $0x40] sm:$0xff]
        %v1871 = vld [vmem:[%s398 + $0x48] sm:$0xff]
        %v1872 = vld [vmem:[%s398 + $0x50] sm:$0xff]
        %v1873 = vld [vmem:[%s398 + $0x58] sm:$0xff]
        %v1874 = vld [vmem:[%s398 + $0x60] sm:$0xff]
        %v1875 = vld [vmem:[%s398 + $0x68] sm:$0xff]
        %v1876 = vld [vmem:[%s398 + $0x70] sm:$0xff]
        %v1877 = vld [vmem:[%s398 + $0x78] sm:$0xff]
        %v1878 = vld [vmem:[%s398 + $0x80] sm:$0xff]
        %v1879 = vld [vmem:[%s398 + $0x88] sm:$0xff]
        %v1880 = vld [vmem:[%s398 + $0x90] sm:$0xff]
        %v1881 = vld [vmem:[%s398 + $0x98] sm:$0xff]
        %v1882 = vld [vmem:[%s398 + $0xa0] sm:$0xff]
        %v1883 = vld [vmem:[%s398 + $0xa8] sm:$0xff]
        %v1884 = vld [vmem:[%s398 + $0xb0] sm:$0xff]
        %v1885 = vld [vmem:[%s398 + $0xb8] sm:$0xff]
        %v1886 = vld [vmem:[%s398 + $0xc0] sm:$0xff]
        %v1887 = vld [vmem:[%s398 + $0xc8] sm:$0xff]
        %v1888 = vld [vmem:[%s398 + $0xd0] sm:$0xff]
        %v1889 = vld [vmem:[%s398 + $0xd8] sm:$0xff]
        %v1890 = vld [vmem:[%s398 + $0xe0] sm:$0xff]
        %v1891 = vld [vmem:[%s398 + $0xe8] sm:$0xff]
        %v1892 = vld [vmem:[%s398 + $0xf0] sm:$0xff]
        %v1893 = vld [vmem:[%s398 + $0xf8] sm:$0xff]
        %v1894 = vld [vmem:[%s398 + $0x100] sm:$0xff]
        %v1895 = vld [vmem:[%s398 + $0x108] sm:$0xff]
        %v1896 = vld [vmem:[%s398 + $0x110] sm:$0xff]
        %v1897 = vld [vmem:[%s398 + $0x118] sm:$0xff]
        %v1898 = vld [vmem:[%s398 + $0x120] sm:$0xff]
        %v1899 = vld [vmem:[%s398 + $0x128] sm:$0xff]
        %v1900 = vld [vmem:[%s398 + $0x130] sm:$0xff]
        %v1901 = vld [vmem:[%s398 + $0x138] sm:$0xff]
        %v1902 = vld [vmem:[%s398 + $0x140] sm:$0xff]
        %v1903 = vld [vmem:[%s398 + $0x148] sm:$0xff]
        %v1904 = vld [vmem:[%s398 + $0x150] sm:$0xff]
        %v1905 = vld [vmem:[%s398 + $0x158] sm:$0xff]
        %v1906 = vld [vmem:[%s398 + $0x160] sm:$0xff]
        %v1907 = vld [vmem:[%s398 + $0x168] sm:$0xff]
        %v1908 = vld [vmem:[%s398 + $0x170] sm:$0xff]
        %v1909 = vld [vmem:[%s398 + $0x178] sm:$0xff]
        %v1910 = vld [vmem:[%s398 + $0x180] sm:$0xff]
        %v1911 = vld [vmem:[%s398 + $0x188] sm:$0xff]
        %v1912 = vld [vmem:[%s398 + $0x190] sm:$0xff]
        %v1913 = vld [vmem:[%s398 + $0x198] sm:$0xff]
        %v1914 = vld [vmem:[%s398 + $0x1a0] sm:$0xff]
        %v1915 = vld [vmem:[%s398 + $0x1a8] sm:$0xff]
        %s1916 = scalar_lea.vmem %s1, 768
        %v1917 = vld [vmem:[%s1916] sm:$0xff]
        %v1918 = vld [vmem:[%s1916 + $0x8] sm:$0xff]
        %v1919 = vld [vmem:[%s1916 + $0x10] sm:$0xff]
        %v1920 = vld [vmem:[%s1916 + $0x18] sm:$0xff]
        %v1921 = vld [vmem:[%s1916 + $0x20] sm:$0xff]
        %v1922 = vld [vmem:[%s1916 + $0x28] sm:$0xff]
        %v1923 = vld [vmem:[%s1916 + $0x30] sm:$0xff]
        %v1924 = vld [vmem:[%s1916 + $0x38] sm:$0xff]
        %v1925 = vld [vmem:[%s1916 + $0x40] sm:$0xff]
        %v1926 = vld [vmem:[%s1916 + $0x48] sm:$0xff]
        %v1927 = vld [vmem:[%s1916 + $0x50] sm:$0xff]
        %v1928 = vld [vmem:[%s1916 + $0x58] sm:$0xff]
        %v1929 = vld [vmem:[%s1916 + $0x60] sm:$0xff]
        %v1930 = vld [vmem:[%s1916 + $0x68] sm:$0xff]
        %v1931 = vld [vmem:[%s1916 + $0x70] sm:$0xff]
        %v1932 = vld [vmem:[%s1916 + $0x78] sm:$0xff]
        %v1933 = vld [vmem:[%s1916 + $0x80] sm:$0xff]
        %v1934 = vld [vmem:[%s1916 + $0x88] sm:$0xff]
        %v1935 = vld [vmem:[%s1916 + $0x90] sm:$0xff]
        %v1936 = vld [vmem:[%s1916 + $0x98] sm:$0xff]
        %v1937 = vld [vmem:[%s1916 + $0xa0] sm:$0xff]
        %v1938 = vld [vmem:[%s1916 + $0xa8] sm:$0xff]
        %v1939 = vld [vmem:[%s1916 + $0xb0] sm:$0xff]
        %v1940 = vld [vmem:[%s1916 + $0xb8] sm:$0xff]
        %v1941 = vld [vmem:[%s1916 + $0xc0] sm:$0xff]
        %v1942 = vld [vmem:[%s1916 + $0xc8] sm:$0xff]
        %v1943 = vld [vmem:[%s1916 + $0xd0] sm:$0xff]
        %v1944 = vld [vmem:[%s1916 + $0xd8] sm:$0xff]
        %v1945 = vld [vmem:[%s1916 + $0xe0] sm:$0xff]
        %v1946 = vld [vmem:[%s1916 + $0xe8] sm:$0xff]
        %v1947 = vld [vmem:[%s1916 + $0xf0] sm:$0xff]
        %v1948 = vld [vmem:[%s1916 + $0xf8] sm:$0xff]
        %v1949 = vld [vmem:[%s1916 + $0x100] sm:$0xff]
        %v1950 = vld [vmem:[%s1916 + $0x108] sm:$0xff]
        %v1951 = vld [vmem:[%s1916 + $0x110] sm:$0xff]
        %v1952 = vld [vmem:[%s1916 + $0x118] sm:$0xff]
        %v1953 = vld [vmem:[%s1916 + $0x120] sm:$0xff]
        %v1954 = vld [vmem:[%s1916 + $0x128] sm:$0xff]
        %v1955 = vld [vmem:[%s1916 + $0x130] sm:$0xff]
        %v1956 = vld [vmem:[%s1916 + $0x138] sm:$0xff]
        %v1957 = vld [vmem:[%s1916 + $0x140] sm:$0xff]
        %v1958 = vld [vmem:[%s1916 + $0x148] sm:$0xff]
        %v1959 = vld [vmem:[%s1916 + $0x150] sm:$0xff]
        %v1960 = vld [vmem:[%s1916 + $0x158] sm:$0xff]
        %v1961 = vld [vmem:[%s1916 + $0x160] sm:$0xff]
        %v1962 = vld [vmem:[%s1916 + $0x168] sm:$0xff]
        %v1963 = vld [vmem:[%s1916 + $0x170] sm:$0xff]
        %v1964 = vld [vmem:[%s1916 + $0x178] sm:$0xff]
        %1965 = vmatprep.subr.mxu0 %v1918
        %1966 = vmatpush1.msra.mxu0 %v1917
        %1967 = vmatprep.subr.mxu0 %v1921
        %1968 = vmatpush1.msra.mxu0 %v1920
        %1969 = vmatprep.subr.mxu0 %v1924
        %1970 = vmatpush1.msra.mxu0 %v1923
        %1971 = vmatprep.subr.mxu0 %v1927
        %1972 = vmatpush1.msra.mxu0 %v1926
        %1973 = vmatprep.subr.mxu0 %v1930
        %1974 = vmatpush1.msra.mxu0 %v1929
        %1975 = vmatprep.subr.mxu0 %v1933
        %1976 = vmatpush1.msra.mxu0 %v1932
        %1977 = vmatprep.subr.mxu0 %v1936
        %1978 = vmatpush1.msra.mxu0 %v1935
        %1979 = vmatprep.subr.mxu0 %v1939
        %1980 = vmatpush1.msra.mxu0 %v1938
        %1981 = vmatprep.subr.mxu0 %v1942
        %1982 = vmatpush1.msra.mxu0 %v1941
        %1983 = vmatprep.subr.mxu0 %v1945
        %1984 = vmatpush1.msra.mxu0 %v1944
        %1985 = vmatprep.subr.mxu0 %v1948
        %1986 = vmatpush1.msra.mxu0 %v1947
        %1987 = vmatprep.subr.mxu0 %v1951
        %1988 = vmatpush1.msra.mxu0 %v1950
        %1989 = vmatprep.subr.mxu0 %v1954
        %1990 = vmatpush1.msra.mxu0 %v1953
        %1991 = vmatprep.subr.mxu0 %v1957
        %1992 = vmatpush1.msra.mxu0 %v1956
        %1993 = vmatprep.subr.mxu0 %v1960
        %1994 = vmatpush1.msra.mxu0 %v1959
        %1995 = vmatprep.subr.mxu0 %v1963
        %1996 = vmatpush1.msra.mxu0 %v1962
        %1997 = vmatprep.subr.mxu0 0.0
        %1998 = vmatpush1.msra.mxu0 0.0
        %1999 = vmatprep.subr.mxu0 0.0
        %2000 = vmatpush1.msra.mxu0 0.0
        %2001 = vmatprep.subr.mxu0 0.0
        %2002 = vmatpush1.msra.mxu0 0.0
        %2003 = vmatprep.subr.mxu0 0.0
        %2004 = vmatpush1.msra.mxu0 0.0
        %2005 = vmatprep.subr.mxu0 0.0
        %2006 = vmatpush1.msra.mxu0 0.0
        %2007 = vmatprep.subr.mxu0 0.0
        %2008 = vmatpush1.msra.mxu0 0.0
        %2009 = vmatprep.subr.mxu0 0.0
        %2010 = vmatpush1.msra.mxu0 0.0
        %2011 = vmatprep.subr.mxu0 0.0
        %2012 = vmatpush1.msra.mxu0 0.0
        %2013 = vmatprep.subr.mxu0 0.0
        %2014 = vmatpush1.msra.mxu0 0.0
        %2015 = vmatprep.subr.mxu0 0.0
        %2016 = vmatpush1.msra.mxu0 0.0
        %2017 = vmatprep.subr.mxu0 0.0
        %2018 = vmatpush1.msra.mxu0 0.0
        %2019 = vmatprep.subr.mxu0 0.0
        %2020 = vmatpush1.msra.mxu0 0.0
        %2021 = vmatprep.subr.mxu0 0.0
        %2022 = vmatpush1.msra.mxu0 0.0
        %2023 = vmatprep.subr.mxu0 0.0
        %2024 = vmatpush1.msra.mxu0 0.0
        %2025 = vmatprep.subr.mxu0 0.0
        %2026 = vmatpush1.msra.mxu0 0.0
        %2027 = vmatprep.subr.mxu0 0.0
        %2028 = vmatpush1.msra.mxu0 0.0
        %2029 = vmatprep.mubr.f32.mxu0 0.0
        %2030 = vmatmul.mubr.f32.gmra.mrb[0].mxu0 %v1868
        %v2031 = vpop.f32.mrb[0].mxu0
        %v2032 = vadd.f32 0.0, %v2031
        %v2033 = vpop.f32.mrb[0].mxu0
        %v2034 = vadd.f32 0.0, %v2033
        %2035 = vmatprep.mubr.f32.mxu0 0.0
        %2036 = vmatmul.mubr.f32.gmra.mrb[0].mxu0 %v1869
        %v2037 = vpop.f32.mrb[0].mxu0
        %v2038 = vadd.f32 0.0, %v2037
        %v2039 = vpop.f32.mrb[0].mxu0
        %v2040 = vadd.f32 0.0, %v2039
        %2041 = vmatprep.mubr.f32.mxu0 0.0
        %2042 = vmatmul.mubr.f32.gmra.mrb[0].mxu0 %v1870
        %v2043 = vpop.f32.mrb[0].mxu0
        %v2044 = vadd.f32 0.0, %v2043
        %v2045 = vpop.f32.mrb[0].mxu0
        %v2046 = vadd.f32 0.0, %v2045
        %2047 = vmatprep.mubr.f32.mxu0 0.0
        %2048 = vmatmul.mubr.f32.gmra.mrb[0].mxu0 %v1871
        %v2049 = vpop.f32.mrb[0].mxu0
        %v2050 = vadd.f32 0.0, %v2049
        %v2051 = vpop.f32.mrb[0].mxu0
        %v2052 = vadd.f32 0.0, %v2051
        %2053 = vmatprep.mubr.f32.mxu0 0.0
        %2054 = vmatmul.mubr.f32.gmra.mrb[0].mxu0 %v1872
        %v2055 = vpop.f32.mrb[0].mxu0
        %v2056 = vadd.f32 0.0, %v2055
        %v2057 = vpop.f32.mrb[0].mxu0
        %v2058 = vadd.f32 0.0, %v2057
        %2059 = vmatprep.mubr.f32.mxu0 0.0
        %2060 = vmatmul.mubr.f32.gmra.mrb[0].mxu0 %v1873
        %v2061 = vpop.f32.mrb[0].mxu0
        %v2062 = vadd.f32 0.0, %v2061
        %v2063 = vpop.f32.mrb[0].mxu0
        %v2064 = vadd.f32 0.0, %v2063
        %2065 = vmatprep.mubr.f32.mxu0 0.0
        %2066 = vmatmul.mubr.f32.gmra.mrb[0].mxu0 %v1874
        %v2067 = vpop.f32.mrb[0].mxu0
        %v2068 = vadd.f32 0.0, %v2067
        %v2069 = vpop.f32.mrb[0].mxu0
        %v2070 = vadd.f32 0.0, %v2069
        %2071 = vmatprep.mubr.f32.mxu0 0.0
        %2072 = vmatmul.mubr.f32.gmra.mrb[0].mxu0 %v1875
        %v2073 = vpop.f32.mrb[0].mxu0
        %v2074 = vadd.f32 0.0, %v2073
        %v2075 = vpop.f32.mrb[0].mxu0
        %v2076 = vadd.f32 0.0, %v2075
        %2077 = vmatprep.mubr.f32.mxu0 0.0
        %2078 = vmatmul.mubr.f32.gmra.mrb[0].mxu0 %v1876
        %v2079 = vpop.f32.mrb[0].mxu0
        %v2080 = vadd.f32 0.0, %v2079
        %v2081 = vpop.f32.mrb[0].mxu0
        %v2082 = vadd.f32 0.0, %v2081
        %2083 = vmatprep.mubr.f32.mxu0 0.0
        %2084 = vmatmul.mubr.f32.gmra.mrb[0].mxu0 %v1877
        %v2085 = vpop.f32.mrb[0].mxu0
        %v2086 = vadd.f32 0.0, %v2085
        %v2087 = vpop.f32.mrb[0].mxu0
        %v2088 = vadd.f32 0.0, %v2087
        %2089 = vmatprep.mubr.f32.mxu0 0.0
        %2090 = vmatmul.mubr.f32.gmra.mrb[0].mxu0 %v1878
        %v2091 = vpop.f32.mrb[0].mxu0
        %v2092 = vadd.f32 0.0, %v2091
        %v2093 = vpop.f32.mrb[0].mxu0
        %v2094 = vadd.f32 0.0, %v2093
        %2095 = vmatprep.mubr.f32.mxu0 0.0
        %2096 = vmatmul.mubr.f32.gmra.mrb[0].mxu0 %v1879
        %v2097 = vpop.f32.mrb[0].mxu0
        %v2098 = vadd.f32 0.0, %v2097
        %v2099 = vpop.f32.mrb[0].mxu0
        %v2100 = vadd.f32 0.0, %v2099
        %2101 = vmatprep.mubr.f32.mxu0 0.0
        %2102 = vmatmul.mubr.f32.gmra.mrb[0].mxu0 %v1880
        %v2103 = vpop.f32.mrb[0].mxu0
        %v2104 = vadd.f32 0.0, %v2103
        %v2105 = vpop.f32.mrb[0].mxu0
        %v2106 = vadd.f32 0.0, %v2105
        %2107 = vmatprep.mubr.f32.mxu0 0.0
        %2108 = vmatmul.mubr.f32.gmra.mrb[0].mxu0 %v1881
        %v2109 = vpop.f32.mrb[0].mxu0
        %v2110 = vadd.f32 0.0, %v2109
        %v2111 = vpop.f32.mrb[0].mxu0
        %v2112 = vadd.f32 0.0, %v2111
        %2113 = vmatprep.mubr.f32.mxu0 0.0
        %2114 = vmatmul.mubr.f32.gmra.mrb[0].mxu0 %v1882
        %v2115 = vpop.f32.mrb[0].mxu0
        %v2116 = vadd.f32 0.0, %v2115
        %v2117 = vpop.f32.mrb[0].mxu0
        %v2118 = vadd.f32 0.0, %v2117
        %2119 = vmatprep.mubr.f32.mxu0 0.0
        %2120 = vmatmul.mubr.f32.gmra.mrb[0].mxu0 %v1883
        %v2121 = vpop.f32.mrb[0].mxu0
        %v2122 = vadd.f32 0.0, %v2121
        %v2123 = vpop.f32.mrb[0].mxu0
        %v2124 = vadd.f32 0.0, %v2123
        %2125 = vmatprep.mubr.f32.mxu0 0.0
        %2126 = vmatmul.mubr.f32.gmra.mrb[0].mxu0 %v1884
        %v2127 = vpop.f32.mrb[0].mxu0
        %v2128 = vadd.f32 0.0, %v2127
        %v2129 = vpop.f32.mrb[0].mxu0
        %v2130 = vadd.f32 0.0, %v2129
        %2131 = vmatprep.mubr.f32.mxu0 0.0
        %2132 = vmatmul.mubr.f32.gmra.mrb[0].mxu0 %v1885
        %v2133 = vpop.f32.mrb[0].mxu0
        %v2134 = vadd.f32 0.0, %v2133
        %v2135 = vpop.f32.mrb[0].mxu0
        %v2136 = vadd.f32 0.0, %v2135
        %2137 = vmatprep.mubr.f32.mxu0 0.0
        %2138 = vmatmul.mubr.f32.gmra.mrb[0].mxu0 %v1886
        %v2139 = vpop.f32.mrb[0].mxu0
        %v2140 = vadd.f32 0.0, %v2139
        %v2141 = vpop.f32.mrb[0].mxu0
        %v2142 = vadd.f32 0.0, %v2141
        %2143 = vmatprep.mubr.f32.mxu0 0.0
        %2144 = vmatmul.mubr.f32.gmra.mrb[0].mxu0 %v1887
        %v2145 = vpop.f32.mrb[0].mxu0
        %v2146 = vadd.f32 0.0, %v2145
        %v2147 = vpop.f32.mrb[0].mxu0
        %v2148 = vadd.f32 0.0, %v2147
        %2149 = vmatprep.mubr.f32.mxu0 0.0
        %2150 = vmatmul.mubr.f32.gmra.mrb[0].mxu0 %v1888
        %v2151 = vpop.f32.mrb[0].mxu0
        %v2152 = vadd.f32 0.0, %v2151
        %v2153 = vpop.f32.mrb[0].mxu0
        %v2154 = vadd.f32 0.0, %v2153
        %2155 = vmatprep.mubr.f32.mxu0 0.0
        %2156 = vmatmul.mubr.f32.gmra.mrb[0].mxu0 %v1889
        %v2157 = vpop.f32.mrb[0].mxu0
        %v2158 = vadd.f32 0.0, %v2157
        %v2159 = vpop.f32.mrb[0].mxu0
        %v2160 = vadd.f32 0.0, %v2159
        %2161 = vmatprep.mubr.f32.mxu0 0.0
        %2162 = vmatmul.mubr.f32.gmra.mrb[0].mxu0 %v1890
        %v2163 = vpop.f32.mrb[0].mxu0
        %v2164 = vadd.f32 0.0, %v2163
        %v2165 = vpop.f32.mrb[0].mxu0
        %v2166 = vadd.f32 0.0, %v2165
        %2167 = vmatprep.mubr.f32.mxu0 0.0
        %2168 = vmatmul.mubr.f32.gmra.mrb[0].mxu0 %v1891
        %v2169 = vpop.f32.mrb[0].mxu0
        %v2170 = vadd.f32 0.0, %v2169
        %v2171 = vpop.f32.mrb[0].mxu0
        %v2172 = vadd.f32 0.0, %v2171
        %2173 = vmatprep.mubr.f32.mxu0 0.0
        %2174 = vmatmul.mubr.f32.gmra.mrb[0].mxu0 %v1892
        %v2175 = vpop.f32.mrb[0].mxu0
        %v2176 = vadd.f32 0.0, %v2175
        %v2177 = vpop.f32.mrb[0].mxu0
        %v2178 = vadd.f32 0.0, %v2177
        %2179 = vmatprep.mubr.f32.mxu0 0.0
        %2180 = vmatmul.mubr.f32.gmra.mrb[0].mxu0 %v1893
        %v2181 = vpop.f32.mrb[0].mxu0
        %v2182 = vadd.f32 0.0, %v2181
        %v2183 = vpop.f32.mrb[0].mxu0
        %v2184 = vadd.f32 0.0, %v2183
        %2185 = vmatprep.mubr.f32.mxu0 0.0
        %2186 = vmatmul.mubr.f32.gmra.mrb[0].mxu0 %v1894
        %v2187 = vpop.f32.mrb[0].mxu0
        %v2188 = vadd.f32 0.0, %v2187
        %v2189 = vpop.f32.mrb[0].mxu0
        %v2190 = vadd.f32 0.0, %v2189
        %2191 = vmatprep.mubr.f32.mxu0 0.0
        %2192 = vmatmul.mubr.f32.gmra.mrb[0].mxu0 %v1895
        %v2193 = vpop.f32.mrb[0].mxu0
        %v2194 = vadd.f32 0.0, %v2193
        %v2195 = vpop.f32.mrb[0].mxu0
        %v2196 = vadd.f32 0.0, %v2195
        %2197 = vmatprep.mubr.f32.mxu0 0.0
        %2198 = vmatmul.mubr.f32.gmra.mrb[0].mxu0 %v1896
        %v2199 = vpop.f32.mrb[0].mxu0
        %v2200 = vadd.f32 0.0, %v2199
        %v2201 = vpop.f32.mrb[0].mxu0
        %v2202 = vadd.f32 0.0, %v2201
        %2203 = vmatprep.mubr.f32.mxu0 0.0
        %2204 = vmatmul.mubr.f32.gmra.mrb[0].mxu0 %v1897
        %v2205 = vpop.f32.mrb[0].mxu0
        %v2206 = vadd.f32 0.0, %v2205
        %v2207 = vpop.f32.mrb[0].mxu0
        %v2208 = vadd.f32 0.0, %v2207
        %2209 = vmatprep.mubr.f32.mxu0 0.0
        %2210 = vmatmul.mubr.f32.gmra.mrb[0].mxu0 %v1898
        %v2211 = vpop.f32.mrb[0].mxu0
        %v2212 = vadd.f32 0.0, %v2211
        %v2213 = vpop.f32.mrb[0].mxu0
        %v2214 = vadd.f32 0.0, %v2213
        %2215 = vmatprep.mubr.f32.mxu0 0.0
        %2216 = vmatmul.mubr.f32.gmra.mrb[0].mxu0 %v1899
        %v2217 = vpop.f32.mrb[0].mxu0
        %v2218 = vadd.f32 0.0, %v2217
        %v2219 = vpop.f32.mrb[0].mxu0
        %v2220 = vadd.f32 0.0, %v2219
        %2221 = vmatprep.mubr.f32.mxu0 0.0
        %2222 = vmatmul.mubr.f32.gmra.mrb[0].mxu0 %v1900
        %v2223 = vpop.f32.mrb[0].mxu0
        %v2224 = vadd.f32 0.0, %v2223
        %v2225 = vpop.f32.mrb[0].mxu0
        %v2226 = vadd.f32 0.0, %v2225
        %2227 = vmatprep.mubr.f32.mxu0 0.0
        %2228 = vmatmul.mubr.f32.gmra.mrb[0].mxu0 %v1901
        %v2229 = vpop.f32.mrb[0].mxu0
        %v2230 = vadd.f32 0.0, %v2229
        %v2231 = vpop.f32.mrb[0].mxu0
        %v2232 = vadd.f32 0.0, %v2231
        %2233 = vmatprep.mubr.f32.mxu0 0.0
        %2234 = vmatmul.mubr.f32.gmra.mrb[0].mxu0 %v1902
        %v2235 = vpop.f32.mrb[0].mxu0
        %v2236 = vadd.f32 0.0, %v2235
        %v2237 = vpop.f32.mrb[0].mxu0
        %v2238 = vadd.f32 0.0, %v2237
        %2239 = vmatprep.mubr.f32.mxu0 0.0
        %2240 = vmatmul.mubr.f32.gmra.mrb[0].mxu0 %v1903
        %v2241 = vpop.f32.mrb[0].mxu0
        %v2242 = vadd.f32 0.0, %v2241
        %v2243 = vpop.f32.mrb[0].mxu0
        %v2244 = vadd.f32 0.0, %v2243
        %2245 = vmatprep.mubr.f32.mxu0 0.0
        %2246 = vmatmul.mubr.f32.gmra.mrb[0].mxu0 %v1904
        %v2247 = vpop.f32.mrb[0].mxu0
        %v2248 = vadd.f32 0.0, %v2247
        %v2249 = vpop.f32.mrb[0].mxu0
        %v2250 = vadd.f32 0.0, %v2249
        %2251 = vmatprep.mubr.f32.mxu0 0.0
        %2252 = vmatmul.mubr.f32.gmra.mrb[0].mxu0 %v1905
        %v2253 = vpop.f32.mrb[0].mxu0
        %v2254 = vadd.f32 0.0, %v2253
        %v2255 = vpop.f32.mrb[0].mxu0
        %v2256 = vadd.f32 0.0, %v2255
        %2257 = vmatprep.mubr.f32.mxu0 0.0
        %2258 = vmatmul.mubr.f32.gmra.mrb[0].mxu0 %v1906
        %v2259 = vpop.f32.mrb[0].mxu0
        %v2260 = vadd.f32 0.0, %v2259
        %v2261 = vpop.f32.mrb[0].mxu0
        %v2262 = vadd.f32 0.0, %v2261
        %2263 = vmatprep.mubr.f32.mxu0 0.0
        %2264 = vmatmul.mubr.f32.gmra.mrb[0].mxu0 %v1907
        %v2265 = vpop.f32.mrb[0].mxu0
        %v2266 = vadd.f32 0.0, %v2265
        %v2267 = vpop.f32.mrb[0].mxu0
        %v2268 = vadd.f32 0.0, %v2267
        %2269 = vmatprep.mubr.f32.mxu0 0.0
        %2270 = vmatmul.mubr.f32.gmra.mrb[0].mxu0 %v1908
        %v2271 = vpop.f32.mrb[0].mxu0
        %v2272 = vadd.f32 0.0, %v2271
        %v2273 = vpop.f32.mrb[0].mxu0
        %v2274 = vadd.f32 0.0, %v2273
        %2275 = vmatprep.mubr.f32.mxu0 0.0
        %2276 = vmatmul.mubr.f32.gmra.mrb[0].mxu0 %v1909
        %v2277 = vpop.f32.mrb[0].mxu0
        %v2278 = vadd.f32 0.0, %v2277
        %v2279 = vpop.f32.mrb[0].mxu0
        %v2280 = vadd.f32 0.0, %v2279
        %2281 = vmatprep.mubr.f32.mxu0 0.0
        %2282 = vmatmul.mubr.f32.gmra.mrb[0].mxu0 %v1910
        %v2283 = vpop.f32.mrb[0].mxu0
        %v2284 = vadd.f32 0.0, %v2283
        %v2285 = vpop.f32.mrb[0].mxu0
        %v2286 = vadd.f32 0.0, %v2285
        %2287 = vmatprep.mubr.f32.mxu0 0.0
        %2288 = vmatmul.mubr.f32.gmra.mrb[0].mxu0 %v1911
        %v2289 = vpop.f32.mrb[0].mxu0
        %v2290 = vadd.f32 0.0, %v2289
        %v2291 = vpop.f32.mrb[0].mxu0
        %v2292 = vadd.f32 0.0, %v2291
        %2293 = vmatprep.mubr.f32.mxu0 0.0
        %2294 = vmatmul.mubr.f32.gmra.mrb[0].mxu0 %v1912
        %v2295 = vpop.f32.mrb[0].mxu0
        %v2296 = vadd.f32 0.0, %v2295
        %v2297 = vpop.f32.mrb[0].mxu0
        %v2298 = vadd.f32 0.0, %v2297
        %2299 = vmatprep.mubr.f32.mxu0 0.0
        %2300 = vmatmul.mubr.f32.gmra.mrb[0].mxu0 %v1913
        %v2301 = vpop.f32.mrb[0].mxu0
        %v2302 = vadd.f32 0.0, %v2301
        %v2303 = vpop.f32.mrb[0].mxu0
        %v2304 = vadd.f32 0.0, %v2303
        %2305 = vmatprep.mubr.f32.mxu0 0.0
        %2306 = vmatmul.mubr.f32.gmra.mrb[0].mxu0 %v1914
        %v2307 = vpop.f32.mrb[0].mxu0
        %v2308 = vadd.f32 0.0, %v2307
        %v2309 = vpop.f32.mrb[0].mxu0
        %v2310 = vadd.f32 0.0, %v2309
        %2311 = vmatprep.mubr.f32.mxu0 0.0
        %2312 = vmatmul.mubr.f32.gmra.mrb[0].mxu0 %v1915
        %v2313 = vpop.f32.mrb[0].mxu0
        %v2314 = vadd.f32 0.0, %v2313
        %v2315 = vpop.f32.mrb[0].mxu0
        %v2316 = vadd.f32 0.0, %v2315
        %2317 = vdwg.mxu0
        %2318 = vmatprep.subr.mxu0 0.0
        %2319 = vmatpush1.msra.mxu0 %v1919
        %2320 = vmatprep.subr.mxu0 0.0
        %2321 = vmatpush1.msra.mxu0 %v1922
        %2322 = vmatprep.subr.mxu0 0.0
        %2323 = vmatpush1.msra.mxu0 %v1925
        %2324 = vmatprep.subr.mxu0 0.0
        %2325 = vmatpush1.msra.mxu0 %v1928
        %2326 = vmatprep.subr.mxu0 0.0
        %2327 = vmatpush1.msra.mxu0 %v1931
        %2328 = vmatprep.subr.mxu0 0.0
        %2329 = vmatpush1.msra.mxu0 %v1934
        %2330 = vmatprep.subr.mxu0 0.0
        %2331 = vmatpush1.msra.mxu0 %v1937
        %2332 = vmatprep.subr.mxu0 0.0
        %2333 = vmatpush1.msra.mxu0 %v1940
        %2334 = vmatprep.subr.mxu0 0.0
        %2335 = vmatpush1.msra.mxu0 %v1943
        %2336 = vmatprep.subr.mxu0 0.0
        %2337 = vmatpush1.msra.mxu0 %v1946
        %2338 = vmatprep.subr.mxu0 0.0
        %2339 = vmatpush1.msra.mxu0 %v1949
        %2340 = vmatprep.subr.mxu0 0.0
        %2341 = vmatpush1.msra.mxu0 %v1952
        %2342 = vmatprep.subr.mxu0 0.0
        %2343 = vmatpush1.msra.mxu0 %v1955
        %2344 = vmatprep.subr.mxu0 0.0
        %2345 = vmatpush1.msra.mxu0 %v1958
        %2346 = vmatprep.subr.mxu0 0.0
        %2347 = vmatpush1.msra.mxu0 %v1961
        %2348 = vmatprep.subr.mxu0 0.0
        %2349 = vmatpush1.msra.mxu0 %v1964
        %2350 = vmatprep.subr.mxu0 0.0
        %2351 = vmatpush1.msra.mxu0 0.0
        %2352 = vmatprep.subr.mxu0 0.0
        %2353 = vmatpush1.msra.mxu0 0.0
        %2354 = vmatprep.subr.mxu0 0.0
        %2355 = vmatpush1.msra.mxu0 0.0
        %2356 = vmatprep.subr.mxu0 0.0
        %2357 = vmatpush1.msra.mxu0 0.0
        %2358 = vmatprep.subr.mxu0 0.0
        %2359 = vmatpush1.msra.mxu0 0.0
        %2360 = vmatprep.subr.mxu0 0.0
        %2361 = vmatpush1.msra.mxu0 0.0
        %2362 = vmatprep.subr.mxu0 0.0
        %2363 = vmatpush1.msra.mxu0 0.0
        %2364 = vmatprep.subr.mxu0 0.0
        %2365 = vmatpush1.msra.mxu0 0.0
        %2366 = vmatprep.subr.mxu0 0.0
        %2367 = vmatpush1.msra.mxu0 0.0
        %2368 = vmatprep.subr.mxu0 0.0
        %2369 = vmatpush1.msra.mxu0 0.0
        %2370 = vmatprep.subr.mxu0 0.0
        %2371 = vmatpush1.msra.mxu0 0.0
        %2372 = vmatprep.subr.mxu0 0.0
        %2373 = vmatpush1.msra.mxu0 0.0
        %2374 = vmatprep.subr.mxu0 0.0
        %2375 = vmatpush1.msra.mxu0 0.0
        %2376 = vmatprep.subr.mxu0 0.0
        %2377 = vmatpush1.msra.mxu0 0.0
        %2378 = vmatprep.subr.mxu0 0.0
        %2379 = vmatpush1.msra.mxu0 0.0
        %2380 = vmatprep.subr.mxu0 0.0
        %2381 = vmatpush1.msra.mxu0 0.0
        %2382 = vmatprep.mubr.f32.mxu0 0.0
        %2383 = vmatmul.mubr.f32.gmra.mrb[0].mxu0 %v1868
        %v2384 = vpop.f32.mrb[0].mxu0
        %v2385 = vadd.f32 0.0, %v2384
        %v2386 = vpop.f32.mrb[0].mxu0
        %2387 = vmatprep.mubr.f32.mxu0 0.0
        %2388 = vmatmul.mubr.f32.gmra.mrb[0].mxu0 %v1869
        %v2389 = vpop.f32.mrb[0].mxu0
        %v2390 = vadd.f32 0.0, %v2389
        %v2391 = vpop.f32.mrb[0].mxu0
        %2392 = vmatprep.mubr.f32.mxu0 0.0
        %2393 = vmatmul.mubr.f32.gmra.mrb[0].mxu0 %v1870
        %v2394 = vpop.f32.mrb[0].mxu0
        %v2395 = vadd.f32 0.0, %v2394
        %v2396 = vpop.f32.mrb[0].mxu0
        %2397 = vmatprep.mubr.f32.mxu0 0.0
        %2398 = vmatmul.mubr.f32.gmra.mrb[0].mxu0 %v1871
        %v2399 = vpop.f32.mrb[0].mxu0
        %v2400 = vadd.f32 0.0, %v2399
        %v2401 = vpop.f32.mrb[0].mxu0
        %2402 = vmatprep.mubr.f32.mxu0 0.0
        %2403 = vmatmul.mubr.f32.gmra.mrb[0].mxu0 %v1872
        %v2404 = vpop.f32.mrb[0].mxu0
        %v2405 = vadd.f32 0.0, %v2404
        %v2406 = vpop.f32.mrb[0].mxu0
        %2407 = vmatprep.mubr.f32.mxu0 0.0
        %2408 = vmatmul.mubr.f32.gmra.mrb[0].mxu0 %v1873
        %v2409 = vpop.f32.mrb[0].mxu0
        %v2410 = vadd.f32 0.0, %v2409
        %v2411 = vpop.f32.mrb[0].mxu0
        %2412 = vmatprep.mubr.f32.mxu0 0.0
        %2413 = vmatmul.mubr.f32.gmra.mrb[0].mxu0 %v1874
        %v2414 = vpop.f32.mrb[0].mxu0
        %v2415 = vadd.f32 0.0, %v2414
        %v2416 = vpop.f32.mrb[0].mxu0
        %2417 = vmatprep.mubr.f32.mxu0 0.0
        %2418 = vmatmul.mubr.f32.gmra.mrb[0].mxu0 %v1875
        %v2419 = vpop.f32.mrb[0].mxu0
        %v2420 = vadd.f32 0.0, %v2419
        %v2421 = vpop.f32.mrb[0].mxu0
        %2422 = vmatprep.mubr.f32.mxu0 0.0
        %2423 = vmatmul.mubr.f32.gmra.mrb[0].mxu0 %v1876
        %v2424 = vpop.f32.mrb[0].mxu0
        %v2425 = vadd.f32 0.0, %v2424
        %v2426 = vpop.f32.mrb[0].mxu0
        %2427 = vmatprep.mubr.f32.mxu0 0.0
        %2428 = vmatmul.mubr.f32.gmra.mrb[0].mxu0 %v1877
        %v2429 = vpop.f32.mrb[0].mxu0
        %v2430 = vadd.f32 0.0, %v2429
        %v2431 = vpop.f32.mrb[0].mxu0
        %2432 = vmatprep.mubr.f32.mxu0 0.0
        %2433 = vmatmul.mubr.f32.gmra.mrb[0].mxu0 %v1878
        %v2434 = vpop.f32.mrb[0].mxu0
        %v2435 = vadd.f32 0.0, %v2434
        %v2436 = vpop.f32.mrb[0].mxu0
        %2437 = vmatprep.mubr.f32.mxu0 0.0
        %2438 = vmatmul.mubr.f32.gmra.mrb[0].mxu0 %v1879
        %v2439 = vpop.f32.mrb[0].mxu0
        %v2440 = vadd.f32 0.0, %v2439
        %v2441 = vpop.f32.mrb[0].mxu0
        %2442 = vmatprep.mubr.f32.mxu0 0.0
        %2443 = vmatmul.mubr.f32.gmra.mrb[0].mxu0 %v1880
        %v2444 = vpop.f32.mrb[0].mxu0
        %v2445 = vadd.f32 0.0, %v2444
        %v2446 = vpop.f32.mrb[0].mxu0
        %2447 = vmatprep.mubr.f32.mxu0 0.0
        %2448 = vmatmul.mubr.f32.gmra.mrb[0].mxu0 %v1881
        %v2449 = vpop.f32.mrb[0].mxu0
        %v2450 = vadd.f32 0.0, %v2449
        %v2451 = vpop.f32.mrb[0].mxu0
        %2452 = vmatprep.mubr.f32.mxu0 0.0
        %2453 = vmatmul.mubr.f32.gmra.mrb[0].mxu0 %v1882
        %v2454 = vpop.f32.mrb[0].mxu0
        %v2455 = vadd.f32 0.0, %v2454
        %v2456 = vpop.f32.mrb[0].mxu0
        %2457 = vmatprep.mubr.f32.mxu0 0.0
        %2458 = vmatmul.mubr.f32.gmra.mrb[0].mxu0 %v1883
        %v2459 = vpop.f32.mrb[0].mxu0
        %v2460 = vadd.f32 0.0, %v2459
        %v2461 = vpop.f32.mrb[0].mxu0
        %2462 = vmatprep.mubr.f32.mxu0 0.0
        %2463 = vmatmul.mubr.f32.gmra.mrb[0].mxu0 %v1884
        %v2464 = vpop.f32.mrb[0].mxu0
        %v2465 = vadd.f32 0.0, %v2464
        %v2466 = vpop.f32.mrb[0].mxu0
        %2467 = vmatprep.mubr.f32.mxu0 0.0
        %2468 = vmatmul.mubr.f32.gmra.mrb[0].mxu0 %v1885
        %v2469 = vpop.f32.mrb[0].mxu0
        %v2470 = vadd.f32 0.0, %v2469
        %v2471 = vpop.f32.mrb[0].mxu0
        %2472 = vmatprep.mubr.f32.mxu0 0.0
        %2473 = vmatmul.mubr.f32.gmra.mrb[0].mxu0 %v1886
        %v2474 = vpop.f32.mrb[0].mxu0
        %v2475 = vadd.f32 0.0, %v2474
        %v2476 = vpop.f32.mrb[0].mxu0
        %2477 = vmatprep.mubr.f32.mxu0 0.0
        %2478 = vmatmul.mubr.f32.gmra.mrb[0].mxu0 %v1887
        %v2479 = vpop.f32.mrb[0].mxu0
        %v2480 = vadd.f32 0.0, %v2479
        %v2481 = vpop.f32.mrb[0].mxu0
        %2482 = vmatprep.mubr.f32.mxu0 0.0
        %2483 = vmatmul.mubr.f32.gmra.mrb[0].mxu0 %v1888
        %v2484 = vpop.f32.mrb[0].mxu0
        %v2485 = vadd.f32 0.0, %v2484
        %v2486 = vpop.f32.mrb[0].mxu0
        %2487 = vmatprep.mubr.f32.mxu0 0.0
        %2488 = vmatmul.mubr.f32.gmra.mrb[0].mxu0 %v1889
        %v2489 = vpop.f32.mrb[0].mxu0
        %v2490 = vadd.f32 0.0, %v2489
        %v2491 = vpop.f32.mrb[0].mxu0
        %2492 = vmatprep.mubr.f32.mxu0 0.0
        %2493 = vmatmul.mubr.f32.gmra.mrb[0].mxu0 %v1890
        %v2494 = vpop.f32.mrb[0].mxu0
        %v2495 = vadd.f32 0.0, %v2494
        %v2496 = vpop.f32.mrb[0].mxu0
        %2497 = vmatprep.mubr.f32.mxu0 0.0
        %2498 = vmatmul.mubr.f32.gmra.mrb[0].mxu0 %v1891
        %v2499 = vpop.f32.mrb[0].mxu0
        %v2500 = vadd.f32 0.0, %v2499
        %v2501 = vpop.f32.mrb[0].mxu0
        %2502 = vmatprep.mubr.f32.mxu0 0.0
        %2503 = vmatmul.mubr.f32.gmra.mrb[0].mxu0 %v1892
        %v2504 = vpop.f32.mrb[0].mxu0
        %v2505 = vadd.f32 0.0, %v2504
        %v2506 = vpop.f32.mrb[0].mxu0
        %2507 = vmatprep.mubr.f32.mxu0 0.0
        %2508 = vmatmul.mubr.f32.gmra.mrb[0].mxu0 %v1893
        %v2509 = vpop.f32.mrb[0].mxu0
        %v2510 = vadd.f32 0.0, %v2509
        %v2511 = vpop.f32.mrb[0].mxu0
        %2512 = vmatprep.mubr.f32.mxu0 0.0
        %2513 = vmatmul.mubr.f32.gmra.mrb[0].mxu0 %v1894
        %v2514 = vpop.f32.mrb[0].mxu0
        %v2515 = vadd.f32 0.0, %v2514
        %v2516 = vpop.f32.mrb[0].mxu0
        %2517 = vmatprep.mubr.f32.mxu0 0.0
        %2518 = vmatmul.mubr.f32.gmra.mrb[0].mxu0 %v1895
        %v2519 = vpop.f32.mrb[0].mxu0
        %v2520 = vadd.f32 0.0, %v2519
        %v2521 = vpop.f32.mrb[0].mxu0
        %2522 = vmatprep.mubr.f32.mxu0 0.0
        %2523 = vmatmul.mubr.f32.gmra.mrb[0].mxu0 %v1896
        %v2524 = vpop.f32.mrb[0].mxu0
        %v2525 = vadd.f32 0.0, %v2524
        %v2526 = vpop.f32.mrb[0].mxu0
        %2527 = vmatprep.mubr.f32.mxu0 0.0
        %2528 = vmatmul.mubr.f32.gmra.mrb[0].mxu0 %v1897
        %v2529 = vpop.f32.mrb[0].mxu0
        %v2530 = vadd.f32 0.0, %v2529
        %v2531 = vpop.f32.mrb[0].mxu0
        %2532 = vmatprep.mubr.f32.mxu0 0.0
        %2533 = vmatmul.mubr.f32.gmra.mrb[0].mxu0 %v1898
        %v2534 = vpop.f32.mrb[0].mxu0
        %v2535 = vadd.f32 0.0, %v2534
        %v2536 = vpop.f32.mrb[0].mxu0
        %2537 = vmatprep.mubr.f32.mxu0 0.0
        %2538 = vmatmul.mubr.f32.gmra.mrb[0].mxu0 %v1899
        %v2539 = vpop.f32.mrb[0].mxu0
        %v2540 = vadd.f32 0.0, %v2539
        %v2541 = vpop.f32.mrb[0].mxu0
        %2542 = vmatprep.mubr.f32.mxu0 0.0
        %2543 = vmatmul.mubr.f32.gmra.mrb[0].mxu0 %v1900
        %v2544 = vpop.f32.mrb[0].mxu0
        %v2545 = vadd.f32 0.0, %v2544
        %v2546 = vpop.f32.mrb[0].mxu0
        %2547 = vmatprep.mubr.f32.mxu0 0.0
        %2548 = vmatmul.mubr.f32.gmra.mrb[0].mxu0 %v1901
        %v2549 = vpop.f32.mrb[0].mxu0
        %v2550 = vadd.f32 0.0, %v2549
        %v2551 = vpop.f32.mrb[0].mxu0
        %2552 = vmatprep.mubr.f32.mxu0 0.0
        %2553 = vmatmul.mubr.f32.gmra.mrb[0].mxu0 %v1902
        %v2554 = vpop.f32.mrb[0].mxu0
        %v2555 = vadd.f32 0.0, %v2554
        %v2556 = vpop.f32.mrb[0].mxu0
        %2557 = vmatprep.mubr.f32.mxu0 0.0
        %2558 = vmatmul.mubr.f32.gmra.mrb[0].mxu0 %v1903
        %v2559 = vpop.f32.mrb[0].mxu0
        %v2560 = vadd.f32 0.0, %v2559
        %v2561 = vpop.f32.mrb[0].mxu0
        %2562 = vmatprep.mubr.f32.mxu0 0.0
        %2563 = vmatmul.mubr.f32.gmra.mrb[0].mxu0 %v1904
        %v2564 = vpop.f32.mrb[0].mxu0
        %v2565 = vadd.f32 0.0, %v2564
        %v2566 = vpop.f32.mrb[0].mxu0
        %2567 = vmatprep.mubr.f32.mxu0 0.0
        %2568 = vmatmul.mubr.f32.gmra.mrb[0].mxu0 %v1905
        %v2569 = vpop.f32.mrb[0].mxu0
        %v2570 = vadd.f32 0.0, %v2569
        %v2571 = vpop.f32.mrb[0].mxu0
        %2572 = vmatprep.mubr.f32.mxu0 0.0
        %2573 = vmatmul.mubr.f32.gmra.mrb[0].mxu0 %v1906
        %v2574 = vpop.f32.mrb[0].mxu0
        %v2575 = vadd.f32 0.0, %v2574
        %v2576 = vpop.f32.mrb[0].mxu0
        %2577 = vmatprep.mubr.f32.mxu0 0.0
        %2578 = vmatmul.mubr.f32.gmra.mrb[0].mxu0 %v1907
        %v2579 = vpop.f32.mrb[0].mxu0
        %v2580 = vadd.f32 0.0, %v2579
        %v2581 = vpop.f32.mrb[0].mxu0
        %2582 = vmatprep.mubr.f32.mxu0 0.0
        %2583 = vmatmul.mubr.f32.gmra.mrb[0].mxu0 %v1908
        %v2584 = vpop.f32.mrb[0].mxu0
        %v2585 = vadd.f32 0.0, %v2584
        %v2586 = vpop.f32.mrb[0].mxu0
        %2587 = vmatprep.mubr.f32.mxu0 0.0
        %2588 = vmatmul.mubr.f32.gmra.mrb[0].mxu0 %v1909
        %v2589 = vpop.f32.mrb[0].mxu0
        %v2590 = vadd.f32 0.0, %v2589
        %v2591 = vpop.f32.mrb[0].mxu0
        %2592 = vmatprep.mubr.f32.mxu0 0.0
        %2593 = vmatmul.mubr.f32.gmra.mrb[0].mxu0 %v1910
        %v2594 = vpop.f32.mrb[0].mxu0
        %v2595 = vadd.f32 0.0, %v2594
        %v2596 = vpop.f32.mrb[0].mxu0
        %2597 = vmatprep.mubr.f32.mxu0 0.0
        %2598 = vmatmul.mubr.f32.gmra.mrb[0].mxu0 %v1911
        %v2599 = vpop.f32.mrb[0].mxu0
        %v2600 = vadd.f32 0.0, %v2599
        %v2601 = vpop.f32.mrb[0].mxu0
        %2602 = vmatprep.mubr.f32.mxu0 0.0
        %2603 = vmatmul.mubr.f32.gmra.mrb[0].mxu0 %v1912
        %v2604 = vpop.f32.mrb[0].mxu0
        %v2605 = vadd.f32 0.0, %v2604
        %v2606 = vpop.f32.mrb[0].mxu0
        %2607 = vmatprep.mubr.f32.mxu0 0.0
        %2608 = vmatmul.mubr.f32.gmra.mrb[0].mxu0 %v1913
        %v2609 = vpop.f32.mrb[0].mxu0
        %v2610 = vadd.f32 0.0, %v2609
        %v2611 = vpop.f32.mrb[0].mxu0
        %2612 = vmatprep.mubr.f32.mxu0 0.0
        %2613 = vmatmul.mubr.f32.gmra.mrb[0].mxu0 %v1914
        %v2614 = vpop.f32.mrb[0].mxu0
        %v2615 = vadd.f32 0.0, %v2614
        %v2616 = vpop.f32.mrb[0].mxu0
        %2617 = vmatprep.mubr.f32.mxu0 0.0
        %2618 = vmatmul.mubr.f32.gmra.mrb[0].mxu0 %v1915
        %v2619 = vpop.f32.mrb[0].mxu0
        %v2620 = vadd.f32 0.0, %v2619
        %v2621 = vpop.f32.mrb[0].mxu0
        %2622 = vdwg.mxu0
        %v2623 = vadd.f32 %v1277, %v2032
        %v2624 = vadd.f32 %v1279, %v2034
        %v2625 = vadd.f32 %v1630, %v2385
        %v2626 = vadd.f32 %v1283, %v2038
        %v2627 = vadd.f32 %v1285, %v2040
        %v2628 = vadd.f32 %v1635, %v2390
        %v2629 = vadd.f32 %v1289, %v2044
        %v2630 = vadd.f32 %v1291, %v2046
        %v2631 = vadd.f32 %v1640, %v2395
        %v2632 = vadd.f32 %v1295, %v2050
        %v2633 = vadd.f32 %v1297, %v2052
        %v2634 = vadd.f32 %v1645, %v2400
        %v2635 = vadd.f32 %v1301, %v2056
        %v2636 = vadd.f32 %v1303, %v2058
        %v2637 = vadd.f32 %v1650, %v2405
        %v2638 = vadd.f32 %v1307, %v2062
        %v2639 = vadd.f32 %v1309, %v2064
        %v2640 = vadd.f32 %v1655, %v2410
        %v2641 = vadd.f32 %v1313, %v2068
        %v2642 = vadd.f32 %v1315, %v2070
        %v2643 = vadd.f32 %v1660, %v2415
        %v2644 = vadd.f32 %v1319, %v2074
        %v2645 = vadd.f32 %v1321, %v2076
        %v2646 = vadd.f32 %v1665, %v2420
        %v2647 = vadd.f32 %v1325, %v2080
        %v2648 = vadd.f32 %v1327, %v2082
        %v2649 = vadd.f32 %v1670, %v2425
        %v2650 = vadd.f32 %v1331, %v2086
        %v2651 = vadd.f32 %v1333, %v2088
        %v2652 = vadd.f32 %v1675, %v2430
        %v2653 = vadd.f32 %v1337, %v2092
        %v2654 = vadd.f32 %v1339, %v2094
        %v2655 = vadd.f32 %v1680, %v2435
        %v2656 = vadd.f32 %v1343, %v2098
        %v2657 = vadd.f32 %v1345, %v2100
        %v2658 = vadd.f32 %v1685, %v2440
        %v2659 = vadd.f32 %v1349, %v2104
        %v2660 = vadd.f32 %v1351, %v2106
        %v2661 = vadd.f32 %v1690, %v2445
        %v2662 = vadd.f32 %v1355, %v2110
        %v2663 = vadd.f32 %v1357, %v2112
        %v2664 = vadd.f32 %v1695, %v2450
        %v2665 = vadd.f32 %v1361, %v2116
        %v2666 = vadd.f32 %v1363, %v2118
        %v2667 = vadd.f32 %v1700, %v2455
        %v2668 = vadd.f32 %v1367, %v2122
        %v2669 = vadd.f32 %v1369, %v2124
        %v2670 = vadd.f32 %v1705, %v2460
        %v2671 = vadd.f32 %v1373, %v2128
        %v2672 = vadd.f32 %v1375, %v2130
        %v2673 = vadd.f32 %v1710, %v2465
        %v2674 = vadd.f32 %v1379, %v2134
        %v2675 = vadd.f32 %v1381, %v2136
        %v2676 = vadd.f32 %v1715, %v2470
        %v2677 = vadd.f32 %v1385, %v2140
        %v2678 = vadd.f32 %v1387, %v2142
        %v2679 = vadd.f32 %v1720, %v2475
        %v2680 = vadd.f32 %v1391, %v2146
        %v2681 = vadd.f32 %v1393, %v2148
        %v2682 = vadd.f32 %v1725, %v2480
        %v2683 = vadd.f32 %v1397, %v2152
        %v2684 = vadd.f32 %v1399, %v2154
        %v2685 = vadd.f32 %v1730, %v2485
        %v2686 = vadd.f32 %v1403, %v2158
        %v2687 = vadd.f32 %v1405, %v2160
        %v2688 = vadd.f32 %v1735, %v2490
        %v2689 = vadd.f32 %v1409, %v2164
        %v2690 = vadd.f32 %v1411, %v2166
        %v2691 = vadd.f32 %v1740, %v2495
        %v2692 = vadd.f32 %v1415, %v2170
        %v2693 = vadd.f32 %v1417, %v2172
        %v2694 = vadd.f32 %v1745, %v2500
        %v2695 = vadd.f32 %v1421, %v2176
        %v2696 = vadd.f32 %v1423, %v2178
        %v2697 = vadd.f32 %v1750, %v2505
        %v2698 = vadd.f32 %v1427, %v2182
        %v2699 = vadd.f32 %v1429, %v2184
        %v2700 = vadd.f32 %v1755, %v2510
        %v2701 = vadd.f32 %v1433, %v2188
        %v2702 = vadd.f32 %v1435, %v2190
        %v2703 = vadd.f32 %v1760, %v2515
        %v2704 = vadd.f32 %v1439, %v2194
        %v2705 = vadd.f32 %v1441, %v2196
        %v2706 = vadd.f32 %v1765, %v2520
        %v2707 = vadd.f32 %v1445, %v2200
        %v2708 = vadd.f32 %v1447, %v2202
        %v2709 = vadd.f32 %v1770, %v2525
        %v2710 = vadd.f32 %v1451, %v2206
        %v2711 = vadd.f32 %v1453, %v2208
        %v2712 = vadd.f32 %v1775, %v2530
        %v2713 = vadd.f32 %v1457, %v2212
        %v2714 = vadd.f32 %v1459, %v2214
        %v2715 = vadd.f32 %v1780, %v2535
        %v2716 = vadd.f32 %v1463, %v2218
        %v2717 = vadd.f32 %v1465, %v2220
        %v2718 = vadd.f32 %v1785, %v2540
        %v2719 = vadd.f32 %v1469, %v2224
        %v2720 = vadd.f32 %v1471, %v2226
        %v2721 = vadd.f32 %v1790, %v2545
        %v2722 = vadd.f32 %v1475, %v2230
        %v2723 = vadd.f32 %v1477, %v2232
        %v2724 = vadd.f32 %v1795, %v2550
        %v2725 = vadd.f32 %v1481, %v2236
        %v2726 = vadd.f32 %v1483, %v2238
        %v2727 = vadd.f32 %v1800, %v2555
        %v2728 = vadd.f32 %v1487, %v2242
        %v2729 = vadd.f32 %v1489, %v2244
        %v2730 = vadd.f32 %v1805, %v2560
        %v2731 = vadd.f32 %v1493, %v2248
        %v2732 = vadd.f32 %v1495, %v2250
        %v2733 = vadd.f32 %v1810, %v2565
        %v2734 = vadd.f32 %v1499, %v2254
        %v2735 = vadd.f32 %v1501, %v2256
        %v2736 = vadd.f32 %v1815, %v2570
        %v2737 = vadd.f32 %v1505, %v2260
        %v2738 = vadd.f32 %v1507, %v2262
        %v2739 = vadd.f32 %v1820, %v2575
        %v2740 = vadd.f32 %v1511, %v2266
        %v2741 = vadd.f32 %v1513, %v2268
        %v2742 = vadd.f32 %v1825, %v2580
        %v2743 = vadd.f32 %v1517, %v2272
        %v2744 = vadd.f32 %v1519, %v2274
        %v2745 = vadd.f32 %v1830, %v2585
        %v2746 = vadd.f32 %v1523, %v2278
        %v2747 = vadd.f32 %v1525, %v2280
        %v2748 = vadd.f32 %v1835, %v2590
        %v2749 = vadd.f32 %v1529, %v2284
        %v2750 = vadd.f32 %v1531, %v2286
        %v2751 = vadd.f32 %v1840, %v2595
        %v2752 = vadd.f32 %v1535, %v2290
        %v2753 = vadd.f32 %v1537, %v2292
        %v2754 = vadd.f32 %v1845, %v2600
        %v2755 = vadd.f32 %v1541, %v2296
        %v2756 = vadd.f32 %v1543, %v2298
        %v2757 = vadd.f32 %v1850, %v2605
        %v2758 = vadd.f32 %v1547, %v2302
        %v2759 = vadd.f32 %v1549, %v2304
        %v2760 = vadd.f32 %v1855, %v2610
        %v2761 = vadd.f32 %v1553, %v2308
        %v2762 = vadd.f32 %v1555, %v2310
        %v2763 = vadd.f32 %v1860, %v2615
        %v2764 = vadd.f32 %v1559, %v2314
        %v2765 = vadd.f32 %v1561, %v2316
        %v2766 = vadd.f32 %v1865, %v2620
        %v2767 = vrot.slane %v2623, 7
        %v2768 = vrot.slane %v2626, 7
        %v2769 = vrot.slane %v2629, 7
        %v2770 = vrot.slane %v2632, 7
        %v2771 = vrot.slane %v2635, 7
        %v2772 = vrot.slane %v2638, 7
        %v2773 = vrot.slane %v2641, 7
        %v2774 = vrot.slane %v2644, 7
        %v2775 = vrot.slane %v2647, 7
        %v2776 = vrot.slane %v2650, 7
        %v2777 = vrot.slane %v2653, 7
        %v2778 = vrot.slane %v2656, 7
        %v2779 = vrot.slane %v2659, 7
        %v2780 = vrot.slane %v2662, 7
        %v2781 = vrot.slane %v2665, 7
        %v2782 = vrot.slane %v2668, 7
        %v2783 = vrot.slane %v2671, 7
        %v2784 = vrot.slane %v2674, 7
        %v2785 = vrot.slane %v2677, 7
        %v2786 = vrot.slane %v2680, 7
        %v2787 = vrot.slane %v2683, 7
        %v2788 = vrot.slane %v2686, 7
        %v2789 = vrot.slane %v2689, 7
        %v2790 = vrot.slane %v2692, 7
        %v2791 = vrot.slane %v2695, 7
        %v2792 = vrot.slane %v2698, 7
        %v2793 = vrot.slane %v2701, 7
        %v2794 = vrot.slane %v2704, 7
        %v2795 = vrot.slane %v2707, 7
        %v2796 = vrot.slane %v2710, 7
        %v2797 = vrot.slane %v2713, 7
        %v2798 = vrot.slane %v2716, 7
        %v2799 = vrot.slane %v2719, 7
        %v2800 = vrot.slane %v2722, 7
        %v2801 = vrot.slane %v2725, 7
        %v2802 = vrot.slane %v2728, 7
        %v2803 = vrot.slane %v2731, 7
        %v2804 = vrot.slane %v2734, 7
        %v2805 = vrot.slane %v2737, 7
        %v2806 = vrot.slane %v2740, 7
        %v2807 = vrot.slane %v2743, 7
        %v2808 = vrot.slane %v2746, 7
        %v2809 = vrot.slane %v2749, 7
        %v2810 = vrot.slane %v2752, 7
        %v2811 = vrot.slane %v2755, 7
        %v2812 = vrot.slane %v2758, 7
        %v2813 = vrot.slane %v2761, 7
        %v2814 = vrot.slane %v2764, 7
        %v2815 = vlaneseq
        %v2816 = vshrl.u32 %v2815, 7
        %vm2817 = vcmp.lt.s32.totalorder %v2816, 1
        %v2818 = vsel %vm2817, %v2813, %v2814
        %v2819 = vsel %vm2817, %v2812, %v2813
        %v2820 = vsel %vm2817, %v2811, %v2812
        %v2821 = vsel %vm2817, %v2810, %v2811
        %v2822 = vsel %vm2817, %v2809, %v2810
        %v2823 = vsel %vm2817, %v2808, %v2809
        %v2824 = vsel %vm2817, %v2807, %v2808
        %v2825 = vsel %vm2817, %v2806, %v2807
        %v2826 = vsel %vm2817, %v2805, %v2806
        %v2827 = vsel %vm2817, %v2804, %v2805
        %v2828 = vsel %vm2817, %v2803, %v2804
        %v2829 = vsel %vm2817, %v2802, %v2803
        %v2830 = vsel %vm2817, %v2801, %v2802
        %v2831 = vsel %vm2817, %v2800, %v2801
        %v2832 = vsel %vm2817, %v2799, %v2800
        %v2833 = vsel %vm2817, %v2798, %v2799
        %v2834 = vsel %vm2817, %v2797, %v2798
        %v2835 = vsel %vm2817, %v2796, %v2797
        %v2836 = vsel %vm2817, %v2795, %v2796
        %v2837 = vsel %vm2817, %v2794, %v2795
        %v2838 = vsel %vm2817, %v2793, %v2794
        %v2839 = vsel %vm2817, %v2792, %v2793
        %v2840 = vsel %vm2817, %v2791, %v2792
        %v2841 = vsel %vm2817, %v2790, %v2791
        %v2842 = vsel %vm2817, %v2789, %v2790
        %v2843 = vsel %vm2817, %v2788, %v2789
        %v2844 = vsel %vm2817, %v2787, %v2788
        %v2845 = vsel %vm2817, %v2786, %v2787
        %v2846 = vsel %vm2817, %v2785, %v2786
        %v2847 = vsel %vm2817, %v2784, %v2785
        %v2848 = vsel %vm2817, %v2783, %v2784
        %v2849 = vsel %vm2817, %v2782, %v2783
        %v2850 = vsel %vm2817, %v2781, %v2782
        %v2851 = vsel %vm2817, %v2780, %v2781
        %v2852 = vsel %vm2817, %v2779, %v2780
        %v2853 = vsel %vm2817, %v2778, %v2779
        %v2854 = vsel %vm2817, %v2777, %v2778
        %v2855 = vsel %vm2817, %v2776, %v2777
        %v2856 = vsel %vm2817, %v2775, %v2776
        %v2857 = vsel %vm2817, %v2774, %v2775
        %v2858 = vsel %vm2817, %v2773, %v2774
        %v2859 = vsel %vm2817, %v2772, %v2773
        %v2860 = vsel %vm2817, %v2771, %v2772
        %v2861 = vsel %vm2817, %v2770, %v2771
        %v2862 = vsel %vm2817, %v2769, %v2770
        %v2863 = vsel %vm2817, %v2768, %v2769
        %v2864 = vsel %vm2817, %v2767, %v2768
        %v2865 = vsel %vm2817, %v2814, %v2767
        %v2866 = vadd.f32 %v2624, %v2865
        %v2867 = vadd.f32 %v2627, %v2864
        %v2868 = vadd.f32 %v2630, %v2863
        %v2869 = vadd.f32 %v2633, %v2862
        %v2870 = vadd.f32 %v2636, %v2861
        %v2871 = vadd.f32 %v2639, %v2860
        %v2872 = vadd.f32 %v2642, %v2859
        %v2873 = vadd.f32 %v2645, %v2858
        %v2874 = vadd.f32 %v2648, %v2857
        %v2875 = vadd.f32 %v2651, %v2856
        %v2876 = vadd.f32 %v2654, %v2855
        %v2877 = vadd.f32 %v2657, %v2854
        %v2878 = vadd.f32 %v2660, %v2853
        %v2879 = vadd.f32 %v2663, %v2852
        %v2880 = vadd.f32 %v2666, %v2851
        %v2881 = vadd.f32 %v2669, %v2850
        %v2882 = vadd.f32 %v2672, %v2849
        %v2883 = vadd.f32 %v2675, %v2848
        %v2884 = vadd.f32 %v2678, %v2847
        %v2885 = vadd.f32 %v2681, %v2846
        %v2886 = vadd.f32 %v2684, %v2845
        %v2887 = vadd.f32 %v2687, %v2844
        %v2888 = vadd.f32 %v2690, %v2843
        %v2889 = vadd.f32 %v2693, %v2842
        %v2890 = vadd.f32 %v2696, %v2841
        %v2891 = vadd.f32 %v2699, %v2840
        %v2892 = vadd.f32 %v2702, %v2839
        %v2893 = vadd.f32 %v2705, %v2838
        %v2894 = vadd.f32 %v2708, %v2837
        %v2895 = vadd.f32 %v2711, %v2836
        %v2896 = vadd.f32 %v2714, %v2835
        %v2897 = vadd.f32 %v2717, %v2834
        %v2898 = vadd.f32 %v2720, %v2833
        %v2899 = vadd.f32 %v2723, %v2832
        %v2900 = vadd.f32 %v2726, %v2831
        %v2901 = vadd.f32 %v2729, %v2830
        %v2902 = vadd.f32 %v2732, %v2829
        %v2903 = vadd.f32 %v2735, %v2828
        %v2904 = vadd.f32 %v2738, %v2827
        %v2905 = vadd.f32 %v2741, %v2826
        %v2906 = vadd.f32 %v2744, %v2825
        %v2907 = vadd.f32 %v2747, %v2824
        %v2908 = vadd.f32 %v2750, %v2823
        %v2909 = vadd.f32 %v2753, %v2822
        %v2910 = vadd.f32 %v2756, %v2821
        %v2911 = vadd.f32 %v2759, %v2820
        %v2912 = vadd.f32 %v2762, %v2819
        %v2913 = vadd.f32 %v2765, %v2818
        %v2914 = vrot.slane %v2625, 1
        %v2915 = vrot.slane %v2628, 1
        %v2916 = vrot.slane %v2631, 1
        %v2917 = vrot.slane %v2634, 1
        %v2918 = vrot.slane %v2637, 1
        %v2919 = vrot.slane %v2640, 1
        %v2920 = vrot.slane %v2643, 1
        %v2921 = vrot.slane %v2646, 1
        %v2922 = vrot.slane %v2649, 1
        %v2923 = vrot.slane %v2652, 1
        %v2924 = vrot.slane %v2655, 1
        %v2925 = vrot.slane %v2658, 1
        %v2926 = vrot.slane %v2661, 1
        %v2927 = vrot.slane %v2664, 1
        %v2928 = vrot.slane %v2667, 1
        %v2929 = vrot.slane %v2670, 1
        %v2930 = vrot.slane %v2673, 1
        %v2931 = vrot.slane %v2676, 1
        %v2932 = vrot.slane %v2679, 1
        %v2933 = vrot.slane %v2682, 1
        %v2934 = vrot.slane %v2685, 1
        %v2935 = vrot.slane %v2688, 1
        %v2936 = vrot.slane %v2691, 1
        %v2937 = vrot.slane %v2694, 1
        %v2938 = vrot.slane %v2697, 1
        %v2939 = vrot.slane %v2700, 1
        %v2940 = vrot.slane %v2703, 1
        %v2941 = vrot.slane %v2706, 1
        %v2942 = vrot.slane %v2709, 1
        %v2943 = vrot.slane %v2712, 1
        %v2944 = vrot.slane %v2715, 1
        %v2945 = vrot.slane %v2718, 1
        %v2946 = vrot.slane %v2721, 1
        %v2947 = vrot.slane %v2724, 1
        %v2948 = vrot.slane %v2727, 1
        %v2949 = vrot.slane %v2730, 1
        %v2950 = vrot.slane %v2733, 1
        %v2951 = vrot.slane %v2736, 1
        %v2952 = vrot.slane %v2739, 1
        %v2953 = vrot.slane %v2742, 1
        %v2954 = vrot.slane %v2745, 1
        %v2955 = vrot.slane %v2748, 1
        %v2956 = vrot.slane %v2751, 1
        %v2957 = vrot.slane %v2754, 1
        %v2958 = vrot.slane %v2757, 1
        %v2959 = vrot.slane %v2760, 1
        %v2960 = vrot.slane %v2763, 1
        %v2961 = vrot.slane %v2766, 1
        %vm2962 = vcmp.lt.s32.totalorder %v2816, 7
        %v2963 = vsel %vm2962, %v2960, %v2961
        %v2964 = vsel %vm2962, %v2959, %v2960
        %v2965 = vsel %vm2962, %v2958, %v2959
        %v2966 = vsel %vm2962, %v2957, %v2958
        %v2967 = vsel %vm2962, %v2956, %v2957
        %v2968 = vsel %vm2962, %v2955, %v2956
        %v2969 = vsel %vm2962, %v2954, %v2955
        %v2970 = vsel %vm2962, %v2953, %v2954
        %v2971 = vsel %vm2962, %v2952, %v2953
        %v2972 = vsel %vm2962, %v2951, %v2952
        %v2973 = vsel %vm2962, %v2950, %v2951
        %v2974 = vsel %vm2962, %v2949, %v2950
        %v2975 = vsel %vm2962, %v2948, %v2949
        %v2976 = vsel %vm2962, %v2947, %v2948
        %v2977 = vsel %vm2962, %v2946, %v2947
        %v2978 = vsel %vm2962, %v2945, %v2946
        %v2979 = vsel %vm2962, %v2944, %v2945
        %v2980 = vsel %vm2962, %v2943, %v2944
        %v2981 = vsel %vm2962, %v2942, %v2943
        %v2982 = vsel %vm2962, %v2941, %v2942
        %v2983 = vsel %vm2962, %v2940, %v2941
        %v2984 = vsel %vm2962, %v2939, %v2940
        %v2985 = vsel %vm2962, %v2938, %v2939
        %v2986 = vsel %vm2962, %v2937, %v2938
        %v2987 = vsel %vm2962, %v2936, %v2937
        %v2988 = vsel %vm2962, %v2935, %v2936
        %v2989 = vsel %vm2962, %v2934, %v2935
        %v2990 = vsel %vm2962, %v2933, %v2934
        %v2991 = vsel %vm2962, %v2932, %v2933
        %v2992 = vsel %vm2962, %v2931, %v2932
        %v2993 = vsel %vm2962, %v2930, %v2931
        %v2994 = vsel %vm2962, %v2929, %v2930
        %v2995 = vsel %vm2962, %v2928, %v2929
        %v2996 = vsel %vm2962, %v2927, %v2928
        %v2997 = vsel %vm2962, %v2926, %v2927
        %v2998 = vsel %vm2962, %v2925, %v2926
        %v2999 = vsel %vm2962, %v2924, %v2925
        %v3000 = vsel %vm2962, %v2923, %v2924
        %v3001 = vsel %vm2962, %v2922, %v2923
        %v3002 = vsel %vm2962, %v2921, %v2922
        %v3003 = vsel %vm2962, %v2920, %v2921
        %v3004 = vsel %vm2962, %v2919, %v2920
        %v3005 = vsel %vm2962, %v2918, %v2919
        %v3006 = vsel %vm2962, %v2917, %v2918
        %v3007 = vsel %vm2962, %v2916, %v2917
        %v3008 = vsel %vm2962, %v2915, %v2916
        %v3009 = vsel %vm2962, %v2914, %v2915
        %v3010 = vsel %vm2962, %v2961, %v2914
        %v3011 = vadd.f32 %v2866, %v3009
        %v3012 = vadd.f32 %v2867, %v3008
        %v3013 = vadd.f32 %v2868, %v3007
        %v3014 = vadd.f32 %v2869, %v3006
        %v3015 = vadd.f32 %v2870, %v3005
        %v3016 = vadd.f32 %v2871, %v3004
        %v3017 = vadd.f32 %v2872, %v3003
        %v3018 = vadd.f32 %v2873, %v3002
        %v3019 = vadd.f32 %v2874, %v3001
        %v3020 = vadd.f32 %v2875, %v3000
        %v3021 = vadd.f32 %v2876, %v2999
        %v3022 = vadd.f32 %v2877, %v2998
        %v3023 = vadd.f32 %v2878, %v2997
        %v3024 = vadd.f32 %v2879, %v2996
        %v3025 = vadd.f32 %v2880, %v2995
        %v3026 = vadd.f32 %v2881, %v2994
        %v3027 = vadd.f32 %v2882, %v2993
        %v3028 = vadd.f32 %v2883, %v2992
        %v3029 = vadd.f32 %v2884, %v2991
        %v3030 = vadd.f32 %v2885, %v2990
        %v3031 = vadd.f32 %v2886, %v2989
        %v3032 = vadd.f32 %v2887, %v2988
        %v3033 = vadd.f32 %v2888, %v2987
        %v3034 = vadd.f32 %v2889, %v2986
        %v3035 = vadd.f32 %v2890, %v2985
        %v3036 = vadd.f32 %v2891, %v2984
        %v3037 = vadd.f32 %v2892, %v2983
        %v3038 = vadd.f32 %v2893, %v2982
        %v3039 = vadd.f32 %v2894, %v2981
        %v3040 = vadd.f32 %v2895, %v2980
        %v3041 = vadd.f32 %v2896, %v2979
        %v3042 = vadd.f32 %v2897, %v2978
        %v3043 = vadd.f32 %v2898, %v2977
        %v3044 = vadd.f32 %v2899, %v2976
        %v3045 = vadd.f32 %v2900, %v2975
        %v3046 = vadd.f32 %v2901, %v2974
        %v3047 = vadd.f32 %v2902, %v2973
        %v3048 = vadd.f32 %v2903, %v2972
        %v3049 = vadd.f32 %v2904, %v2971
        %v3050 = vadd.f32 %v2905, %v2970
        %v3051 = vadd.f32 %v2906, %v2969
        %v3052 = vadd.f32 %v2907, %v2968
        %v3053 = vadd.f32 %v2908, %v2967
        %v3054 = vadd.f32 %v2909, %v2966
        %v3055 = vadd.f32 %v2910, %v2965
        %v3056 = vadd.f32 %v2911, %v2964
        %v3057 = vadd.f32 %v2912, %v2963
        %v3058 = vadd.f32 %v2913, %v3010
        %v3059 = vld [vmem:[%s2] sm:$0x1]
        %v3061 = vlaneseq
        %v3062 = vshrl.u32 %v3061, 7
        %v3063 = vsub.s32 0, %v3062
        %v3064 = vrot.slane %v3059, %v3063
        %v3066 = vmul.f32 %v3011, %v3064
        %v3067 = vmul.f32 %v3012, %v3064
        %v3068 = vmul.f32 %v3013, %v3064
        %v3069 = vmul.f32 %v3014, %v3064
        %v3070 = vmul.f32 %v3015, %v3064
        %v3071 = vmul.f32 %v3016, %v3064
        %v3072 = vmul.f32 %v3017, %v3064
        %v3073 = vmul.f32 %v3018, %v3064
        %v3074 = vmul.f32 %v3019, %v3064
        %v3075 = vmul.f32 %v3020, %v3064
        %v3076 = vmul.f32 %v3021, %v3064
        %v3077 = vmul.f32 %v3022, %v3064
        %v3078 = vmul.f32 %v3023, %v3064
        %v3079 = vmul.f32 %v3024, %v3064
        %v3080 = vmul.f32 %v3025, %v3064
        %v3081 = vmul.f32 %v3026, %v3064
        %v3082 = vmul.f32 %v3027, %v3064
        %v3083 = vmul.f32 %v3028, %v3064
        %v3084 = vmul.f32 %v3029, %v3064
        %v3085 = vmul.f32 %v3030, %v3064
        %v3086 = vmul.f32 %v3031, %v3064
        %v3087 = vmul.f32 %v3032, %v3064
        %v3088 = vmul.f32 %v3033, %v3064
        %v3089 = vmul.f32 %v3034, %v3064
        %v3090 = vmul.f32 %v3035, %v3064
        %v3091 = vmul.f32 %v3036, %v3064
        %v3092 = vmul.f32 %v3037, %v3064
        %v3093 = vmul.f32 %v3038, %v3064
        %v3094 = vmul.f32 %v3039, %v3064
        %v3095 = vmul.f32 %v3040, %v3064
        %v3096 = vmul.f32 %v3041, %v3064
        %v3097 = vmul.f32 %v3042, %v3064
        %v3098 = vmul.f32 %v3043, %v3064
        %v3099 = vmul.f32 %v3044, %v3064
        %v3100 = vmul.f32 %v3045, %v3064
        %v3101 = vmul.f32 %v3046, %v3064
        %v3102 = vmul.f32 %v3047, %v3064
        %v3103 = vmul.f32 %v3048, %v3064
        %v3104 = vmul.f32 %v3049, %v3064
        %v3105 = vmul.f32 %v3050, %v3064
        %v3106 = vmul.f32 %v3051, %v3064
        %v3107 = vmul.f32 %v3052, %v3064
        %v3108 = vmul.f32 %v3053, %v3064
        %v3109 = vmul.f32 %v3054, %v3064
        %v3110 = vmul.f32 %v3055, %v3064
        %v3111 = vmul.f32 %v3056, %v3064
        %v3112 = vmul.f32 %v3057, %v3064
        %v3113 = vmul.f32 %v3058, %v3064
        %v3114 = vld [vmem:[%s3] sm:$0x1]
        %v3116 = vlaneseq
        %v3117 = vshrl.u32 %v3116, 7
        %v3118 = vsub.s32 0, %v3117
        %v3119 = vrot.slane %v3114, %v3118
        %v3121 = vadd.f32 %v3066, %v3119
        %v3122 = vadd.f32 %v3067, %v3119
        %v3123 = vadd.f32 %v3068, %v3119
        %v3124 = vadd.f32 %v3069, %v3119
        %v3125 = vadd.f32 %v3070, %v3119
        %v3126 = vadd.f32 %v3071, %v3119
        %v3127 = vadd.f32 %v3072, %v3119
        %v3128 = vadd.f32 %v3073, %v3119
        %v3129 = vadd.f32 %v3074, %v3119
        %v3130 = vadd.f32 %v3075, %v3119
        %v3131 = vadd.f32 %v3076, %v3119
        %v3132 = vadd.f32 %v3077, %v3119
        %v3133 = vadd.f32 %v3078, %v3119
        %v3134 = vadd.f32 %v3079, %v3119
        %v3135 = vadd.f32 %v3080, %v3119
        %v3136 = vadd.f32 %v3081, %v3119
        %v3137 = vadd.f32 %v3082, %v3119
        %v3138 = vadd.f32 %v3083, %v3119
        %v3139 = vadd.f32 %v3084, %v3119
        %v3140 = vadd.f32 %v3085, %v3119
        %v3141 = vadd.f32 %v3086, %v3119
        %v3142 = vadd.f32 %v3087, %v3119
        %v3143 = vadd.f32 %v3088, %v3119
        %v3144 = vadd.f32 %v3089, %v3119
        %v3145 = vadd.f32 %v3090, %v3119
        %v3146 = vadd.f32 %v3091, %v3119
        %v3147 = vadd.f32 %v3092, %v3119
        %v3148 = vadd.f32 %v3093, %v3119
        %v3149 = vadd.f32 %v3094, %v3119
        %v3150 = vadd.f32 %v3095, %v3119
        %v3151 = vadd.f32 %v3096, %v3119
        %v3152 = vadd.f32 %v3097, %v3119
        %v3153 = vadd.f32 %v3098, %v3119
        %v3154 = vadd.f32 %v3099, %v3119
        %v3155 = vadd.f32 %v3100, %v3119
        %v3156 = vadd.f32 %v3101, %v3119
        %v3157 = vadd.f32 %v3102, %v3119
        %v3158 = vadd.f32 %v3103, %v3119
        %v3159 = vadd.f32 %v3104, %v3119
        %v3160 = vadd.f32 %v3105, %v3119
        %v3161 = vadd.f32 %v3106, %v3119
        %v3162 = vadd.f32 %v3107, %v3119
        %v3163 = vadd.f32 %v3108, %v3119
        %v3164 = vadd.f32 %v3109, %v3119
        %v3165 = vadd.f32 %v3110, %v3119
        %v3166 = vadd.f32 %v3111, %v3119
        %v3167 = vadd.f32 %v3112, %v3119
        %v3168 = vadd.f32 %v3113, %v3119
        %v3169 = vxor.u32 %v3121, 2147483648
        %v3170 = vxor.u32 %v3122, 2147483648
        %v3171 = vxor.u32 %v3123, 2147483648
        %v3172 = vxor.u32 %v3124, 2147483648
        %v3173 = vxor.u32 %v3125, 2147483648
        %v3174 = vxor.u32 %v3126, 2147483648
        %v3175 = vxor.u32 %v3127, 2147483648
        %v3176 = vxor.u32 %v3128, 2147483648
        %v3177 = vxor.u32 %v3129, 2147483648
        %v3178 = vxor.u32 %v3130, 2147483648
        %v3179 = vxor.u32 %v3131, 2147483648
        %v3180 = vxor.u32 %v3132, 2147483648
        %v3181 = vxor.u32 %v3133, 2147483648
        %v3182 = vxor.u32 %v3134, 2147483648
        %v3183 = vxor.u32 %v3135, 2147483648
        %v3184 = vxor.u32 %v3136, 2147483648
        %v3185 = vxor.u32 %v3137, 2147483648
        %v3186 = vxor.u32 %v3138, 2147483648
        %v3187 = vxor.u32 %v3139, 2147483648
        %v3188 = vxor.u32 %v3140, 2147483648
        %v3189 = vxor.u32 %v3141, 2147483648
        %v3190 = vxor.u32 %v3142, 2147483648
        %v3191 = vxor.u32 %v3143, 2147483648
        %v3192 = vxor.u32 %v3144, 2147483648
        %v3193 = vxor.u32 %v3145, 2147483648
        %v3194 = vxor.u32 %v3146, 2147483648
        %v3195 = vxor.u32 %v3147, 2147483648
        %v3196 = vxor.u32 %v3148, 2147483648
        %v3197 = vxor.u32 %v3149, 2147483648
        %v3198 = vxor.u32 %v3150, 2147483648
        %v3199 = vxor.u32 %v3151, 2147483648
        %v3200 = vxor.u32 %v3152, 2147483648
        %v3201 = vxor.u32 %v3153, 2147483648
        %v3202 = vxor.u32 %v3154, 2147483648
        %v3203 = vxor.u32 %v3155, 2147483648
        %v3204 = vxor.u32 %v3156, 2147483648
        %v3205 = vxor.u32 %v3157, 2147483648
        %v3206 = vxor.u32 %v3158, 2147483648
        %v3207 = vxor.u32 %v3159, 2147483648
        %v3208 = vxor.u32 %v3160, 2147483648
        %v3209 = vxor.u32 %v3161, 2147483648
        %v3210 = vxor.u32 %v3162, 2147483648
        %v3211 = vxor.u32 %v3163, 2147483648
        %v3212 = vxor.u32 %v3164, 2147483648
        %v3213 = vxor.u32 %v3165, 2147483648
        %v3214 = vxor.u32 %v3166, 2147483648
        %v3215 = vxor.u32 %v3167, 2147483648
        %v3216 = vxor.u32 %v3168, 2147483648
        %v3217 = vmul.f32 %v3169, 1.442695
        %v3218 = vpow.pop %v3217
        %v3219 = vmul.f32 %v3170, 1.442695
        %v3220 = vpow.pop %v3219
        %v3221 = vmul.f32 %v3171, 1.442695
        %v3222 = vpow.pop %v3221
        %v3223 = vmul.f32 %v3172, 1.442695
        %v3224 = vpow.pop %v3223
        %v3225 = vmul.f32 %v3173, 1.442695
        %v3226 = vpow.pop %v3225
        %v3227 = vmul.f32 %v3174, 1.442695
        %v3228 = vpow.pop %v3227
        %v3229 = vmul.f32 %v3175, 1.442695
        %v3230 = vpow.pop %v3229
        %v3231 = vmul.f32 %v3176, 1.442695
        %v3232 = vpow.pop %v3231
        %v3233 = vmul.f32 %v3177, 1.442695
        %v3234 = vpow.pop %v3233
        %v3235 = vmul.f32 %v3178, 1.442695
        %v3236 = vpow.pop %v3235
        %v3237 = vmul.f32 %v3179, 1.442695
        %v3238 = vpow.pop %v3237
        %v3239 = vmul.f32 %v3180, 1.442695
        %v3240 = vpow.pop %v3239
        %v3241 = vmul.f32 %v3181, 1.442695
        %v3242 = vpow.pop %v3241
        %v3243 = vmul.f32 %v3182, 1.442695
        %v3244 = vpow.pop %v3243
        %v3245 = vmul.f32 %v3183, 1.442695
        %v3246 = vpow.pop %v3245
        %v3247 = vmul.f32 %v3184, 1.442695
        %v3248 = vpow.pop %v3247
        %v3249 = vmul.f32 %v3185, 1.442695
        %v3250 = vpow.pop %v3249
        %v3251 = vmul.f32 %v3186, 1.442695
        %v3252 = vpow.pop %v3251
        %v3253 = vmul.f32 %v3187, 1.442695
        %v3254 = vpow.pop %v3253
        %v3255 = vmul.f32 %v3188, 1.442695
        %v3256 = vpow.pop %v3255
        %v3257 = vmul.f32 %v3189, 1.442695
        %v3258 = vpow.pop %v3257
        %v3259 = vmul.f32 %v3190, 1.442695
        %v3260 = vpow.pop %v3259
        %v3261 = vmul.f32 %v3191, 1.442695
        %v3262 = vpow.pop %v3261
        %v3263 = vmul.f32 %v3192, 1.442695
        %v3264 = vpow.pop %v3263
        %v3265 = vmul.f32 %v3193, 1.442695
        %v3266 = vpow.pop %v3265
        %v3267 = vmul.f32 %v3194, 1.442695
        %v3268 = vpow.pop %v3267
        %v3269 = vmul.f32 %v3195, 1.442695
        %v3270 = vpow.pop %v3269
        %v3271 = vmul.f32 %v3196, 1.442695
        %v3272 = vpow.pop %v3271
        %v3273 = vmul.f32 %v3197, 1.442695
        %v3274 = vpow.pop %v3273
        %v3275 = vmul.f32 %v3198, 1.442695
        %v3276 = vpow.pop %v3275
        %v3277 = vmul.f32 %v3199, 1.442695
        %v3278 = vpow.pop %v3277
        %v3279 = vmul.f32 %v3200, 1.442695
        %v3280 = vpow.pop %v3279
        %v3281 = vmul.f32 %v3201, 1.442695
        %v3282 = vpow.pop %v3281
        %v3283 = vmul.f32 %v3202, 1.442695
        %v3284 = vpow.pop %v3283
        %v3285 = vmul.f32 %v3203, 1.442695
        %v3286 = vpow.pop %v3285
        %v3287 = vmul.f32 %v3204, 1.442695
        %v3288 = vpow.pop %v3287
        %v3289 = vmul.f32 %v3205, 1.442695
        %v3290 = vpow.pop %v3289
        %v3291 = vmul.f32 %v3206, 1.442695
        %v3292 = vpow.pop %v3291
        %v3293 = vmul.f32 %v3207, 1.442695
        %v3294 = vpow.pop %v3293
        %v3295 = vmul.f32 %v3208, 1.442695
        %v3296 = vpow.pop %v3295
        %v3297 = vmul.f32 %v3209, 1.442695
        %v3298 = vpow.pop %v3297
        %v3299 = vmul.f32 %v3210, 1.442695
        %v3300 = vpow.pop %v3299
        %v3301 = vmul.f32 %v3211, 1.442695
        %v3302 = vpow.pop %v3301
        %v3303 = vmul.f32 %v3212, 1.442695
        %v3304 = vpow.pop %v3303
        %v3305 = vmul.f32 %v3213, 1.442695
        %v3306 = vpow.pop %v3305
        %v3307 = vmul.f32 %v3214, 1.442695
        %v3308 = vpow.pop %v3307
        %v3309 = vmul.f32 %v3215, 1.442695
        %v3310 = vpow.pop %v3309
        %v3311 = vmul.f32 %v3216, 1.442695
        %v3312 = vpow.pop %v3311
        %v3313 = vadd.f32 %v3218, 1.0
        %v3314 = vadd.f32 %v3220, 1.0
        %v3315 = vadd.f32 %v3222, 1.0
        %v3316 = vadd.f32 %v3224, 1.0
        %v3317 = vadd.f32 %v3226, 1.0
        %v3318 = vadd.f32 %v3228, 1.0
        %v3319 = vadd.f32 %v3230, 1.0
        %v3320 = vadd.f32 %v3232, 1.0
        %v3321 = vadd.f32 %v3234, 1.0
        %v3322 = vadd.f32 %v3236, 1.0
        %v3323 = vadd.f32 %v3238, 1.0
        %v3324 = vadd.f32 %v3240, 1.0
        %v3325 = vadd.f32 %v3242, 1.0
        %v3326 = vadd.f32 %v3244, 1.0
        %v3327 = vadd.f32 %v3246, 1.0
        %v3328 = vadd.f32 %v3248, 1.0
        %v3329 = vadd.f32 %v3250, 1.0
        %v3330 = vadd.f32 %v3252, 1.0
        %v3331 = vadd.f32 %v3254, 1.0
        %v3332 = vadd.f32 %v3256, 1.0
        %v3333 = vadd.f32 %v3258, 1.0
        %v3334 = vadd.f32 %v3260, 1.0
        %v3335 = vadd.f32 %v3262, 1.0
        %v3336 = vadd.f32 %v3264, 1.0
        %v3337 = vadd.f32 %v3266, 1.0
        %v3338 = vadd.f32 %v3268, 1.0
        %v3339 = vadd.f32 %v3270, 1.0
        %v3340 = vadd.f32 %v3272, 1.0
        %v3341 = vadd.f32 %v3274, 1.0
        %v3342 = vadd.f32 %v3276, 1.0
        %v3343 = vadd.f32 %v3278, 1.0
        %v3344 = vadd.f32 %v3280, 1.0
        %v3345 = vadd.f32 %v3282, 1.0
        %v3346 = vadd.f32 %v3284, 1.0
        %v3347 = vadd.f32 %v3286, 1.0
        %v3348 = vadd.f32 %v3288, 1.0
        %v3349 = vadd.f32 %v3290, 1.0
        %v3350 = vadd.f32 %v3292, 1.0
        %v3351 = vadd.f32 %v3294, 1.0
        %v3352 = vadd.f32 %v3296, 1.0
        %v3353 = vadd.f32 %v3298, 1.0
        %v3354 = vadd.f32 %v3300, 1.0
        %v3355 = vadd.f32 %v3302, 1.0
        %v3356 = vadd.f32 %v3304, 1.0
        %v3357 = vadd.f32 %v3306, 1.0
        %v3358 = vadd.f32 %v3308, 1.0
        %v3359 = vadd.f32 %v3310, 1.0
        %v3360 = vadd.f32 %v3312, 1.0
        %v3361 = vrcp.pop %v3313
        %v3362 = vmul.f32 1.0, %v3361
        %v3363 = vrcp.pop %v3314
        %v3364 = vmul.f32 1.0, %v3363
        %v3365 = vrcp.pop %v3315
        %v3366 = vmul.f32 1.0, %v3365
        %v3367 = vrcp.pop %v3316
        %v3368 = vmul.f32 1.0, %v3367
        %v3369 = vrcp.pop %v3317
        %v3370 = vmul.f32 1.0, %v3369
        %v3371 = vrcp.pop %v3318
        %v3372 = vmul.f32 1.0, %v3371
        %v3373 = vrcp.pop %v3319
        %v3374 = vmul.f32 1.0, %v3373
        %v3375 = vrcp.pop %v3320
        %v3376 = vmul.f32 1.0, %v3375
        %v3377 = vrcp.pop %v3321
        %v3378 = vmul.f32 1.0, %v3377
        %v3379 = vrcp.pop %v3322
        %v3380 = vmul.f32 1.0, %v3379
        %v3381 = vrcp.pop %v3323
        %v3382 = vmul.f32 1.0, %v3381
        %v3383 = vrcp.pop %v3324
        %v3384 = vmul.f32 1.0, %v3383
        %v3385 = vrcp.pop %v3325
        %v3386 = vmul.f32 1.0, %v3385
        %v3387 = vrcp.pop %v3326
        %v3388 = vmul.f32 1.0, %v3387
        %v3389 = vrcp.pop %v3327
        %v3390 = vmul.f32 1.0, %v3389
        %v3391 = vrcp.pop %v3328
        %v3392 = vmul.f32 1.0, %v3391
        %v3393 = vrcp.pop %v3329
        %v3394 = vmul.f32 1.0, %v3393
        %v3395 = vrcp.pop %v3330
        %v3396 = vmul.f32 1.0, %v3395
        %v3397 = vrcp.pop %v3331
        %v3398 = vmul.f32 1.0, %v3397
        %v3399 = vrcp.pop %v3332
        %v3400 = vmul.f32 1.0, %v3399
        %v3401 = vrcp.pop %v3333
        %v3402 = vmul.f32 1.0, %v3401
        %v3403 = vrcp.pop %v3334
        %v3404 = vmul.f32 1.0, %v3403
        %v3405 = vrcp.pop %v3335
        %v3406 = vmul.f32 1.0, %v3405
        %v3407 = vrcp.pop %v3336
        %v3408 = vmul.f32 1.0, %v3407
        %v3409 = vrcp.pop %v3337
        %v3410 = vmul.f32 1.0, %v3409
        %v3411 = vrcp.pop %v3338
        %v3412 = vmul.f32 1.0, %v3411
        %v3413 = vrcp.pop %v3339
        %v3414 = vmul.f32 1.0, %v3413
        %v3415 = vrcp.pop %v3340
        %v3416 = vmul.f32 1.0, %v3415
        %v3417 = vrcp.pop %v3341
        %v3418 = vmul.f32 1.0, %v3417
        %v3419 = vrcp.pop %v3342
        %v3420 = vmul.f32 1.0, %v3419
        %v3421 = vrcp.pop %v3343
        %v3422 = vmul.f32 1.0, %v3421
        %v3423 = vrcp.pop %v3344
        %v3424 = vmul.f32 1.0, %v3423
        %v3425 = vrcp.pop %v3345
        %v3426 = vmul.f32 1.0, %v3425
        %v3427 = vrcp.pop %v3346
        %v3428 = vmul.f32 1.0, %v3427
        %v3429 = vrcp.pop %v3347
        %v3430 = vmul.f32 1.0, %v3429
        %v3431 = vrcp.pop %v3348
        %v3432 = vmul.f32 1.0, %v3431
        %v3433 = vrcp.pop %v3349
        %v3434 = vmul.f32 1.0, %v3433
        %v3435 = vrcp.pop %v3350
        %v3436 = vmul.f32 1.0, %v3435
        %v3437 = vrcp.pop %v3351
        %v3438 = vmul.f32 1.0, %v3437
        %v3439 = vrcp.pop %v3352
        %v3440 = vmul.f32 1.0, %v3439
        %v3441 = vrcp.pop %v3353
        %v3442 = vmul.f32 1.0, %v3441
        %v3443 = vrcp.pop %v3354
        %v3444 = vmul.f32 1.0, %v3443
        %v3445 = vrcp.pop %v3355
        %v3446 = vmul.f32 1.0, %v3445
        %v3447 = vrcp.pop %v3356
        %v3448 = vmul.f32 1.0, %v3447
        %v3449 = vrcp.pop %v3357
        %v3450 = vmul.f32 1.0, %v3449
        %v3451 = vrcp.pop %v3358
        %v3452 = vmul.f32 1.0, %v3451
        %v3453 = vrcp.pop %v3359
        %v3454 = vmul.f32 1.0, %v3453
        %v3455 = vrcp.pop %v3360
        %v3456 = vmul.f32 1.0, %v3455
        %v3457 = vmul.f32 %v3121, %v3362
        %v3458 = vmul.f32 %v3122, %v3364
        %v3459 = vmul.f32 %v3123, %v3366
        %v3460 = vmul.f32 %v3124, %v3368
        %v3461 = vmul.f32 %v3125, %v3370
        %v3462 = vmul.f32 %v3126, %v3372
        %v3463 = vmul.f32 %v3127, %v3374
        %v3464 = vmul.f32 %v3128, %v3376
        %v3465 = vmul.f32 %v3129, %v3378
        %v3466 = vmul.f32 %v3130, %v3380
        %v3467 = vmul.f32 %v3131, %v3382
        %v3468 = vmul.f32 %v3132, %v3384
        %v3469 = vmul.f32 %v3133, %v3386
        %v3470 = vmul.f32 %v3134, %v3388
        %v3471 = vmul.f32 %v3135, %v3390
        %v3472 = vmul.f32 %v3136, %v3392
        %v3473 = vmul.f32 %v3137, %v3394
        %v3474 = vmul.f32 %v3138, %v3396
        %v3475 = vmul.f32 %v3139, %v3398
        %v3476 = vmul.f32 %v3140, %v3400
        %v3477 = vmul.f32 %v3141, %v3402
        %v3478 = vmul.f32 %v3142, %v3404
        %v3479 = vmul.f32 %v3143, %v3406
        %v3480 = vmul.f32 %v3144, %v3408
        %v3481 = vmul.f32 %v3145, %v3410
        %v3482 = vmul.f32 %v3146, %v3412
        %v3483 = vmul.f32 %v3147, %v3414
        %v3484 = vmul.f32 %v3148, %v3416
        %v3485 = vmul.f32 %v3149, %v3418
        %v3486 = vmul.f32 %v3150, %v3420
        %v3487 = vmul.f32 %v3151, %v3422
        %v3488 = vmul.f32 %v3152, %v3424
        %v3489 = vmul.f32 %v3153, %v3426
        %v3490 = vmul.f32 %v3154, %v3428
        %v3491 = vmul.f32 %v3155, %v3430
        %v3492 = vmul.f32 %v3156, %v3432
        %v3493 = vmul.f32 %v3157, %v3434
        %v3494 = vmul.f32 %v3158, %v3436
        %v3495 = vmul.f32 %v3159, %v3438
        %v3496 = vmul.f32 %v3160, %v3440
        %v3497 = vmul.f32 %v3161, %v3442
        %v3498 = vmul.f32 %v3162, %v3444
        %v3499 = vmul.f32 %v3163, %v3446
        %v3500 = vmul.f32 %v3164, %v3448
        %v3501 = vmul.f32 %v3165, %v3450
        %v3502 = vmul.f32 %v3166, %v3452
        %v3503 = vmul.f32 %v3167, %v3454
        %v3504 = vmul.f32 %v3168, %v3456
        %v3505 = vld [vmem:[%s364] sm:$0xff]
        %v3506 = vld [vmem:[%s364 + $0x8] sm:$0xff]
        %v3507 = vld [vmem:[%s364 + $0x10] sm:$0xff]
        %v3508 = vld [vmem:[%s364 + $0x18] sm:$0xff]
        %v3509 = vld [vmem:[%s364 + $0x20] sm:$0xff]
        %v3510 = vld [vmem:[%s364 + $0x28] sm:$0xff]
        %v3511 = vld [vmem:[%s364 + $0x30] sm:$0xff]
        %v3512 = vld [vmem:[%s364 + $0x38] sm:$0xff]
        %v3513 = vld [vmem:[%s364 + $0x40] sm:$0xff]
        %v3514 = vld [vmem:[%s364 + $0x48] sm:$0xff]
        %v3515 = vld [vmem:[%s364 + $0x50] sm:$0xff]
        %v3516 = vld [vmem:[%s364 + $0x58] sm:$0xff]
        %v3517 = vld [vmem:[%s364 + $0x60] sm:$0xff]
        %v3518 = vld [vmem:[%s364 + $0x68] sm:$0xff]
        %v3519 = vld [vmem:[%s364 + $0x70] sm:$0xff]
        %v3520 = vld [vmem:[%s364 + $0x78] sm:$0xff]
        %v3521 = vld [vmem:[%s364 + $0x80] sm:$0xff]
        %v3522 = vld [vmem:[%s364 + $0x88] sm:$0xff]
        %v3523 = vld [vmem:[%s364 + $0x90] sm:$0xff]
        %v3524 = vld [vmem:[%s364 + $0x98] sm:$0xff]
        %v3525 = vld [vmem:[%s364 + $0xa0] sm:$0xff]
        %v3526 = vld [vmem:[%s364 + $0xa8] sm:$0xff]
        %v3527 = vld [vmem:[%s364 + $0xb0] sm:$0xff]
        %v3528 = vld [vmem:[%s364 + $0xb8] sm:$0xff]
        %v3529 = vld [vmem:[%s364 + $0xc0] sm:$0xff]
        %v3530 = vld [vmem:[%s364 + $0xc8] sm:$0xff]
        %v3531 = vld [vmem:[%s364 + $0xd0] sm:$0xff]
        %v3532 = vld [vmem:[%s364 + $0xd8] sm:$0xff]
        %v3533 = vld [vmem:[%s364 + $0xe0] sm:$0xff]
        %v3534 = vld [vmem:[%s364 + $0xe8] sm:$0xff]
        %v3535 = vld [vmem:[%s364 + $0xf0] sm:$0xff]
        %v3536 = vld [vmem:[%s364 + $0xf8] sm:$0xff]
        %vm3569 = vcmask 1040384
        %v3570 = vrot.slane %v3505, 7
        %v3571 = vrot.slane %v3506, 7
        %v3572 = vsel %vm3569, %v3570, %v3571
        %v3573 = vrot.slane %v3507, 7
        %v3574 = vrot.slane %v3508, 7
        %v3575 = vsel %vm3569, %v3573, %v3574
        %v3576 = vrot.slane %v3509, 7
        %v3577 = vrot.slane %v3510, 7
        %v3578 = vsel %vm3569, %v3576, %v3577
        %v3579 = vrot.slane %v3511, 7
        %v3580 = vrot.slane %v3512, 7
        %v3581 = vsel %vm3569, %v3579, %v3580
        %v3582 = vrot.slane %v3513, 7
        %v3583 = vrot.slane %v3514, 7
        %v3584 = vsel %vm3569, %v3582, %v3583
        %v3585 = vrot.slane %v3515, 7
        %v3586 = vrot.slane %v3516, 7
        %v3587 = vsel %vm3569, %v3585, %v3586
        %v3588 = vrot.slane %v3517, 7
        %v3589 = vrot.slane %v3518, 7
        %v3590 = vsel %vm3569, %v3588, %v3589
        %v3591 = vrot.slane %v3519, 7
        %v3592 = vrot.slane %v3520, 7
        %v3593 = vsel %vm3569, %v3591, %v3592
        %v3594 = vrot.slane %v3521, 7
        %v3595 = vrot.slane %v3522, 7
        %v3596 = vsel %vm3569, %v3594, %v3595
        %v3597 = vrot.slane %v3523, 7
        %v3598 = vrot.slane %v3524, 7
        %v3599 = vsel %vm3569, %v3597, %v3598
        %v3600 = vrot.slane %v3525, 7
        %v3601 = vrot.slane %v3526, 7
        %v3602 = vsel %vm3569, %v3600, %v3601
        %v3603 = vrot.slane %v3527, 7
        %v3604 = vrot.slane %v3528, 7
        %v3605 = vsel %vm3569, %v3603, %v3604
        %v3606 = vrot.slane %v3529, 7
        %v3607 = vrot.slane %v3530, 7
        %v3608 = vsel %vm3569, %v3606, %v3607
        %v3609 = vrot.slane %v3531, 7
        %v3610 = vrot.slane %v3532, 7
        %v3611 = vsel %vm3569, %v3609, %v3610
        %v3612 = vrot.slane %v3533, 7
        %v3613 = vrot.slane %v3534, 7
        %v3614 = vsel %vm3569, %v3612, %v3613
        %v3615 = vrot.slane %v3535, 7
        %v3616 = vrot.slane %v3536, 7
        %v3617 = vsel %vm3569, %v3615, %v3616
        %v3666 = vadd.f32 %v3457, %v3570
        %v3667 = vadd.f32 %v3458, %v3572
        %v3668 = vadd.f32 %v3459, %v3571
        %v3669 = vadd.f32 %v3460, %v3573
        %v3670 = vadd.f32 %v3461, %v3575
        %v3671 = vadd.f32 %v3462, %v3574
        %v3672 = vadd.f32 %v3463, %v3576
        %v3673 = vadd.f32 %v3464, %v3578
        %v3674 = vadd.f32 %v3465, %v3577
        %v3675 = vadd.f32 %v3466, %v3579
        %v3676 = vadd.f32 %v3467, %v3581
        %v3677 = vadd.f32 %v3468, %v3580
        %v3678 = vadd.f32 %v3469, %v3582
        %v3679 = vadd.f32 %v3470, %v3584
        %v3680 = vadd.f32 %v3471, %v3583
        %v3681 = vadd.f32 %v3472, %v3585
        %v3682 = vadd.f32 %v3473, %v3587
        %v3683 = vadd.f32 %v3474, %v3586
        %v3684 = vadd.f32 %v3475, %v3588
        %v3685 = vadd.f32 %v3476, %v3590
        %v3686 = vadd.f32 %v3477, %v3589
        %v3687 = vadd.f32 %v3478, %v3591
        %v3688 = vadd.f32 %v3479, %v3593
        %v3689 = vadd.f32 %v3480, %v3592
        %v3690 = vadd.f32 %v3481, %v3594
        %v3691 = vadd.f32 %v3482, %v3596
        %v3692 = vadd.f32 %v3483, %v3595
        %v3693 = vadd.f32 %v3484, %v3597
        %v3694 = vadd.f32 %v3485, %v3599
        %v3695 = vadd.f32 %v3486, %v3598
        %v3696 = vadd.f32 %v3487, %v3600
        %v3697 = vadd.f32 %v3488, %v3602
        %v3698 = vadd.f32 %v3489, %v3601
        %v3699 = vadd.f32 %v3490, %v3603
        %v3700 = vadd.f32 %v3491, %v3605
        %v3701 = vadd.f32 %v3492, %v3604
        %v3702 = vadd.f32 %v3493, %v3606
        %v3703 = vadd.f32 %v3494, %v3608
        %v3704 = vadd.f32 %v3495, %v3607
        %v3705 = vadd.f32 %v3496, %v3609
        %v3706 = vadd.f32 %v3497, %v3611
        %v3707 = vadd.f32 %v3498, %v3610
        %v3708 = vadd.f32 %v3499, %v3612
        %v3709 = vadd.f32 %v3500, %v3614
        %v3710 = vadd.f32 %v3501, %v3613
        %v3711 = vadd.f32 %v3502, %v3615
        %v3712 = vadd.f32 %v3503, %v3617
        %v3713 = vadd.f32 %v3504, %v3616
        %3714 = vst [vmem:[%s403 - $0x1] sm:$0xfe] %v3666
        %3715 = vst [vmem:[%s403 + $0x7] sm:$0xff] %v3667
        %3716 = vst [vmem:[%s403 + $0xf] sm:$0x1] %v3668
        %3717 = vst [vmem:[%s403 + $0xf] sm:$0xfe] %v3669
        %3718 = vst [vmem:[%s403 + $0x17] sm:$0xff] %v3670
        %3719 = vst [vmem:[%s403 + $0x1f] sm:$0x1] %v3671
        %3720 = vst [vmem:[%s403 + $0x1f] sm:$0xfe] %v3672
        %3721 = vst [vmem:[%s403 + $0x27] sm:$0xff] %v3673
        %3722 = vst [vmem:[%s403 + $0x2f] sm:$0x1] %v3674
        %3723 = vst [vmem:[%s403 + $0x2f] sm:$0xfe] %v3675
        %3724 = vst [vmem:[%s403 + $0x37] sm:$0xff] %v3676
        %3725 = vst [vmem:[%s403 + $0x3f] sm:$0x1] %v3677
        %3726 = vst [vmem:[%s403 + $0x3f] sm:$0xfe] %v3678
        %3727 = vst [vmem:[%s403 + $0x47] sm:$0xff] %v3679
        %3728 = vst [vmem:[%s403 + $0x4f] sm:$0x1] %v3680
        %3729 = vst [vmem:[%s403 + $0x4f] sm:$0xfe] %v3681
        %3730 = vst [vmem:[%s403 + $0x57] sm:$0xff] %v3682
        %3731 = vst [vmem:[%s403 + $0x5f] sm:$0x1] %v3683
        %3732 = vst [vmem:[%s403 + $0x5f] sm:$0xfe] %v3684
        %3733 = vst [vmem:[%s403 + $0x67] sm:$0xff] %v3685
        %3734 = vst [vmem:[%s403 + $0x6f] sm:$0x1] %v3686
        %3735 = vst [vmem:[%s403 + $0x6f] sm:$0xfe] %v3687
        %3736 = vst [vmem:[%s403 + $0x77] sm:$0xff] %v3688
        %3737 = vst [vmem:[%s403 + $0x7f] sm:$0x1] %v3689
        %3738 = vst [vmem:[%s403 + $0x7f] sm:$0xfe] %v3690
        %3739 = vst [vmem:[%s403 + $0x87] sm:$0xff] %v3691
        %3740 = vst [vmem:[%s403 + $0x8f] sm:$0x1] %v3692
        %3741 = vst [vmem:[%s403 + $0x8f] sm:$0xfe] %v3693
        %3742 = vst [vmem:[%s403 + $0x97] sm:$0xff] %v3694
        %3743 = vst [vmem:[%s403 + $0x9f] sm:$0x1] %v3695
        %3744 = vst [vmem:[%s403 + $0x9f] sm:$0xfe] %v3696
        %3745 = vst [vmem:[%s403 + $0xa7] sm:$0xff] %v3697
        %3746 = vst [vmem:[%s403 + $0xaf] sm:$0x1] %v3698
        %3747 = vst [vmem:[%s403 + $0xaf] sm:$0xfe] %v3699
        %3748 = vst [vmem:[%s403 + $0xb7] sm:$0xff] %v3700
        %3749 = vst [vmem:[%s403 + $0xbf] sm:$0x1] %v3701
        %3750 = vst [vmem:[%s403 + $0xbf] sm:$0xfe] %v3702
        %3751 = vst [vmem:[%s403 + $0xc7] sm:$0xff] %v3703
        %3752 = vst [vmem:[%s403 + $0xcf] sm:$0x1] %v3704
        %3753 = vst [vmem:[%s403 + $0xcf] sm:$0xfe] %v3705
        %3754 = vst [vmem:[%s403 + $0xd7] sm:$0xff] %v3706
        %3755 = vst [vmem:[%s403 + $0xdf] sm:$0x1] %v3707
        %3756 = vst [vmem:[%s403 + $0xdf] sm:$0xfe] %v3708
        %3757 = vst [vmem:[%s403 + $0xe7] sm:$0xff] %v3709
        %3758 = vst [vmem:[%s403 + $0xef] sm:$0x1] %v3710
        %3759 = vst [vmem:[%s403 + $0xef] sm:$0xfe] %v3711
        %3760 = vst [vmem:[%s403 + $0xf7] sm:$0xff] %v3712
        %3761 = vst [vmem:[%s403 + $0xff] sm:$0x1] %v3713
        %p3762 = scmp.lt.s32.totalorder %s16, 1
        %s3763 = scalar_select %p3762, %s16, 1
        %s3764 = smul.addr %s3763, 32
        %s3765 = smul.addr %s3764, 8
        %s3766 = scalar_lea.vmem %s5, %s3765
        // Predicated region
        $region79: #{csp_layer_forward.6} parent=73 // pred_check
          %p3767 = pneg %p149
        $region80: #{csp_layer_forward.6} parent=73 // pred_check_branch
          %3769 = sbr.rel (%p3767) target = $region82
        $region81: #{csp_layer_forward.6} parent=73 // pred_region
          _
        $region82: #{csp_layer_forward.6} parent=73 // pred_fallthru
          _
      $region74: #{csp_layer_forward.6} parent=5 // pred_fallthru
        _
      %p3770 = scmp.le.s32.totalorder 2, %s11
      // Predicated region
      $region83: #{csp_layer_forward.6} parent=5 // pred_check
        %p3771 = pneg %p3770
      $region84: #{csp_layer_forward.6} parent=5 // pred_check_branch
        %3773 = sbr.rel (%p3771) target = $region86
      $region85: #{csp_layer_forward.6} parent=5 // pred_region
        %s3774 = ssub.s32 %s11, 2
        // Predicated region
        $region87: #{csp_layer_forward.6} parent=85 // pred_check
          %p3775 = pneg %p155
        $region88: #{csp_layer_forward.6} parent=85 // pred_check_branch
          %3777 = sbr.rel (%p3775) target = $region90
        $region89: #{csp_layer_forward.6} parent=85 // pred_region
          %p3778 = scmp.lt.s32.totalorder %s17, 1
          %s3779 = scalar_select %p3778, %s17, 1
          %s3780 = smul.addr %s3779, 32
          %s3781 = smul.addr %s3780, 8
          %s3782 = scalar_lea.vmem %s5, %s3781
        $region90: #{csp_layer_forward.6} parent=85 // pred_fallthru
          _
      $region86: #{csp_layer_forward.6} parent=5 // pred_fallthru
        _
    $region6: #{csp_layer_forward.6} parent=1 // loop_footer
      %s15 = sadd.s32 1, %s11
    $region7: #{csp_layer_forward.6} parent=1 // loop_footer_branch
      %10 = sbr.rel target = $region3
    $region8: #{csp_layer_forward.6} parent=1 // loop_exit
      _

</llo_original>
